<compile_context>
chip_gen: v7x
topology: tpu7x:2x2x1
jax: 0.10.0
libtpu: 0.0.40
codegen_flags: <defaults>
</compile_context>

<pallas_src>
import jax
import jax.numpy as jnp
from jax import lax
from jax.experimental import pallas as pl
from jax.experimental.pallas import tpu as pltpu
import numpy as np


# ---------------------------------------------------------------------------
# Pallas kernel factory: whole ConvGRU sequence in one pallas_call
# ---------------------------------------------------------------------------
def _make_convgru_call(T, B, H, W, Cx, Ch):
    Hp, Wp = H + 2, W + 2

    def kernel(xpad_ref, h0_ref, wx_ref, whru_ref, who_ref, b_ref,
               out_ref, hpad_ref, ghpad_ref):
        t = pl.program_id(1)

        # --- sequence start: (re)build the zero-bordered hidden state -------
        @pl.when(t == 0)
        def _():
            hpad_ref[...] = jnp.zeros(hpad_ref.shape, hpad_ref.dtype)
            ghpad_ref[...] = jnp.zeros(ghpad_ref.shape, ghpad_ref.dtype)
            hpad_ref[1:1 + H, 1:1 + W, :] = h0_ref[...]

        def conv3x3(p_ref, w_ref, acc):
            # 'same' 3x3 conv: p_ref is a zero-padded (H+2, W+2, Cin) ref,
            # w_ref is (3, 3, Cin, Cout); acc is the (H, W, Cout) f32 init
            # (bias already folded in for the x path).
            for dy in range(3):
                for dx in range(3):
                    sl = p_ref[dy:dy + H, dx:dx + W, :]
                    acc = acc + lax.dot_general(
                        sl, w_ref[dy, dx],
                        dimension_numbers=(((2,), (0,)), ((), ())),
                        preferred_element_type=jnp.float32)
            return acc

        # x contribution to all three gates; biases folded into the acc init.
        bias = jnp.broadcast_to(b_ref[...], (H, W, 3 * Ch)).astype(jnp.float32)
        xc = conv3x3(xpad_ref, wx_ref, bias)                       # (H, W, 3*Ch)

        # h contribution to read/update gates (single fused conv).
        hc = conv3x3(hpad_ref, whru_ref,
                     jnp.zeros((H, W, 2 * Ch), jnp.float32))       # (H, W, 2*Ch)

        h_prev = hpad_ref[1:1 + H, 1:1 + W, :]                     # (H, W, Ch)

        ru = jax.nn.sigmoid(xc[:, :, :2 * Ch] + hc)                # fused sigmoid
        r = ru[:, :, :Ch]
        u = ru[:, :, Ch:]

        # Candidate conv input: zero-padded r * h_prev (borders already zero;
        # only the interior is overwritten each step).
        ghpad_ref[1:1 + H, 1:1 + W, :] = r * h_prev
        oc = conv3x3(ghpad_ref, who_ref,
                     jnp.zeros((H, W, Ch), jnp.float32))           # (H, W, Ch)
        c = jax.nn.relu(xc[:, :, 2 * Ch:] + oc)

        h_new = u * h_prev + (1.0 - u) * c

        hpad_ref[1:1 + H, 1:1 + W, :] = h_new     # carried to the next step
        out_ref[...] = h_new.astype(out_ref.dtype)
        # TODO(synk): at production DGMR sizes, switch the per-tap dots to an
        # im2col matmul (K = 9*Cin), use bf16 inputs, and a lane-dense
        # (H, W*Ch) output layout; at Ch=8 the relayout cost ~= the masked
        # store it removes, so it is intentionally not done here.

    return pl.pallas_call(
        kernel,
        out_shape=jax.ShapeDtypeStruct((T, B, H, W, Ch), jnp.float32),
        grid_spec=pltpu.PrefetchScalarGridSpec(
            num_scalar_prefetch=0,
            grid=(B, T),                       # T innermost: recurrence order
            in_specs=[
                pl.BlockSpec((None, None, Hp, Wp, Cx),
                             lambda b, t: (t, b, 0, 0, 0)),        # x (padded)
                pl.BlockSpec((None, H, W, Ch),
                             lambda b, t: (b, 0, 0, 0)),           # h0
                pl.BlockSpec((3, 3, Cx, 3 * Ch), lambda b, t: (0, 0, 0, 0)),
                pl.BlockSpec((3, 3, Ch, 2 * Ch), lambda b, t: (0, 0, 0, 0)),
                pl.BlockSpec((3, 3, Ch, Ch), lambda b, t: (0, 0, 0, 0)),
                pl.BlockSpec((1, 3 * Ch), lambda b, t: (0, 0)),    # fused bias
            ],
            out_specs=pl.BlockSpec((None, None, H, W, Ch),
                                   lambda b, t: (t, b, 0, 0, 0)),
            scratch_shapes=[
                pltpu.VMEM((Hp, Wp, Ch), jnp.float32),   # padded h (carried)
                pltpu.VMEM((Hp, Wp, Ch), jnp.float32),   # padded r*h
            ]),
        compiler_params=pltpu.CompilerParams(
            dimension_semantics=("parallel", "arbitrary")),
    )


# ---------------------------------------------------------------------------
# Wrapper: layout conversion + weight fusion, one pallas_call per sequence
# ---------------------------------------------------------------------------
def convgru_forward(x_tbchw, h0_bchw, params):
    """x: (T, B, Cx, H, W); h0: (B, Ch, H, W) -> (T, B, Ch, H, W)."""
    T, B, Cx, H, W = x_tbchw.shape
    Ch = h0_bchw.shape[1]
    (wr, br), (wu, bu), (wo, bo) = params        # HWIO (3, 3, Cx + Ch, Ch)

    # Split each SNConv weight into its x-part / h-part and fuse along Cout.
    wx_all = jnp.concatenate(
        [wr[:, :, :Cx, :], wu[:, :, :Cx, :], wo[:, :, :Cx, :]], axis=-1)
    wh_ru = jnp.concatenate([wr[:, :, Cx:, :], wu[:, :, Cx:, :]], axis=-1)
    wh_o = wo[:, :, Cx:, :]
    b_all = jnp.concatenate([br, bu, bo])[None, :]           # (1, 3*Ch)

    x_nhwc = jnp.transpose(x_tbchw, (0, 1, 3, 4, 2)).astype(jnp.float32)
    xpad = jnp.pad(x_nhwc, ((0, 0), (0, 0), (1, 1), (1, 1), (0, 0)))  # once
    h0 = jnp.transpose(h0_bchw, (0, 2, 3, 1)).astype(jnp.float32)

    call = _make_convgru_call(T, B, H, W, Cx, Ch)
    out = call(xpad, h0,
               wx_all.astype(jnp.float32), wh_ru.astype(jnp.float32),
               wh_o.astype(jnp.float32), b_all.astype(jnp.float32))
    return jnp.transpose(out, (0, 1, 4, 2, 3))               # (T, B, Ch, H, W)


# ---------------------------------------------------------------------------
# Parameter setup (deterministic, synthetic) + pure-JAX reference
# ---------------------------------------------------------------------------
def spectral_normalize(w_hwio, key, eps=1e-4):
    """One-step power-iteration spectral norm (torch-style), JAX-side glue."""
    kh, kw, cin, cout = w_hwio.shape
    w_mat = jnp.transpose(w_hwio, (3, 0, 1, 2)).reshape(cout, -1)
    u = jax.random.normal(key, (cout,), jnp.float32)
    u = u / (jnp.linalg.norm(u) + eps)
    v = w_mat.T @ u
    v = v / (jnp.linalg.norm(v) + eps)
    u = w_mat @ v
    u = u / (jnp.linalg.norm(u) + eps)
    sigma = u @ (w_mat @ v)
    return w_hwio / sigma


def _conv_same_ref(x_nhwc, w_hwio, b):
    y = lax.conv_general_dilated(
        x_nhwc, w_hwio, window_strides=(1, 1), padding="SAME",
        dimension_numbers=("NHWC", "HWIO", "NHWC"))
    return y + b[None, None, None, :]


def convgru_forward_ref(x_tbchw, h0_bchw, params):
    (wr, br), (wu, bu), (wo, bo) = params
    T = x_tbchw.shape[0]
    x_nhwc = jnp.transpose(x_tbchw, (0, 1, 3, 4, 2)).astype(jnp.float32)
    h = jnp.transpose(h0_bchw, (0, 2, 3, 1)).astype(jnp.float32)
    outs = []
    for t in range(T):
        x = x_nhwc[t]
        xh = jnp.concatenate([x, h], axis=-1)
        r = jax.nn.sigmoid(_conv_same_ref(xh, wr, br))
        u = jax.nn.sigmoid(_conv_same_ref(xh, wu, bu))
        gated = jnp.concatenate([x, r * h], axis=-1)
        c = jax.nn.relu(_conv_same_ref(gated, wo, bo))
        h = u * h + (1.0 - u) * c
        outs.append(h)
    out = jnp.stack(outs, axis=0)
    return jnp.transpose(out, (0, 1, 4, 2, 3))


if __name__ == "__main__":
    # small shapes: seq=8, batch=2, x-channels=4, hidden/out-channels=8, 16x16
    T, B, Cx, Ch, H, W = 8, 2, 4, 8, 16, 16
    Cin = Cx + Ch  # SNConv in_channels (operates on cat([x, h]))

    key = jax.random.PRNGKey(0)
    kx, kh0, kwr, kwu, kwo, kbr, kbu, kbo, ku1, ku2, ku3 = jax.random.split(key, 11)

    x = jax.random.normal(kx, (T, B, Cx, H, W), jnp.float32)
    h0 = jax.random.normal(kh0, (B, Ch, H, W), jnp.float32)

    def mk_w(k): return jax.random.normal(k, (3, 3, Cin, Ch), jnp.float32) * 0.1
    def mk_b(k): return jax.random.normal(k, (Ch,), jnp.float32) * 0.1

    # spectral normalization (SNConv) applied as a weight transform in JAX glue
    wr = spectral_normalize(mk_w(kwr), ku1)
    wu = spectral_normalize(mk_w(kwu), ku2)
    wo = spectral_normalize(mk_w(kwo), ku3)
    params = ((wr, mk_b(kbr)), (wu, mk_b(kbu)), (wo, mk_b(kbo)))

    fwd = jax.jit(convgru_forward)
    out = jax.block_until_ready(fwd(x, h0, params))
    assert out.shape == (T, B, Ch, H, W), out.shape

    ref = jax.block_until_ready(convgru_forward_ref(x, h0, params))
    np.testing.assert_allclose(np.asarray(out), np.asarray(ref),
                               rtol=2e-2, atol=2e-2)

    print("KERNEL_OK")
</pallas_src>

<mosaic_0001>
module attributes {stable_mosaic.version = 11 : i64} {
  func.func @kernel(%arg0: i32, %arg1: i32, %arg2: memref<1x1x18x18x4xf32, #tpu.memory_space<vmem>>, %arg3: memref<1x16x16x8xf32, #tpu.memory_space<vmem>>, %arg4: memref<3x3x4x24xf32, #tpu.memory_space<vmem>>, %arg5: memref<3x3x8x16xf32, #tpu.memory_space<vmem>>, %arg6: memref<3x3x8x8xf32, #tpu.memory_space<vmem>>, %arg7: memref<1x24xf32, #tpu.memory_space<vmem>>, %arg8: memref<1x1x16x16x8xf32, #tpu.memory_space<vmem>>, %arg9: memref<18x18x8xf32, #tpu.memory_space<vmem>>, %arg10: memref<18x18x8xf32, #tpu.memory_space<vmem>>) attributes {dimension_semantics = [#tpu.dimension_semantics<parallel>, #tpu.dimension_semantics<arbitrary>], iteration_bounds = array<i64: 2, 8>, scalar_prefetch = 0 : i64, scratch_operands = 2 : i64, tpu.core_type = #tpu.core_type<tc>, window_params = [{transform_indices = @transform_0, window_bounds = array<i64: 1, 1, 18, 18, 4>}, {transform_indices = @transform_1, window_bounds = array<i64: 1, 16, 16, 8>}, {pipeline_mode = #tpu.pipeline_mode<synchronous>, transform_indices = @transform_2, window_bounds = array<i64: 3, 3, 4, 24>}, {pipeline_mode = #tpu.pipeline_mode<synchronous>, transform_indices = @transform_3, window_bounds = array<i64: 3, 3, 8, 16>}, {pipeline_mode = #tpu.pipeline_mode<synchronous>, transform_indices = @transform_4, window_bounds = array<i64: 3, 3, 8, 8>}, {pipeline_mode = #tpu.pipeline_mode<synchronous>, transform_indices = @transform_5, window_bounds = array<i64: 1, 24>}, {transform_indices = @transform_6, window_bounds = array<i64: 1, 1, 16, 16, 8>}]} {
    %c0_i32 = arith.constant 0 : i32
    %0 = arith.cmpi eq, %arg1, %c0_i32 : i32
    %1 = arith.extui %0 : i1 to i32
    %c0_i32_0 = arith.constant 0 : i32
    %2 = arith.cmpi ne, %1, %c0_i32_0 : i32
    scf.if %2 {
      %cst_252 = arith.constant 0.000000e+00 : f32
      %177 = vector.broadcast %cst_252 : f32 to vector<18x18x8xf32>
      %c0_253 = arith.constant 0 : index
      %c0_254 = arith.constant 0 : index
      %c0_255 = arith.constant 0 : index
      %178 = vector.load %arg9[%c0_253, %c0_254, %c0_255] : memref<18x18x8xf32, #tpu.memory_space<vmem>>, vector<18x18x8xf32>
      tpu.vector_store %arg9[%c0_253, %c0_254, %c0_255], %177 {strides = array<i32>} : memref<18x18x8xf32, #tpu.memory_space<vmem>>, vector<18x18x8xf32>,
      %cst_256 = arith.constant 0.000000e+00 : f32
      %179 = vector.broadcast %cst_256 : f32 to vector<18x18x8xf32>
      %c0_257 = arith.constant 0 : index
      %c0_258 = arith.constant 0 : index
      %c0_259 = arith.constant 0 : index
      %180 = vector.load %arg10[%c0_257, %c0_258, %c0_259] : memref<18x18x8xf32, #tpu.memory_space<vmem>>, vector<18x18x8xf32>
      tpu.vector_store %arg10[%c0_257, %c0_258, %c0_259], %179 {strides = array<i32>} : memref<18x18x8xf32, #tpu.memory_space<vmem>>, vector<18x18x8xf32>,
      %c0_260 = arith.constant 0 : index
      %c0_261 = arith.constant 0 : index
      %c0_262 = arith.constant 0 : index
      %c0_263 = arith.constant 0 : index
      %181 = vector.load %arg3[%c0_260, %c0_261, %c0_262, %c0_263] : memref<1x16x16x8xf32, #tpu.memory_space<vmem>>, vector<1x16x16x8xf32>
      %182 = vector.shape_cast %181 : vector<1x16x16x8xf32> to vector<16x16x8xf32>
      %c1_264 = arith.constant 1 : index
      %c1_265 = arith.constant 1 : index
      %c0_266 = arith.constant 0 : index
      %183 = vector.load %arg9[%c1_264, %c1_265, %c0_266] : memref<18x18x8xf32, #tpu.memory_space<vmem>>, vector<16x16x8xf32>
      tpu.vector_store %arg9[%c1_264, %c1_265, %c0_266], %182 {strides = array<i32>} : memref<18x18x8xf32, #tpu.memory_space<vmem>>, vector<16x16x8xf32>,
    } else {
    }
    %c0 = arith.constant 0 : index
    %c0_1 = arith.constant 0 : index
    %3 = vector.load %arg7[%c0, %c0_1] : memref<1x24xf32, #tpu.memory_space<vmem>>, vector<1x24xf32>
    %4 = vector.shape_cast %3 : vector<1x24xf32> to vector<1x1x24xf32>
    %5 = vector.broadcast %4 : vector<1x1x24xf32> to vector<16x16x24xf32>
    %c0_2 = arith.constant 0 : index
    %c0_3 = arith.constant 0 : index
    %c0_4 = arith.constant 0 : index
    %c0_5 = arith.constant 0 : index
    %c0_6 = arith.constant 0 : index
    %6 = vector.load %arg2[%c0_2, %c0_3, %c0_4, %c0_5, %c0_6] : memref<1x1x18x18x4xf32, #tpu.memory_space<vmem>>, vector<1x1x16x16x4xf32>
    %7 = vector.shape_cast %6 : vector<1x1x16x16x4xf32> to vector<16x16x4xf32>
    %c0_7 = arith.constant 0 : index
    %c0_8 = arith.constant 0 : index
    %c0_9 = arith.constant 0 : index
    %c0_10 = arith.constant 0 : index
    %8 = vector.load %arg4[%c0_7, %c0_8, %c0_9, %c0_10] : memref<3x3x4x24xf32, #tpu.memory_space<vmem>>, vector<1x1x4x24xf32>
    %9 = vector.shape_cast %8 : vector<1x1x4x24xf32> to vector<4x24xf32>
    %cst = arith.constant dense<0.000000e+00> : vector<16x16x24xf32>
    %10 = tpu.matmul %7, %9, %cst {dimension_numbers = #tpu.dot_dimension_numbers<[2], [0], [0, 1], [1], [0, 0, 0, 1, 1, 1], [], []>} : vector<16x16x4xf32>, vector<4x24xf32>, vector<16x16x24xf32> -> vector<16x16x24xf32>
    %11 = arith.addf %5, %10 : vector<16x16x24xf32>
    %c0_11 = arith.constant 0 : index
    %c0_12 = arith.constant 0 : index
    %c0_13 = arith.constant 0 : index
    %c1 = arith.constant 1 : index
    %c0_14 = arith.constant 0 : index
    %12 = vector.load %arg2[%c0_11, %c0_12, %c0_13, %c1, %c0_14] : memref<1x1x18x18x4xf32, #tpu.memory_space<vmem>>, vector<1x1x16x16x4xf32>
    %13 = vector.shape_cast %12 : vector<1x1x16x16x4xf32> to vector<16x16x4xf32>
    %c0_15 = arith.constant 0 : index
    %c1_16 = arith.constant 1 : index
    %c0_17 = arith.constant 0 : index
    %c0_18 = arith.constant 0 : index
    %14 = vector.load %arg4[%c0_15, %c1_16, %c0_17, %c0_18] : memref<3x3x4x24xf32, #tpu.memory_space<vmem>>, vector<1x1x4x24xf32>
    %15 = vector.shape_cast %14 : vector<1x1x4x24xf32> to vector<4x24xf32>
    %cst_19 = arith.constant dense<0.000000e+00> : vector<16x16x24xf32>
    %16 = tpu.matmul %13, %15, %cst_19 {dimension_numbers = #tpu.dot_dimension_numbers<[2], [0], [0, 1], [1], [0, 0, 0, 1, 1, 1], [], []>} : vector<16x16x4xf32>, vector<4x24xf32>, vector<16x16x24xf32> -> vector<16x16x24xf32>
    %17 = arith.addf %11, %16 : vector<16x16x24xf32>
    %c0_20 = arith.constant 0 : index
    %c0_21 = arith.constant 0 : index
    %c0_22 = arith.constant 0 : index
    %c2 = arith.constant 2 : index
    %c0_23 = arith.constant 0 : index
    %18 = vector.load %arg2[%c0_20, %c0_21, %c0_22, %c2, %c0_23] : memref<1x1x18x18x4xf32, #tpu.memory_space<vmem>>, vector<1x1x16x16x4xf32>
    %19 = vector.shape_cast %18 : vector<1x1x16x16x4xf32> to vector<16x16x4xf32>
    %c0_24 = arith.constant 0 : index
    %c2_25 = arith.constant 2 : index
    %c0_26 = arith.constant 0 : index
    %c0_27 = arith.constant 0 : index
    %20 = vector.load %arg4[%c0_24, %c2_25, %c0_26, %c0_27] : memref<3x3x4x24xf32, #tpu.memory_space<vmem>>, vector<1x1x4x24xf32>
    %21 = vector.shape_cast %20 : vector<1x1x4x24xf32> to vector<4x24xf32>
    %cst_28 = arith.constant dense<0.000000e+00> : vector<16x16x24xf32>
    %22 = tpu.matmul %19, %21, %cst_28 {dimension_numbers = #tpu.dot_dimension_numbers<[2], [0], [0, 1], [1], [0, 0, 0, 1, 1, 1], [], []>} : vector<16x16x4xf32>, vector<4x24xf32>, vector<16x16x24xf32> -> vector<16x16x24xf32>
    %23 = arith.addf %17, %22 : vector<16x16x24xf32>
    %c0_29 = arith.constant 0 : index
    %c0_30 = arith.constant 0 : index
    %c1_31 = arith.constant 1 : index
    %c0_32 = arith.constant 0 : index
    %c0_33 = arith.constant 0 : index
    %24 = vector.load %arg2[%c0_29, %c0_30, %c1_31, %c0_32, %c0_33] : memref<1x1x18x18x4xf32, #tpu.memory_space<vmem>>, vector<1x1x16x16x4xf32>
    %25 = vector.shape_cast %24 : vector<1x1x16x16x4xf32> to vector<16x16x4xf32>
    %c1_34 = arith.constant 1 : index
    %c0_35 = arith.constant 0 : index
    %c0_36 = arith.constant 0 : index
    %c0_37 = arith.constant 0 : index
    %26 = vector.load %arg4[%c1_34, %c0_35, %c0_36, %c0_37] : memref<3x3x4x24xf32, #tpu.memory_space<vmem>>, vector<1x1x4x24xf32>
    %27 = vector.shape_cast %26 : vector<1x1x4x24xf32> to vector<4x24xf32>
    %cst_38 = arith.constant dense<0.000000e+00> : vector<16x16x24xf32>
    %28 = tpu.matmul %25, %27, %cst_38 {dimension_numbers = #tpu.dot_dimension_numbers<[2], [0], [0, 1], [1], [0, 0, 0, 1, 1, 1], [], []>} : vector<16x16x4xf32>, vector<4x24xf32>, vector<16x16x24xf32> -> vector<16x16x24xf32>
    %29 = arith.addf %23, %28 : vector<16x16x24xf32>
    %c0_39 = arith.constant 0 : index
    %c0_40 = arith.constant 0 : index
    %c1_41 = arith.constant 1 : index
    %c1_42 = arith.constant 1 : index
    %c0_43 = arith.constant 0 : index
    %30 = vector.load %arg2[%c0_39, %c0_40, %c1_41, %c1_42, %c0_43] : memref<1x1x18x18x4xf32, #tpu.memory_space<vmem>>, vector<1x1x16x16x4xf32>
    %31 = vector.shape_cast %30 : vector<1x1x16x16x4xf32> to vector<16x16x4xf32>
    %c1_44 = arith.constant 1 : index
    %c1_45 = arith.constant 1 : index
    %c0_46 = arith.constant 0 : index
    %c0_47 = arith.constant 0 : index
    %32 = vector.load %arg4[%c1_44, %c1_45, %c0_46, %c0_47] : memref<3x3x4x24xf32, #tpu.memory_space<vmem>>, vector<1x1x4x24xf32>
    %33 = vector.shape_cast %32 : vector<1x1x4x24xf32> to vector<4x24xf32>
    %cst_48 = arith.constant dense<0.000000e+00> : vector<16x16x24xf32>
    %34 = tpu.matmul %31, %33, %cst_48 {dimension_numbers = #tpu.dot_dimension_numbers<[2], [0], [0, 1], [1], [0, 0, 0, 1, 1, 1], [], []>} : vector<16x16x4xf32>, vector<4x24xf32>, vector<16x16x24xf32> -> vector<16x16x24xf32>
    %35 = arith.addf %29, %34 : vector<16x16x24xf32>
    %c0_49 = arith.constant 0 : index
    %c0_50 = arith.constant 0 : index
    %c1_51 = arith.constant 1 : index
    %c2_52 = arith.constant 2 : index
    %c0_53 = arith.constant 0 : index
    %36 = vector.load %arg2[%c0_49, %c0_50, %c1_51, %c2_52, %c0_53] : memref<1x1x18x18x4xf32, #tpu.memory_space<vmem>>, vector<1x1x16x16x4xf32>
    %37 = vector.shape_cast %36 : vector<1x1x16x16x4xf32> to vector<16x16x4xf32>
    %c1_54 = arith.constant 1 : index
    %c2_55 = arith.constant 2 : index
    %c0_56 = arith.constant 0 : index
    %c0_57 = arith.constant 0 : index
    %38 = vector.load %arg4[%c1_54, %c2_55, %c0_56, %c0_57] : memref<3x3x4x24xf32, #tpu.memory_space<vmem>>, vector<1x1x4x24xf32>
    %39 = vector.shape_cast %38 : vector<1x1x4x24xf32> to vector<4x24xf32>
    %cst_58 = arith.constant dense<0.000000e+00> : vector<16x16x24xf32>
    %40 = tpu.matmul %37, %39, %cst_58 {dimension_numbers = #tpu.dot_dimension_numbers<[2], [0], [0, 1], [1], [0, 0, 0, 1, 1, 1], [], []>} : vector<16x16x4xf32>, vector<4x24xf32>, vector<16x16x24xf32> -> vector<16x16x24xf32>
    %41 = arith.addf %35, %40 : vector<16x16x24xf32>
    %c0_59 = arith.constant 0 : index
    %c0_60 = arith.constant 0 : index
    %c2_61 = arith.constant 2 : index
    %c0_62 = arith.constant 0 : index
    %c0_63 = arith.constant 0 : index
    %42 = vector.load %arg2[%c0_59, %c0_60, %c2_61, %c0_62, %c0_63] : memref<1x1x18x18x4xf32, #tpu.memory_space<vmem>>, vector<1x1x16x16x4xf32>
    %43 = vector.shape_cast %42 : vector<1x1x16x16x4xf32> to vector<16x16x4xf32>
    %c2_64 = arith.constant 2 : index
    %c0_65 = arith.constant 0 : index
    %c0_66 = arith.constant 0 : index
    %c0_67 = arith.constant 0 : index
    %44 = vector.load %arg4[%c2_64, %c0_65, %c0_66, %c0_67] : memref<3x3x4x24xf32, #tpu.memory_space<vmem>>, vector<1x1x4x24xf32>
    %45 = vector.shape_cast %44 : vector<1x1x4x24xf32> to vector<4x24xf32>
    %cst_68 = arith.constant dense<0.000000e+00> : vector<16x16x24xf32>
    %46 = tpu.matmul %43, %45, %cst_68 {dimension_numbers = #tpu.dot_dimension_numbers<[2], [0], [0, 1], [1], [0, 0, 0, 1, 1, 1], [], []>} : vector<16x16x4xf32>, vector<4x24xf32>, vector<16x16x24xf32> -> vector<16x16x24xf32>
    %47 = arith.addf %41, %46 : vector<16x16x24xf32>
    %c0_69 = arith.constant 0 : index
    %c0_70 = arith.constant 0 : index
    %c2_71 = arith.constant 2 : index
    %c1_72 = arith.constant 1 : index
    %c0_73 = arith.constant 0 : index
    %48 = vector.load %arg2[%c0_69, %c0_70, %c2_71, %c1_72, %c0_73] : memref<1x1x18x18x4xf32, #tpu.memory_space<vmem>>, vector<1x1x16x16x4xf32>
    %49 = vector.shape_cast %48 : vector<1x1x16x16x4xf32> to vector<16x16x4xf32>
    %c2_74 = arith.constant 2 : index
    %c1_75 = arith.constant 1 : index
    %c0_76 = arith.constant 0 : index
    %c0_77 = arith.constant 0 : index
    %50 = vector.load %arg4[%c2_74, %c1_75, %c0_76, %c0_77] : memref<3x3x4x24xf32, #tpu.memory_space<vmem>>, vector<1x1x4x24xf32>
    %51 = vector.shape_cast %50 : vector<1x1x4x24xf32> to vector<4x24xf32>
    %cst_78 = arith.constant dense<0.000000e+00> : vector<16x16x24xf32>
    %52 = tpu.matmul %49, %51, %cst_78 {dimension_numbers = #tpu.dot_dimension_numbers<[2], [0], [0, 1], [1], [0, 0, 0, 1, 1, 1], [], []>} : vector<16x16x4xf32>, vector<4x24xf32>, vector<16x16x24xf32> -> vector<16x16x24xf32>
    %53 = arith.addf %47, %52 : vector<16x16x24xf32>
    %c0_79 = arith.constant 0 : index
    %c0_80 = arith.constant 0 : index
    %c2_81 = arith.constant 2 : index
    %c2_82 = arith.constant 2 : index
    %c0_83 = arith.constant 0 : index
    %54 = vector.load %arg2[%c0_79, %c0_80, %c2_81, %c2_82, %c0_83] : memref<1x1x18x18x4xf32, #tpu.memory_space<vmem>>, vector<1x1x16x16x4xf32>
    %55 = vector.shape_cast %54 : vector<1x1x16x16x4xf32> to vector<16x16x4xf32>
    %c2_84 = arith.constant 2 : index
    %c2_85 = arith.constant 2 : index
    %c0_86 = arith.constant 0 : index
    %c0_87 = arith.constant 0 : index
    %56 = vector.load %arg4[%c2_84, %c2_85, %c0_86, %c0_87] : memref<3x3x4x24xf32, #tpu.memory_space<vmem>>, vector<1x1x4x24xf32>
    %57 = vector.shape_cast %56 : vector<1x1x4x24xf32> to vector<4x24xf32>
    %cst_88 = arith.constant dense<0.000000e+00> : vector<16x16x24xf32>
    %58 = tpu.matmul %55, %57, %cst_88 {dimension_numbers = #tpu.dot_dimension_numbers<[2], [0], [0, 1], [1], [0, 0, 0, 1, 1, 1], [], []>} : vector<16x16x4xf32>, vector<4x24xf32>, vector<16x16x24xf32> -> vector<16x16x24xf32>
    %59 = arith.addf %53, %58 : vector<16x16x24xf32>
    %cst_89 = arith.constant 0.000000e+00 : f32
    %60 = vector.broadcast %cst_89 : f32 to vector<16x16x16xf32>
    %c0_90 = arith.constant 0 : index
    %c0_91 = arith.constant 0 : index
    %c0_92 = arith.constant 0 : index
    %61 = vector.load %arg9[%c0_90, %c0_91, %c0_92] : memref<18x18x8xf32, #tpu.memory_space<vmem>>, vector<16x16x8xf32>
    %c0_93 = arith.constant 0 : index
    %c0_94 = arith.constant 0 : index
    %c0_95 = arith.constant 0 : index
    %c0_96 = arith.constant 0 : index
    %62 = vector.load %arg5[%c0_93, %c0_94, %c0_95, %c0_96] : memref<3x3x8x16xf32, #tpu.memory_space<vmem>>, vector<1x1x8x16xf32>
    %63 = vector.shape_cast %62 : vector<1x1x8x16xf32> to vector<8x16xf32>
    %cst_97 = arith.constant dense<0.000000e+00> : vector<16x16x16xf32>
    %64 = tpu.matmul %61, %63, %cst_97 {dimension_numbers = #tpu.dot_dimension_numbers<[2], [0], [0, 1], [1], [0, 0, 0, 1, 1, 1], [], []>} : vector<16x16x8xf32>, vector<8x16xf32>, vector<16x16x16xf32> -> vector<16x16x16xf32>
    %65 = arith.addf %60, %64 : vector<16x16x16xf32>
    %c0_98 = arith.constant 0 : index
    %c1_99 = arith.constant 1 : index
    %c0_100 = arith.constant 0 : index
    %66 = vector.load %arg9[%c0_98, %c1_99, %c0_100] : memref<18x18x8xf32, #tpu.memory_space<vmem>>, vector<16x16x8xf32>
    %c0_101 = arith.constant 0 : index
    %c1_102 = arith.constant 1 : index
    %c0_103 = arith.constant 0 : index
    %c0_104 = arith.constant 0 : index
    %67 = vector.load %arg5[%c0_101, %c1_102, %c0_103, %c0_104] : memref<3x3x8x16xf32, #tpu.memory_space<vmem>>, vector<1x1x8x16xf32>
    %68 = vector.shape_cast %67 : vector<1x1x8x16xf32> to vector<8x16xf32>
    %cst_105 = arith.constant dense<0.000000e+00> : vector<16x16x16xf32>
    %69 = tpu.matmul %66, %68, %cst_105 {dimension_numbers = #tpu.dot_dimension_numbers<[2], [0], [0, 1], [1], [0, 0, 0, 1, 1, 1], [], []>} : vector<16x16x8xf32>, vector<8x16xf32>, vector<16x16x16xf32> -> vector<16x16x16xf32>
    %70 = arith.addf %65, %69 : vector<16x16x16xf32>
    %c0_106 = arith.constant 0 : index
    %c2_107 = arith.constant 2 : index
    %c0_108 = arith.constant 0 : index
    %71 = vector.load %arg9[%c0_106, %c2_107, %c0_108] : memref<18x18x8xf32, #tpu.memory_space<vmem>>, vector<16x16x8xf32>
    %c0_109 = arith.constant 0 : index
    %c2_110 = arith.constant 2 : index
    %c0_111 = arith.constant 0 : index
    %c0_112 = arith.constant 0 : index
    %72 = vector.load %arg5[%c0_109, %c2_110, %c0_111, %c0_112] : memref<3x3x8x16xf32, #tpu.memory_space<vmem>>, vector<1x1x8x16xf32>
    %73 = vector.shape_cast %72 : vector<1x1x8x16xf32> to vector<8x16xf32>
    %cst_113 = arith.constant dense<0.000000e+00> : vector<16x16x16xf32>
    %74 = tpu.matmul %71, %73, %cst_113 {dimension_numbers = #tpu.dot_dimension_numbers<[2], [0], [0, 1], [1], [0, 0, 0, 1, 1, 1], [], []>} : vector<16x16x8xf32>, vector<8x16xf32>, vector<16x16x16xf32> -> vector<16x16x16xf32>
    %75 = arith.addf %70, %74 : vector<16x16x16xf32>
    %c1_114 = arith.constant 1 : index
    %c0_115 = arith.constant 0 : index
    %c0_116 = arith.constant 0 : index
    %76 = vector.load %arg9[%c1_114, %c0_115, %c0_116] : memref<18x18x8xf32, #tpu.memory_space<vmem>>, vector<16x16x8xf32>
    %c1_117 = arith.constant 1 : index
    %c0_118 = arith.constant 0 : index
    %c0_119 = arith.constant 0 : index
    %c0_120 = arith.constant 0 : index
    %77 = vector.load %arg5[%c1_117, %c0_118, %c0_119, %c0_120] : memref<3x3x8x16xf32, #tpu.memory_space<vmem>>, vector<1x1x8x16xf32>
    %78 = vector.shape_cast %77 : vector<1x1x8x16xf32> to vector<8x16xf32>
    %cst_121 = arith.constant dense<0.000000e+00> : vector<16x16x16xf32>
    %79 = tpu.matmul %76, %78, %cst_121 {dimension_numbers = #tpu.dot_dimension_numbers<[2], [0], [0, 1], [1], [0, 0, 0, 1, 1, 1], [], []>} : vector<16x16x8xf32>, vector<8x16xf32>, vector<16x16x16xf32> -> vector<16x16x16xf32>
    %80 = arith.addf %75, %79 : vector<16x16x16xf32>
    %c1_122 = arith.constant 1 : index
    %c1_123 = arith.constant 1 : index
    %c0_124 = arith.constant 0 : index
    %81 = vector.load %arg9[%c1_122, %c1_123, %c0_124] : memref<18x18x8xf32, #tpu.memory_space<vmem>>, vector<16x16x8xf32>
    %c1_125 = arith.constant 1 : index
    %c1_126 = arith.constant 1 : index
    %c0_127 = arith.constant 0 : index
    %c0_128 = arith.constant 0 : index
    %82 = vector.load %arg5[%c1_125, %c1_126, %c0_127, %c0_128] : memref<3x3x8x16xf32, #tpu.memory_space<vmem>>, vector<1x1x8x16xf32>
    %83 = vector.shape_cast %82 : vector<1x1x8x16xf32> to vector<8x16xf32>
    %cst_129 = arith.constant dense<0.000000e+00> : vector<16x16x16xf32>
    %84 = tpu.matmul %81, %83, %cst_129 {dimension_numbers = #tpu.dot_dimension_numbers<[2], [0], [0, 1], [1], [0, 0, 0, 1, 1, 1], [], []>} : vector<16x16x8xf32>, vector<8x16xf32>, vector<16x16x16xf32> -> vector<16x16x16xf32>
    %85 = arith.addf %80, %84 : vector<16x16x16xf32>
    %c1_130 = arith.constant 1 : index
    %c2_131 = arith.constant 2 : index
    %c0_132 = arith.constant 0 : index
    %86 = vector.load %arg9[%c1_130, %c2_131, %c0_132] : memref<18x18x8xf32, #tpu.memory_space<vmem>>, vector<16x16x8xf32>
    %c1_133 = arith.constant 1 : index
    %c2_134 = arith.constant 2 : index
    %c0_135 = arith.constant 0 : index
    %c0_136 = arith.constant 0 : index
    %87 = vector.load %arg5[%c1_133, %c2_134, %c0_135, %c0_136] : memref<3x3x8x16xf32, #tpu.memory_space<vmem>>, vector<1x1x8x16xf32>
    %88 = vector.shape_cast %87 : vector<1x1x8x16xf32> to vector<8x16xf32>
    %cst_137 = arith.constant dense<0.000000e+00> : vector<16x16x16xf32>
    %89 = tpu.matmul %86, %88, %cst_137 {dimension_numbers = #tpu.dot_dimension_numbers<[2], [0], [0, 1], [1], [0, 0, 0, 1, 1, 1], [], []>} : vector<16x16x8xf32>, vector<8x16xf32>, vector<16x16x16xf32> -> vector<16x16x16xf32>
    %90 = arith.addf %85, %89 : vector<16x16x16xf32>
    %c2_138 = arith.constant 2 : index
    %c0_139 = arith.constant 0 : index
    %c0_140 = arith.constant 0 : index
    %91 = vector.load %arg9[%c2_138, %c0_139, %c0_140] : memref<18x18x8xf32, #tpu.memory_space<vmem>>, vector<16x16x8xf32>
    %c2_141 = arith.constant 2 : index
    %c0_142 = arith.constant 0 : index
    %c0_143 = arith.constant 0 : index
    %c0_144 = arith.constant 0 : index
    %92 = vector.load %arg5[%c2_141, %c0_142, %c0_143, %c0_144] : memref<3x3x8x16xf32, #tpu.memory_space<vmem>>, vector<1x1x8x16xf32>
    %93 = vector.shape_cast %92 : vector<1x1x8x16xf32> to vector<8x16xf32>
    %cst_145 = arith.constant dense<0.000000e+00> : vector<16x16x16xf32>
    %94 = tpu.matmul %91, %93, %cst_145 {dimension_numbers = #tpu.dot_dimension_numbers<[2], [0], [0, 1], [1], [0, 0, 0, 1, 1, 1], [], []>} : vector<16x16x8xf32>, vector<8x16xf32>, vector<16x16x16xf32> -> vector<16x16x16xf32>
    %95 = arith.addf %90, %94 : vector<16x16x16xf32>
    %c2_146 = arith.constant 2 : index
    %c1_147 = arith.constant 1 : index
    %c0_148 = arith.constant 0 : index
    %96 = vector.load %arg9[%c2_146, %c1_147, %c0_148] : memref<18x18x8xf32, #tpu.memory_space<vmem>>, vector<16x16x8xf32>
    %c2_149 = arith.constant 2 : index
    %c1_150 = arith.constant 1 : index
    %c0_151 = arith.constant 0 : index
    %c0_152 = arith.constant 0 : index
    %97 = vector.load %arg5[%c2_149, %c1_150, %c0_151, %c0_152] : memref<3x3x8x16xf32, #tpu.memory_space<vmem>>, vector<1x1x8x16xf32>
    %98 = vector.shape_cast %97 : vector<1x1x8x16xf32> to vector<8x16xf32>
    %cst_153 = arith.constant dense<0.000000e+00> : vector<16x16x16xf32>
    %99 = tpu.matmul %96, %98, %cst_153 {dimension_numbers = #tpu.dot_dimension_numbers<[2], [0], [0, 1], [1], [0, 0, 0, 1, 1, 1], [], []>} : vector<16x16x8xf32>, vector<8x16xf32>, vector<16x16x16xf32> -> vector<16x16x16xf32>
    %100 = arith.addf %95, %99 : vector<16x16x16xf32>
    %c2_154 = arith.constant 2 : index
    %c2_155 = arith.constant 2 : index
    %c0_156 = arith.constant 0 : index
    %101 = vector.load %arg9[%c2_154, %c2_155, %c0_156] : memref<18x18x8xf32, #tpu.memory_space<vmem>>, vector<16x16x8xf32>
    %c2_157 = arith.constant 2 : index
    %c2_158 = arith.constant 2 : index
    %c0_159 = arith.constant 0 : index
    %c0_160 = arith.constant 0 : index
    %102 = vector.load %arg5[%c2_157, %c2_158, %c0_159, %c0_160] : memref<3x3x8x16xf32, #tpu.memory_space<vmem>>, vector<1x1x8x16xf32>
    %103 = vector.shape_cast %102 : vector<1x1x8x16xf32> to vector<8x16xf32>
    %cst_161 = arith.constant dense<0.000000e+00> : vector<16x16x16xf32>
    %104 = tpu.matmul %101, %103, %cst_161 {dimension_numbers = #tpu.dot_dimension_numbers<[2], [0], [0, 1], [1], [0, 0, 0, 1, 1, 1], [], []>} : vector<16x16x8xf32>, vector<8x16xf32>, vector<16x16x16xf32> -> vector<16x16x16xf32>
    %105 = arith.addf %100, %104 : vector<16x16x16xf32>
    %c1_162 = arith.constant 1 : index
    %c1_163 = arith.constant 1 : index
    %c0_164 = arith.constant 0 : index
    %106 = vector.load %arg9[%c1_162, %c1_163, %c0_164] : memref<18x18x8xf32, #tpu.memory_space<vmem>>, vector<16x16x8xf32>
    %107 = vector.extract_strided_slice %59 {offsets = [0, 0, 0], sizes = [16, 16, 16], strides = [1, 1, 1]} : vector<16x16x24xf32> to vector<16x16x16xf32>
    %108 = arith.addf %107, %105 : vector<16x16x16xf32>
    %109 = arith.negf %108 : vector<16x16x16xf32>
    %110 = math.exp %109 : vector<16x16x16xf32>
    %cst_165 = arith.constant 1.000000e+00 : f32
    %111 = vector.broadcast %cst_165 : f32 to vector<16x16x16xf32>
    %112 = arith.addf %111, %110 : vector<16x16x16xf32>
    %113 = arith.divf %111, %112 : vector<16x16x16xf32>
    %114 = vector.extract_strided_slice %113 {offsets = [0, 0, 0], sizes = [16, 16, 8], strides = [1, 1, 1]} : vector<16x16x16xf32> to vector<16x16x8xf32>
    %115 = vector.extract_strided_slice %113 {offsets = [0, 0, 8], sizes = [16, 16, 8], strides = [1, 1, 1]} : vector<16x16x16xf32> to vector<16x16x8xf32>
    %116 = arith.mulf %114, %106 : vector<16x16x8xf32>
    %c1_166 = arith.constant 1 : index
    %c1_167 = arith.constant 1 : index
    %c0_168 = arith.constant 0 : index
    %117 = vector.load %arg10[%c1_166, %c1_167, %c0_168] : memref<18x18x8xf32, #tpu.memory_space<vmem>>, vector<16x16x8xf32>
    tpu.vector_store %arg10[%c1_166, %c1_167, %c0_168], %116 {strides = array<i32>} : memref<18x18x8xf32, #tpu.memory_space<vmem>>, vector<16x16x8xf32>,
    %cst_169 = arith.constant 0.000000e+00 : f32
    %118 = vector.broadcast %cst_169 : f32 to vector<16x16x8xf32>
    %c0_170 = arith.constant 0 : index
    %c0_171 = arith.constant 0 : index
    %c0_172 = arith.constant 0 : index
    %119 = vector.load %arg10[%c0_170, %c0_171, %c0_172] : memref<18x18x8xf32, #tpu.memory_space<vmem>>, vector<16x16x8xf32>
    %c0_173 = arith.constant 0 : index
    %c0_174 = arith.constant 0 : index
    %c0_175 = arith.constant 0 : index
    %c0_176 = arith.constant 0 : index
    %120 = vector.load %arg6[%c0_173, %c0_174, %c0_175, %c0_176] : memref<3x3x8x8xf32, #tpu.memory_space<vmem>>, vector<1x1x8x8xf32>
    %121 = vector.shape_cast %120 : vector<1x1x8x8xf32> to vector<8x8xf32>
    %cst_177 = arith.constant dense<0.000000e+00> : vector<16x16x8xf32>
    %122 = tpu.matmul %119, %121, %cst_177 {dimension_numbers = #tpu.dot_dimension_numbers<[2], [0], [0, 1], [1], [0, 0, 0, 1, 1, 1], [], []>} : vector<16x16x8xf32>, vector<8x8xf32>, vector<16x16x8xf32> -> vector<16x16x8xf32>
    %123 = arith.addf %118, %122 : vector<16x16x8xf32>
    %c0_178 = arith.constant 0 : index
    %c1_179 = arith.constant 1 : index
    %c0_180 = arith.constant 0 : index
    %124 = vector.load %arg10[%c0_178, %c1_179, %c0_180] : memref<18x18x8xf32, #tpu.memory_space<vmem>>, vector<16x16x8xf32>
    %c0_181 = arith.constant 0 : index
    %c1_182 = arith.constant 1 : index
    %c0_183 = arith.constant 0 : index
    %c0_184 = arith.constant 0 : index
    %125 = vector.load %arg6[%c0_181, %c1_182, %c0_183, %c0_184] : memref<3x3x8x8xf32, #tpu.memory_space<vmem>>, vector<1x1x8x8xf32>
    %126 = vector.shape_cast %125 : vector<1x1x8x8xf32> to vector<8x8xf32>
    %cst_185 = arith.constant dense<0.000000e+00> : vector<16x16x8xf32>
    %127 = tpu.matmul %124, %126, %cst_185 {dimension_numbers = #tpu.dot_dimension_numbers<[2], [0], [0, 1], [1], [0, 0, 0, 1, 1, 1], [], []>} : vector<16x16x8xf32>, vector<8x8xf32>, vector<16x16x8xf32> -> vector<16x16x8xf32>
    %128 = arith.addf %123, %127 : vector<16x16x8xf32>
    %c0_186 = arith.constant 0 : index
    %c2_187 = arith.constant 2 : index
    %c0_188 = arith.constant 0 : index
    %129 = vector.load %arg10[%c0_186, %c2_187, %c0_188] : memref<18x18x8xf32, #tpu.memory_space<vmem>>, vector<16x16x8xf32>
    %c0_189 = arith.constant 0 : index
    %c2_190 = arith.constant 2 : index
    %c0_191 = arith.constant 0 : index
    %c0_192 = arith.constant 0 : index
    %130 = vector.load %arg6[%c0_189, %c2_190, %c0_191, %c0_192] : memref<3x3x8x8xf32, #tpu.memory_space<vmem>>, vector<1x1x8x8xf32>
    %131 = vector.shape_cast %130 : vector<1x1x8x8xf32> to vector<8x8xf32>
    %cst_193 = arith.constant dense<0.000000e+00> : vector<16x16x8xf32>
    %132 = tpu.matmul %129, %131, %cst_193 {dimension_numbers = #tpu.dot_dimension_numbers<[2], [0], [0, 1], [1], [0, 0, 0, 1, 1, 1], [], []>} : vector<16x16x8xf32>, vector<8x8xf32>, vector<16x16x8xf32> -> vector<16x16x8xf32>
    %133 = arith.addf %128, %132 : vector<16x16x8xf32>
    %c1_194 = arith.constant 1 : index
    %c0_195 = arith.constant 0 : index
    %c0_196 = arith.constant 0 : index
    %134 = vector.load %arg10[%c1_194, %c0_195, %c0_196] : memref<18x18x8xf32, #tpu.memory_space<vmem>>, vector<16x16x8xf32>
    %c1_197 = arith.constant 1 : index
    %c0_198 = arith.constant 0 : index
    %c0_199 = arith.constant 0 : index
    %c0_200 = arith.constant 0 : index
    %135 = vector.load %arg6[%c1_197, %c0_198, %c0_199, %c0_200] : memref<3x3x8x8xf32, #tpu.memory_space<vmem>>, vector<1x1x8x8xf32>
    %136 = vector.shape_cast %135 : vector<1x1x8x8xf32> to vector<8x8xf32>
    %cst_201 = arith.constant dense<0.000000e+00> : vector<16x16x8xf32>
    %137 = tpu.matmul %134, %136, %cst_201 {dimension_numbers = #tpu.dot_dimension_numbers<[2], [0], [0, 1], [1], [0, 0, 0, 1, 1, 1], [], []>} : vector<16x16x8xf32>, vector<8x8xf32>, vector<16x16x8xf32> -> vector<16x16x8xf32>
    %138 = arith.addf %133, %137 : vector<16x16x8xf32>
    %c1_202 = arith.constant 1 : index
    %c1_203 = arith.constant 1 : index
    %c0_204 = arith.constant 0 : index
    %139 = vector.load %arg10[%c1_202, %c1_203, %c0_204] : memref<18x18x8xf32, #tpu.memory_space<vmem>>, vector<16x16x8xf32>
    %c1_205 = arith.constant 1 : index
    %c1_206 = arith.constant 1 : index
    %c0_207 = arith.constant 0 : index
    %c0_208 = arith.constant 0 : index
    %140 = vector.load %arg6[%c1_205, %c1_206, %c0_207, %c0_208] : memref<3x3x8x8xf32, #tpu.memory_space<vmem>>, vector<1x1x8x8xf32>
    %141 = vector.shape_cast %140 : vector<1x1x8x8xf32> to vector<8x8xf32>
    %cst_209 = arith.constant dense<0.000000e+00> : vector<16x16x8xf32>
    %142 = tpu.matmul %139, %141, %cst_209 {dimension_numbers = #tpu.dot_dimension_numbers<[2], [0], [0, 1], [1], [0, 0, 0, 1, 1, 1], [], []>} : vector<16x16x8xf32>, vector<8x8xf32>, vector<16x16x8xf32> -> vector<16x16x8xf32>
    %143 = arith.addf %138, %142 : vector<16x16x8xf32>
    %c1_210 = arith.constant 1 : index
    %c2_211 = arith.constant 2 : index
    %c0_212 = arith.constant 0 : index
    %144 = vector.load %arg10[%c1_210, %c2_211, %c0_212] : memref<18x18x8xf32, #tpu.memory_space<vmem>>, vector<16x16x8xf32>
    %c1_213 = arith.constant 1 : index
    %c2_214 = arith.constant 2 : index
    %c0_215 = arith.constant 0 : index
    %c0_216 = arith.constant 0 : index
    %145 = vector.load %arg6[%c1_213, %c2_214, %c0_215, %c0_216] : memref<3x3x8x8xf32, #tpu.memory_space<vmem>>, vector<1x1x8x8xf32>
    %146 = vector.shape_cast %145 : vector<1x1x8x8xf32> to vector<8x8xf32>
    %cst_217 = arith.constant dense<0.000000e+00> : vector<16x16x8xf32>
    %147 = tpu.matmul %144, %146, %cst_217 {dimension_numbers = #tpu.dot_dimension_numbers<[2], [0], [0, 1], [1], [0, 0, 0, 1, 1, 1], [], []>} : vector<16x16x8xf32>, vector<8x8xf32>, vector<16x16x8xf32> -> vector<16x16x8xf32>
    %148 = arith.addf %143, %147 : vector<16x16x8xf32>
    %c2_218 = arith.constant 2 : index
    %c0_219 = arith.constant 0 : index
    %c0_220 = arith.constant 0 : index
    %149 = vector.load %arg10[%c2_218, %c0_219, %c0_220] : memref<18x18x8xf32, #tpu.memory_space<vmem>>, vector<16x16x8xf32>
    %c2_221 = arith.constant 2 : index
    %c0_222 = arith.constant 0 : index
    %c0_223 = arith.constant 0 : index
    %c0_224 = arith.constant 0 : index
    %150 = vector.load %arg6[%c2_221, %c0_222, %c0_223, %c0_224] : memref<3x3x8x8xf32, #tpu.memory_space<vmem>>, vector<1x1x8x8xf32>
    %151 = vector.shape_cast %150 : vector<1x1x8x8xf32> to vector<8x8xf32>
    %cst_225 = arith.constant dense<0.000000e+00> : vector<16x16x8xf32>
    %152 = tpu.matmul %149, %151, %cst_225 {dimension_numbers = #tpu.dot_dimension_numbers<[2], [0], [0, 1], [1], [0, 0, 0, 1, 1, 1], [], []>} : vector<16x16x8xf32>, vector<8x8xf32>, vector<16x16x8xf32> -> vector<16x16x8xf32>
    %153 = arith.addf %148, %152 : vector<16x16x8xf32>
    %c2_226 = arith.constant 2 : index
    %c1_227 = arith.constant 1 : index
    %c0_228 = arith.constant 0 : index
    %154 = vector.load %arg10[%c2_226, %c1_227, %c0_228] : memref<18x18x8xf32, #tpu.memory_space<vmem>>, vector<16x16x8xf32>
    %c2_229 = arith.constant 2 : index
    %c1_230 = arith.constant 1 : index
    %c0_231 = arith.constant 0 : index
    %c0_232 = arith.constant 0 : index
    %155 = vector.load %arg6[%c2_229, %c1_230, %c0_231, %c0_232] : memref<3x3x8x8xf32, #tpu.memory_space<vmem>>, vector<1x1x8x8xf32>
    %156 = vector.shape_cast %155 : vector<1x1x8x8xf32> to vector<8x8xf32>
    %cst_233 = arith.constant dense<0.000000e+00> : vector<16x16x8xf32>
    %157 = tpu.matmul %154, %156, %cst_233 {dimension_numbers = #tpu.dot_dimension_numbers<[2], [0], [0, 1], [1], [0, 0, 0, 1, 1, 1], [], []>} : vector<16x16x8xf32>, vector<8x8xf32>, vector<16x16x8xf32> -> vector<16x16x8xf32>
    %158 = arith.addf %153, %157 : vector<16x16x8xf32>
    %c2_234 = arith.constant 2 : index
    %c2_235 = arith.constant 2 : index
    %c0_236 = arith.constant 0 : index
    %159 = vector.load %arg10[%c2_234, %c2_235, %c0_236] : memref<18x18x8xf32, #tpu.memory_space<vmem>>, vector<16x16x8xf32>
    %c2_237 = arith.constant 2 : index
    %c2_238 = arith.constant 2 : index
    %c0_239 = arith.constant 0 : index
    %c0_240 = arith.constant 0 : index
    %160 = vector.load %arg6[%c2_237, %c2_238, %c0_239, %c0_240] : memref<3x3x8x8xf32, #tpu.memory_space<vmem>>, vector<1x1x8x8xf32>
    %161 = vector.shape_cast %160 : vector<1x1x8x8xf32> to vector<8x8xf32>
    %cst_241 = arith.constant dense<0.000000e+00> : vector<16x16x8xf32>
    %162 = tpu.matmul %159, %161, %cst_241 {dimension_numbers = #tpu.dot_dimension_numbers<[2], [0], [0, 1], [1], [0, 0, 0, 1, 1, 1], [], []>} : vector<16x16x8xf32>, vector<8x8xf32>, vector<16x16x8xf32> -> vector<16x16x8xf32>
    %163 = arith.addf %158, %162 : vector<16x16x8xf32>
    %164 = vector.extract_strided_slice %59 {offsets = [0, 0, 16], sizes = [16, 16, 8], strides = [1, 1, 1]} : vector<16x16x24xf32> to vector<16x16x8xf32>
    %165 = arith.addf %164, %163 : vector<16x16x8xf32>
    %cst_242 = arith.constant 0.000000e+00 : f32
    %166 = vector.broadcast %cst_242 : f32 to vector<16x16x8xf32>
    %167 = arith.maximumf %165, %166 : vector<16x16x8xf32>
    %168 = arith.mulf %115, %106 : vector<16x16x8xf32>
    %cst_243 = arith.constant 1.000000e+00 : f32
    %169 = vector.broadcast %cst_243 : f32 to vector<16x16x8xf32>
    %170 = arith.subf %169, %115 : vector<16x16x8xf32>
    %171 = arith.mulf %170, %167 : vector<16x16x8xf32>
    %172 = arith.addf %168, %171 : vector<16x16x8xf32>
    %c1_244 = arith.constant 1 : index
    %c1_245 = arith.constant 1 : index
    %c0_246 = arith.constant 0 : index
    %173 = vector.load %arg9[%c1_244, %c1_245, %c0_246] : memref<18x18x8xf32, #tpu.memory_space<vmem>>, vector<16x16x8xf32>
    tpu.vector_store %arg9[%c1_244, %c1_245, %c0_246], %172 {strides = array<i32>} : memref<18x18x8xf32, #tpu.memory_space<vmem>>, vector<16x16x8xf32>,
    %c0_247 = arith.constant 0 : index
    %c0_248 = arith.constant 0 : index
    %c0_249 = arith.constant 0 : index
    %c0_250 = arith.constant 0 : index
    %c0_251 = arith.constant 0 : index
    %174 = vector.load %arg8[%c0_247, %c0_248, %c0_249, %c0_250, %c0_251] : memref<1x1x16x16x8xf32, #tpu.memory_space<vmem>>, vector<1x1x16x16x8xf32>
    %175 = vector.shape_cast %174 : vector<1x1x16x16x8xf32> to vector<16x16x8xf32>
    %176 = vector.shape_cast %172 : vector<16x16x8xf32> to vector<1x1x16x16x8xf32>
    tpu.vector_store %arg8[%c0_247, %c0_248, %c0_249, %c0_250, %c0_251], %176 {strides = array<i32>} : memref<1x1x16x16x8xf32, #tpu.memory_space<vmem>>, vector<1x1x16x16x8xf32>,
    return
  }
  func.func @transform_0(%arg0: i32, %arg1: i32) -> (i32, i32, i32, i32, i32) {
    %c0_i32 = arith.constant 0 : i32
    %c0_i32_0 = arith.constant 0 : i32
    %c0_i32_1 = arith.constant 0 : i32
    %c0_i32_2 = arith.constant 0 : i32
    return %arg1, %arg0, %c0_i32, %c0_i32_0, %c0_i32_1 : i32, i32, i32, i32, i32
  }
  func.func @transform_1(%arg0: i32, %arg1: i32) -> (i32, i32, i32, i32) {
    %c0_i32 = arith.constant 0 : i32
    %c0_i32_0 = arith.constant 0 : i32
    %c0_i32_1 = arith.constant 0 : i32
    %c0_i32_2 = arith.constant 0 : i32
    return %arg0, %c0_i32, %c0_i32_0, %c0_i32_1 : i32, i32, i32, i32
  }
  func.func @transform_2(%arg0: i32, %arg1: i32) -> (i32, i32, i32, i32) {
    %c0_i32 = arith.constant 0 : i32
    %c0_i32_0 = arith.constant 0 : i32
    %c0_i32_1 = arith.constant 0 : i32
    %c0_i32_2 = arith.constant 0 : i32
    %c0_i32_3 = arith.constant 0 : i32
    return %c0_i32, %c0_i32_0, %c0_i32_1, %c0_i32_2 : i32, i32, i32, i32
  }
  func.func @transform_3(%arg0: i32, %arg1: i32) -> (i32, i32, i32, i32) {
    %c0_i32 = arith.constant 0 : i32
    %c0_i32_0 = arith.constant 0 : i32
    %c0_i32_1 = arith.constant 0 : i32
    %c0_i32_2 = arith.constant 0 : i32
    %c0_i32_3 = arith.constant 0 : i32
    return %c0_i32, %c0_i32_0, %c0_i32_1, %c0_i32_2 : i32, i32, i32, i32
  }
  func.func @transform_4(%arg0: i32, %arg1: i32) -> (i32, i32, i32, i32) {
    %c0_i32 = arith.constant 0 : i32
    %c0_i32_0 = arith.constant 0 : i32
    %c0_i32_1 = arith.constant 0 : i32
    %c0_i32_2 = arith.constant 0 : i32
    %c0_i32_3 = arith.constant 0 : i32
    return %c0_i32, %c0_i32_0, %c0_i32_1, %c0_i32_2 : i32, i32, i32, i32
  }
  func.func @transform_5(%arg0: i32, %arg1: i32) -> (i32, i32) {
    %c0_i32 = arith.constant 0 : i32
    %c0_i32_0 = arith.constant 0 : i32
    %c0_i32_1 = arith.constant 0 : i32
    return %c0_i32, %c0_i32_0 : i32, i32
  }
  func.func @transform_6(%arg0: i32, %arg1: i32) -> (i32, i32, i32, i32, i32) {
    %c0_i32 = arith.constant 0 : i32
    %c0_i32_0 = arith.constant 0 : i32
    %c0_i32_1 = arith.constant 0 : i32
    %c0_i32_2 = arith.constant 0 : i32
    return %arg1, %arg0, %c0_i32, %c0_i32_0, %c0_i32_1 : i32, i32, i32, i32, i32
  }
}

</mosaic_0001>

<llo_original>
// kernel: convgru_forward.1
$region0: #{convgru_forward.1}
  #allocation0 [shape = 'u32[]', space=smem, size = 0x4, offset = 0x4, fixed_abs, tag = 'smem constant byte address 0x4 - core index']
  #allocation1 [shape = 'u32[144,128]{1,0:T(1,128)}', space=vmem, size = 0x12000, scoped, tag = 'internal scratch']
  #allocation2 [shape = 'f32[18,18,8]{2,1,0:T(8,128)}', space=vmem, size = 0x36000, scoped, tag = 'scratch operand']
  #allocation3 [shape = 'f32[18,18,8]{2,1,0:T(8,128)}', space=vmem, size = 0x36000, scoped, tag = 'scratch operand']
  %s0 = inlined_call_operand.vmem [shape: f32[8,2,18,18,4], index: 0, kind: input, shape index: {}]
  %s1 = inlined_call_operand.vmem [shape: f32[2,16,16,8], index: 1, kind: input, shape index: {}]
  %s2 = inlined_call_operand.vmem [shape: f32[3,3,4,24], index: 2, kind: input, shape index: {}]
  %s3 = inlined_call_operand.vmem [shape: f32[3,3,8,16], index: 3, kind: input, shape index: {}]
  %s4 = inlined_call_operand.vmem [shape: f32[3,3,8,8], index: 4, kind: input, shape index: {}]
  %s5 = inlined_call_operand.vmem [shape: f32[1,24], index: 5, kind: input, shape index: {}]
  %s6 = inlined_call_operand.vmem [shape: f32[8,2,16,16,8], index: 6, kind: output, shape index: {}]
  %s7 = sld [smem:[#allocation0]]
  $region61: #{convgru_forward.1} parent=0
    _
  %s9 = ssub.s32 1, %s7
  %s10 = scalar_select 0, %s9, %s7
  loop: start=0, step=1, limit=18
  $region2: #{convgru_forward.1} parent=0 // loop_pre_header
    _
  $region3: #{convgru_forward.1} parent=0 // loop_header
    %s12 = sphi 0, %s16
    %p13 = scmp.ge.s32.totalorder %s12, 18
    %s19 = sphi 0, %s31
    %s20 = sphi 0, %s27
    %s21 = sphi 0, %s19
    %s22 = sphi 0, %s20
    %s23 = sphi 0, %s21
    %s24 = sphi 0, %s22
    %s36 = sphi 0, %s38
    %s39 = sphi 0, %s36
    %s40 = sphi 0, %s39
    %s56 = sphi 0, %s40
    %s62 = sphi 0, %s64
    %s65 = sphi 0, %s62
    %s66 = sphi 0, %s65
    %s82 = sphi 0, %s66
    %s86 = sphi 0, %s86
    %s88 = sphi 0, %s86
    %s89 = sphi 0, %s88
    %s103 = sphi 0, %s89
    %s107 = sphi 0, %s107
    %s109 = sphi 0, %s107
    %s110 = sphi 0, %s109
    %s124 = sphi 0, %s110
    %s128 = sphi 0, %s128
    %s130 = sphi 0, %s128
    %s131 = sphi 0, %s130
    %s145 = sphi 0, %s131
    %s149 = sphi 0, %s149
    %s151 = sphi 0, %s149
    %s152 = sphi 0, %s151
    %s166 = sphi 0, %s152
    %s174 = sphi 0, %s176
    %s177 = sphi 0, %s174
    %s178 = sphi 0, %s177
    %s194 = sphi 0, %s178
  $region4: #{convgru_forward.1} parent=0 // loop_header_branch
    %15 = sbr.rel (%p13) target = $region8
  $region5: #{convgru_forward.1} parent=0 // loop_body
    %s17 = ssub.s32 %s12, 1
    %s18 = ssub.s32 %s12, 2
    %s25 = sadd.s32 1, %s20
    %p26 = scmp.ge.s32.totalorder %s25, 8
    %s27 = scalar_select %p26, 0, %s25
    %s28 = sadd.s32 1, %s19
    %s29 = scalar_select %p26, %s28, %s19
    %p30 = scmp.ge.s32.totalorder %s29, 2
    %s31 = scalar_select %p30, 0, %s29
    %s32 = ssub.s32 %s20, %s27
    %s33 = ssub.s32 %s19, %s31
    %s34 = sor.u32 %s32, %s33
    %p35 = scmp.eq.s32.totalorder %s34, 0
    %s37 = sadd.s32 %s36, 1
    %s38 = scalar_select %p35, %s36, %s37
    %p41 = pneg %p35
    %p42 = scmp.eq.s32.totalorder %s12, 15
    %p43 = por %p41, %p42
    %p44 = scmp.ne.s32.totalorder %s36, %s39
    %p45 = scmp.eq.s32.totalorder %s12, 0
    %p46 = por %p44, %p45
    %p47 = scmp.ne.s32.totalorder %s36, %s39
    %p48 = scmp.eq.s32.totalorder %s17, 15
    %p49 = por %p47, %p48
    %p50 = scmp.ne.s32.totalorder %s39, %s40
    %p51 = scmp.eq.s32.totalorder %s17, 0
    %p52 = por %p50, %p51
    %p53 = scmp.ne.s32.totalorder %s39, %s40
    %p54 = scmp.eq.s32.totalorder %s18, 15
    %p55 = por %p53, %p54
    %p57 = scmp.ne.s32.totalorder %s40, %s56
    %p58 = scmp.eq.s32.totalorder %s18, 0
    %p59 = por %p57, %p58
    %s60 = ssub.s32 %s19, %s31
    %p61 = scmp.eq.s32.totalorder %s60, 0
    %s63 = sadd.s32 %s62, 1
    %s64 = scalar_select %p61, %s62, %s63
    %p67 = pneg %p61
    %p68 = scmp.eq.s32.totalorder %s12, 15
    %p69 = por %p67, %p68
    %p70 = scmp.ne.s32.totalorder %s62, %s65
    %p71 = scmp.eq.s32.totalorder %s12, 0
    %p72 = por %p70, %p71
    %p73 = scmp.ne.s32.totalorder %s62, %s65
    %p74 = scmp.eq.s32.totalorder %s17, 15
    %p75 = por %p73, %p74
    %p76 = scmp.ne.s32.totalorder %s65, %s66
    %p77 = scmp.eq.s32.totalorder %s17, 0
    %p78 = por %p76, %p77
    %p79 = scmp.ne.s32.totalorder %s65, %s66
    %p80 = scmp.eq.s32.totalorder %s18, 15
    %p81 = por %p79, %p80
    %p83 = scmp.ne.s32.totalorder %s66, %s82
    %p84 = scmp.eq.s32.totalorder %s18, 0
    %p85 = por %p83, %p84
    %s87 = sadd.s32 %s86, 1
    %p90 = scmp.eq.s32.totalorder %s12, 15
    %p91 = scmp.ne.s32.totalorder %s86, %s88
    %p92 = scmp.eq.s32.totalorder %s12, 0
    %p93 = por %p91, %p92
    %p94 = scmp.ne.s32.totalorder %s86, %s88
    %p95 = scmp.eq.s32.totalorder %s17, 15
    %p96 = por %p94, %p95
    %p97 = scmp.ne.s32.totalorder %s88, %s89
    %p98 = scmp.eq.s32.totalorder %s17, 0
    %p99 = por %p97, %p98
    %p100 = scmp.ne.s32.totalorder %s88, %s89
    %p101 = scmp.eq.s32.totalorder %s18, 15
    %p102 = por %p100, %p101
    %p104 = scmp.ne.s32.totalorder %s89, %s103
    %p105 = scmp.eq.s32.totalorder %s18, 0
    %p106 = por %p104, %p105
    %s108 = sadd.s32 %s107, 1
    %p111 = scmp.eq.s32.totalorder %s12, 15
    %p112 = scmp.ne.s32.totalorder %s107, %s109
    %p113 = scmp.eq.s32.totalorder %s12, 0
    %p114 = por %p112, %p113
    %p115 = scmp.ne.s32.totalorder %s107, %s109
    %p116 = scmp.eq.s32.totalorder %s17, 15
    %p117 = por %p115, %p116
    %p118 = scmp.ne.s32.totalorder %s109, %s110
    %p119 = scmp.eq.s32.totalorder %s17, 0
    %p120 = por %p118, %p119
    %p121 = scmp.ne.s32.totalorder %s109, %s110
    %p122 = scmp.eq.s32.totalorder %s18, 15
    %p123 = por %p121, %p122
    %p125 = scmp.ne.s32.totalorder %s110, %s124
    %p126 = scmp.eq.s32.totalorder %s18, 0
    %p127 = por %p125, %p126
    %s129 = sadd.s32 %s128, 1
    %p132 = scmp.eq.s32.totalorder %s12, 15
    %p133 = scmp.ne.s32.totalorder %s128, %s130
    %p134 = scmp.eq.s32.totalorder %s12, 0
    %p135 = por %p133, %p134
    %p136 = scmp.ne.s32.totalorder %s128, %s130
    %p137 = scmp.eq.s32.totalorder %s17, 15
    %p138 = por %p136, %p137
    %p139 = scmp.ne.s32.totalorder %s130, %s131
    %p140 = scmp.eq.s32.totalorder %s17, 0
    %p141 = por %p139, %p140
    %p142 = scmp.ne.s32.totalorder %s130, %s131
    %p143 = scmp.eq.s32.totalorder %s18, 15
    %p144 = por %p142, %p143
    %p146 = scmp.ne.s32.totalorder %s131, %s145
    %p147 = scmp.eq.s32.totalorder %s18, 0
    %p148 = por %p146, %p147
    %s150 = sadd.s32 %s149, 1
    %p153 = scmp.eq.s32.totalorder %s12, 15
    %p154 = scmp.ne.s32.totalorder %s149, %s151
    %p155 = scmp.eq.s32.totalorder %s12, 0
    %p156 = por %p154, %p155
    %p157 = scmp.ne.s32.totalorder %s149, %s151
    %p158 = scmp.eq.s32.totalorder %s17, 15
    %p159 = por %p157, %p158
    %p160 = scmp.ne.s32.totalorder %s151, %s152
    %p161 = scmp.eq.s32.totalorder %s17, 0
    %p162 = por %p160, %p161
    %p163 = scmp.ne.s32.totalorder %s151, %s152
    %p164 = scmp.eq.s32.totalorder %s18, 15
    %p165 = por %p163, %p164
    %p167 = scmp.ne.s32.totalorder %s152, %s166
    %p168 = scmp.eq.s32.totalorder %s18, 0
    %p169 = por %p167, %p168
    %s170 = ssub.s32 %s20, %s27
    %s171 = ssub.s32 %s19, %s31
    %s172 = sor.u32 %s170, %s171
    %p173 = scmp.eq.s32.totalorder %s172, 0
    %s175 = sadd.s32 %s174, 1
    %s176 = scalar_select %p173, %s174, %s175
    %p179 = pneg %p173
    %p180 = scmp.eq.s32.totalorder %s12, 15
    %p181 = por %p179, %p180
    %p182 = scmp.ne.s32.totalorder %s174, %s177
    %p183 = scmp.eq.s32.totalorder %s12, 0
    %p184 = por %p182, %p183
    %p185 = scmp.ne.s32.totalorder %s174, %s177
    %p186 = scmp.eq.s32.totalorder %s17, 15
    %p187 = por %p185, %p186
    %p188 = scmp.ne.s32.totalorder %s177, %s178
    %p189 = scmp.eq.s32.totalorder %s17, 0
    %p190 = por %p188, %p189
    %p191 = scmp.ne.s32.totalorder %s177, %s178
    %p192 = scmp.eq.s32.totalorder %s18, 15
    %p193 = por %p191, %p192
    %p195 = scmp.ne.s32.totalorder %s178, %s194
    %p196 = scmp.eq.s32.totalorder %s18, 0
    %p197 = por %p195, %p196
    %p198 = scmp.le.s32.totalorder 1, %s12
    %p199 = scmp.lt.s32.totalorder %s12, 17
    %p200 = pnand %p198, %p199
    %p201 = pneg %p200
    // Predicated region
    $region9: #{convgru_forward.1} parent=5 // pred_check
      _
    $region10: #{convgru_forward.1} parent=5 // pred_check_branch
      %203 = sbr.rel (%p200) target = $region12
    $region11: #{convgru_forward.1} parent=5 // pred_region
      %s204 = ssub.s32 %s12, 1
      // Predicated region
      $region13: #{convgru_forward.1} parent=11 // pred_check
        %p205 = pneg %p99
      $region14: #{convgru_forward.1} parent=11 // pred_check_branch
        %207 = sbr.rel (%p205) target = $region16
      $region15: #{convgru_forward.1} parent=11 // pred_region
        _
      $region16: #{convgru_forward.1} parent=11 // pred_fallthru
        _
      // Predicated region
      $region17: #{convgru_forward.1} parent=11 // pred_check
        %p208 = pneg %p120
      $region18: #{convgru_forward.1} parent=11 // pred_check_branch
        %210 = sbr.rel (%p208) target = $region20
      $region19: #{convgru_forward.1} parent=11 // pred_region
        _
      $region20: #{convgru_forward.1} parent=11 // pred_fallthru
        _
      // Predicated region
      $region21: #{convgru_forward.1} parent=11 // pred_check
        %p211 = pneg %p141
      $region22: #{convgru_forward.1} parent=11 // pred_check_branch
        %213 = sbr.rel (%p211) target = $region24
      $region23: #{convgru_forward.1} parent=11 // pred_region
        _
      $region24: #{convgru_forward.1} parent=11 // pred_fallthru
        _
      // Predicated region
      $region25: #{convgru_forward.1} parent=11 // pred_check
        %p214 = pneg %p162
      $region26: #{convgru_forward.1} parent=11 // pred_check_branch
        %216 = sbr.rel (%p214) target = $region28
      $region27: #{convgru_forward.1} parent=11 // pred_region
        _
      $region28: #{convgru_forward.1} parent=11 // pred_fallthru
        _
    $region12: #{convgru_forward.1} parent=5 // pred_fallthru
      _
    %p217 = scmp.lt.s32.totalorder %s12, 16
    // Predicated region
    $region29: #{convgru_forward.1} parent=5 // pred_check
      %p218 = pneg %p217
    $region30: #{convgru_forward.1} parent=5 // pred_check_branch
      %220 = sbr.rel (%p218) target = $region32
    $region31: #{convgru_forward.1} parent=5 // pred_region
      // Predicated region
      $region33: #{convgru_forward.1} parent=31 // pred_check
        %p221 = pneg %p46
      $region34: #{convgru_forward.1} parent=31 // pred_check_branch
        %223 = sbr.rel (%p221) target = $region36
      $region35: #{convgru_forward.1} parent=31 // pred_region
        %p224 = scmp.lt.s32.totalorder %s20, 7
        %s225 = scalar_select %p224, %s20, 7
        %p226 = scmp.lt.s32.totalorder %s19, 1
        %s227 = scalar_select %p226, %s19, 1
        %s228 = smul.addr %s227, 54
        %s229 = smul.addr %s225, 108
        %s230 = sadd.s32 %s228, %s229
        %s231 = smul.addr %s230, 8
        %s232 = scalar_lea.vmem %s0, %s231
      $region36: #{convgru_forward.1} parent=31 // pred_fallthru
        _
      // Predicated region
      $region37: #{convgru_forward.1} parent=31 // pred_check
        %p233 = pneg %p72
      $region38: #{convgru_forward.1} parent=31 // pred_check_branch
        %235 = sbr.rel (%p233) target = $region40
      $region39: #{convgru_forward.1} parent=31 // pred_region
        %p236 = scmp.lt.s32.totalorder %s19, 1
        %s237 = scalar_select %p236, %s19, 1
        %s238 = smul.addr %s237, 32
        %s239 = smul.addr %s238, 8
        %s240 = scalar_lea.vmem %s1, %s239
      $region40: #{convgru_forward.1} parent=31 // pred_fallthru
        _
    $region32: #{convgru_forward.1} parent=5 // pred_fallthru
      _
    %p241 = scmp.le.s32.totalorder 1, %s12
    %p242 = scmp.lt.s32.totalorder %s12, 17
    %p243 = pnand %p241, %p242
    %p244 = pneg %p243
    // Predicated region
    $region41: #{convgru_forward.1} parent=5 // pred_check
      _
    $region42: #{convgru_forward.1} parent=5 // pred_check_branch
      %246 = sbr.rel (%p243) target = $region44
    $region43: #{convgru_forward.1} parent=5 // pred_region
      %s247 = ssub.s32 %s12, 1
      %p248 = scmp.lt.s32.totalorder %s22, 7
      %s249 = scalar_select %p248, %s22, 7
      %p250 = scmp.lt.s32.totalorder %s21, 1
      %s251 = scalar_select %p250, %s21, 1
      %s252 = smul.addr %s251, 54
      %s253 = smul.addr %s249, 108
      %s254 = sadd.s32 %s252, %s253
      %s255 = smul.addr %s254, 8
      %s256 = scalar_lea.vmem %s0, %s255
      %p257 = pneg %p52
      %p258 = pneg %p49
      %p259 = scmp.lt.s32.totalorder %s21, 1
      %s260 = scalar_select %p259, %s21, 1
      %s261 = smul.addr %s260, 32
      %s262 = smul.addr %s261, 8
      %s263 = scalar_lea.vmem %s1, %s262
      %p264 = pneg %p78
      %p265 = pneg %p75
      %p266 = pneg %p99
      %p267 = pneg %p96
      %p268 = pneg %p120
      %p269 = pneg %p117
      %p270 = pneg %p141
      %p271 = pneg %p138
      %p272 = pneg %p162
      %p273 = pneg %p159
      %p274 = pneg %p190
      %p275 = pneg %p187
      %p276 = scmp.lt.s32.totalorder %s22, 7
      %s277 = scalar_select %p276, %s22, 7
      %p278 = scmp.lt.s32.totalorder %s21, 1
      %s279 = scalar_select %p278, %s21, 1
      %s280 = smul.addr %s279, 32
      %s281 = smul.addr %s277, 64
      %s282 = sadd.s32 %s280, %s281
      %s283 = smul.addr %s282, 8
      %s284 = scalar_lea.vmem %s6, %s283
      %p285 = scmp.lt.s32.totalorder %s22, 7
      %s286 = scalar_select %p285, %s22, 7
      %p287 = scmp.lt.s32.totalorder %s21, 1
      %s288 = scalar_select %p287, %s21, 1
      %s289 = smul.addr %s288, 54
      %s290 = smul.addr %s286, 108
      %s291 = sadd.s32 %s289, %s290
      %s292 = smul.addr %s291, 8
      %s293 = scalar_lea.vmem %s0, %s292
      %p294 = scmp.lt.s32.totalorder %s21, 1
      %s295 = scalar_select %p294, %s21, 1
      %s296 = smul.addr %s295, 32
      %s297 = smul.addr %s296, 8
      %s298 = scalar_lea.vmem %s1, %s297
      %p299 = scmp.lt.s32.totalorder %s22, 7
      %s300 = scalar_select %p299, %s22, 7
      %p301 = scmp.lt.s32.totalorder %s21, 1
      %s302 = scalar_select %p301, %s21, 1
      %s303 = smul.addr %s302, 32
      %s304 = smul.addr %s300, 64
      %s305 = sadd.s32 %s303, %s304
      %s306 = smul.addr %s305, 8
      %s307 = scalar_lea.vmem %s6, %s306
      %p308 = scmp.eq.s32.totalorder %s22, 0
      // Predicated region
      $region45: #{convgru_forward.1} parent=43 // pred_check
        %p309 = pneg %p308
      $region46: #{convgru_forward.1} parent=43 // pred_check_branch
        %311 = sbr.rel (%p309) target = $region48
      $region47: #{convgru_forward.1} parent=43 // pred_region
        %vm312 = vcmask 64512
        %313 = vst.msk [vmem:[#allocation2] sm:$0xff] %vm312, 0.0
        %314 = vst.msk [vmem:[#allocation2 + $0x8] sm:$0xff] %vm312, 0.0
        %vm315 = vcmask 58368
        %316 = vst.msk [vmem:[#allocation2 + $0x10] sm:$0x3] %vm315, 0.0
        %317 = vst.msk [vmem:[#allocation2 + $0x18] sm:$0xff] %vm312, 0.0
        %318 = vst.msk [vmem:[#allocation2 + $0x20] sm:$0xff] %vm312, 0.0
        %319 = vst.msk [vmem:[#allocation2 + $0x28] sm:$0x3] %vm315, 0.0
        %320 = vst.msk [vmem:[#allocation2 + $0x30] sm:$0xff] %vm312, 0.0
        %321 = vst.msk [vmem:[#allocation2 + $0x38] sm:$0xff] %vm312, 0.0
        %322 = vst.msk [vmem:[#allocation2 + $0x40] sm:$0x3] %vm315, 0.0
        %323 = vst.msk [vmem:[#allocation2 + $0x48] sm:$0xff] %vm312, 0.0
        %324 = vst.msk [vmem:[#allocation2 + $0x50] sm:$0xff] %vm312, 0.0
        %325 = vst.msk [vmem:[#allocation2 + $0x58] sm:$0x3] %vm315, 0.0
        %326 = vst.msk [vmem:[#allocation2 + $0x60] sm:$0xff] %vm312, 0.0
        %327 = vst.msk [vmem:[#allocation2 + $0x68] sm:$0xff] %vm312, 0.0
        %328 = vst.msk [vmem:[#allocation2 + $0x70] sm:$0x3] %vm315, 0.0
        %329 = vst.msk [vmem:[#allocation2 + $0x78] sm:$0xff] %vm312, 0.0
        %330 = vst.msk [vmem:[#allocation2 + $0x80] sm:$0xff] %vm312, 0.0
        %331 = vst.msk [vmem:[#allocation2 + $0x88] sm:$0x3] %vm315, 0.0
        %332 = vst.msk [vmem:[#allocation2 + $0x90] sm:$0xff] %vm312, 0.0
        %333 = vst.msk [vmem:[#allocation2 + $0x98] sm:$0xff] %vm312, 0.0
        %334 = vst.msk [vmem:[#allocation2 + $0xa0] sm:$0x3] %vm315, 0.0
        %335 = vst.msk [vmem:[#allocation2 + $0xa8] sm:$0xff] %vm312, 0.0
        %336 = vst.msk [vmem:[#allocation2 + $0xb0] sm:$0xff] %vm312, 0.0
        %337 = vst.msk [vmem:[#allocation2 + $0xb8] sm:$0x3] %vm315, 0.0
        %338 = vst.msk [vmem:[#allocation2 + $0xc0] sm:$0xff] %vm312, 0.0
        %339 = vst.msk [vmem:[#allocation2 + $0xc8] sm:$0xff] %vm312, 0.0
        %340 = vst.msk [vmem:[#allocation2 + $0xd0] sm:$0x3] %vm315, 0.0
        %341 = vst.msk [vmem:[#allocation2 + $0xd8] sm:$0xff] %vm312, 0.0
        %342 = vst.msk [vmem:[#allocation2 + $0xe0] sm:$0xff] %vm312, 0.0
        %343 = vst.msk [vmem:[#allocation2 + $0xe8] sm:$0x3] %vm315, 0.0
        %344 = vst.msk [vmem:[#allocation2 + $0xf0] sm:$0xff] %vm312, 0.0
        %345 = vst.msk [vmem:[#allocation2 + $0xf8] sm:$0xff] %vm312, 0.0
        %346 = vst.msk [vmem:[#allocation2 + $0x100] sm:$0x3] %vm315, 0.0
        %347 = vst.msk [vmem:[#allocation2 + $0x108] sm:$0xff] %vm312, 0.0
        %348 = vst.msk [vmem:[#allocation2 + $0x110] sm:$0xff] %vm312, 0.0
        %349 = vst.msk [vmem:[#allocation2 + $0x118] sm:$0x3] %vm315, 0.0
        %350 = vst.msk [vmem:[#allocation2 + $0x120] sm:$0xff] %vm312, 0.0
        %351 = vst.msk [vmem:[#allocation2 + $0x128] sm:$0xff] %vm312, 0.0
        %352 = vst.msk [vmem:[#allocation2 + $0x130] sm:$0x3] %vm315, 0.0
        %353 = vst.msk [vmem:[#allocation2 + $0x138] sm:$0xff] %vm312, 0.0
        %354 = vst.msk [vmem:[#allocation2 + $0x140] sm:$0xff] %vm312, 0.0
        %355 = vst.msk [vmem:[#allocation2 + $0x148] sm:$0x3] %vm315, 0.0
        %356 = vst.msk [vmem:[#allocation2 + $0x150] sm:$0xff] %vm312, 0.0
        %357 = vst.msk [vmem:[#allocation2 + $0x158] sm:$0xff] %vm312, 0.0
        %358 = vst.msk [vmem:[#allocation2 + $0x160] sm:$0x3] %vm315, 0.0
        %359 = vst.msk [vmem:[#allocation2 + $0x168] sm:$0xff] %vm312, 0.0
        %360 = vst.msk [vmem:[#allocation2 + $0x170] sm:$0xff] %vm312, 0.0
        %361 = vst.msk [vmem:[#allocation2 + $0x178] sm:$0x3] %vm315, 0.0
        %362 = vst.msk [vmem:[#allocation2 + $0x180] sm:$0xff] %vm312, 0.0
        %363 = vst.msk [vmem:[#allocation2 + $0x188] sm:$0xff] %vm312, 0.0
        %364 = vst.msk [vmem:[#allocation2 + $0x190] sm:$0x3] %vm315, 0.0
        %365 = vst.msk [vmem:[#allocation2 + $0x198] sm:$0xff] %vm312, 0.0
        %366 = vst.msk [vmem:[#allocation2 + $0x1a0] sm:$0xff] %vm312, 0.0
        %367 = vst.msk [vmem:[#allocation2 + $0x1a8] sm:$0x3] %vm315, 0.0
        %368 = vst.msk [vmem:[#allocation3] sm:$0xff] %vm312, 0.0
        %369 = vst.msk [vmem:[#allocation3 + $0x8] sm:$0xff] %vm312, 0.0
        %370 = vst.msk [vmem:[#allocation3 + $0x10] sm:$0x3] %vm315, 0.0
        %371 = vst.msk [vmem:[#allocation3 + $0x18] sm:$0xff] %vm312, 0.0
        %372 = vst.msk [vmem:[#allocation3 + $0x20] sm:$0xff] %vm312, 0.0
        %373 = vst.msk [vmem:[#allocation3 + $0x28] sm:$0x3] %vm315, 0.0
        %374 = vst.msk [vmem:[#allocation3 + $0x30] sm:$0xff] %vm312, 0.0
        %375 = vst.msk [vmem:[#allocation3 + $0x38] sm:$0xff] %vm312, 0.0
        %376 = vst.msk [vmem:[#allocation3 + $0x40] sm:$0x3] %vm315, 0.0
        %377 = vst.msk [vmem:[#allocation3 + $0x48] sm:$0xff] %vm312, 0.0
        %378 = vst.msk [vmem:[#allocation3 + $0x50] sm:$0xff] %vm312, 0.0
        %379 = vst.msk [vmem:[#allocation3 + $0x58] sm:$0x3] %vm315, 0.0
        %380 = vst.msk [vmem:[#allocation3 + $0x60] sm:$0xff] %vm312, 0.0
        %381 = vst.msk [vmem:[#allocation3 + $0x68] sm:$0xff] %vm312, 0.0
        %382 = vst.msk [vmem:[#allocation3 + $0x70] sm:$0x3] %vm315, 0.0
        %383 = vst.msk [vmem:[#allocation3 + $0x78] sm:$0xff] %vm312, 0.0
        %384 = vst.msk [vmem:[#allocation3 + $0x80] sm:$0xff] %vm312, 0.0
        %385 = vst.msk [vmem:[#allocation3 + $0x88] sm:$0x3] %vm315, 0.0
        %386 = vst.msk [vmem:[#allocation3 + $0x90] sm:$0xff] %vm312, 0.0
        %387 = vst.msk [vmem:[#allocation3 + $0x98] sm:$0xff] %vm312, 0.0
        %388 = vst.msk [vmem:[#allocation3 + $0xa0] sm:$0x3] %vm315, 0.0
        %389 = vst.msk [vmem:[#allocation3 + $0xa8] sm:$0xff] %vm312, 0.0
        %390 = vst.msk [vmem:[#allocation3 + $0xb0] sm:$0xff] %vm312, 0.0
        %391 = vst.msk [vmem:[#allocation3 + $0xb8] sm:$0x3] %vm315, 0.0
        %392 = vst.msk [vmem:[#allocation3 + $0xc0] sm:$0xff] %vm312, 0.0
        %393 = vst.msk [vmem:[#allocation3 + $0xc8] sm:$0xff] %vm312, 0.0
        %394 = vst.msk [vmem:[#allocation3 + $0xd0] sm:$0x3] %vm315, 0.0
        %395 = vst.msk [vmem:[#allocation3 + $0xd8] sm:$0xff] %vm312, 0.0
        %396 = vst.msk [vmem:[#allocation3 + $0xe0] sm:$0xff] %vm312, 0.0
        %397 = vst.msk [vmem:[#allocation3 + $0xe8] sm:$0x3] %vm315, 0.0
        %398 = vst.msk [vmem:[#allocation3 + $0xf0] sm:$0xff] %vm312, 0.0
        %399 = vst.msk [vmem:[#allocation3 + $0xf8] sm:$0xff] %vm312, 0.0
        %400 = vst.msk [vmem:[#allocation3 + $0x100] sm:$0x3] %vm315, 0.0
        %401 = vst.msk [vmem:[#allocation3 + $0x108] sm:$0xff] %vm312, 0.0
        %402 = vst.msk [vmem:[#allocation3 + $0x110] sm:$0xff] %vm312, 0.0
        %403 = vst.msk [vmem:[#allocation3 + $0x118] sm:$0x3] %vm315, 0.0
        %404 = vst.msk [vmem:[#allocation3 + $0x120] sm:$0xff] %vm312, 0.0
        %405 = vst.msk [vmem:[#allocation3 + $0x128] sm:$0xff] %vm312, 0.0
        %406 = vst.msk [vmem:[#allocation3 + $0x130] sm:$0x3] %vm315, 0.0
        %407 = vst.msk [vmem:[#allocation3 + $0x138] sm:$0xff] %vm312, 0.0
        %408 = vst.msk [vmem:[#allocation3 + $0x140] sm:$0xff] %vm312, 0.0
        %409 = vst.msk [vmem:[#allocation3 + $0x148] sm:$0x3] %vm315, 0.0
        %410 = vst.msk [vmem:[#allocation3 + $0x150] sm:$0xff] %vm312, 0.0
        %411 = vst.msk [vmem:[#allocation3 + $0x158] sm:$0xff] %vm312, 0.0
        %412 = vst.msk [vmem:[#allocation3 + $0x160] sm:$0x3] %vm315, 0.0
        %413 = vst.msk [vmem:[#allocation3 + $0x168] sm:$0xff] %vm312, 0.0
        %414 = vst.msk [vmem:[#allocation3 + $0x170] sm:$0xff] %vm312, 0.0
        %415 = vst.msk [vmem:[#allocation3 + $0x178] sm:$0x3] %vm315, 0.0
        %416 = vst.msk [vmem:[#allocation3 + $0x180] sm:$0xff] %vm312, 0.0
        %417 = vst.msk [vmem:[#allocation3 + $0x188] sm:$0xff] %vm312, 0.0
        %418 = vst.msk [vmem:[#allocation3 + $0x190] sm:$0x3] %vm315, 0.0
        %419 = vst.msk [vmem:[#allocation3 + $0x198] sm:$0xff] %vm312, 0.0
        %420 = vst.msk [vmem:[#allocation3 + $0x1a0] sm:$0xff] %vm312, 0.0
        %421 = vst.msk [vmem:[#allocation3 + $0x1a8] sm:$0x3] %vm315, 0.0
        %v422 = vld [vmem:[%s298] sm:$0xff]
        %v423 = vld [vmem:[%s298 + $0x8] sm:$0xff]
        %v424 = vld [vmem:[%s298 + $0x10] sm:$0xff]
        %v425 = vld [vmem:[%s298 + $0x18] sm:$0xff]
        %v426 = vld [vmem:[%s298 + $0x20] sm:$0xff]
        %v427 = vld [vmem:[%s298 + $0x28] sm:$0xff]
        %v428 = vld [vmem:[%s298 + $0x30] sm:$0xff]
        %v429 = vld [vmem:[%s298 + $0x38] sm:$0xff]
        %v430 = vld [vmem:[%s298 + $0x40] sm:$0xff]
        %v431 = vld [vmem:[%s298 + $0x48] sm:$0xff]
        %v432 = vld [vmem:[%s298 + $0x50] sm:$0xff]
        %v433 = vld [vmem:[%s298 + $0x58] sm:$0xff]
        %v434 = vld [vmem:[%s298 + $0x60] sm:$0xff]
        %v435 = vld [vmem:[%s298 + $0x68] sm:$0xff]
        %v436 = vld [vmem:[%s298 + $0x70] sm:$0xff]
        %v437 = vld [vmem:[%s298 + $0x78] sm:$0xff]
        %v438 = vld [vmem:[%s298 + $0x80] sm:$0xff]
        %v439 = vld [vmem:[%s298 + $0x88] sm:$0xff]
        %v440 = vld [vmem:[%s298 + $0x90] sm:$0xff]
        %v441 = vld [vmem:[%s298 + $0x98] sm:$0xff]
        %v442 = vld [vmem:[%s298 + $0xa0] sm:$0xff]
        %v443 = vld [vmem:[%s298 + $0xa8] sm:$0xff]
        %v444 = vld [vmem:[%s298 + $0xb0] sm:$0xff]
        %v445 = vld [vmem:[%s298 + $0xb8] sm:$0xff]
        %v446 = vld [vmem:[%s298 + $0xc0] sm:$0xff]
        %v447 = vld [vmem:[%s298 + $0xc8] sm:$0xff]
        %v448 = vld [vmem:[%s298 + $0xd0] sm:$0xff]
        %v449 = vld [vmem:[%s298 + $0xd8] sm:$0xff]
        %v450 = vld [vmem:[%s298 + $0xe0] sm:$0xff]
        %v451 = vld [vmem:[%s298 + $0xe8] sm:$0xff]
        %v452 = vld [vmem:[%s298 + $0xf0] sm:$0xff]
        %v453 = vld [vmem:[%s298 + $0xf8] sm:$0xff]
        %s454 = scalar_lea.vmem [#allocation2], 24
        %455 = vst.msk [vmem:[%s454 + $0x1] sm:$0xff] %vm312, %v422
        %456 = vst.msk [vmem:[%s454 + $0x9] sm:$0xff] %vm312, %v423
        %457 = vst.msk [vmem:[%s454 + $0x19] sm:$0xff] %vm312, %v424
        %458 = vst.msk [vmem:[%s454 + $0x21] sm:$0xff] %vm312, %v425
        %459 = vst.msk [vmem:[%s454 + $0x31] sm:$0xff] %vm312, %v426
        %460 = vst.msk [vmem:[%s454 + $0x39] sm:$0xff] %vm312, %v427
        %461 = vst.msk [vmem:[%s454 + $0x49] sm:$0xff] %vm312, %v428
        %462 = vst.msk [vmem:[%s454 + $0x51] sm:$0xff] %vm312, %v429
        %463 = vst.msk [vmem:[%s454 + $0x61] sm:$0xff] %vm312, %v430
        %464 = vst.msk [vmem:[%s454 + $0x69] sm:$0xff] %vm312, %v431
        %465 = vst.msk [vmem:[%s454 + $0x79] sm:$0xff] %vm312, %v432
        %466 = vst.msk [vmem:[%s454 + $0x81] sm:$0xff] %vm312, %v433
        %467 = vst.msk [vmem:[%s454 + $0x91] sm:$0xff] %vm312, %v434
        %468 = vst.msk [vmem:[%s454 + $0x99] sm:$0xff] %vm312, %v435
        %469 = vst.msk [vmem:[%s454 + $0xa9] sm:$0xff] %vm312, %v436
        %470 = vst.msk [vmem:[%s454 + $0xb1] sm:$0xff] %vm312, %v437
        %471 = vst.msk [vmem:[%s454 + $0xc1] sm:$0xff] %vm312, %v438
        %472 = vst.msk [vmem:[%s454 + $0xc9] sm:$0xff] %vm312, %v439
        %473 = vst.msk [vmem:[%s454 + $0xd9] sm:$0xff] %vm312, %v440
        %474 = vst.msk [vmem:[%s454 + $0xe1] sm:$0xff] %vm312, %v441
        %475 = vst.msk [vmem:[%s454 + $0xf1] sm:$0xff] %vm312, %v442
        %476 = vst.msk [vmem:[%s454 + $0xf9] sm:$0xff] %vm312, %v443
        %477 = vst.msk [vmem:[%s454 + $0x109] sm:$0xff] %vm312, %v444
        %478 = vst.msk [vmem:[%s454 + $0x111] sm:$0xff] %vm312, %v445
        %479 = vst.msk [vmem:[%s454 + $0x121] sm:$0xff] %vm312, %v446
        %480 = vst.msk [vmem:[%s454 + $0x129] sm:$0xff] %vm312, %v447
        %481 = vst.msk [vmem:[%s454 + $0x139] sm:$0xff] %vm312, %v448
        %482 = vst.msk [vmem:[%s454 + $0x141] sm:$0xff] %vm312, %v449
        %483 = vst.msk [vmem:[%s454 + $0x151] sm:$0xff] %vm312, %v450
        %484 = vst.msk [vmem:[%s454 + $0x159] sm:$0xff] %vm312, %v451
        %485 = vst.msk [vmem:[%s454 + $0x169] sm:$0xff] %vm312, %v452
        %486 = vst.msk [vmem:[%s454 + $0x171] sm:$0xff] %vm312, %v453
      $region48: #{convgru_forward.1} parent=43 // pred_fallthru
        _
      %v487 = vld [vmem:[%s5] sm:$0x1]
      %v489 = vlaneseq
      %v490 = vshrl.u32 %v489, 7
      %v491 = vsub.s32 0, %v490
      %v492 = vrot.slane %v487, %v491
      %v494 = vld [vmem:[%s293] sm:$0xff]
      %v495 = vld [vmem:[%s293 + $0x8] sm:$0xff]
      %v496 = vld [vmem:[%s293 + $0x18] sm:$0xff]
      %v497 = vld [vmem:[%s293 + $0x20] sm:$0xff]
      %v498 = vld [vmem:[%s293 + $0x30] sm:$0xff]
      %v499 = vld [vmem:[%s293 + $0x38] sm:$0xff]
      %v500 = vld [vmem:[%s293 + $0x48] sm:$0xff]
      %v501 = vld [vmem:[%s293 + $0x50] sm:$0xff]
      %v502 = vld [vmem:[%s293 + $0x60] sm:$0xff]
      %v503 = vld [vmem:[%s293 + $0x68] sm:$0xff]
      %v504 = vld [vmem:[%s293 + $0x78] sm:$0xff]
      %v505 = vld [vmem:[%s293 + $0x80] sm:$0xff]
      %v506 = vld [vmem:[%s293 + $0x90] sm:$0xff]
      %v507 = vld [vmem:[%s293 + $0x98] sm:$0xff]
      %v508 = vld [vmem:[%s293 + $0xa8] sm:$0xff]
      %v509 = vld [vmem:[%s293 + $0xb0] sm:$0xff]
      %v510 = vld [vmem:[%s293 + $0xc0] sm:$0xff]
      %v511 = vld [vmem:[%s293 + $0xc8] sm:$0xff]
      %v512 = vld [vmem:[%s293 + $0xd8] sm:$0xff]
      %v513 = vld [vmem:[%s293 + $0xe0] sm:$0xff]
      %v514 = vld [vmem:[%s293 + $0xf0] sm:$0xff]
      %v515 = vld [vmem:[%s293 + $0xf8] sm:$0xff]
      %v516 = vld [vmem:[%s293 + $0x108] sm:$0xff]
      %v517 = vld [vmem:[%s293 + $0x110] sm:$0xff]
      %v518 = vld [vmem:[%s293 + $0x120] sm:$0xff]
      %v519 = vld [vmem:[%s293 + $0x128] sm:$0xff]
      %v520 = vld [vmem:[%s293 + $0x138] sm:$0xff]
      %v521 = vld [vmem:[%s293 + $0x140] sm:$0xff]
      %v522 = vld [vmem:[%s293 + $0x150] sm:$0xff]
      %v523 = vld [vmem:[%s293 + $0x158] sm:$0xff]
      %v524 = vld [vmem:[%s293 + $0x168] sm:$0xff]
      %v525 = vld [vmem:[%s293 + $0x170] sm:$0xff]
      %v526 = vld [vmem:[%s2] sm:$0xf]
      %vm527 = vcmask 31744
      %v529 = vsel %vm527, %v494, 0
      %v532 = vsel %vm527, %v495, 0
      %v535 = vsel %vm527, %v496, 0
      %v538 = vsel %vm527, %v497, 0
      %v541 = vsel %vm527, %v498, 0
      %v544 = vsel %vm527, %v499, 0
      %v547 = vsel %vm527, %v500, 0
      %v550 = vsel %vm527, %v501, 0
      %v553 = vsel %vm527, %v502, 0
      %v556 = vsel %vm527, %v503, 0
      %v559 = vsel %vm527, %v504, 0
      %v562 = vsel %vm527, %v505, 0
      %v565 = vsel %vm527, %v506, 0
      %v568 = vsel %vm527, %v507, 0
      %v571 = vsel %vm527, %v508, 0
      %v574 = vsel %vm527, %v509, 0
      %v577 = vsel %vm527, %v510, 0
      %v580 = vsel %vm527, %v511, 0
      %v583 = vsel %vm527, %v512, 0
      %v586 = vsel %vm527, %v513, 0
      %v589 = vsel %vm527, %v514, 0
      %v592 = vsel %vm527, %v515, 0
      %v595 = vsel %vm527, %v516, 0
      %v598 = vsel %vm527, %v517, 0
      %v601 = vsel %vm527, %v518, 0
      %v604 = vsel %vm527, %v519, 0
      %v607 = vsel %vm527, %v520, 0
      %v610 = vsel %vm527, %v521, 0
      %v613 = vsel %vm527, %v522, 0
      %v616 = vsel %vm527, %v523, 0
      %v619 = vsel %vm527, %v524, 0
      %v622 = vsel %vm527, %v525, 0
      %vm624 = vcmask 1043456
      %v626 = vsel %vm624, %v526, 0
      %628 = vmatprep.subr.mxu0 0.0
      %629 = vmatpush1.msra.mxu0 %v626
      %630 = vmatprep.subr.mxu0 0.0
      %631 = vmatpush1.msra.mxu0 0.0
      %632 = vmatprep.subr.mxu0 0.0
      %633 = vmatpush1.msra.mxu0 0.0
      %634 = vmatprep.subr.mxu0 0.0
      %635 = vmatpush1.msra.mxu0 0.0
      %636 = vmatprep.subr.mxu0 0.0
      %637 = vmatpush1.msra.mxu0 0.0
      %638 = vmatprep.subr.mxu0 0.0
      %639 = vmatpush1.msra.mxu0 0.0
      %640 = vmatprep.subr.mxu0 0.0
      %641 = vmatpush1.msra.mxu0 0.0
      %642 = vmatprep.subr.mxu0 0.0
      %643 = vmatpush1.msra.mxu0 0.0
      %644 = vmatprep.subr.mxu0 0.0
      %645 = vmatpush1.msra.mxu0 0.0
      %646 = vmatprep.subr.mxu0 0.0
      %647 = vmatpush1.msra.mxu0 0.0
      %648 = vmatprep.subr.mxu0 0.0
      %649 = vmatpush1.msra.mxu0 0.0
      %650 = vmatprep.subr.mxu0 0.0
      %651 = vmatpush1.msra.mxu0 0.0
      %652 = vmatprep.subr.mxu0 0.0
      %653 = vmatpush1.msra.mxu0 0.0
      %654 = vmatprep.subr.mxu0 0.0
      %655 = vmatpush1.msra.mxu0 0.0
      %656 = vmatprep.subr.mxu0 0.0
      %657 = vmatpush1.msra.mxu0 0.0
      %658 = vmatprep.subr.mxu0 0.0
      %659 = vmatpush1.msra.mxu0 0.0
      %660 = vmatprep.subr.mxu0 0.0
      %661 = vmatpush1.msra.mxu0 0.0
      %662 = vmatprep.subr.mxu0 0.0
      %663 = vmatpush1.msra.mxu0 0.0
      %664 = vmatprep.subr.mxu0 0.0
      %665 = vmatpush1.msra.mxu0 0.0
      %666 = vmatprep.subr.mxu0 0.0
      %667 = vmatpush1.msra.mxu0 0.0
      %668 = vmatprep.subr.mxu0 0.0
      %669 = vmatpush1.msra.mxu0 0.0
      %670 = vmatprep.subr.mxu0 0.0
      %671 = vmatpush1.msra.mxu0 0.0
      %672 = vmatprep.subr.mxu0 0.0
      %673 = vmatpush1.msra.mxu0 0.0
      %674 = vmatprep.subr.mxu0 0.0
      %675 = vmatpush1.msra.mxu0 0.0
      %676 = vmatprep.subr.mxu0 0.0
      %677 = vmatpush1.msra.mxu0 0.0
      %678 = vmatprep.subr.mxu0 0.0
      %679 = vmatpush1.msra.mxu0 0.0
      %680 = vmatprep.subr.mxu0 0.0
      %681 = vmatpush1.msra.mxu0 0.0
      %682 = vmatprep.subr.mxu0 0.0
      %683 = vmatpush1.msra.mxu0 0.0
      %684 = vmatprep.subr.mxu0 0.0
      %685 = vmatpush1.msra.mxu0 0.0
      %686 = vmatprep.subr.mxu0 0.0
      %687 = vmatpush1.msra.mxu0 0.0
      %688 = vmatprep.subr.mxu0 0.0
      %689 = vmatpush1.msra.mxu0 0.0
      %690 = vmatprep.subr.mxu0 0.0
      %691 = vmatpush1.msra.mxu0 0.0
      %692 = vmatprep.mubr.f32.mxu0 0.0
      %693 = vmatmul.mubr.f32.gmra.mrb[0].mxu0 %v529
      %v694 = vpop.f32.mrb[0].mxu0
      %v695 = vadd.f32 0.0, %v694
      %v696 = vpop.f32.mrb[0].mxu0
      %697 = vmatprep.mubr.f32.mxu0 0.0
      %698 = vmatmul.mubr.f32.gmra.mrb[0].mxu0 %v532
      %v699 = vpop.f32.mrb[0].mxu0
      %v700 = vadd.f32 0.0, %v699
      %v701 = vpop.f32.mrb[0].mxu0
      %702 = vmatprep.mubr.f32.mxu0 0.0
      %703 = vmatmul.mubr.f32.gmra.mrb[0].mxu0 %v535
      %v704 = vpop.f32.mrb[0].mxu0
      %v705 = vadd.f32 0.0, %v704
      %v706 = vpop.f32.mrb[0].mxu0
      %707 = vmatprep.mubr.f32.mxu0 0.0
      %708 = vmatmul.mubr.f32.gmra.mrb[0].mxu0 %v538
      %v709 = vpop.f32.mrb[0].mxu0
      %v710 = vadd.f32 0.0, %v709
      %v711 = vpop.f32.mrb[0].mxu0
      %712 = vmatprep.mubr.f32.mxu0 0.0
      %713 = vmatmul.mubr.f32.gmra.mrb[0].mxu0 %v541
      %v714 = vpop.f32.mrb[0].mxu0
      %v715 = vadd.f32 0.0, %v714
      %v716 = vpop.f32.mrb[0].mxu0
      %717 = vmatprep.mubr.f32.mxu0 0.0
      %718 = vmatmul.mubr.f32.gmra.mrb[0].mxu0 %v544
      %v719 = vpop.f32.mrb[0].mxu0
      %v720 = vadd.f32 0.0, %v719
      %v721 = vpop.f32.mrb[0].mxu0
      %722 = vmatprep.mubr.f32.mxu0 0.0
      %723 = vmatmul.mubr.f32.gmra.mrb[0].mxu0 %v547
      %v724 = vpop.f32.mrb[0].mxu0
      %v725 = vadd.f32 0.0, %v724
      %v726 = vpop.f32.mrb[0].mxu0
      %727 = vmatprep.mubr.f32.mxu0 0.0
      %728 = vmatmul.mubr.f32.gmra.mrb[0].mxu0 %v550
      %v729 = vpop.f32.mrb[0].mxu0
      %v730 = vadd.f32 0.0, %v729
      %v731 = vpop.f32.mrb[0].mxu0
      %732 = vmatprep.mubr.f32.mxu0 0.0
      %733 = vmatmul.mubr.f32.gmra.mrb[0].mxu0 %v553
      %v734 = vpop.f32.mrb[0].mxu0
      %v735 = vadd.f32 0.0, %v734
      %v736 = vpop.f32.mrb[0].mxu0
      %737 = vmatprep.mubr.f32.mxu0 0.0
      %738 = vmatmul.mubr.f32.gmra.mrb[0].mxu0 %v556
      %v739 = vpop.f32.mrb[0].mxu0
      %v740 = vadd.f32 0.0, %v739
      %v741 = vpop.f32.mrb[0].mxu0
      %742 = vmatprep.mubr.f32.mxu0 0.0
      %743 = vmatmul.mubr.f32.gmra.mrb[0].mxu0 %v559
      %v744 = vpop.f32.mrb[0].mxu0
      %v745 = vadd.f32 0.0, %v744
      %v746 = vpop.f32.mrb[0].mxu0
      %747 = vmatprep.mubr.f32.mxu0 0.0
      %748 = vmatmul.mubr.f32.gmra.mrb[0].mxu0 %v562
      %v749 = vpop.f32.mrb[0].mxu0
      %v750 = vadd.f32 0.0, %v749
      %v751 = vpop.f32.mrb[0].mxu0
      %752 = vmatprep.mubr.f32.mxu0 0.0
      %753 = vmatmul.mubr.f32.gmra.mrb[0].mxu0 %v565
      %v754 = vpop.f32.mrb[0].mxu0
      %v755 = vadd.f32 0.0, %v754
      %v756 = vpop.f32.mrb[0].mxu0
      %757 = vmatprep.mubr.f32.mxu0 0.0
      %758 = vmatmul.mubr.f32.gmra.mrb[0].mxu0 %v568
      %v759 = vpop.f32.mrb[0].mxu0
      %v760 = vadd.f32 0.0, %v759
      %v761 = vpop.f32.mrb[0].mxu0
      %762 = vmatprep.mubr.f32.mxu0 0.0
      %763 = vmatmul.mubr.f32.gmra.mrb[0].mxu0 %v571
      %v764 = vpop.f32.mrb[0].mxu0
      %v765 = vadd.f32 0.0, %v764
      %v766 = vpop.f32.mrb[0].mxu0
      %767 = vmatprep.mubr.f32.mxu0 0.0
      %768 = vmatmul.mubr.f32.gmra.mrb[0].mxu0 %v574
      %v769 = vpop.f32.mrb[0].mxu0
      %v770 = vadd.f32 0.0, %v769
      %v771 = vpop.f32.mrb[0].mxu0
      %772 = vmatprep.mubr.f32.mxu0 0.0
      %773 = vmatmul.mubr.f32.gmra.mrb[0].mxu0 %v577
      %v774 = vpop.f32.mrb[0].mxu0
      %v775 = vadd.f32 0.0, %v774
      %v776 = vpop.f32.mrb[0].mxu0
      %777 = vmatprep.mubr.f32.mxu0 0.0
      %778 = vmatmul.mubr.f32.gmra.mrb[0].mxu0 %v580
      %v779 = vpop.f32.mrb[0].mxu0
      %v780 = vadd.f32 0.0, %v779
      %v781 = vpop.f32.mrb[0].mxu0
      %782 = vmatprep.mubr.f32.mxu0 0.0
      %783 = vmatmul.mubr.f32.gmra.mrb[0].mxu0 %v583
      %v784 = vpop.f32.mrb[0].mxu0
      %v785 = vadd.f32 0.0, %v784
      %v786 = vpop.f32.mrb[0].mxu0
      %787 = vmatprep.mubr.f32.mxu0 0.0
      %788 = vmatmul.mubr.f32.gmra.mrb[0].mxu0 %v586
      %v789 = vpop.f32.mrb[0].mxu0
      %v790 = vadd.f32 0.0, %v789
      %v791 = vpop.f32.mrb[0].mxu0
      %792 = vmatprep.mubr.f32.mxu0 0.0
      %793 = vmatmul.mubr.f32.gmra.mrb[0].mxu0 %v589
      %v794 = vpop.f32.mrb[0].mxu0
      %v795 = vadd.f32 0.0, %v794
      %v796 = vpop.f32.mrb[0].mxu0
      %797 = vmatprep.mubr.f32.mxu0 0.0
      %798 = vmatmul.mubr.f32.gmra.mrb[0].mxu0 %v592
      %v799 = vpop.f32.mrb[0].mxu0
      %v800 = vadd.f32 0.0, %v799
      %v801 = vpop.f32.mrb[0].mxu0
      %802 = vmatprep.mubr.f32.mxu0 0.0
      %803 = vmatmul.mubr.f32.gmra.mrb[0].mxu0 %v595
      %v804 = vpop.f32.mrb[0].mxu0
      %v805 = vadd.f32 0.0, %v804
      %v806 = vpop.f32.mrb[0].mxu0
      %807 = vmatprep.mubr.f32.mxu0 0.0
      %808 = vmatmul.mubr.f32.gmra.mrb[0].mxu0 %v598
      %v809 = vpop.f32.mrb[0].mxu0
      %v810 = vadd.f32 0.0, %v809
      %v811 = vpop.f32.mrb[0].mxu0
      %812 = vmatprep.mubr.f32.mxu0 0.0
      %813 = vmatmul.mubr.f32.gmra.mrb[0].mxu0 %v601
      %v814 = vpop.f32.mrb[0].mxu0
      %v815 = vadd.f32 0.0, %v814
      %v816 = vpop.f32.mrb[0].mxu0
      %817 = vmatprep.mubr.f32.mxu0 0.0
      %818 = vmatmul.mubr.f32.gmra.mrb[0].mxu0 %v604
      %v819 = vpop.f32.mrb[0].mxu0
      %v820 = vadd.f32 0.0, %v819
      %v821 = vpop.f32.mrb[0].mxu0
      %822 = vmatprep.mubr.f32.mxu0 0.0
      %823 = vmatmul.mubr.f32.gmra.mrb[0].mxu0 %v607
      %v824 = vpop.f32.mrb[0].mxu0
      %v825 = vadd.f32 0.0, %v824
      %v826 = vpop.f32.mrb[0].mxu0
      %827 = vmatprep.mubr.f32.mxu0 0.0
      %828 = vmatmul.mubr.f32.gmra.mrb[0].mxu0 %v610
      %v829 = vpop.f32.mrb[0].mxu0
      %v830 = vadd.f32 0.0, %v829
      %v831 = vpop.f32.mrb[0].mxu0
      %832 = vmatprep.mubr.f32.mxu0 0.0
      %833 = vmatmul.mubr.f32.gmra.mrb[0].mxu0 %v613
      %v834 = vpop.f32.mrb[0].mxu0
      %v835 = vadd.f32 0.0, %v834
      %v836 = vpop.f32.mrb[0].mxu0
      %837 = vmatprep.mubr.f32.mxu0 0.0
      %838 = vmatmul.mubr.f32.gmra.mrb[0].mxu0 %v616
      %v839 = vpop.f32.mrb[0].mxu0
      %v840 = vadd.f32 0.0, %v839
      %v841 = vpop.f32.mrb[0].mxu0
      %842 = vmatprep.mubr.f32.mxu0 0.0
      %843 = vmatmul.mubr.f32.gmra.mrb[0].mxu0 %v619
      %v844 = vpop.f32.mrb[0].mxu0
      %v845 = vadd.f32 0.0, %v844
      %v846 = vpop.f32.mrb[0].mxu0
      %847 = vmatprep.mubr.f32.mxu0 0.0
      %848 = vmatmul.mubr.f32.gmra.mrb[0].mxu0 %v622
      %v849 = vpop.f32.mrb[0].mxu0
      %v850 = vadd.f32 0.0, %v849
      %v851 = vpop.f32.mrb[0].mxu0
      %852 = vdwg.mxu0
      %v853 = vadd.f32 %v492, %v695
      %v854 = vadd.f32 %v492, %v700
      %v855 = vadd.f32 %v492, %v705
      %v856 = vadd.f32 %v492, %v710
      %v857 = vadd.f32 %v492, %v715
      %v858 = vadd.f32 %v492, %v720
      %v859 = vadd.f32 %v492, %v725
      %v860 = vadd.f32 %v492, %v730
      %v861 = vadd.f32 %v492, %v735
      %v862 = vadd.f32 %v492, %v740
      %v863 = vadd.f32 %v492, %v745
      %v864 = vadd.f32 %v492, %v750
      %v865 = vadd.f32 %v492, %v755
      %v866 = vadd.f32 %v492, %v760
      %v867 = vadd.f32 %v492, %v765
      %v868 = vadd.f32 %v492, %v770
      %v869 = vadd.f32 %v492, %v775
      %v870 = vadd.f32 %v492, %v780
      %v871 = vadd.f32 %v492, %v785
      %v872 = vadd.f32 %v492, %v790
      %v873 = vadd.f32 %v492, %v795
      %v874 = vadd.f32 %v492, %v800
      %v875 = vadd.f32 %v492, %v805
      %v876 = vadd.f32 %v492, %v810
      %v877 = vadd.f32 %v492, %v815
      %v878 = vadd.f32 %v492, %v820
      %v879 = vadd.f32 %v492, %v825
      %v880 = vadd.f32 %v492, %v830
      %v881 = vadd.f32 %v492, %v835
      %v882 = vadd.f32 %v492, %v840
      %v883 = vadd.f32 %v492, %v845
      %v884 = vadd.f32 %v492, %v850
      %v885 = vld [vmem:[%s293 + $0x1] sm:$0xff]
      %v886 = vld [vmem:[%s293 + $0x9] sm:$0xff]
      %v887 = vld [vmem:[%s293 + $0x19] sm:$0xff]
      %v888 = vld [vmem:[%s293 + $0x21] sm:$0xff]
      %v889 = vld [vmem:[%s293 + $0x31] sm:$0xff]
      %v890 = vld [vmem:[%s293 + $0x39] sm:$0xff]
      %v891 = vld [vmem:[%s293 + $0x49] sm:$0xff]
      %v892 = vld [vmem:[%s293 + $0x51] sm:$0xff]
      %v893 = vld [vmem:[%s293 + $0x61] sm:$0xff]
      %v894 = vld [vmem:[%s293 + $0x69] sm:$0xff]
      %v895 = vld [vmem:[%s293 + $0x79] sm:$0xff]
      %v896 = vld [vmem:[%s293 + $0x81] sm:$0xff]
      %v897 = vld [vmem:[%s293 + $0x91] sm:$0xff]
      %v898 = vld [vmem:[%s293 + $0x99] sm:$0xff]
      %v899 = vld [vmem:[%s293 + $0xa9] sm:$0xff]
      %v900 = vld [vmem:[%s293 + $0xb1] sm:$0xff]
      %v901 = vld [vmem:[%s293 + $0xc1] sm:$0xff]
      %v902 = vld [vmem:[%s293 + $0xc9] sm:$0xff]
      %v903 = vld [vmem:[%s293 + $0xd9] sm:$0xff]
      %v904 = vld [vmem:[%s293 + $0xe1] sm:$0xff]
      %v905 = vld [vmem:[%s293 + $0xf1] sm:$0xff]
      %v906 = vld [vmem:[%s293 + $0xf9] sm:$0xff]
      %v907 = vld [vmem:[%s293 + $0x109] sm:$0xff]
      %v908 = vld [vmem:[%s293 + $0x111] sm:$0xff]
      %v909 = vld [vmem:[%s293 + $0x121] sm:$0xff]
      %v910 = vld [vmem:[%s293 + $0x129] sm:$0xff]
      %v911 = vld [vmem:[%s293 + $0x139] sm:$0xff]
      %v912 = vld [vmem:[%s293 + $0x141] sm:$0xff]
      %v913 = vld [vmem:[%s293 + $0x151] sm:$0xff]
      %v914 = vld [vmem:[%s293 + $0x159] sm:$0xff]
      %v915 = vld [vmem:[%s293 + $0x169] sm:$0xff]
      %v916 = vld [vmem:[%s293 + $0x171] sm:$0xff]
      %s917 = scalar_lea.vmem %s2, 4
      %v918 = vld [vmem:[%s917] sm:$0xf]
      %v920 = vsel %vm527, %v885, 0
      %v923 = vsel %vm527, %v886, 0
      %v926 = vsel %vm527, %v887, 0
      %v929 = vsel %vm527, %v888, 0
      %v932 = vsel %vm527, %v889, 0
      %v935 = vsel %vm527, %v890, 0
      %v938 = vsel %vm527, %v891, 0
      %v941 = vsel %vm527, %v892, 0
      %v944 = vsel %vm527, %v893, 0
      %v947 = vsel %vm527, %v894, 0
      %v950 = vsel %vm527, %v895, 0
      %v953 = vsel %vm527, %v896, 0
      %v956 = vsel %vm527, %v897, 0
      %v959 = vsel %vm527, %v898, 0
      %v962 = vsel %vm527, %v899, 0
      %v965 = vsel %vm527, %v900, 0
      %v968 = vsel %vm527, %v901, 0
      %v971 = vsel %vm527, %v902, 0
      %v974 = vsel %vm527, %v903, 0
      %v977 = vsel %vm527, %v904, 0
      %v980 = vsel %vm527, %v905, 0
      %v983 = vsel %vm527, %v906, 0
      %v986 = vsel %vm527, %v907, 0
      %v989 = vsel %vm527, %v908, 0
      %v992 = vsel %vm527, %v909, 0
      %v995 = vsel %vm527, %v910, 0
      %v998 = vsel %vm527, %v911, 0
      %v1001 = vsel %vm527, %v912, 0
      %v1004 = vsel %vm527, %v913, 0
      %v1007 = vsel %vm527, %v914, 0
      %v1010 = vsel %vm527, %v915, 0
      %v1013 = vsel %vm527, %v916, 0
      %v1016 = vsel %vm624, %v918, 0
      %1018 = vmatprep.subr.mxu0 0.0
      %1019 = vmatpush1.msra.mxu0 %v1016
      %1020 = vmatprep.subr.mxu0 0.0
      %1021 = vmatpush1.msra.mxu0 0.0
      %1022 = vmatprep.subr.mxu0 0.0
      %1023 = vmatpush1.msra.mxu0 0.0
      %1024 = vmatprep.subr.mxu0 0.0
      %1025 = vmatpush1.msra.mxu0 0.0
      %1026 = vmatprep.subr.mxu0 0.0
      %1027 = vmatpush1.msra.mxu0 0.0
      %1028 = vmatprep.subr.mxu0 0.0
      %1029 = vmatpush1.msra.mxu0 0.0
      %1030 = vmatprep.subr.mxu0 0.0
      %1031 = vmatpush1.msra.mxu0 0.0
      %1032 = vmatprep.subr.mxu0 0.0
      %1033 = vmatpush1.msra.mxu0 0.0
      %1034 = vmatprep.subr.mxu0 0.0
      %1035 = vmatpush1.msra.mxu0 0.0
      %1036 = vmatprep.subr.mxu0 0.0
      %1037 = vmatpush1.msra.mxu0 0.0
      %1038 = vmatprep.subr.mxu0 0.0
      %1039 = vmatpush1.msra.mxu0 0.0
      %1040 = vmatprep.subr.mxu0 0.0
      %1041 = vmatpush1.msra.mxu0 0.0
      %1042 = vmatprep.subr.mxu0 0.0
      %1043 = vmatpush1.msra.mxu0 0.0
      %1044 = vmatprep.subr.mxu0 0.0
      %1045 = vmatpush1.msra.mxu0 0.0
      %1046 = vmatprep.subr.mxu0 0.0
      %1047 = vmatpush1.msra.mxu0 0.0
      %1048 = vmatprep.subr.mxu0 0.0
      %1049 = vmatpush1.msra.mxu0 0.0
      %1050 = vmatprep.subr.mxu0 0.0
      %1051 = vmatpush1.msra.mxu0 0.0
      %1052 = vmatprep.subr.mxu0 0.0
      %1053 = vmatpush1.msra.mxu0 0.0
      %1054 = vmatprep.subr.mxu0 0.0
      %1055 = vmatpush1.msra.mxu0 0.0
      %1056 = vmatprep.subr.mxu0 0.0
      %1057 = vmatpush1.msra.mxu0 0.0
      %1058 = vmatprep.subr.mxu0 0.0
      %1059 = vmatpush1.msra.mxu0 0.0
      %1060 = vmatprep.subr.mxu0 0.0
      %1061 = vmatpush1.msra.mxu0 0.0
      %1062 = vmatprep.subr.mxu0 0.0
      %1063 = vmatpush1.msra.mxu0 0.0
      %1064 = vmatprep.subr.mxu0 0.0
      %1065 = vmatpush1.msra.mxu0 0.0
      %1066 = vmatprep.subr.mxu0 0.0
      %1067 = vmatpush1.msra.mxu0 0.0
      %1068 = vmatprep.subr.mxu0 0.0
      %1069 = vmatpush1.msra.mxu0 0.0
      %1070 = vmatprep.subr.mxu0 0.0
      %1071 = vmatpush1.msra.mxu0 0.0
      %1072 = vmatprep.subr.mxu0 0.0
      %1073 = vmatpush1.msra.mxu0 0.0
      %1074 = vmatprep.subr.mxu0 0.0
      %1075 = vmatpush1.msra.mxu0 0.0
      %1076 = vmatprep.subr.mxu0 0.0
      %1077 = vmatpush1.msra.mxu0 0.0
      %1078 = vmatprep.subr.mxu0 0.0
      %1079 = vmatpush1.msra.mxu0 0.0
      %1080 = vmatprep.subr.mxu0 0.0
      %1081 = vmatpush1.msra.mxu0 0.0
      %1082 = vmatprep.mubr.f32.mxu0 0.0
      %1083 = vmatmul.mubr.f32.gmra.mrb[0].mxu0 %v920
      %v1084 = vpop.f32.mrb[0].mxu0
      %v1085 = vadd.f32 0.0, %v1084
      %v1086 = vpop.f32.mrb[0].mxu0
      %1087 = vmatprep.mubr.f32.mxu0 0.0
      %1088 = vmatmul.mubr.f32.gmra.mrb[0].mxu0 %v923
      %v1089 = vpop.f32.mrb[0].mxu0
      %v1090 = vadd.f32 0.0, %v1089
      %v1091 = vpop.f32.mrb[0].mxu0
      %1092 = vmatprep.mubr.f32.mxu0 0.0
      %1093 = vmatmul.mubr.f32.gmra.mrb[0].mxu0 %v926
      %v1094 = vpop.f32.mrb[0].mxu0
      %v1095 = vadd.f32 0.0, %v1094
      %v1096 = vpop.f32.mrb[0].mxu0
      %1097 = vmatprep.mubr.f32.mxu0 0.0
      %1098 = vmatmul.mubr.f32.gmra.mrb[0].mxu0 %v929
      %v1099 = vpop.f32.mrb[0].mxu0
      %v1100 = vadd.f32 0.0, %v1099
      %v1101 = vpop.f32.mrb[0].mxu0
      %1102 = vmatprep.mubr.f32.mxu0 0.0
      %1103 = vmatmul.mubr.f32.gmra.mrb[0].mxu0 %v932
      %v1104 = vpop.f32.mrb[0].mxu0
      %v1105 = vadd.f32 0.0, %v1104
      %v1106 = vpop.f32.mrb[0].mxu0
      %1107 = vmatprep.mubr.f32.mxu0 0.0
      %1108 = vmatmul.mubr.f32.gmra.mrb[0].mxu0 %v935
      %v1109 = vpop.f32.mrb[0].mxu0
      %v1110 = vadd.f32 0.0, %v1109
      %v1111 = vpop.f32.mrb[0].mxu0
      %1112 = vmatprep.mubr.f32.mxu0 0.0
      %1113 = vmatmul.mubr.f32.gmra.mrb[0].mxu0 %v938
      %v1114 = vpop.f32.mrb[0].mxu0
      %v1115 = vadd.f32 0.0, %v1114
      %v1116 = vpop.f32.mrb[0].mxu0
      %1117 = vmatprep.mubr.f32.mxu0 0.0
      %1118 = vmatmul.mubr.f32.gmra.mrb[0].mxu0 %v941
      %v1119 = vpop.f32.mrb[0].mxu0
      %v1120 = vadd.f32 0.0, %v1119
      %v1121 = vpop.f32.mrb[0].mxu0
      %1122 = vmatprep.mubr.f32.mxu0 0.0
      %1123 = vmatmul.mubr.f32.gmra.mrb[0].mxu0 %v944
      %v1124 = vpop.f32.mrb[0].mxu0
      %v1125 = vadd.f32 0.0, %v1124
      %v1126 = vpop.f32.mrb[0].mxu0
      %1127 = vmatprep.mubr.f32.mxu0 0.0
      %1128 = vmatmul.mubr.f32.gmra.mrb[0].mxu0 %v947
      %v1129 = vpop.f32.mrb[0].mxu0
      %v1130 = vadd.f32 0.0, %v1129
      %v1131 = vpop.f32.mrb[0].mxu0
      %1132 = vmatprep.mubr.f32.mxu0 0.0
      %1133 = vmatmul.mubr.f32.gmra.mrb[0].mxu0 %v950
      %v1134 = vpop.f32.mrb[0].mxu0
      %v1135 = vadd.f32 0.0, %v1134
      %v1136 = vpop.f32.mrb[0].mxu0
      %1137 = vmatprep.mubr.f32.mxu0 0.0
      %1138 = vmatmul.mubr.f32.gmra.mrb[0].mxu0 %v953
      %v1139 = vpop.f32.mrb[0].mxu0
      %v1140 = vadd.f32 0.0, %v1139
      %v1141 = vpop.f32.mrb[0].mxu0
      %1142 = vmatprep.mubr.f32.mxu0 0.0
      %1143 = vmatmul.mubr.f32.gmra.mrb[0].mxu0 %v956
      %v1144 = vpop.f32.mrb[0].mxu0
      %v1145 = vadd.f32 0.0, %v1144
      %v1146 = vpop.f32.mrb[0].mxu0
      %1147 = vmatprep.mubr.f32.mxu0 0.0
      %1148 = vmatmul.mubr.f32.gmra.mrb[0].mxu0 %v959
      %v1149 = vpop.f32.mrb[0].mxu0
      %v1150 = vadd.f32 0.0, %v1149
      %v1151 = vpop.f32.mrb[0].mxu0
      %1152 = vmatprep.mubr.f32.mxu0 0.0
      %1153 = vmatmul.mubr.f32.gmra.mrb[0].mxu0 %v962
      %v1154 = vpop.f32.mrb[0].mxu0
      %v1155 = vadd.f32 0.0, %v1154
      %v1156 = vpop.f32.mrb[0].mxu0
      %1157 = vmatprep.mubr.f32.mxu0 0.0
      %1158 = vmatmul.mubr.f32.gmra.mrb[0].mxu0 %v965
      %v1159 = vpop.f32.mrb[0].mxu0
      %v1160 = vadd.f32 0.0, %v1159
      %v1161 = vpop.f32.mrb[0].mxu0
      %1162 = vmatprep.mubr.f32.mxu0 0.0
      %1163 = vmatmul.mubr.f32.gmra.mrb[0].mxu0 %v968
      %v1164 = vpop.f32.mrb[0].mxu0
      %v1165 = vadd.f32 0.0, %v1164
      %v1166 = vpop.f32.mrb[0].mxu0
      %1167 = vmatprep.mubr.f32.mxu0 0.0
      %1168 = vmatmul.mubr.f32.gmra.mrb[0].mxu0 %v971
      %v1169 = vpop.f32.mrb[0].mxu0
      %v1170 = vadd.f32 0.0, %v1169
      %v1171 = vpop.f32.mrb[0].mxu0
      %1172 = vmatprep.mubr.f32.mxu0 0.0
      %1173 = vmatmul.mubr.f32.gmra.mrb[0].mxu0 %v974
      %v1174 = vpop.f32.mrb[0].mxu0
      %v1175 = vadd.f32 0.0, %v1174
      %v1176 = vpop.f32.mrb[0].mxu0
      %1177 = vmatprep.mubr.f32.mxu0 0.0
      %1178 = vmatmul.mubr.f32.gmra.mrb[0].mxu0 %v977
      %v1179 = vpop.f32.mrb[0].mxu0
      %v1180 = vadd.f32 0.0, %v1179
      %v1181 = vpop.f32.mrb[0].mxu0
      %1182 = vmatprep.mubr.f32.mxu0 0.0
      %1183 = vmatmul.mubr.f32.gmra.mrb[0].mxu0 %v980
      %v1184 = vpop.f32.mrb[0].mxu0
      %v1185 = vadd.f32 0.0, %v1184
      %v1186 = vpop.f32.mrb[0].mxu0
      %1187 = vmatprep.mubr.f32.mxu0 0.0
      %1188 = vmatmul.mubr.f32.gmra.mrb[0].mxu0 %v983
      %v1189 = vpop.f32.mrb[0].mxu0
      %v1190 = vadd.f32 0.0, %v1189
      %v1191 = vpop.f32.mrb[0].mxu0
      %1192 = vmatprep.mubr.f32.mxu0 0.0
      %1193 = vmatmul.mubr.f32.gmra.mrb[0].mxu0 %v986
      %v1194 = vpop.f32.mrb[0].mxu0
      %v1195 = vadd.f32 0.0, %v1194
      %v1196 = vpop.f32.mrb[0].mxu0
      %1197 = vmatprep.mubr.f32.mxu0 0.0
      %1198 = vmatmul.mubr.f32.gmra.mrb[0].mxu0 %v989
      %v1199 = vpop.f32.mrb[0].mxu0
      %v1200 = vadd.f32 0.0, %v1199
      %v1201 = vpop.f32.mrb[0].mxu0
      %1202 = vmatprep.mubr.f32.mxu0 0.0
      %1203 = vmatmul.mubr.f32.gmra.mrb[0].mxu0 %v992
      %v1204 = vpop.f32.mrb[0].mxu0
      %v1205 = vadd.f32 0.0, %v1204
      %v1206 = vpop.f32.mrb[0].mxu0
      %1207 = vmatprep.mubr.f32.mxu0 0.0
      %1208 = vmatmul.mubr.f32.gmra.mrb[0].mxu0 %v995
      %v1209 = vpop.f32.mrb[0].mxu0
      %v1210 = vadd.f32 0.0, %v1209
      %v1211 = vpop.f32.mrb[0].mxu0
      %1212 = vmatprep.mubr.f32.mxu0 0.0
      %1213 = vmatmul.mubr.f32.gmra.mrb[0].mxu0 %v998
      %v1214 = vpop.f32.mrb[0].mxu0
      %v1215 = vadd.f32 0.0, %v1214
      %v1216 = vpop.f32.mrb[0].mxu0
      %1217 = vmatprep.mubr.f32.mxu0 0.0
      %1218 = vmatmul.mubr.f32.gmra.mrb[0].mxu0 %v1001
      %v1219 = vpop.f32.mrb[0].mxu0
      %v1220 = vadd.f32 0.0, %v1219
      %v1221 = vpop.f32.mrb[0].mxu0
      %1222 = vmatprep.mubr.f32.mxu0 0.0
      %1223 = vmatmul.mubr.f32.gmra.mrb[0].mxu0 %v1004
      %v1224 = vpop.f32.mrb[0].mxu0
      %v1225 = vadd.f32 0.0, %v1224
      %v1226 = vpop.f32.mrb[0].mxu0
      %1227 = vmatprep.mubr.f32.mxu0 0.0
      %1228 = vmatmul.mubr.f32.gmra.mrb[0].mxu0 %v1007
      %v1229 = vpop.f32.mrb[0].mxu0
      %v1230 = vadd.f32 0.0, %v1229
      %v1231 = vpop.f32.mrb[0].mxu0
      %1232 = vmatprep.mubr.f32.mxu0 0.0
      %1233 = vmatmul.mubr.f32.gmra.mrb[0].mxu0 %v1010
      %v1234 = vpop.f32.mrb[0].mxu0
      %v1235 = vadd.f32 0.0, %v1234
      %v1236 = vpop.f32.mrb[0].mxu0
      %1237 = vmatprep.mubr.f32.mxu0 0.0
      %1238 = vmatmul.mubr.f32.gmra.mrb[0].mxu0 %v1013
      %v1239 = vpop.f32.mrb[0].mxu0
      %v1240 = vadd.f32 0.0, %v1239
      %v1241 = vpop.f32.mrb[0].mxu0
      %1242 = vdwg.mxu0
      %v1243 = vadd.f32 %v853, %v1085
      %v1244 = vadd.f32 %v854, %v1090
      %v1245 = vadd.f32 %v855, %v1095
      %v1246 = vadd.f32 %v856, %v1100
      %v1247 = vadd.f32 %v857, %v1105
      %v1248 = vadd.f32 %v858, %v1110
      %v1249 = vadd.f32 %v859, %v1115
      %v1250 = vadd.f32 %v860, %v1120
      %v1251 = vadd.f32 %v861, %v1125
      %v1252 = vadd.f32 %v862, %v1130
      %v1253 = vadd.f32 %v863, %v1135
      %v1254 = vadd.f32 %v864, %v1140
      %v1255 = vadd.f32 %v865, %v1145
      %v1256 = vadd.f32 %v866, %v1150
      %v1257 = vadd.f32 %v867, %v1155
      %v1258 = vadd.f32 %v868, %v1160
      %v1259 = vadd.f32 %v869, %v1165
      %v1260 = vadd.f32 %v870, %v1170
      %v1261 = vadd.f32 %v871, %v1175
      %v1262 = vadd.f32 %v872, %v1180
      %v1263 = vadd.f32 %v873, %v1185
      %v1264 = vadd.f32 %v874, %v1190
      %v1265 = vadd.f32 %v875, %v1195
      %v1266 = vadd.f32 %v876, %v1200
      %v1267 = vadd.f32 %v877, %v1205
      %v1268 = vadd.f32 %v878, %v1210
      %v1269 = vadd.f32 %v879, %v1215
      %v1270 = vadd.f32 %v880, %v1220
      %v1271 = vadd.f32 %v881, %v1225
      %v1272 = vadd.f32 %v882, %v1230
      %v1273 = vadd.f32 %v883, %v1235
      %v1274 = vadd.f32 %v884, %v1240
      %v1275 = vld [vmem:[%s293 + $0x2] sm:$0xff]
      %v1276 = vld [vmem:[%s293 + $0xa] sm:$0xff]
      %v1277 = vld [vmem:[%s293 + $0x1a] sm:$0xff]
      %v1278 = vld [vmem:[%s293 + $0x22] sm:$0xff]
      %v1279 = vld [vmem:[%s293 + $0x32] sm:$0xff]
      %v1280 = vld [vmem:[%s293 + $0x3a] sm:$0xff]
      %v1281 = vld [vmem:[%s293 + $0x4a] sm:$0xff]
      %v1282 = vld [vmem:[%s293 + $0x52] sm:$0xff]
      %v1283 = vld [vmem:[%s293 + $0x62] sm:$0xff]
      %v1284 = vld [vmem:[%s293 + $0x6a] sm:$0xff]
      %v1285 = vld [vmem:[%s293 + $0x7a] sm:$0xff]
      %v1286 = vld [vmem:[%s293 + $0x82] sm:$0xff]
      %v1287 = vld [vmem:[%s293 + $0x92] sm:$0xff]
      %v1288 = vld [vmem:[%s293 + $0x9a] sm:$0xff]
      %v1289 = vld [vmem:[%s293 + $0xaa] sm:$0xff]
      %v1290 = vld [vmem:[%s293 + $0xb2] sm:$0xff]
      %v1291 = vld [vmem:[%s293 + $0xc2] sm:$0xff]
      %v1292 = vld [vmem:[%s293 + $0xca] sm:$0xff]
      %v1293 = vld [vmem:[%s293 + $0xda] sm:$0xff]
      %v1294 = vld [vmem:[%s293 + $0xe2] sm:$0xff]
      %v1295 = vld [vmem:[%s293 + $0xf2] sm:$0xff]
      %v1296 = vld [vmem:[%s293 + $0xfa] sm:$0xff]
      %v1297 = vld [vmem:[%s293 + $0x10a] sm:$0xff]
      %v1298 = vld [vmem:[%s293 + $0x112] sm:$0xff]
      %v1299 = vld [vmem:[%s293 + $0x122] sm:$0xff]
      %v1300 = vld [vmem:[%s293 + $0x12a] sm:$0xff]
      %v1301 = vld [vmem:[%s293 + $0x13a] sm:$0xff]
      %v1302 = vld [vmem:[%s293 + $0x142] sm:$0xff]
      %v1303 = vld [vmem:[%s293 + $0x152] sm:$0xff]
      %v1304 = vld [vmem:[%s293 + $0x15a] sm:$0xff]
      %v1305 = vld [vmem:[%s293 + $0x16a] sm:$0xff]
      %v1306 = vld [vmem:[%s293 + $0x172] sm:$0xff]
      %s1307 = scalar_lea.vmem %s2, 8
      %v1308 = vld [vmem:[%s1307] sm:$0xf]
      %v1310 = vsel %vm527, %v1275, 0
      %v1313 = vsel %vm527, %v1276, 0
      %v1316 = vsel %vm527, %v1277, 0
      %v1319 = vsel %vm527, %v1278, 0
      %v1322 = vsel %vm527, %v1279, 0
      %v1325 = vsel %vm527, %v1280, 0
      %v1328 = vsel %vm527, %v1281, 0
      %v1331 = vsel %vm527, %v1282, 0
      %v1334 = vsel %vm527, %v1283, 0
      %v1337 = vsel %vm527, %v1284, 0
      %v1340 = vsel %vm527, %v1285, 0
      %v1343 = vsel %vm527, %v1286, 0
      %v1346 = vsel %vm527, %v1287, 0
      %v1349 = vsel %vm527, %v1288, 0
      %v1352 = vsel %vm527, %v1289, 0
      %v1355 = vsel %vm527, %v1290, 0
      %v1358 = vsel %vm527, %v1291, 0
      %v1361 = vsel %vm527, %v1292, 0
      %v1364 = vsel %vm527, %v1293, 0
      %v1367 = vsel %vm527, %v1294, 0
      %v1370 = vsel %vm527, %v1295, 0
      %v1373 = vsel %vm527, %v1296, 0
      %v1376 = vsel %vm527, %v1297, 0
      %v1379 = vsel %vm527, %v1298, 0
      %v1382 = vsel %vm527, %v1299, 0
      %v1385 = vsel %vm527, %v1300, 0
      %v1388 = vsel %vm527, %v1301, 0
      %v1391 = vsel %vm527, %v1302, 0
      %v1394 = vsel %vm527, %v1303, 0
      %v1397 = vsel %vm527, %v1304, 0
      %v1400 = vsel %vm527, %v1305, 0
      %v1403 = vsel %vm527, %v1306, 0
      %v1406 = vsel %vm624, %v1308, 0
      %1408 = vmatprep.subr.mxu0 0.0
      %1409 = vmatpush1.msra.mxu0 %v1406
      %1410 = vmatprep.subr.mxu0 0.0
      %1411 = vmatpush1.msra.mxu0 0.0
      %1412 = vmatprep.subr.mxu0 0.0
      %1413 = vmatpush1.msra.mxu0 0.0
      %1414 = vmatprep.subr.mxu0 0.0
      %1415 = vmatpush1.msra.mxu0 0.0
      %1416 = vmatprep.subr.mxu0 0.0
      %1417 = vmatpush1.msra.mxu0 0.0
      %1418 = vmatprep.subr.mxu0 0.0
      %1419 = vmatpush1.msra.mxu0 0.0
      %1420 = vmatprep.subr.mxu0 0.0
      %1421 = vmatpush1.msra.mxu0 0.0
      %1422 = vmatprep.subr.mxu0 0.0
      %1423 = vmatpush1.msra.mxu0 0.0
      %1424 = vmatprep.subr.mxu0 0.0
      %1425 = vmatpush1.msra.mxu0 0.0
      %1426 = vmatprep.subr.mxu0 0.0
      %1427 = vmatpush1.msra.mxu0 0.0
      %1428 = vmatprep.subr.mxu0 0.0
      %1429 = vmatpush1.msra.mxu0 0.0
      %1430 = vmatprep.subr.mxu0 0.0
      %1431 = vmatpush1.msra.mxu0 0.0
      %1432 = vmatprep.subr.mxu0 0.0
      %1433 = vmatpush1.msra.mxu0 0.0
      %1434 = vmatprep.subr.mxu0 0.0
      %1435 = vmatpush1.msra.mxu0 0.0
      %1436 = vmatprep.subr.mxu0 0.0
      %1437 = vmatpush1.msra.mxu0 0.0
      %1438 = vmatprep.subr.mxu0 0.0
      %1439 = vmatpush1.msra.mxu0 0.0
      %1440 = vmatprep.subr.mxu0 0.0
      %1441 = vmatpush1.msra.mxu0 0.0
      %1442 = vmatprep.subr.mxu0 0.0
      %1443 = vmatpush1.msra.mxu0 0.0
      %1444 = vmatprep.subr.mxu0 0.0
      %1445 = vmatpush1.msra.mxu0 0.0
      %1446 = vmatprep.subr.mxu0 0.0
      %1447 = vmatpush1.msra.mxu0 0.0
      %1448 = vmatprep.subr.mxu0 0.0
      %1449 = vmatpush1.msra.mxu0 0.0
      %1450 = vmatprep.subr.mxu0 0.0
      %1451 = vmatpush1.msra.mxu0 0.0
      %1452 = vmatprep.subr.mxu0 0.0
      %1453 = vmatpush1.msra.mxu0 0.0
      %1454 = vmatprep.subr.mxu0 0.0
      %1455 = vmatpush1.msra.mxu0 0.0
      %1456 = vmatprep.subr.mxu0 0.0
      %1457 = vmatpush1.msra.mxu0 0.0
      %1458 = vmatprep.subr.mxu0 0.0
      %1459 = vmatpush1.msra.mxu0 0.0
      %1460 = vmatprep.subr.mxu0 0.0
      %1461 = vmatpush1.msra.mxu0 0.0
      %1462 = vmatprep.subr.mxu0 0.0
      %1463 = vmatpush1.msra.mxu0 0.0
      %1464 = vmatprep.subr.mxu0 0.0
      %1465 = vmatpush1.msra.mxu0 0.0
      %1466 = vmatprep.subr.mxu0 0.0
      %1467 = vmatpush1.msra.mxu0 0.0
      %1468 = vmatprep.subr.mxu0 0.0
      %1469 = vmatpush1.msra.mxu0 0.0
      %1470 = vmatprep.subr.mxu0 0.0
      %1471 = vmatpush1.msra.mxu0 0.0
      %1472 = vmatprep.mubr.f32.mxu0 0.0
      %1473 = vmatmul.mubr.f32.gmra.mrb[0].mxu0 %v1310
      %v1474 = vpop.f32.mrb[0].mxu0
      %v1475 = vadd.f32 0.0, %v1474
      %v1476 = vpop.f32.mrb[0].mxu0
      %1477 = vmatprep.mubr.f32.mxu0 0.0
      %1478 = vmatmul.mubr.f32.gmra.mrb[0].mxu0 %v1313
      %v1479 = vpop.f32.mrb[0].mxu0
      %v1480 = vadd.f32 0.0, %v1479
      %v1481 = vpop.f32.mrb[0].mxu0
      %1482 = vmatprep.mubr.f32.mxu0 0.0
      %1483 = vmatmul.mubr.f32.gmra.mrb[0].mxu0 %v1316
      %v1484 = vpop.f32.mrb[0].mxu0
      %v1485 = vadd.f32 0.0, %v1484
      %v1486 = vpop.f32.mrb[0].mxu0
      %1487 = vmatprep.mubr.f32.mxu0 0.0
      %1488 = vmatmul.mubr.f32.gmra.mrb[0].mxu0 %v1319
      %v1489 = vpop.f32.mrb[0].mxu0
      %v1490 = vadd.f32 0.0, %v1489
      %v1491 = vpop.f32.mrb[0].mxu0
      %1492 = vmatprep.mubr.f32.mxu0 0.0
      %1493 = vmatmul.mubr.f32.gmra.mrb[0].mxu0 %v1322
      %v1494 = vpop.f32.mrb[0].mxu0
      %v1495 = vadd.f32 0.0, %v1494
      %v1496 = vpop.f32.mrb[0].mxu0
      %1497 = vmatprep.mubr.f32.mxu0 0.0
      %1498 = vmatmul.mubr.f32.gmra.mrb[0].mxu0 %v1325
      %v1499 = vpop.f32.mrb[0].mxu0
      %v1500 = vadd.f32 0.0, %v1499
      %v1501 = vpop.f32.mrb[0].mxu0
      %1502 = vmatprep.mubr.f32.mxu0 0.0
      %1503 = vmatmul.mubr.f32.gmra.mrb[0].mxu0 %v1328
      %v1504 = vpop.f32.mrb[0].mxu0
      %v1505 = vadd.f32 0.0, %v1504
      %v1506 = vpop.f32.mrb[0].mxu0
      %1507 = vmatprep.mubr.f32.mxu0 0.0
      %1508 = vmatmul.mubr.f32.gmra.mrb[0].mxu0 %v1331
      %v1509 = vpop.f32.mrb[0].mxu0
      %v1510 = vadd.f32 0.0, %v1509
      %v1511 = vpop.f32.mrb[0].mxu0
      %1512 = vmatprep.mubr.f32.mxu0 0.0
      %1513 = vmatmul.mubr.f32.gmra.mrb[0].mxu0 %v1334
      %v1514 = vpop.f32.mrb[0].mxu0
      %v1515 = vadd.f32 0.0, %v1514
      %v1516 = vpop.f32.mrb[0].mxu0
      %1517 = vmatprep.mubr.f32.mxu0 0.0
      %1518 = vmatmul.mubr.f32.gmra.mrb[0].mxu0 %v1337
      %v1519 = vpop.f32.mrb[0].mxu0
      %v1520 = vadd.f32 0.0, %v1519
      %v1521 = vpop.f32.mrb[0].mxu0
      %1522 = vmatprep.mubr.f32.mxu0 0.0
      %1523 = vmatmul.mubr.f32.gmra.mrb[0].mxu0 %v1340
      %v1524 = vpop.f32.mrb[0].mxu0
      %v1525 = vadd.f32 0.0, %v1524
      %v1526 = vpop.f32.mrb[0].mxu0
      %1527 = vmatprep.mubr.f32.mxu0 0.0
      %1528 = vmatmul.mubr.f32.gmra.mrb[0].mxu0 %v1343
      %v1529 = vpop.f32.mrb[0].mxu0
      %v1530 = vadd.f32 0.0, %v1529
      %v1531 = vpop.f32.mrb[0].mxu0
      %1532 = vmatprep.mubr.f32.mxu0 0.0
      %1533 = vmatmul.mubr.f32.gmra.mrb[0].mxu0 %v1346
      %v1534 = vpop.f32.mrb[0].mxu0
      %v1535 = vadd.f32 0.0, %v1534
      %v1536 = vpop.f32.mrb[0].mxu0
      %1537 = vmatprep.mubr.f32.mxu0 0.0
      %1538 = vmatmul.mubr.f32.gmra.mrb[0].mxu0 %v1349
      %v1539 = vpop.f32.mrb[0].mxu0
      %v1540 = vadd.f32 0.0, %v1539
      %v1541 = vpop.f32.mrb[0].mxu0
      %1542 = vmatprep.mubr.f32.mxu0 0.0
      %1543 = vmatmul.mubr.f32.gmra.mrb[0].mxu0 %v1352
      %v1544 = vpop.f32.mrb[0].mxu0
      %v1545 = vadd.f32 0.0, %v1544
      %v1546 = vpop.f32.mrb[0].mxu0
      %1547 = vmatprep.mubr.f32.mxu0 0.0
      %1548 = vmatmul.mubr.f32.gmra.mrb[0].mxu0 %v1355
      %v1549 = vpop.f32.mrb[0].mxu0
      %v1550 = vadd.f32 0.0, %v1549
      %v1551 = vpop.f32.mrb[0].mxu0
      %1552 = vmatprep.mubr.f32.mxu0 0.0
      %1553 = vmatmul.mubr.f32.gmra.mrb[0].mxu0 %v1358
      %v1554 = vpop.f32.mrb[0].mxu0
      %v1555 = vadd.f32 0.0, %v1554
      %v1556 = vpop.f32.mrb[0].mxu0
      %1557 = vmatprep.mubr.f32.mxu0 0.0
      %1558 = vmatmul.mubr.f32.gmra.mrb[0].mxu0 %v1361
      %v1559 = vpop.f32.mrb[0].mxu0
      %v1560 = vadd.f32 0.0, %v1559
      %v1561 = vpop.f32.mrb[0].mxu0
      %1562 = vmatprep.mubr.f32.mxu0 0.0
      %1563 = vmatmul.mubr.f32.gmra.mrb[0].mxu0 %v1364
      %v1564 = vpop.f32.mrb[0].mxu0
      %v1565 = vadd.f32 0.0, %v1564
      %v1566 = vpop.f32.mrb[0].mxu0
      %1567 = vmatprep.mubr.f32.mxu0 0.0
      %1568 = vmatmul.mubr.f32.gmra.mrb[0].mxu0 %v1367
      %v1569 = vpop.f32.mrb[0].mxu0
      %v1570 = vadd.f32 0.0, %v1569
      %v1571 = vpop.f32.mrb[0].mxu0
      %1572 = vmatprep.mubr.f32.mxu0 0.0
      %1573 = vmatmul.mubr.f32.gmra.mrb[0].mxu0 %v1370
      %v1574 = vpop.f32.mrb[0].mxu0
      %v1575 = vadd.f32 0.0, %v1574
      %v1576 = vpop.f32.mrb[0].mxu0
      %1577 = vmatprep.mubr.f32.mxu0 0.0
      %1578 = vmatmul.mubr.f32.gmra.mrb[0].mxu0 %v1373
      %v1579 = vpop.f32.mrb[0].mxu0
      %v1580 = vadd.f32 0.0, %v1579
      %v1581 = vpop.f32.mrb[0].mxu0
      %1582 = vmatprep.mubr.f32.mxu0 0.0
      %1583 = vmatmul.mubr.f32.gmra.mrb[0].mxu0 %v1376
      %v1584 = vpop.f32.mrb[0].mxu0
      %v1585 = vadd.f32 0.0, %v1584
      %v1586 = vpop.f32.mrb[0].mxu0
      %1587 = vmatprep.mubr.f32.mxu0 0.0
      %1588 = vmatmul.mubr.f32.gmra.mrb[0].mxu0 %v1379
      %v1589 = vpop.f32.mrb[0].mxu0
      %v1590 = vadd.f32 0.0, %v1589
      %v1591 = vpop.f32.mrb[0].mxu0
      %1592 = vmatprep.mubr.f32.mxu0 0.0
      %1593 = vmatmul.mubr.f32.gmra.mrb[0].mxu0 %v1382
      %v1594 = vpop.f32.mrb[0].mxu0
      %v1595 = vadd.f32 0.0, %v1594
      %v1596 = vpop.f32.mrb[0].mxu0
      %1597 = vmatprep.mubr.f32.mxu0 0.0
      %1598 = vmatmul.mubr.f32.gmra.mrb[0].mxu0 %v1385
      %v1599 = vpop.f32.mrb[0].mxu0
      %v1600 = vadd.f32 0.0, %v1599
      %v1601 = vpop.f32.mrb[0].mxu0
      %1602 = vmatprep.mubr.f32.mxu0 0.0
      %1603 = vmatmul.mubr.f32.gmra.mrb[0].mxu0 %v1388
      %v1604 = vpop.f32.mrb[0].mxu0
      %v1605 = vadd.f32 0.0, %v1604
      %v1606 = vpop.f32.mrb[0].mxu0
      %1607 = vmatprep.mubr.f32.mxu0 0.0
      %1608 = vmatmul.mubr.f32.gmra.mrb[0].mxu0 %v1391
      %v1609 = vpop.f32.mrb[0].mxu0
      %v1610 = vadd.f32 0.0, %v1609
      %v1611 = vpop.f32.mrb[0].mxu0
      %1612 = vmatprep.mubr.f32.mxu0 0.0
      %1613 = vmatmul.mubr.f32.gmra.mrb[0].mxu0 %v1394
      %v1614 = vpop.f32.mrb[0].mxu0
      %v1615 = vadd.f32 0.0, %v1614
      %v1616 = vpop.f32.mrb[0].mxu0
      %1617 = vmatprep.mubr.f32.mxu0 0.0
      %1618 = vmatmul.mubr.f32.gmra.mrb[0].mxu0 %v1397
      %v1619 = vpop.f32.mrb[0].mxu0
      %v1620 = vadd.f32 0.0, %v1619
      %v1621 = vpop.f32.mrb[0].mxu0
      %1622 = vmatprep.mubr.f32.mxu0 0.0
      %1623 = vmatmul.mubr.f32.gmra.mrb[0].mxu0 %v1400
      %v1624 = vpop.f32.mrb[0].mxu0
      %v1625 = vadd.f32 0.0, %v1624
      %v1626 = vpop.f32.mrb[0].mxu0
      %1627 = vmatprep.mubr.f32.mxu0 0.0
      %1628 = vmatmul.mubr.f32.gmra.mrb[0].mxu0 %v1403
      %v1629 = vpop.f32.mrb[0].mxu0
      %v1630 = vadd.f32 0.0, %v1629
      %v1631 = vpop.f32.mrb[0].mxu0
      %1632 = vdwg.mxu0
      %v1633 = vadd.f32 %v1243, %v1475
      %v1634 = vadd.f32 %v1244, %v1480
      %v1635 = vadd.f32 %v1245, %v1485
      %v1636 = vadd.f32 %v1246, %v1490
      %v1637 = vadd.f32 %v1247, %v1495
      %v1638 = vadd.f32 %v1248, %v1500
      %v1639 = vadd.f32 %v1249, %v1505
      %v1640 = vadd.f32 %v1250, %v1510
      %v1641 = vadd.f32 %v1251, %v1515
      %v1642 = vadd.f32 %v1252, %v1520
      %v1643 = vadd.f32 %v1253, %v1525
      %v1644 = vadd.f32 %v1254, %v1530
      %v1645 = vadd.f32 %v1255, %v1535
      %v1646 = vadd.f32 %v1256, %v1540
      %v1647 = vadd.f32 %v1257, %v1545
      %v1648 = vadd.f32 %v1258, %v1550
      %v1649 = vadd.f32 %v1259, %v1555
      %v1650 = vadd.f32 %v1260, %v1560
      %v1651 = vadd.f32 %v1261, %v1565
      %v1652 = vadd.f32 %v1262, %v1570
      %v1653 = vadd.f32 %v1263, %v1575
      %v1654 = vadd.f32 %v1264, %v1580
      %v1655 = vadd.f32 %v1265, %v1585
      %v1656 = vadd.f32 %v1266, %v1590
      %v1657 = vadd.f32 %v1267, %v1595
      %v1658 = vadd.f32 %v1268, %v1600
      %v1659 = vadd.f32 %v1269, %v1605
      %v1660 = vadd.f32 %v1270, %v1610
      %v1661 = vadd.f32 %v1271, %v1615
      %v1662 = vadd.f32 %v1272, %v1620
      %v1663 = vadd.f32 %v1273, %v1625
      %v1664 = vadd.f32 %v1274, %v1630
      %s1665 = scalar_lea.vmem %s293, 24
      %v1666 = vld [vmem:[%s1665] sm:$0xff]
      %v1667 = vld [vmem:[%s1665 + $0x8] sm:$0xff]
      %v1668 = vld [vmem:[%s1665 + $0x18] sm:$0xff]
      %v1669 = vld [vmem:[%s1665 + $0x20] sm:$0xff]
      %v1670 = vld [vmem:[%s1665 + $0x30] sm:$0xff]
      %v1671 = vld [vmem:[%s1665 + $0x38] sm:$0xff]
      %v1672 = vld [vmem:[%s1665 + $0x48] sm:$0xff]
      %v1673 = vld [vmem:[%s1665 + $0x50] sm:$0xff]
      %v1674 = vld [vmem:[%s1665 + $0x60] sm:$0xff]
      %v1675 = vld [vmem:[%s1665 + $0x68] sm:$0xff]
      %v1676 = vld [vmem:[%s1665 + $0x78] sm:$0xff]
      %v1677 = vld [vmem:[%s1665 + $0x80] sm:$0xff]
      %v1678 = vld [vmem:[%s1665 + $0x90] sm:$0xff]
      %v1679 = vld [vmem:[%s1665 + $0x98] sm:$0xff]
      %v1680 = vld [vmem:[%s1665 + $0xa8] sm:$0xff]
      %v1681 = vld [vmem:[%s1665 + $0xb0] sm:$0xff]
      %v1682 = vld [vmem:[%s1665 + $0xc0] sm:$0xff]
      %v1683 = vld [vmem:[%s1665 + $0xc8] sm:$0xff]
      %v1684 = vld [vmem:[%s1665 + $0xd8] sm:$0xff]
      %v1685 = vld [vmem:[%s1665 + $0xe0] sm:$0xff]
      %v1686 = vld [vmem:[%s1665 + $0xf0] sm:$0xff]
      %v1687 = vld [vmem:[%s1665 + $0xf8] sm:$0xff]
      %v1688 = vld [vmem:[%s1665 + $0x108] sm:$0xff]
      %v1689 = vld [vmem:[%s1665 + $0x110] sm:$0xff]
      %v1690 = vld [vmem:[%s1665 + $0x120] sm:$0xff]
      %v1691 = vld [vmem:[%s1665 + $0x128] sm:$0xff]
      %v1692 = vld [vmem:[%s1665 + $0x138] sm:$0xff]
      %v1693 = vld [vmem:[%s1665 + $0x140] sm:$0xff]
      %v1694 = vld [vmem:[%s1665 + $0x150] sm:$0xff]
      %v1695 = vld [vmem:[%s1665 + $0x158] sm:$0xff]
      %v1696 = vld [vmem:[%s1665 + $0x168] sm:$0xff]
      %v1697 = vld [vmem:[%s1665 + $0x170] sm:$0xff]
      %s1698 = scalar_lea.vmem %s2, 12
      %v1699 = vld [vmem:[%s1698] sm:$0xf]
      %v1701 = vsel %vm527, %v1666, 0
      %v1704 = vsel %vm527, %v1667, 0
      %v1707 = vsel %vm527, %v1668, 0
      %v1710 = vsel %vm527, %v1669, 0
      %v1713 = vsel %vm527, %v1670, 0
      %v1716 = vsel %vm527, %v1671, 0
      %v1719 = vsel %vm527, %v1672, 0
      %v1722 = vsel %vm527, %v1673, 0
      %v1725 = vsel %vm527, %v1674, 0
      %v1728 = vsel %vm527, %v1675, 0
      %v1731 = vsel %vm527, %v1676, 0
      %v1734 = vsel %vm527, %v1677, 0
      %v1737 = vsel %vm527, %v1678, 0
      %v1740 = vsel %vm527, %v1679, 0
      %v1743 = vsel %vm527, %v1680, 0
      %v1746 = vsel %vm527, %v1681, 0
      %v1749 = vsel %vm527, %v1682, 0
      %v1752 = vsel %vm527, %v1683, 0
      %v1755 = vsel %vm527, %v1684, 0
      %v1758 = vsel %vm527, %v1685, 0
      %v1761 = vsel %vm527, %v1686, 0
      %v1764 = vsel %vm527, %v1687, 0
      %v1767 = vsel %vm527, %v1688, 0
      %v1770 = vsel %vm527, %v1689, 0
      %v1773 = vsel %vm527, %v1690, 0
      %v1776 = vsel %vm527, %v1691, 0
      %v1779 = vsel %vm527, %v1692, 0
      %v1782 = vsel %vm527, %v1693, 0
      %v1785 = vsel %vm527, %v1694, 0
      %v1788 = vsel %vm527, %v1695, 0
      %v1791 = vsel %vm527, %v1696, 0
      %v1794 = vsel %vm527, %v1697, 0
      %v1797 = vsel %vm624, %v1699, 0
      %1799 = vmatprep.subr.mxu0 0.0
      %1800 = vmatpush1.msra.mxu0 %v1797
      %1801 = vmatprep.subr.mxu0 0.0
      %1802 = vmatpush1.msra.mxu0 0.0
      %1803 = vmatprep.subr.mxu0 0.0
      %1804 = vmatpush1.msra.mxu0 0.0
      %1805 = vmatprep.subr.mxu0 0.0
      %1806 = vmatpush1.msra.mxu0 0.0
      %1807 = vmatprep.subr.mxu0 0.0
      %1808 = vmatpush1.msra.mxu0 0.0
      %1809 = vmatprep.subr.mxu0 0.0
      %1810 = vmatpush1.msra.mxu0 0.0
      %1811 = vmatprep.subr.mxu0 0.0
      %1812 = vmatpush1.msra.mxu0 0.0
      %1813 = vmatprep.subr.mxu0 0.0
      %1814 = vmatpush1.msra.mxu0 0.0
      %1815 = vmatprep.subr.mxu0 0.0
      %1816 = vmatpush1.msra.mxu0 0.0
      %1817 = vmatprep.subr.mxu0 0.0
      %1818 = vmatpush1.msra.mxu0 0.0
      %1819 = vmatprep.subr.mxu0 0.0
      %1820 = vmatpush1.msra.mxu0 0.0
      %1821 = vmatprep.subr.mxu0 0.0
      %1822 = vmatpush1.msra.mxu0 0.0
      %1823 = vmatprep.subr.mxu0 0.0
      %1824 = vmatpush1.msra.mxu0 0.0
      %1825 = vmatprep.subr.mxu0 0.0
      %1826 = vmatpush1.msra.mxu0 0.0
      %1827 = vmatprep.subr.mxu0 0.0
      %1828 = vmatpush1.msra.mxu0 0.0
      %1829 = vmatprep.subr.mxu0 0.0
      %1830 = vmatpush1.msra.mxu0 0.0
      %1831 = vmatprep.subr.mxu0 0.0
      %1832 = vmatpush1.msra.mxu0 0.0
      %1833 = vmatprep.subr.mxu0 0.0
      %1834 = vmatpush1.msra.mxu0 0.0
      %1835 = vmatprep.subr.mxu0 0.0
      %1836 = vmatpush1.msra.mxu0 0.0
      %1837 = vmatprep.subr.mxu0 0.0
      %1838 = vmatpush1.msra.mxu0 0.0
      %1839 = vmatprep.subr.mxu0 0.0
      %1840 = vmatpush1.msra.mxu0 0.0
      %1841 = vmatprep.subr.mxu0 0.0
      %1842 = vmatpush1.msra.mxu0 0.0
      %1843 = vmatprep.subr.mxu0 0.0
      %1844 = vmatpush1.msra.mxu0 0.0
      %1845 = vmatprep.subr.mxu0 0.0
      %1846 = vmatpush1.msra.mxu0 0.0
      %1847 = vmatprep.subr.mxu0 0.0
      %1848 = vmatpush1.msra.mxu0 0.0
      %1849 = vmatprep.subr.mxu0 0.0
      %1850 = vmatpush1.msra.mxu0 0.0
      %1851 = vmatprep.subr.mxu0 0.0
      %1852 = vmatpush1.msra.mxu0 0.0
      %1853 = vmatprep.subr.mxu0 0.0
      %1854 = vmatpush1.msra.mxu0 0.0
      %1855 = vmatprep.subr.mxu0 0.0
      %1856 = vmatpush1.msra.mxu0 0.0
      %1857 = vmatprep.subr.mxu0 0.0
      %1858 = vmatpush1.msra.mxu0 0.0
      %1859 = vmatprep.subr.mxu0 0.0
      %1860 = vmatpush1.msra.mxu0 0.0
      %1861 = vmatprep.subr.mxu0 0.0
      %1862 = vmatpush1.msra.mxu0 0.0
      %1863 = vmatprep.mubr.f32.mxu0 0.0
      %1864 = vmatmul.mubr.f32.gmra.mrb[0].mxu0 %v1701
      %v1865 = vpop.f32.mrb[0].mxu0
      %v1866 = vadd.f32 0.0, %v1865
      %v1867 = vpop.f32.mrb[0].mxu0
      %1868 = vmatprep.mubr.f32.mxu0 0.0
      %1869 = vmatmul.mubr.f32.gmra.mrb[0].mxu0 %v1704
      %v1870 = vpop.f32.mrb[0].mxu0
      %v1871 = vadd.f32 0.0, %v1870
      %v1872 = vpop.f32.mrb[0].mxu0
      %1873 = vmatprep.mubr.f32.mxu0 0.0
      %1874 = vmatmul.mubr.f32.gmra.mrb[0].mxu0 %v1707
      %v1875 = vpop.f32.mrb[0].mxu0
      %v1876 = vadd.f32 0.0, %v1875
      %v1877 = vpop.f32.mrb[0].mxu0
      %1878 = vmatprep.mubr.f32.mxu0 0.0
      %1879 = vmatmul.mubr.f32.gmra.mrb[0].mxu0 %v1710
      %v1880 = vpop.f32.mrb[0].mxu0
      %v1881 = vadd.f32 0.0, %v1880
      %v1882 = vpop.f32.mrb[0].mxu0
      %1883 = vmatprep.mubr.f32.mxu0 0.0
      %1884 = vmatmul.mubr.f32.gmra.mrb[0].mxu0 %v1713
      %v1885 = vpop.f32.mrb[0].mxu0
      %v1886 = vadd.f32 0.0, %v1885
      %v1887 = vpop.f32.mrb[0].mxu0
      %1888 = vmatprep.mubr.f32.mxu0 0.0
      %1889 = vmatmul.mubr.f32.gmra.mrb[0].mxu0 %v1716
      %v1890 = vpop.f32.mrb[0].mxu0
      %v1891 = vadd.f32 0.0, %v1890
      %v1892 = vpop.f32.mrb[0].mxu0
      %1893 = vmatprep.mubr.f32.mxu0 0.0
      %1894 = vmatmul.mubr.f32.gmra.mrb[0].mxu0 %v1719
      %v1895 = vpop.f32.mrb[0].mxu0
      %v1896 = vadd.f32 0.0, %v1895
      %v1897 = vpop.f32.mrb[0].mxu0
      %1898 = vmatprep.mubr.f32.mxu0 0.0
      %1899 = vmatmul.mubr.f32.gmra.mrb[0].mxu0 %v1722
      %v1900 = vpop.f32.mrb[0].mxu0
      %v1901 = vadd.f32 0.0, %v1900
      %v1902 = vpop.f32.mrb[0].mxu0
      %1903 = vmatprep.mubr.f32.mxu0 0.0
      %1904 = vmatmul.mubr.f32.gmra.mrb[0].mxu0 %v1725
      %v1905 = vpop.f32.mrb[0].mxu0
      %v1906 = vadd.f32 0.0, %v1905
      %v1907 = vpop.f32.mrb[0].mxu0
      %1908 = vmatprep.mubr.f32.mxu0 0.0
      %1909 = vmatmul.mubr.f32.gmra.mrb[0].mxu0 %v1728
      %v1910 = vpop.f32.mrb[0].mxu0
      %v1911 = vadd.f32 0.0, %v1910
      %v1912 = vpop.f32.mrb[0].mxu0
      %1913 = vmatprep.mubr.f32.mxu0 0.0
      %1914 = vmatmul.mubr.f32.gmra.mrb[0].mxu0 %v1731
      %v1915 = vpop.f32.mrb[0].mxu0
      %v1916 = vadd.f32 0.0, %v1915
      %v1917 = vpop.f32.mrb[0].mxu0
      %1918 = vmatprep.mubr.f32.mxu0 0.0
      %1919 = vmatmul.mubr.f32.gmra.mrb[0].mxu0 %v1734
      %v1920 = vpop.f32.mrb[0].mxu0
      %v1921 = vadd.f32 0.0, %v1920
      %v1922 = vpop.f32.mrb[0].mxu0
      %1923 = vmatprep.mubr.f32.mxu0 0.0
      %1924 = vmatmul.mubr.f32.gmra.mrb[0].mxu0 %v1737
      %v1925 = vpop.f32.mrb[0].mxu0
      %v1926 = vadd.f32 0.0, %v1925
      %v1927 = vpop.f32.mrb[0].mxu0
      %1928 = vmatprep.mubr.f32.mxu0 0.0
      %1929 = vmatmul.mubr.f32.gmra.mrb[0].mxu0 %v1740
      %v1930 = vpop.f32.mrb[0].mxu0
      %v1931 = vadd.f32 0.0, %v1930
      %v1932 = vpop.f32.mrb[0].mxu0
      %1933 = vmatprep.mubr.f32.mxu0 0.0
      %1934 = vmatmul.mubr.f32.gmra.mrb[0].mxu0 %v1743
      %v1935 = vpop.f32.mrb[0].mxu0
      %v1936 = vadd.f32 0.0, %v1935
      %v1937 = vpop.f32.mrb[0].mxu0
      %1938 = vmatprep.mubr.f32.mxu0 0.0
      %1939 = vmatmul.mubr.f32.gmra.mrb[0].mxu0 %v1746
      %v1940 = vpop.f32.mrb[0].mxu0
      %v1941 = vadd.f32 0.0, %v1940
      %v1942 = vpop.f32.mrb[0].mxu0
      %1943 = vmatprep.mubr.f32.mxu0 0.0
      %1944 = vmatmul.mubr.f32.gmra.mrb[0].mxu0 %v1749
      %v1945 = vpop.f32.mrb[0].mxu0
      %v1946 = vadd.f32 0.0, %v1945
      %v1947 = vpop.f32.mrb[0].mxu0
      %1948 = vmatprep.mubr.f32.mxu0 0.0
      %1949 = vmatmul.mubr.f32.gmra.mrb[0].mxu0 %v1752
      %v1950 = vpop.f32.mrb[0].mxu0
      %v1951 = vadd.f32 0.0, %v1950
      %v1952 = vpop.f32.mrb[0].mxu0
      %1953 = vmatprep.mubr.f32.mxu0 0.0
      %1954 = vmatmul.mubr.f32.gmra.mrb[0].mxu0 %v1755
      %v1955 = vpop.f32.mrb[0].mxu0
      %v1956 = vadd.f32 0.0, %v1955
      %v1957 = vpop.f32.mrb[0].mxu0
      %1958 = vmatprep.mubr.f32.mxu0 0.0
      %1959 = vmatmul.mubr.f32.gmra.mrb[0].mxu0 %v1758
      %v1960 = vpop.f32.mrb[0].mxu0
      %v1961 = vadd.f32 0.0, %v1960
      %v1962 = vpop.f32.mrb[0].mxu0
      %1963 = vmatprep.mubr.f32.mxu0 0.0
      %1964 = vmatmul.mubr.f32.gmra.mrb[0].mxu0 %v1761
      %v1965 = vpop.f32.mrb[0].mxu0
      %v1966 = vadd.f32 0.0, %v1965
      %v1967 = vpop.f32.mrb[0].mxu0
      %1968 = vmatprep.mubr.f32.mxu0 0.0
      %1969 = vmatmul.mubr.f32.gmra.mrb[0].mxu0 %v1764
      %v1970 = vpop.f32.mrb[0].mxu0
      %v1971 = vadd.f32 0.0, %v1970
      %v1972 = vpop.f32.mrb[0].mxu0
      %1973 = vmatprep.mubr.f32.mxu0 0.0
      %1974 = vmatmul.mubr.f32.gmra.mrb[0].mxu0 %v1767
      %v1975 = vpop.f32.mrb[0].mxu0
      %v1976 = vadd.f32 0.0, %v1975
      %v1977 = vpop.f32.mrb[0].mxu0
      %1978 = vmatprep.mubr.f32.mxu0 0.0
      %1979 = vmatmul.mubr.f32.gmra.mrb[0].mxu0 %v1770
      %v1980 = vpop.f32.mrb[0].mxu0
      %v1981 = vadd.f32 0.0, %v1980
      %v1982 = vpop.f32.mrb[0].mxu0
      %1983 = vmatprep.mubr.f32.mxu0 0.0
      %1984 = vmatmul.mubr.f32.gmra.mrb[0].mxu0 %v1773
      %v1985 = vpop.f32.mrb[0].mxu0
      %v1986 = vadd.f32 0.0, %v1985
      %v1987 = vpop.f32.mrb[0].mxu0
      %1988 = vmatprep.mubr.f32.mxu0 0.0
      %1989 = vmatmul.mubr.f32.gmra.mrb[0].mxu0 %v1776
      %v1990 = vpop.f32.mrb[0].mxu0
      %v1991 = vadd.f32 0.0, %v1990
      %v1992 = vpop.f32.mrb[0].mxu0
      %1993 = vmatprep.mubr.f32.mxu0 0.0
      %1994 = vmatmul.mubr.f32.gmra.mrb[0].mxu0 %v1779
      %v1995 = vpop.f32.mrb[0].mxu0
      %v1996 = vadd.f32 0.0, %v1995
      %v1997 = vpop.f32.mrb[0].mxu0
      %1998 = vmatprep.mubr.f32.mxu0 0.0
      %1999 = vmatmul.mubr.f32.gmra.mrb[0].mxu0 %v1782
      %v2000 = vpop.f32.mrb[0].mxu0
      %v2001 = vadd.f32 0.0, %v2000
      %v2002 = vpop.f32.mrb[0].mxu0
      %2003 = vmatprep.mubr.f32.mxu0 0.0
      %2004 = vmatmul.mubr.f32.gmra.mrb[0].mxu0 %v1785
      %v2005 = vpop.f32.mrb[0].mxu0
      %v2006 = vadd.f32 0.0, %v2005
      %v2007 = vpop.f32.mrb[0].mxu0
      %2008 = vmatprep.mubr.f32.mxu0 0.0
      %2009 = vmatmul.mubr.f32.gmra.mrb[0].mxu0 %v1788
      %v2010 = vpop.f32.mrb[0].mxu0
      %v2011 = vadd.f32 0.0, %v2010
      %v2012 = vpop.f32.mrb[0].mxu0
      %2013 = vmatprep.mubr.f32.mxu0 0.0
      %2014 = vmatmul.mubr.f32.gmra.mrb[0].mxu0 %v1791
      %v2015 = vpop.f32.mrb[0].mxu0
      %v2016 = vadd.f32 0.0, %v2015
      %v2017 = vpop.f32.mrb[0].mxu0
      %2018 = vmatprep.mubr.f32.mxu0 0.0
      %2019 = vmatmul.mubr.f32.gmra.mrb[0].mxu0 %v1794
      %v2020 = vpop.f32.mrb[0].mxu0
      %v2021 = vadd.f32 0.0, %v2020
      %v2022 = vpop.f32.mrb[0].mxu0
      %2023 = vdwg.mxu0
      %v2024 = vadd.f32 %v1633, %v1866
      %v2025 = vadd.f32 %v1634, %v1871
      %v2026 = vadd.f32 %v1635, %v1876
      %v2027 = vadd.f32 %v1636, %v1881
      %v2028 = vadd.f32 %v1637, %v1886
      %v2029 = vadd.f32 %v1638, %v1891
      %v2030 = vadd.f32 %v1639, %v1896
      %v2031 = vadd.f32 %v1640, %v1901
      %v2032 = vadd.f32 %v1641, %v1906
      %v2033 = vadd.f32 %v1642, %v1911
      %v2034 = vadd.f32 %v1643, %v1916
      %v2035 = vadd.f32 %v1644, %v1921
      %v2036 = vadd.f32 %v1645, %v1926
      %v2037 = vadd.f32 %v1646, %v1931
      %v2038 = vadd.f32 %v1647, %v1936
      %v2039 = vadd.f32 %v1648, %v1941
      %v2040 = vadd.f32 %v1649, %v1946
      %v2041 = vadd.f32 %v1650, %v1951
      %v2042 = vadd.f32 %v1651, %v1956
      %v2043 = vadd.f32 %v1652, %v1961
      %v2044 = vadd.f32 %v1653, %v1966
      %v2045 = vadd.f32 %v1654, %v1971
      %v2046 = vadd.f32 %v1655, %v1976
      %v2047 = vadd.f32 %v1656, %v1981
      %v2048 = vadd.f32 %v1657, %v1986
      %v2049 = vadd.f32 %v1658, %v1991
      %v2050 = vadd.f32 %v1659, %v1996
      %v2051 = vadd.f32 %v1660, %v2001
      %v2052 = vadd.f32 %v1661, %v2006
      %v2053 = vadd.f32 %v1662, %v2011
      %v2054 = vadd.f32 %v1663, %v2016
      %v2055 = vadd.f32 %v1664, %v2021
      %v2056 = vld [vmem:[%s1665 + $0x1] sm:$0xff]
      %v2057 = vld [vmem:[%s1665 + $0x9] sm:$0xff]
      %v2058 = vld [vmem:[%s1665 + $0x19] sm:$0xff]
      %v2059 = vld [vmem:[%s1665 + $0x21] sm:$0xff]
      %v2060 = vld [vmem:[%s1665 + $0x31] sm:$0xff]
      %v2061 = vld [vmem:[%s1665 + $0x39] sm:$0xff]
      %v2062 = vld [vmem:[%s1665 + $0x49] sm:$0xff]
      %v2063 = vld [vmem:[%s1665 + $0x51] sm:$0xff]
      %v2064 = vld [vmem:[%s1665 + $0x61] sm:$0xff]
      %v2065 = vld [vmem:[%s1665 + $0x69] sm:$0xff]
      %v2066 = vld [vmem:[%s1665 + $0x79] sm:$0xff]
      %v2067 = vld [vmem:[%s1665 + $0x81] sm:$0xff]
      %v2068 = vld [vmem:[%s1665 + $0x91] sm:$0xff]
      %v2069 = vld [vmem:[%s1665 + $0x99] sm:$0xff]
      %v2070 = vld [vmem:[%s1665 + $0xa9] sm:$0xff]
      %v2071 = vld [vmem:[%s1665 + $0xb1] sm:$0xff]
      %v2072 = vld [vmem:[%s1665 + $0xc1] sm:$0xff]
      %v2073 = vld [vmem:[%s1665 + $0xc9] sm:$0xff]
      %v2074 = vld [vmem:[%s1665 + $0xd9] sm:$0xff]
      %v2075 = vld [vmem:[%s1665 + $0xe1] sm:$0xff]
      %v2076 = vld [vmem:[%s1665 + $0xf1] sm:$0xff]
      %v2077 = vld [vmem:[%s1665 + $0xf9] sm:$0xff]
      %v2078 = vld [vmem:[%s1665 + $0x109] sm:$0xff]
      %v2079 = vld [vmem:[%s1665 + $0x111] sm:$0xff]
      %v2080 = vld [vmem:[%s1665 + $0x121] sm:$0xff]
      %v2081 = vld [vmem:[%s1665 + $0x129] sm:$0xff]
      %v2082 = vld [vmem:[%s1665 + $0x139] sm:$0xff]
      %v2083 = vld [vmem:[%s1665 + $0x141] sm:$0xff]
      %v2084 = vld [vmem:[%s1665 + $0x151] sm:$0xff]
      %v2085 = vld [vmem:[%s1665 + $0x159] sm:$0xff]
      %v2086 = vld [vmem:[%s1665 + $0x169] sm:$0xff]
      %v2087 = vld [vmem:[%s1665 + $0x171] sm:$0xff]
      %s2088 = scalar_lea.vmem %s2, 16
      %v2089 = vld [vmem:[%s2088] sm:$0xf]
      %v2091 = vsel %vm527, %v2056, 0
      %v2094 = vsel %vm527, %v2057, 0
      %v2097 = vsel %vm527, %v2058, 0
      %v2100 = vsel %vm527, %v2059, 0
      %v2103 = vsel %vm527, %v2060, 0
      %v2106 = vsel %vm527, %v2061, 0
      %v2109 = vsel %vm527, %v2062, 0
      %v2112 = vsel %vm527, %v2063, 0
      %v2115 = vsel %vm527, %v2064, 0
      %v2118 = vsel %vm527, %v2065, 0
      %v2121 = vsel %vm527, %v2066, 0
      %v2124 = vsel %vm527, %v2067, 0
      %v2127 = vsel %vm527, %v2068, 0
      %v2130 = vsel %vm527, %v2069, 0
      %v2133 = vsel %vm527, %v2070, 0
      %v2136 = vsel %vm527, %v2071, 0
      %v2139 = vsel %vm527, %v2072, 0
      %v2142 = vsel %vm527, %v2073, 0
      %v2145 = vsel %vm527, %v2074, 0
      %v2148 = vsel %vm527, %v2075, 0
      %v2151 = vsel %vm527, %v2076, 0
      %v2154 = vsel %vm527, %v2077, 0
      %v2157 = vsel %vm527, %v2078, 0
      %v2160 = vsel %vm527, %v2079, 0
      %v2163 = vsel %vm527, %v2080, 0
      %v2166 = vsel %vm527, %v2081, 0
      %v2169 = vsel %vm527, %v2082, 0
      %v2172 = vsel %vm527, %v2083, 0
      %v2175 = vsel %vm527, %v2084, 0
      %v2178 = vsel %vm527, %v2085, 0
      %v2181 = vsel %vm527, %v2086, 0
      %v2184 = vsel %vm527, %v2087, 0
      %v2187 = vsel %vm624, %v2089, 0
      %2189 = vmatprep.subr.mxu0 0.0
      %2190 = vmatpush1.msra.mxu0 %v2187
      %2191 = vmatprep.subr.mxu0 0.0
      %2192 = vmatpush1.msra.mxu0 0.0
      %2193 = vmatprep.subr.mxu0 0.0
      %2194 = vmatpush1.msra.mxu0 0.0
      %2195 = vmatprep.subr.mxu0 0.0
      %2196 = vmatpush1.msra.mxu0 0.0
      %2197 = vmatprep.subr.mxu0 0.0
      %2198 = vmatpush1.msra.mxu0 0.0
      %2199 = vmatprep.subr.mxu0 0.0
      %2200 = vmatpush1.msra.mxu0 0.0
      %2201 = vmatprep.subr.mxu0 0.0
      %2202 = vmatpush1.msra.mxu0 0.0
      %2203 = vmatprep.subr.mxu0 0.0
      %2204 = vmatpush1.msra.mxu0 0.0
      %2205 = vmatprep.subr.mxu0 0.0
      %2206 = vmatpush1.msra.mxu0 0.0
      %2207 = vmatprep.subr.mxu0 0.0
      %2208 = vmatpush1.msra.mxu0 0.0
      %2209 = vmatprep.subr.mxu0 0.0
      %2210 = vmatpush1.msra.mxu0 0.0
      %2211 = vmatprep.subr.mxu0 0.0
      %2212 = vmatpush1.msra.mxu0 0.0
      %2213 = vmatprep.subr.mxu0 0.0
      %2214 = vmatpush1.msra.mxu0 0.0
      %2215 = vmatprep.subr.mxu0 0.0
      %2216 = vmatpush1.msra.mxu0 0.0
      %2217 = vmatprep.subr.mxu0 0.0
      %2218 = vmatpush1.msra.mxu0 0.0
      %2219 = vmatprep.subr.mxu0 0.0
      %2220 = vmatpush1.msra.mxu0 0.0
      %2221 = vmatprep.subr.mxu0 0.0
      %2222 = vmatpush1.msra.mxu0 0.0
      %2223 = vmatprep.subr.mxu0 0.0
      %2224 = vmatpush1.msra.mxu0 0.0
      %2225 = vmatprep.subr.mxu0 0.0
      %2226 = vmatpush1.msra.mxu0 0.0
      %2227 = vmatprep.subr.mxu0 0.0
      %2228 = vmatpush1.msra.mxu0 0.0
      %2229 = vmatprep.subr.mxu0 0.0
      %2230 = vmatpush1.msra.mxu0 0.0
      %2231 = vmatprep.subr.mxu0 0.0
      %2232 = vmatpush1.msra.mxu0 0.0
      %2233 = vmatprep.subr.mxu0 0.0
      %2234 = vmatpush1.msra.mxu0 0.0
      %2235 = vmatprep.subr.mxu0 0.0
      %2236 = vmatpush1.msra.mxu0 0.0
      %2237 = vmatprep.subr.mxu0 0.0
      %2238 = vmatpush1.msra.mxu0 0.0
      %2239 = vmatprep.subr.mxu0 0.0
      %2240 = vmatpush1.msra.mxu0 0.0
      %2241 = vmatprep.subr.mxu0 0.0
      %2242 = vmatpush1.msra.mxu0 0.0
      %2243 = vmatprep.subr.mxu0 0.0
      %2244 = vmatpush1.msra.mxu0 0.0
      %2245 = vmatprep.subr.mxu0 0.0
      %2246 = vmatpush1.msra.mxu0 0.0
      %2247 = vmatprep.subr.mxu0 0.0
      %2248 = vmatpush1.msra.mxu0 0.0
      %2249 = vmatprep.subr.mxu0 0.0
      %2250 = vmatpush1.msra.mxu0 0.0
      %2251 = vmatprep.subr.mxu0 0.0
      %2252 = vmatpush1.msra.mxu0 0.0
      %2253 = vmatprep.mubr.f32.mxu0 0.0
      %2254 = vmatmul.mubr.f32.gmra.mrb[0].mxu0 %v2091
      %v2255 = vpop.f32.mrb[0].mxu0
      %v2256 = vadd.f32 0.0, %v2255
      %v2257 = vpop.f32.mrb[0].mxu0
      %2258 = vmatprep.mubr.f32.mxu0 0.0
      %2259 = vmatmul.mubr.f32.gmra.mrb[0].mxu0 %v2094
      %v2260 = vpop.f32.mrb[0].mxu0
      %v2261 = vadd.f32 0.0, %v2260
      %v2262 = vpop.f32.mrb[0].mxu0
      %2263 = vmatprep.mubr.f32.mxu0 0.0
      %2264 = vmatmul.mubr.f32.gmra.mrb[0].mxu0 %v2097
      %v2265 = vpop.f32.mrb[0].mxu0
      %v2266 = vadd.f32 0.0, %v2265
      %v2267 = vpop.f32.mrb[0].mxu0
      %2268 = vmatprep.mubr.f32.mxu0 0.0
      %2269 = vmatmul.mubr.f32.gmra.mrb[0].mxu0 %v2100
      %v2270 = vpop.f32.mrb[0].mxu0
      %v2271 = vadd.f32 0.0, %v2270
      %v2272 = vpop.f32.mrb[0].mxu0
      %2273 = vmatprep.mubr.f32.mxu0 0.0
      %2274 = vmatmul.mubr.f32.gmra.mrb[0].mxu0 %v2103
      %v2275 = vpop.f32.mrb[0].mxu0
      %v2276 = vadd.f32 0.0, %v2275
      %v2277 = vpop.f32.mrb[0].mxu0
      %2278 = vmatprep.mubr.f32.mxu0 0.0
      %2279 = vmatmul.mubr.f32.gmra.mrb[0].mxu0 %v2106
      %v2280 = vpop.f32.mrb[0].mxu0
      %v2281 = vadd.f32 0.0, %v2280
      %v2282 = vpop.f32.mrb[0].mxu0
      %2283 = vmatprep.mubr.f32.mxu0 0.0
      %2284 = vmatmul.mubr.f32.gmra.mrb[0].mxu0 %v2109
      %v2285 = vpop.f32.mrb[0].mxu0
      %v2286 = vadd.f32 0.0, %v2285
      %v2287 = vpop.f32.mrb[0].mxu0
      %2288 = vmatprep.mubr.f32.mxu0 0.0
      %2289 = vmatmul.mubr.f32.gmra.mrb[0].mxu0 %v2112
      %v2290 = vpop.f32.mrb[0].mxu0
      %v2291 = vadd.f32 0.0, %v2290
      %v2292 = vpop.f32.mrb[0].mxu0
      %2293 = vmatprep.mubr.f32.mxu0 0.0
      %2294 = vmatmul.mubr.f32.gmra.mrb[0].mxu0 %v2115
      %v2295 = vpop.f32.mrb[0].mxu0
      %v2296 = vadd.f32 0.0, %v2295
      %v2297 = vpop.f32.mrb[0].mxu0
      %2298 = vmatprep.mubr.f32.mxu0 0.0
      %2299 = vmatmul.mubr.f32.gmra.mrb[0].mxu0 %v2118
      %v2300 = vpop.f32.mrb[0].mxu0
      %v2301 = vadd.f32 0.0, %v2300
      %v2302 = vpop.f32.mrb[0].mxu0
      %2303 = vmatprep.mubr.f32.mxu0 0.0
      %2304 = vmatmul.mubr.f32.gmra.mrb[0].mxu0 %v2121
      %v2305 = vpop.f32.mrb[0].mxu0
      %v2306 = vadd.f32 0.0, %v2305
      %v2307 = vpop.f32.mrb[0].mxu0
      %2308 = vmatprep.mubr.f32.mxu0 0.0
      %2309 = vmatmul.mubr.f32.gmra.mrb[0].mxu0 %v2124
      %v2310 = vpop.f32.mrb[0].mxu0
      %v2311 = vadd.f32 0.0, %v2310
      %v2312 = vpop.f32.mrb[0].mxu0
      %2313 = vmatprep.mubr.f32.mxu0 0.0
      %2314 = vmatmul.mubr.f32.gmra.mrb[0].mxu0 %v2127
      %v2315 = vpop.f32.mrb[0].mxu0
      %v2316 = vadd.f32 0.0, %v2315
      %v2317 = vpop.f32.mrb[0].mxu0
      %2318 = vmatprep.mubr.f32.mxu0 0.0
      %2319 = vmatmul.mubr.f32.gmra.mrb[0].mxu0 %v2130
      %v2320 = vpop.f32.mrb[0].mxu0
      %v2321 = vadd.f32 0.0, %v2320
      %v2322 = vpop.f32.mrb[0].mxu0
      %2323 = vmatprep.mubr.f32.mxu0 0.0
      %2324 = vmatmul.mubr.f32.gmra.mrb[0].mxu0 %v2133
      %v2325 = vpop.f32.mrb[0].mxu0
      %v2326 = vadd.f32 0.0, %v2325
      %v2327 = vpop.f32.mrb[0].mxu0
      %2328 = vmatprep.mubr.f32.mxu0 0.0
      %2329 = vmatmul.mubr.f32.gmra.mrb[0].mxu0 %v2136
      %v2330 = vpop.f32.mrb[0].mxu0
      %v2331 = vadd.f32 0.0, %v2330
      %v2332 = vpop.f32.mrb[0].mxu0
      %2333 = vmatprep.mubr.f32.mxu0 0.0
      %2334 = vmatmul.mubr.f32.gmra.mrb[0].mxu0 %v2139
      %v2335 = vpop.f32.mrb[0].mxu0
      %v2336 = vadd.f32 0.0, %v2335
      %v2337 = vpop.f32.mrb[0].mxu0
      %2338 = vmatprep.mubr.f32.mxu0 0.0
      %2339 = vmatmul.mubr.f32.gmra.mrb[0].mxu0 %v2142
      %v2340 = vpop.f32.mrb[0].mxu0
      %v2341 = vadd.f32 0.0, %v2340
      %v2342 = vpop.f32.mrb[0].mxu0
      %2343 = vmatprep.mubr.f32.mxu0 0.0
      %2344 = vmatmul.mubr.f32.gmra.mrb[0].mxu0 %v2145
      %v2345 = vpop.f32.mrb[0].mxu0
      %v2346 = vadd.f32 0.0, %v2345
      %v2347 = vpop.f32.mrb[0].mxu0
      %2348 = vmatprep.mubr.f32.mxu0 0.0
      %2349 = vmatmul.mubr.f32.gmra.mrb[0].mxu0 %v2148
      %v2350 = vpop.f32.mrb[0].mxu0
      %v2351 = vadd.f32 0.0, %v2350
      %v2352 = vpop.f32.mrb[0].mxu0
      %2353 = vmatprep.mubr.f32.mxu0 0.0
      %2354 = vmatmul.mubr.f32.gmra.mrb[0].mxu0 %v2151
      %v2355 = vpop.f32.mrb[0].mxu0
      %v2356 = vadd.f32 0.0, %v2355
      %v2357 = vpop.f32.mrb[0].mxu0
      %2358 = vmatprep.mubr.f32.mxu0 0.0
      %2359 = vmatmul.mubr.f32.gmra.mrb[0].mxu0 %v2154
      %v2360 = vpop.f32.mrb[0].mxu0
      %v2361 = vadd.f32 0.0, %v2360
      %v2362 = vpop.f32.mrb[0].mxu0
      %2363 = vmatprep.mubr.f32.mxu0 0.0
      %2364 = vmatmul.mubr.f32.gmra.mrb[0].mxu0 %v2157
      %v2365 = vpop.f32.mrb[0].mxu0
      %v2366 = vadd.f32 0.0, %v2365
      %v2367 = vpop.f32.mrb[0].mxu0
      %2368 = vmatprep.mubr.f32.mxu0 0.0
      %2369 = vmatmul.mubr.f32.gmra.mrb[0].mxu0 %v2160
      %v2370 = vpop.f32.mrb[0].mxu0
      %v2371 = vadd.f32 0.0, %v2370
      %v2372 = vpop.f32.mrb[0].mxu0
      %2373 = vmatprep.mubr.f32.mxu0 0.0
      %2374 = vmatmul.mubr.f32.gmra.mrb[0].mxu0 %v2163
      %v2375 = vpop.f32.mrb[0].mxu0
      %v2376 = vadd.f32 0.0, %v2375
      %v2377 = vpop.f32.mrb[0].mxu0
      %2378 = vmatprep.mubr.f32.mxu0 0.0
      %2379 = vmatmul.mubr.f32.gmra.mrb[0].mxu0 %v2166
      %v2380 = vpop.f32.mrb[0].mxu0
      %v2381 = vadd.f32 0.0, %v2380
      %v2382 = vpop.f32.mrb[0].mxu0
      %2383 = vmatprep.mubr.f32.mxu0 0.0
      %2384 = vmatmul.mubr.f32.gmra.mrb[0].mxu0 %v2169
      %v2385 = vpop.f32.mrb[0].mxu0
      %v2386 = vadd.f32 0.0, %v2385
      %v2387 = vpop.f32.mrb[0].mxu0
      %2388 = vmatprep.mubr.f32.mxu0 0.0
      %2389 = vmatmul.mubr.f32.gmra.mrb[0].mxu0 %v2172
      %v2390 = vpop.f32.mrb[0].mxu0
      %v2391 = vadd.f32 0.0, %v2390
      %v2392 = vpop.f32.mrb[0].mxu0
      %2393 = vmatprep.mubr.f32.mxu0 0.0
      %2394 = vmatmul.mubr.f32.gmra.mrb[0].mxu0 %v2175
      %v2395 = vpop.f32.mrb[0].mxu0
      %v2396 = vadd.f32 0.0, %v2395
      %v2397 = vpop.f32.mrb[0].mxu0
      %2398 = vmatprep.mubr.f32.mxu0 0.0
      %2399 = vmatmul.mubr.f32.gmra.mrb[0].mxu0 %v2178
      %v2400 = vpop.f32.mrb[0].mxu0
      %v2401 = vadd.f32 0.0, %v2400
      %v2402 = vpop.f32.mrb[0].mxu0
      %2403 = vmatprep.mubr.f32.mxu0 0.0
      %2404 = vmatmul.mubr.f32.gmra.mrb[0].mxu0 %v2181
      %v2405 = vpop.f32.mrb[0].mxu0
      %v2406 = vadd.f32 0.0, %v2405
      %v2407 = vpop.f32.mrb[0].mxu0
      %2408 = vmatprep.mubr.f32.mxu0 0.0
      %2409 = vmatmul.mubr.f32.gmra.mrb[0].mxu0 %v2184
      %v2410 = vpop.f32.mrb[0].mxu0
      %v2411 = vadd.f32 0.0, %v2410
      %v2412 = vpop.f32.mrb[0].mxu0
      %2413 = vdwg.mxu0
      %v2414 = vadd.f32 %v2024, %v2256
      %v2415 = vadd.f32 %v2025, %v2261
      %v2416 = vadd.f32 %v2026, %v2266
      %v2417 = vadd.f32 %v2027, %v2271
      %v2418 = vadd.f32 %v2028, %v2276
      %v2419 = vadd.f32 %v2029, %v2281
      %v2420 = vadd.f32 %v2030, %v2286
      %v2421 = vadd.f32 %v2031, %v2291
      %v2422 = vadd.f32 %v2032, %v2296
      %v2423 = vadd.f32 %v2033, %v2301
      %v2424 = vadd.f32 %v2034, %v2306
      %v2425 = vadd.f32 %v2035, %v2311
      %v2426 = vadd.f32 %v2036, %v2316
      %v2427 = vadd.f32 %v2037, %v2321
      %v2428 = vadd.f32 %v2038, %v2326
      %v2429 = vadd.f32 %v2039, %v2331
      %v2430 = vadd.f32 %v2040, %v2336
      %v2431 = vadd.f32 %v2041, %v2341
      %v2432 = vadd.f32 %v2042, %v2346
      %v2433 = vadd.f32 %v2043, %v2351
      %v2434 = vadd.f32 %v2044, %v2356
      %v2435 = vadd.f32 %v2045, %v2361
      %v2436 = vadd.f32 %v2046, %v2366
      %v2437 = vadd.f32 %v2047, %v2371
      %v2438 = vadd.f32 %v2048, %v2376
      %v2439 = vadd.f32 %v2049, %v2381
      %v2440 = vadd.f32 %v2050, %v2386
      %v2441 = vadd.f32 %v2051, %v2391
      %v2442 = vadd.f32 %v2052, %v2396
      %v2443 = vadd.f32 %v2053, %v2401
      %v2444 = vadd.f32 %v2054, %v2406
      %v2445 = vadd.f32 %v2055, %v2411
      %v2446 = vld [vmem:[%s1665 + $0x2] sm:$0xff]
      %v2447 = vld [vmem:[%s1665 + $0xa] sm:$0xff]
      %v2448 = vld [vmem:[%s1665 + $0x1a] sm:$0xff]
      %v2449 = vld [vmem:[%s1665 + $0x22] sm:$0xff]
      %v2450 = vld [vmem:[%s1665 + $0x32] sm:$0xff]
      %v2451 = vld [vmem:[%s1665 + $0x3a] sm:$0xff]
      %v2452 = vld [vmem:[%s1665 + $0x4a] sm:$0xff]
      %v2453 = vld [vmem:[%s1665 + $0x52] sm:$0xff]
      %v2454 = vld [vmem:[%s1665 + $0x62] sm:$0xff]
      %v2455 = vld [vmem:[%s1665 + $0x6a] sm:$0xff]
      %v2456 = vld [vmem:[%s1665 + $0x7a] sm:$0xff]
      %v2457 = vld [vmem:[%s1665 + $0x82] sm:$0xff]
      %v2458 = vld [vmem:[%s1665 + $0x92] sm:$0xff]
      %v2459 = vld [vmem:[%s1665 + $0x9a] sm:$0xff]
      %v2460 = vld [vmem:[%s1665 + $0xaa] sm:$0xff]
      %v2461 = vld [vmem:[%s1665 + $0xb2] sm:$0xff]
      %v2462 = vld [vmem:[%s1665 + $0xc2] sm:$0xff]
      %v2463 = vld [vmem:[%s1665 + $0xca] sm:$0xff]
      %v2464 = vld [vmem:[%s1665 + $0xda] sm:$0xff]
      %v2465 = vld [vmem:[%s1665 + $0xe2] sm:$0xff]
      %v2466 = vld [vmem:[%s1665 + $0xf2] sm:$0xff]
      %v2467 = vld [vmem:[%s1665 + $0xfa] sm:$0xff]
      %v2468 = vld [vmem:[%s1665 + $0x10a] sm:$0xff]
      %v2469 = vld [vmem:[%s1665 + $0x112] sm:$0xff]
      %v2470 = vld [vmem:[%s1665 + $0x122] sm:$0xff]
      %v2471 = vld [vmem:[%s1665 + $0x12a] sm:$0xff]
      %v2472 = vld [vmem:[%s1665 + $0x13a] sm:$0xff]
      %v2473 = vld [vmem:[%s1665 + $0x142] sm:$0xff]
      %v2474 = vld [vmem:[%s1665 + $0x152] sm:$0xff]
      %v2475 = vld [vmem:[%s1665 + $0x15a] sm:$0xff]
      %v2476 = vld [vmem:[%s1665 + $0x16a] sm:$0xff]
      %v2477 = vld [vmem:[%s1665 + $0x172] sm:$0xff]
      %s2478 = scalar_lea.vmem %s2, 20
      %v2479 = vld [vmem:[%s2478] sm:$0xf]
      %v2481 = vsel %vm527, %v2446, 0
      %v2484 = vsel %vm527, %v2447, 0
      %v2487 = vsel %vm527, %v2448, 0
      %v2490 = vsel %vm527, %v2449, 0
      %v2493 = vsel %vm527, %v2450, 0
      %v2496 = vsel %vm527, %v2451, 0
      %v2499 = vsel %vm527, %v2452, 0
      %v2502 = vsel %vm527, %v2453, 0
      %v2505 = vsel %vm527, %v2454, 0
      %v2508 = vsel %vm527, %v2455, 0
      %v2511 = vsel %vm527, %v2456, 0
      %v2514 = vsel %vm527, %v2457, 0
      %v2517 = vsel %vm527, %v2458, 0
      %v2520 = vsel %vm527, %v2459, 0
      %v2523 = vsel %vm527, %v2460, 0
      %v2526 = vsel %vm527, %v2461, 0
      %v2529 = vsel %vm527, %v2462, 0
      %v2532 = vsel %vm527, %v2463, 0
      %v2535 = vsel %vm527, %v2464, 0
      %v2538 = vsel %vm527, %v2465, 0
      %v2541 = vsel %vm527, %v2466, 0
      %v2544 = vsel %vm527, %v2467, 0
      %v2547 = vsel %vm527, %v2468, 0
      %v2550 = vsel %vm527, %v2469, 0
      %v2553 = vsel %vm527, %v2470, 0
      %v2556 = vsel %vm527, %v2471, 0
      %v2559 = vsel %vm527, %v2472, 0
      %v2562 = vsel %vm527, %v2473, 0
      %v2565 = vsel %vm527, %v2474, 0
      %v2568 = vsel %vm527, %v2475, 0
      %v2571 = vsel %vm527, %v2476, 0
      %v2574 = vsel %vm527, %v2477, 0
      %v2577 = vsel %vm624, %v2479, 0
      %2579 = vmatprep.subr.mxu0 0.0
      %2580 = vmatpush1.msra.mxu0 %v2577
      %2581 = vmatprep.subr.mxu0 0.0
      %2582 = vmatpush1.msra.mxu0 0.0
      %2583 = vmatprep.subr.mxu0 0.0
      %2584 = vmatpush1.msra.mxu0 0.0
      %2585 = vmatprep.subr.mxu0 0.0
      %2586 = vmatpush1.msra.mxu0 0.0
      %2587 = vmatprep.subr.mxu0 0.0
      %2588 = vmatpush1.msra.mxu0 0.0
      %2589 = vmatprep.subr.mxu0 0.0
      %2590 = vmatpush1.msra.mxu0 0.0
      %2591 = vmatprep.subr.mxu0 0.0
      %2592 = vmatpush1.msra.mxu0 0.0
      %2593 = vmatprep.subr.mxu0 0.0
      %2594 = vmatpush1.msra.mxu0 0.0
      %2595 = vmatprep.subr.mxu0 0.0
      %2596 = vmatpush1.msra.mxu0 0.0
      %2597 = vmatprep.subr.mxu0 0.0
      %2598 = vmatpush1.msra.mxu0 0.0
      %2599 = vmatprep.subr.mxu0 0.0
      %2600 = vmatpush1.msra.mxu0 0.0
      %2601 = vmatprep.subr.mxu0 0.0
      %2602 = vmatpush1.msra.mxu0 0.0
      %2603 = vmatprep.subr.mxu0 0.0
      %2604 = vmatpush1.msra.mxu0 0.0
      %2605 = vmatprep.subr.mxu0 0.0
      %2606 = vmatpush1.msra.mxu0 0.0
      %2607 = vmatprep.subr.mxu0 0.0
      %2608 = vmatpush1.msra.mxu0 0.0
      %2609 = vmatprep.subr.mxu0 0.0
      %2610 = vmatpush1.msra.mxu0 0.0
      %2611 = vmatprep.subr.mxu0 0.0
      %2612 = vmatpush1.msra.mxu0 0.0
      %2613 = vmatprep.subr.mxu0 0.0
      %2614 = vmatpush1.msra.mxu0 0.0
      %2615 = vmatprep.subr.mxu0 0.0
      %2616 = vmatpush1.msra.mxu0 0.0
      %2617 = vmatprep.subr.mxu0 0.0
      %2618 = vmatpush1.msra.mxu0 0.0
      %2619 = vmatprep.subr.mxu0 0.0
      %2620 = vmatpush1.msra.mxu0 0.0
      %2621 = vmatprep.subr.mxu0 0.0
      %2622 = vmatpush1.msra.mxu0 0.0
      %2623 = vmatprep.subr.mxu0 0.0
      %2624 = vmatpush1.msra.mxu0 0.0
      %2625 = vmatprep.subr.mxu0 0.0
      %2626 = vmatpush1.msra.mxu0 0.0
      %2627 = vmatprep.subr.mxu0 0.0
      %2628 = vmatpush1.msra.mxu0 0.0
      %2629 = vmatprep.subr.mxu0 0.0
      %2630 = vmatpush1.msra.mxu0 0.0
      %2631 = vmatprep.subr.mxu0 0.0
      %2632 = vmatpush1.msra.mxu0 0.0
      %2633 = vmatprep.subr.mxu0 0.0
      %2634 = vmatpush1.msra.mxu0 0.0
      %2635 = vmatprep.subr.mxu0 0.0
      %2636 = vmatpush1.msra.mxu0 0.0
      %2637 = vmatprep.subr.mxu0 0.0
      %2638 = vmatpush1.msra.mxu0 0.0
      %2639 = vmatprep.subr.mxu0 0.0
      %2640 = vmatpush1.msra.mxu0 0.0
      %2641 = vmatprep.subr.mxu0 0.0
      %2642 = vmatpush1.msra.mxu0 0.0
      %2643 = vmatprep.mubr.f32.mxu0 0.0
      %2644 = vmatmul.mubr.f32.gmra.mrb[0].mxu0 %v2481
      %v2645 = vpop.f32.mrb[0].mxu0
      %v2646 = vadd.f32 0.0, %v2645
      %v2647 = vpop.f32.mrb[0].mxu0
      %2648 = vmatprep.mubr.f32.mxu0 0.0
      %2649 = vmatmul.mubr.f32.gmra.mrb[0].mxu0 %v2484
      %v2650 = vpop.f32.mrb[0].mxu0
      %v2651 = vadd.f32 0.0, %v2650
      %v2652 = vpop.f32.mrb[0].mxu0
      %2653 = vmatprep.mubr.f32.mxu0 0.0
      %2654 = vmatmul.mubr.f32.gmra.mrb[0].mxu0 %v2487
      %v2655 = vpop.f32.mrb[0].mxu0
      %v2656 = vadd.f32 0.0, %v2655
      %v2657 = vpop.f32.mrb[0].mxu0
      %2658 = vmatprep.mubr.f32.mxu0 0.0
      %2659 = vmatmul.mubr.f32.gmra.mrb[0].mxu0 %v2490
      %v2660 = vpop.f32.mrb[0].mxu0
      %v2661 = vadd.f32 0.0, %v2660
      %v2662 = vpop.f32.mrb[0].mxu0
      %2663 = vmatprep.mubr.f32.mxu0 0.0
      %2664 = vmatmul.mubr.f32.gmra.mrb[0].mxu0 %v2493
      %v2665 = vpop.f32.mrb[0].mxu0
      %v2666 = vadd.f32 0.0, %v2665
      %v2667 = vpop.f32.mrb[0].mxu0
      %2668 = vmatprep.mubr.f32.mxu0 0.0
      %2669 = vmatmul.mubr.f32.gmra.mrb[0].mxu0 %v2496
      %v2670 = vpop.f32.mrb[0].mxu0
      %v2671 = vadd.f32 0.0, %v2670
      %v2672 = vpop.f32.mrb[0].mxu0
      %2673 = vmatprep.mubr.f32.mxu0 0.0
      %2674 = vmatmul.mubr.f32.gmra.mrb[0].mxu0 %v2499
      %v2675 = vpop.f32.mrb[0].mxu0
      %v2676 = vadd.f32 0.0, %v2675
      %v2677 = vpop.f32.mrb[0].mxu0
      %2678 = vmatprep.mubr.f32.mxu0 0.0
      %2679 = vmatmul.mubr.f32.gmra.mrb[0].mxu0 %v2502
      %v2680 = vpop.f32.mrb[0].mxu0
      %v2681 = vadd.f32 0.0, %v2680
      %v2682 = vpop.f32.mrb[0].mxu0
      %2683 = vmatprep.mubr.f32.mxu0 0.0
      %2684 = vmatmul.mubr.f32.gmra.mrb[0].mxu0 %v2505
      %v2685 = vpop.f32.mrb[0].mxu0
      %v2686 = vadd.f32 0.0, %v2685
      %v2687 = vpop.f32.mrb[0].mxu0
      %2688 = vmatprep.mubr.f32.mxu0 0.0
      %2689 = vmatmul.mubr.f32.gmra.mrb[0].mxu0 %v2508
      %v2690 = vpop.f32.mrb[0].mxu0
      %v2691 = vadd.f32 0.0, %v2690
      %v2692 = vpop.f32.mrb[0].mxu0
      %2693 = vmatprep.mubr.f32.mxu0 0.0
      %2694 = vmatmul.mubr.f32.gmra.mrb[0].mxu0 %v2511
      %v2695 = vpop.f32.mrb[0].mxu0
      %v2696 = vadd.f32 0.0, %v2695
      %v2697 = vpop.f32.mrb[0].mxu0
      %2698 = vmatprep.mubr.f32.mxu0 0.0
      %2699 = vmatmul.mubr.f32.gmra.mrb[0].mxu0 %v2514
      %v2700 = vpop.f32.mrb[0].mxu0
      %v2701 = vadd.f32 0.0, %v2700
      %v2702 = vpop.f32.mrb[0].mxu0
      %2703 = vmatprep.mubr.f32.mxu0 0.0
      %2704 = vmatmul.mubr.f32.gmra.mrb[0].mxu0 %v2517
      %v2705 = vpop.f32.mrb[0].mxu0
      %v2706 = vadd.f32 0.0, %v2705
      %v2707 = vpop.f32.mrb[0].mxu0
      %2708 = vmatprep.mubr.f32.mxu0 0.0
      %2709 = vmatmul.mubr.f32.gmra.mrb[0].mxu0 %v2520
      %v2710 = vpop.f32.mrb[0].mxu0
      %v2711 = vadd.f32 0.0, %v2710
      %v2712 = vpop.f32.mrb[0].mxu0
      %2713 = vmatprep.mubr.f32.mxu0 0.0
      %2714 = vmatmul.mubr.f32.gmra.mrb[0].mxu0 %v2523
      %v2715 = vpop.f32.mrb[0].mxu0
      %v2716 = vadd.f32 0.0, %v2715
      %v2717 = vpop.f32.mrb[0].mxu0
      %2718 = vmatprep.mubr.f32.mxu0 0.0
      %2719 = vmatmul.mubr.f32.gmra.mrb[0].mxu0 %v2526
      %v2720 = vpop.f32.mrb[0].mxu0
      %v2721 = vadd.f32 0.0, %v2720
      %v2722 = vpop.f32.mrb[0].mxu0
      %2723 = vmatprep.mubr.f32.mxu0 0.0
      %2724 = vmatmul.mubr.f32.gmra.mrb[0].mxu0 %v2529
      %v2725 = vpop.f32.mrb[0].mxu0
      %v2726 = vadd.f32 0.0, %v2725
      %v2727 = vpop.f32.mrb[0].mxu0
      %2728 = vmatprep.mubr.f32.mxu0 0.0
      %2729 = vmatmul.mubr.f32.gmra.mrb[0].mxu0 %v2532
      %v2730 = vpop.f32.mrb[0].mxu0
      %v2731 = vadd.f32 0.0, %v2730
      %v2732 = vpop.f32.mrb[0].mxu0
      %2733 = vmatprep.mubr.f32.mxu0 0.0
      %2734 = vmatmul.mubr.f32.gmra.mrb[0].mxu0 %v2535
      %v2735 = vpop.f32.mrb[0].mxu0
      %v2736 = vadd.f32 0.0, %v2735
      %v2737 = vpop.f32.mrb[0].mxu0
      %2738 = vmatprep.mubr.f32.mxu0 0.0
      %2739 = vmatmul.mubr.f32.gmra.mrb[0].mxu0 %v2538
      %v2740 = vpop.f32.mrb[0].mxu0
      %v2741 = vadd.f32 0.0, %v2740
      %v2742 = vpop.f32.mrb[0].mxu0
      %2743 = vmatprep.mubr.f32.mxu0 0.0
      %2744 = vmatmul.mubr.f32.gmra.mrb[0].mxu0 %v2541
      %v2745 = vpop.f32.mrb[0].mxu0
      %v2746 = vadd.f32 0.0, %v2745
      %v2747 = vpop.f32.mrb[0].mxu0
      %2748 = vmatprep.mubr.f32.mxu0 0.0
      %2749 = vmatmul.mubr.f32.gmra.mrb[0].mxu0 %v2544
      %v2750 = vpop.f32.mrb[0].mxu0
      %v2751 = vadd.f32 0.0, %v2750
      %v2752 = vpop.f32.mrb[0].mxu0
      %2753 = vmatprep.mubr.f32.mxu0 0.0
      %2754 = vmatmul.mubr.f32.gmra.mrb[0].mxu0 %v2547
      %v2755 = vpop.f32.mrb[0].mxu0
      %v2756 = vadd.f32 0.0, %v2755
      %v2757 = vpop.f32.mrb[0].mxu0
      %2758 = vmatprep.mubr.f32.mxu0 0.0
      %2759 = vmatmul.mubr.f32.gmra.mrb[0].mxu0 %v2550
      %v2760 = vpop.f32.mrb[0].mxu0
      %v2761 = vadd.f32 0.0, %v2760
      %v2762 = vpop.f32.mrb[0].mxu0
      %2763 = vmatprep.mubr.f32.mxu0 0.0
      %2764 = vmatmul.mubr.f32.gmra.mrb[0].mxu0 %v2553
      %v2765 = vpop.f32.mrb[0].mxu0
      %v2766 = vadd.f32 0.0, %v2765
      %v2767 = vpop.f32.mrb[0].mxu0
      %2768 = vmatprep.mubr.f32.mxu0 0.0
      %2769 = vmatmul.mubr.f32.gmra.mrb[0].mxu0 %v2556
      %v2770 = vpop.f32.mrb[0].mxu0
      %v2771 = vadd.f32 0.0, %v2770
      %v2772 = vpop.f32.mrb[0].mxu0
      %2773 = vmatprep.mubr.f32.mxu0 0.0
      %2774 = vmatmul.mubr.f32.gmra.mrb[0].mxu0 %v2559
      %v2775 = vpop.f32.mrb[0].mxu0
      %v2776 = vadd.f32 0.0, %v2775
      %v2777 = vpop.f32.mrb[0].mxu0
      %2778 = vmatprep.mubr.f32.mxu0 0.0
      %2779 = vmatmul.mubr.f32.gmra.mrb[0].mxu0 %v2562
      %v2780 = vpop.f32.mrb[0].mxu0
      %v2781 = vadd.f32 0.0, %v2780
      %v2782 = vpop.f32.mrb[0].mxu0
      %2783 = vmatprep.mubr.f32.mxu0 0.0
      %2784 = vmatmul.mubr.f32.gmra.mrb[0].mxu0 %v2565
      %v2785 = vpop.f32.mrb[0].mxu0
      %v2786 = vadd.f32 0.0, %v2785
      %v2787 = vpop.f32.mrb[0].mxu0
      %2788 = vmatprep.mubr.f32.mxu0 0.0
      %2789 = vmatmul.mubr.f32.gmra.mrb[0].mxu0 %v2568
      %v2790 = vpop.f32.mrb[0].mxu0
      %v2791 = vadd.f32 0.0, %v2790
      %v2792 = vpop.f32.mrb[0].mxu0
      %2793 = vmatprep.mubr.f32.mxu0 0.0
      %2794 = vmatmul.mubr.f32.gmra.mrb[0].mxu0 %v2571
      %v2795 = vpop.f32.mrb[0].mxu0
      %v2796 = vadd.f32 0.0, %v2795
      %v2797 = vpop.f32.mrb[0].mxu0
      %2798 = vmatprep.mubr.f32.mxu0 0.0
      %2799 = vmatmul.mubr.f32.gmra.mrb[0].mxu0 %v2574
      %v2800 = vpop.f32.mrb[0].mxu0
      %v2801 = vadd.f32 0.0, %v2800
      %v2802 = vpop.f32.mrb[0].mxu0
      %2803 = vdwg.mxu0
      %v2804 = vadd.f32 %v2414, %v2646
      %v2805 = vadd.f32 %v2415, %v2651
      %v2806 = vadd.f32 %v2416, %v2656
      %v2807 = vadd.f32 %v2417, %v2661
      %v2808 = vadd.f32 %v2418, %v2666
      %v2809 = vadd.f32 %v2419, %v2671
      %v2810 = vadd.f32 %v2420, %v2676
      %v2811 = vadd.f32 %v2421, %v2681
      %v2812 = vadd.f32 %v2422, %v2686
      %v2813 = vadd.f32 %v2423, %v2691
      %v2814 = vadd.f32 %v2424, %v2696
      %v2815 = vadd.f32 %v2425, %v2701
      %v2816 = vadd.f32 %v2426, %v2706
      %v2817 = vadd.f32 %v2427, %v2711
      %v2818 = vadd.f32 %v2428, %v2716
      %v2819 = vadd.f32 %v2429, %v2721
      %v2820 = vadd.f32 %v2430, %v2726
      %v2821 = vadd.f32 %v2431, %v2731
      %v2822 = vadd.f32 %v2432, %v2736
      %v2823 = vadd.f32 %v2433, %v2741
      %v2824 = vadd.f32 %v2434, %v2746
      %v2825 = vadd.f32 %v2435, %v2751
      %v2826 = vadd.f32 %v2436, %v2756
      %v2827 = vadd.f32 %v2437, %v2761
      %v2828 = vadd.f32 %v2438, %v2766
      %v2829 = vadd.f32 %v2439, %v2771
      %v2830 = vadd.f32 %v2440, %v2776
      %v2831 = vadd.f32 %v2441, %v2781
      %v2832 = vadd.f32 %v2442, %v2786
      %v2833 = vadd.f32 %v2443, %v2791
      %v2834 = vadd.f32 %v2444, %v2796
      %v2835 = vadd.f32 %v2445, %v2801
      %s2836 = scalar_lea.vmem %s293, 48
      %v2837 = vld [vmem:[%s2836] sm:$0xff]
      %v2838 = vld [vmem:[%s2836 + $0x8] sm:$0xff]
      %v2839 = vld [vmem:[%s2836 + $0x18] sm:$0xff]
      %v2840 = vld [vmem:[%s2836 + $0x20] sm:$0xff]
      %v2841 = vld [vmem:[%s2836 + $0x30] sm:$0xff]
      %v2842 = vld [vmem:[%s2836 + $0x38] sm:$0xff]
      %v2843 = vld [vmem:[%s2836 + $0x48] sm:$0xff]
      %v2844 = vld [vmem:[%s2836 + $0x50] sm:$0xff]
      %v2845 = vld [vmem:[%s2836 + $0x60] sm:$0xff]
      %v2846 = vld [vmem:[%s2836 + $0x68] sm:$0xff]
      %v2847 = vld [vmem:[%s2836 + $0x78] sm:$0xff]
      %v2848 = vld [vmem:[%s2836 + $0x80] sm:$0xff]
      %v2849 = vld [vmem:[%s2836 + $0x90] sm:$0xff]
      %v2850 = vld [vmem:[%s2836 + $0x98] sm:$0xff]
      %v2851 = vld [vmem:[%s2836 + $0xa8] sm:$0xff]
      %v2852 = vld [vmem:[%s2836 + $0xb0] sm:$0xff]
      %v2853 = vld [vmem:[%s2836 + $0xc0] sm:$0xff]
      %v2854 = vld [vmem:[%s2836 + $0xc8] sm:$0xff]
      %v2855 = vld [vmem:[%s2836 + $0xd8] sm:$0xff]
      %v2856 = vld [vmem:[%s2836 + $0xe0] sm:$0xff]
      %v2857 = vld [vmem:[%s2836 + $0xf0] sm:$0xff]
      %v2858 = vld [vmem:[%s2836 + $0xf8] sm:$0xff]
      %v2859 = vld [vmem:[%s2836 + $0x108] sm:$0xff]
      %v2860 = vld [vmem:[%s2836 + $0x110] sm:$0xff]
      %v2861 = vld [vmem:[%s2836 + $0x120] sm:$0xff]
      %v2862 = vld [vmem:[%s2836 + $0x128] sm:$0xff]
      %v2863 = vld [vmem:[%s2836 + $0x138] sm:$0xff]
      %v2864 = vld [vmem:[%s2836 + $0x140] sm:$0xff]
      %v2865 = vld [vmem:[%s2836 + $0x150] sm:$0xff]
      %v2866 = vld [vmem:[%s2836 + $0x158] sm:$0xff]
      %v2867 = vld [vmem:[%s2836 + $0x168] sm:$0xff]
      %v2868 = vld [vmem:[%s2836 + $0x170] sm:$0xff]
      %s2869 = scalar_lea.vmem %s2, 24
      %v2870 = vld [vmem:[%s2869] sm:$0xf]
      %v2872 = vsel %vm527, %v2837, 0
      %v2875 = vsel %vm527, %v2838, 0
      %v2878 = vsel %vm527, %v2839, 0
      %v2881 = vsel %vm527, %v2840, 0
      %v2884 = vsel %vm527, %v2841, 0
      %v2887 = vsel %vm527, %v2842, 0
      %v2890 = vsel %vm527, %v2843, 0
      %v2893 = vsel %vm527, %v2844, 0
      %v2896 = vsel %vm527, %v2845, 0
      %v2899 = vsel %vm527, %v2846, 0
      %v2902 = vsel %vm527, %v2847, 0
      %v2905 = vsel %vm527, %v2848, 0
      %v2908 = vsel %vm527, %v2849, 0
      %v2911 = vsel %vm527, %v2850, 0
      %v2914 = vsel %vm527, %v2851, 0
      %v2917 = vsel %vm527, %v2852, 0
      %v2920 = vsel %vm527, %v2853, 0
      %v2923 = vsel %vm527, %v2854, 0
      %v2926 = vsel %vm527, %v2855, 0
      %v2929 = vsel %vm527, %v2856, 0
      %v2932 = vsel %vm527, %v2857, 0
      %v2935 = vsel %vm527, %v2858, 0
      %v2938 = vsel %vm527, %v2859, 0
      %v2941 = vsel %vm527, %v2860, 0
      %v2944 = vsel %vm527, %v2861, 0
      %v2947 = vsel %vm527, %v2862, 0
      %v2950 = vsel %vm527, %v2863, 0
      %v2953 = vsel %vm527, %v2864, 0
      %v2956 = vsel %vm527, %v2865, 0
      %v2959 = vsel %vm527, %v2866, 0
      %v2962 = vsel %vm527, %v2867, 0
      %v2965 = vsel %vm527, %v2868, 0
      %v2968 = vsel %vm624, %v2870, 0
      %2970 = vmatprep.subr.mxu0 0.0
      %2971 = vmatpush1.msra.mxu0 %v2968
      %2972 = vmatprep.subr.mxu0 0.0
      %2973 = vmatpush1.msra.mxu0 0.0
      %2974 = vmatprep.subr.mxu0 0.0
      %2975 = vmatpush1.msra.mxu0 0.0
      %2976 = vmatprep.subr.mxu0 0.0
      %2977 = vmatpush1.msra.mxu0 0.0
      %2978 = vmatprep.subr.mxu0 0.0
      %2979 = vmatpush1.msra.mxu0 0.0
      %2980 = vmatprep.subr.mxu0 0.0
      %2981 = vmatpush1.msra.mxu0 0.0
      %2982 = vmatprep.subr.mxu0 0.0
      %2983 = vmatpush1.msra.mxu0 0.0
      %2984 = vmatprep.subr.mxu0 0.0
      %2985 = vmatpush1.msra.mxu0 0.0
      %2986 = vmatprep.subr.mxu0 0.0
      %2987 = vmatpush1.msra.mxu0 0.0
      %2988 = vmatprep.subr.mxu0 0.0
      %2989 = vmatpush1.msra.mxu0 0.0
      %2990 = vmatprep.subr.mxu0 0.0
      %2991 = vmatpush1.msra.mxu0 0.0
      %2992 = vmatprep.subr.mxu0 0.0
      %2993 = vmatpush1.msra.mxu0 0.0
      %2994 = vmatprep.subr.mxu0 0.0
      %2995 = vmatpush1.msra.mxu0 0.0
      %2996 = vmatprep.subr.mxu0 0.0
      %2997 = vmatpush1.msra.mxu0 0.0
      %2998 = vmatprep.subr.mxu0 0.0
      %2999 = vmatpush1.msra.mxu0 0.0
      %3000 = vmatprep.subr.mxu0 0.0
      %3001 = vmatpush1.msra.mxu0 0.0
      %3002 = vmatprep.subr.mxu0 0.0
      %3003 = vmatpush1.msra.mxu0 0.0
      %3004 = vmatprep.subr.mxu0 0.0
      %3005 = vmatpush1.msra.mxu0 0.0
      %3006 = vmatprep.subr.mxu0 0.0
      %3007 = vmatpush1.msra.mxu0 0.0
      %3008 = vmatprep.subr.mxu0 0.0
      %3009 = vmatpush1.msra.mxu0 0.0
      %3010 = vmatprep.subr.mxu0 0.0
      %3011 = vmatpush1.msra.mxu0 0.0
      %3012 = vmatprep.subr.mxu0 0.0
      %3013 = vmatpush1.msra.mxu0 0.0
      %3014 = vmatprep.subr.mxu0 0.0
      %3015 = vmatpush1.msra.mxu0 0.0
      %3016 = vmatprep.subr.mxu0 0.0
      %3017 = vmatpush1.msra.mxu0 0.0
      %3018 = vmatprep.subr.mxu0 0.0
      %3019 = vmatpush1.msra.mxu0 0.0
      %3020 = vmatprep.subr.mxu0 0.0
      %3021 = vmatpush1.msra.mxu0 0.0
      %3022 = vmatprep.subr.mxu0 0.0
      %3023 = vmatpush1.msra.mxu0 0.0
      %3024 = vmatprep.subr.mxu0 0.0
      %3025 = vmatpush1.msra.mxu0 0.0
      %3026 = vmatprep.subr.mxu0 0.0
      %3027 = vmatpush1.msra.mxu0 0.0
      %3028 = vmatprep.subr.mxu0 0.0
      %3029 = vmatpush1.msra.mxu0 0.0
      %3030 = vmatprep.subr.mxu0 0.0
      %3031 = vmatpush1.msra.mxu0 0.0
      %3032 = vmatprep.subr.mxu0 0.0
      %3033 = vmatpush1.msra.mxu0 0.0
      %3034 = vmatprep.mubr.f32.mxu0 0.0
      %3035 = vmatmul.mubr.f32.gmra.mrb[0].mxu0 %v2872
      %v3036 = vpop.f32.mrb[0].mxu0
      %v3037 = vadd.f32 0.0, %v3036
      %v3038 = vpop.f32.mrb[0].mxu0
      %3039 = vmatprep.mubr.f32.mxu0 0.0
      %3040 = vmatmul.mubr.f32.gmra.mrb[0].mxu0 %v2875
      %v3041 = vpop.f32.mrb[0].mxu0
      %v3042 = vadd.f32 0.0, %v3041
      %v3043 = vpop.f32.mrb[0].mxu0
      %3044 = vmatprep.mubr.f32.mxu0 0.0
      %3045 = vmatmul.mubr.f32.gmra.mrb[0].mxu0 %v2878
      %v3046 = vpop.f32.mrb[0].mxu0
      %v3047 = vadd.f32 0.0, %v3046
      %v3048 = vpop.f32.mrb[0].mxu0
      %3049 = vmatprep.mubr.f32.mxu0 0.0
      %3050 = vmatmul.mubr.f32.gmra.mrb[0].mxu0 %v2881
      %v3051 = vpop.f32.mrb[0].mxu0
      %v3052 = vadd.f32 0.0, %v3051
      %v3053 = vpop.f32.mrb[0].mxu0
      %3054 = vmatprep.mubr.f32.mxu0 0.0
      %3055 = vmatmul.mubr.f32.gmra.mrb[0].mxu0 %v2884
      %v3056 = vpop.f32.mrb[0].mxu0
      %v3057 = vadd.f32 0.0, %v3056
      %v3058 = vpop.f32.mrb[0].mxu0
      %3059 = vmatprep.mubr.f32.mxu0 0.0
      %3060 = vmatmul.mubr.f32.gmra.mrb[0].mxu0 %v2887
      %v3061 = vpop.f32.mrb[0].mxu0
      %v3062 = vadd.f32 0.0, %v3061
      %v3063 = vpop.f32.mrb[0].mxu0
      %3064 = vmatprep.mubr.f32.mxu0 0.0
      %3065 = vmatmul.mubr.f32.gmra.mrb[0].mxu0 %v2890
      %v3066 = vpop.f32.mrb[0].mxu0
      %v3067 = vadd.f32 0.0, %v3066
      %v3068 = vpop.f32.mrb[0].mxu0
      %3069 = vmatprep.mubr.f32.mxu0 0.0
      %3070 = vmatmul.mubr.f32.gmra.mrb[0].mxu0 %v2893
      %v3071 = vpop.f32.mrb[0].mxu0
      %v3072 = vadd.f32 0.0, %v3071
      %v3073 = vpop.f32.mrb[0].mxu0
      %3074 = vmatprep.mubr.f32.mxu0 0.0
      %3075 = vmatmul.mubr.f32.gmra.mrb[0].mxu0 %v2896
      %v3076 = vpop.f32.mrb[0].mxu0
      %v3077 = vadd.f32 0.0, %v3076
      %v3078 = vpop.f32.mrb[0].mxu0
      %3079 = vmatprep.mubr.f32.mxu0 0.0
      %3080 = vmatmul.mubr.f32.gmra.mrb[0].mxu0 %v2899
      %v3081 = vpop.f32.mrb[0].mxu0
      %v3082 = vadd.f32 0.0, %v3081
      %v3083 = vpop.f32.mrb[0].mxu0
      %3084 = vmatprep.mubr.f32.mxu0 0.0
      %3085 = vmatmul.mubr.f32.gmra.mrb[0].mxu0 %v2902
      %v3086 = vpop.f32.mrb[0].mxu0
      %v3087 = vadd.f32 0.0, %v3086
      %v3088 = vpop.f32.mrb[0].mxu0
      %3089 = vmatprep.mubr.f32.mxu0 0.0
      %3090 = vmatmul.mubr.f32.gmra.mrb[0].mxu0 %v2905
      %v3091 = vpop.f32.mrb[0].mxu0
      %v3092 = vadd.f32 0.0, %v3091
      %v3093 = vpop.f32.mrb[0].mxu0
      %3094 = vmatprep.mubr.f32.mxu0 0.0
      %3095 = vmatmul.mubr.f32.gmra.mrb[0].mxu0 %v2908
      %v3096 = vpop.f32.mrb[0].mxu0
      %v3097 = vadd.f32 0.0, %v3096
      %v3098 = vpop.f32.mrb[0].mxu0
      %3099 = vmatprep.mubr.f32.mxu0 0.0
      %3100 = vmatmul.mubr.f32.gmra.mrb[0].mxu0 %v2911
      %v3101 = vpop.f32.mrb[0].mxu0
      %v3102 = vadd.f32 0.0, %v3101
      %v3103 = vpop.f32.mrb[0].mxu0
      %3104 = vmatprep.mubr.f32.mxu0 0.0
      %3105 = vmatmul.mubr.f32.gmra.mrb[0].mxu0 %v2914
      %v3106 = vpop.f32.mrb[0].mxu0
      %v3107 = vadd.f32 0.0, %v3106
      %v3108 = vpop.f32.mrb[0].mxu0
      %3109 = vmatprep.mubr.f32.mxu0 0.0
      %3110 = vmatmul.mubr.f32.gmra.mrb[0].mxu0 %v2917
      %v3111 = vpop.f32.mrb[0].mxu0
      %v3112 = vadd.f32 0.0, %v3111
      %v3113 = vpop.f32.mrb[0].mxu0
      %3114 = vmatprep.mubr.f32.mxu0 0.0
      %3115 = vmatmul.mubr.f32.gmra.mrb[0].mxu0 %v2920
      %v3116 = vpop.f32.mrb[0].mxu0
      %v3117 = vadd.f32 0.0, %v3116
      %v3118 = vpop.f32.mrb[0].mxu0
      %3119 = vmatprep.mubr.f32.mxu0 0.0
      %3120 = vmatmul.mubr.f32.gmra.mrb[0].mxu0 %v2923
      %v3121 = vpop.f32.mrb[0].mxu0
      %v3122 = vadd.f32 0.0, %v3121
      %v3123 = vpop.f32.mrb[0].mxu0
      %3124 = vmatprep.mubr.f32.mxu0 0.0
      %3125 = vmatmul.mubr.f32.gmra.mrb[0].mxu0 %v2926
      %v3126 = vpop.f32.mrb[0].mxu0
      %v3127 = vadd.f32 0.0, %v3126
      %v3128 = vpop.f32.mrb[0].mxu0
      %3129 = vmatprep.mubr.f32.mxu0 0.0
      %3130 = vmatmul.mubr.f32.gmra.mrb[0].mxu0 %v2929
      %v3131 = vpop.f32.mrb[0].mxu0
      %v3132 = vadd.f32 0.0, %v3131
      %v3133 = vpop.f32.mrb[0].mxu0
      %3134 = vmatprep.mubr.f32.mxu0 0.0
      %3135 = vmatmul.mubr.f32.gmra.mrb[0].mxu0 %v2932
      %v3136 = vpop.f32.mrb[0].mxu0
      %v3137 = vadd.f32 0.0, %v3136
      %v3138 = vpop.f32.mrb[0].mxu0
      %3139 = vmatprep.mubr.f32.mxu0 0.0
      %3140 = vmatmul.mubr.f32.gmra.mrb[0].mxu0 %v2935
      %v3141 = vpop.f32.mrb[0].mxu0
      %v3142 = vadd.f32 0.0, %v3141
      %v3143 = vpop.f32.mrb[0].mxu0
      %3144 = vmatprep.mubr.f32.mxu0 0.0
      %3145 = vmatmul.mubr.f32.gmra.mrb[0].mxu0 %v2938
      %v3146 = vpop.f32.mrb[0].mxu0
      %v3147 = vadd.f32 0.0, %v3146
      %v3148 = vpop.f32.mrb[0].mxu0
      %3149 = vmatprep.mubr.f32.mxu0 0.0
      %3150 = vmatmul.mubr.f32.gmra.mrb[0].mxu0 %v2941
      %v3151 = vpop.f32.mrb[0].mxu0
      %v3152 = vadd.f32 0.0, %v3151
      %v3153 = vpop.f32.mrb[0].mxu0
      %3154 = vmatprep.mubr.f32.mxu0 0.0
      %3155 = vmatmul.mubr.f32.gmra.mrb[0].mxu0 %v2944
      %v3156 = vpop.f32.mrb[0].mxu0
      %v3157 = vadd.f32 0.0, %v3156
      %v3158 = vpop.f32.mrb[0].mxu0
      %3159 = vmatprep.mubr.f32.mxu0 0.0
      %3160 = vmatmul.mubr.f32.gmra.mrb[0].mxu0 %v2947
      %v3161 = vpop.f32.mrb[0].mxu0
      %v3162 = vadd.f32 0.0, %v3161
      %v3163 = vpop.f32.mrb[0].mxu0
      %3164 = vmatprep.mubr.f32.mxu0 0.0
      %3165 = vmatmul.mubr.f32.gmra.mrb[0].mxu0 %v2950
      %v3166 = vpop.f32.mrb[0].mxu0
      %v3167 = vadd.f32 0.0, %v3166
      %v3168 = vpop.f32.mrb[0].mxu0
      %3169 = vmatprep.mubr.f32.mxu0 0.0
      %3170 = vmatmul.mubr.f32.gmra.mrb[0].mxu0 %v2953
      %v3171 = vpop.f32.mrb[0].mxu0
      %v3172 = vadd.f32 0.0, %v3171
      %v3173 = vpop.f32.mrb[0].mxu0
      %3174 = vmatprep.mubr.f32.mxu0 0.0
      %3175 = vmatmul.mubr.f32.gmra.mrb[0].mxu0 %v2956
      %v3176 = vpop.f32.mrb[0].mxu0
      %v3177 = vadd.f32 0.0, %v3176
      %v3178 = vpop.f32.mrb[0].mxu0
      %3179 = vmatprep.mubr.f32.mxu0 0.0
      %3180 = vmatmul.mubr.f32.gmra.mrb[0].mxu0 %v2959
      %v3181 = vpop.f32.mrb[0].mxu0
      %v3182 = vadd.f32 0.0, %v3181
      %v3183 = vpop.f32.mrb[0].mxu0
      %3184 = vmatprep.mubr.f32.mxu0 0.0
      %3185 = vmatmul.mubr.f32.gmra.mrb[0].mxu0 %v2962
      %v3186 = vpop.f32.mrb[0].mxu0
      %v3187 = vadd.f32 0.0, %v3186
      %v3188 = vpop.f32.mrb[0].mxu0
      %3189 = vmatprep.mubr.f32.mxu0 0.0
      %3190 = vmatmul.mubr.f32.gmra.mrb[0].mxu0 %v2965
      %v3191 = vpop.f32.mrb[0].mxu0
      %v3192 = vadd.f32 0.0, %v3191
      %v3193 = vpop.f32.mrb[0].mxu0
      %3194 = vdwg.mxu0
      %v3195 = vadd.f32 %v2804, %v3037
      %v3196 = vadd.f32 %v2805, %v3042
      %v3197 = vadd.f32 %v2806, %v3047
      %v3198 = vadd.f32 %v2807, %v3052
      %v3199 = vadd.f32 %v2808, %v3057
      %v3200 = vadd.f32 %v2809, %v3062
      %v3201 = vadd.f32 %v2810, %v3067
      %v3202 = vadd.f32 %v2811, %v3072
      %v3203 = vadd.f32 %v2812, %v3077
      %v3204 = vadd.f32 %v2813, %v3082
      %v3205 = vadd.f32 %v2814, %v3087
      %v3206 = vadd.f32 %v2815, %v3092
      %v3207 = vadd.f32 %v2816, %v3097
      %v3208 = vadd.f32 %v2817, %v3102
      %v3209 = vadd.f32 %v2818, %v3107
      %v3210 = vadd.f32 %v2819, %v3112
      %v3211 = vadd.f32 %v2820, %v3117
      %v3212 = vadd.f32 %v2821, %v3122
      %v3213 = vadd.f32 %v2822, %v3127
      %v3214 = vadd.f32 %v2823, %v3132
      %v3215 = vadd.f32 %v2824, %v3137
      %v3216 = vadd.f32 %v2825, %v3142
      %v3217 = vadd.f32 %v2826, %v3147
      %v3218 = vadd.f32 %v2827, %v3152
      %v3219 = vadd.f32 %v2828, %v3157
      %v3220 = vadd.f32 %v2829, %v3162
      %v3221 = vadd.f32 %v2830, %v3167
      %v3222 = vadd.f32 %v2831, %v3172
      %v3223 = vadd.f32 %v2832, %v3177
      %v3224 = vadd.f32 %v2833, %v3182
      %v3225 = vadd.f32 %v2834, %v3187
      %v3226 = vadd.f32 %v2835, %v3192
      %v3227 = vld [vmem:[%s2836 + $0x1] sm:$0xff]
      %v3228 = vld [vmem:[%s2836 + $0x9] sm:$0xff]
      %v3229 = vld [vmem:[%s2836 + $0x19] sm:$0xff]
      %v3230 = vld [vmem:[%s2836 + $0x21] sm:$0xff]
      %v3231 = vld [vmem:[%s2836 + $0x31] sm:$0xff]
      %v3232 = vld [vmem:[%s2836 + $0x39] sm:$0xff]
      %v3233 = vld [vmem:[%s2836 + $0x49] sm:$0xff]
      %v3234 = vld [vmem:[%s2836 + $0x51] sm:$0xff]
      %v3235 = vld [vmem:[%s2836 + $0x61] sm:$0xff]
      %v3236 = vld [vmem:[%s2836 + $0x69] sm:$0xff]
      %v3237 = vld [vmem:[%s2836 + $0x79] sm:$0xff]
      %v3238 = vld [vmem:[%s2836 + $0x81] sm:$0xff]
      %v3239 = vld [vmem:[%s2836 + $0x91] sm:$0xff]
      %v3240 = vld [vmem:[%s2836 + $0x99] sm:$0xff]
      %v3241 = vld [vmem:[%s2836 + $0xa9] sm:$0xff]
      %v3242 = vld [vmem:[%s2836 + $0xb1] sm:$0xff]
      %v3243 = vld [vmem:[%s2836 + $0xc1] sm:$0xff]
      %v3244 = vld [vmem:[%s2836 + $0xc9] sm:$0xff]
      %v3245 = vld [vmem:[%s2836 + $0xd9] sm:$0xff]
      %v3246 = vld [vmem:[%s2836 + $0xe1] sm:$0xff]
      %v3247 = vld [vmem:[%s2836 + $0xf1] sm:$0xff]
      %v3248 = vld [vmem:[%s2836 + $0xf9] sm:$0xff]
      %v3249 = vld [vmem:[%s2836 + $0x109] sm:$0xff]
      %v3250 = vld [vmem:[%s2836 + $0x111] sm:$0xff]
      %v3251 = vld [vmem:[%s2836 + $0x121] sm:$0xff]
      %v3252 = vld [vmem:[%s2836 + $0x129] sm:$0xff]
      %v3253 = vld [vmem:[%s2836 + $0x139] sm:$0xff]
      %v3254 = vld [vmem:[%s2836 + $0x141] sm:$0xff]
      %v3255 = vld [vmem:[%s2836 + $0x151] sm:$0xff]
      %v3256 = vld [vmem:[%s2836 + $0x159] sm:$0xff]
      %v3257 = vld [vmem:[%s2836 + $0x169] sm:$0xff]
      %v3258 = vld [vmem:[%s2836 + $0x171] sm:$0xff]
      %s3259 = scalar_lea.vmem %s2, 28
      %v3260 = vld [vmem:[%s3259] sm:$0xf]
      %v3262 = vsel %vm527, %v3227, 0
      %v3265 = vsel %vm527, %v3228, 0
      %v3268 = vsel %vm527, %v3229, 0
      %v3271 = vsel %vm527, %v3230, 0
      %v3274 = vsel %vm527, %v3231, 0
      %v3277 = vsel %vm527, %v3232, 0
      %v3280 = vsel %vm527, %v3233, 0
      %v3283 = vsel %vm527, %v3234, 0
      %v3286 = vsel %vm527, %v3235, 0
      %v3289 = vsel %vm527, %v3236, 0
      %v3292 = vsel %vm527, %v3237, 0
      %v3295 = vsel %vm527, %v3238, 0
      %v3298 = vsel %vm527, %v3239, 0
      %v3301 = vsel %vm527, %v3240, 0
      %v3304 = vsel %vm527, %v3241, 0
      %v3307 = vsel %vm527, %v3242, 0
      %v3310 = vsel %vm527, %v3243, 0
      %v3313 = vsel %vm527, %v3244, 0
      %v3316 = vsel %vm527, %v3245, 0
      %v3319 = vsel %vm527, %v3246, 0
      %v3322 = vsel %vm527, %v3247, 0
      %v3325 = vsel %vm527, %v3248, 0
      %v3328 = vsel %vm527, %v3249, 0
      %v3331 = vsel %vm527, %v3250, 0
      %v3334 = vsel %vm527, %v3251, 0
      %v3337 = vsel %vm527, %v3252, 0
      %v3340 = vsel %vm527, %v3253, 0
      %v3343 = vsel %vm527, %v3254, 0
      %v3346 = vsel %vm527, %v3255, 0
      %v3349 = vsel %vm527, %v3256, 0
      %v3352 = vsel %vm527, %v3257, 0
      %v3355 = vsel %vm527, %v3258, 0
      %v3358 = vsel %vm624, %v3260, 0
      %3360 = vmatprep.subr.mxu0 0.0
      %3361 = vmatpush1.msra.mxu0 %v3358
      %3362 = vmatprep.subr.mxu0 0.0
      %3363 = vmatpush1.msra.mxu0 0.0
      %3364 = vmatprep.subr.mxu0 0.0
      %3365 = vmatpush1.msra.mxu0 0.0
      %3366 = vmatprep.subr.mxu0 0.0
      %3367 = vmatpush1.msra.mxu0 0.0
      %3368 = vmatprep.subr.mxu0 0.0
      %3369 = vmatpush1.msra.mxu0 0.0
      %3370 = vmatprep.subr.mxu0 0.0
      %3371 = vmatpush1.msra.mxu0 0.0
      %3372 = vmatprep.subr.mxu0 0.0
      %3373 = vmatpush1.msra.mxu0 0.0
      %3374 = vmatprep.subr.mxu0 0.0
      %3375 = vmatpush1.msra.mxu0 0.0
      %3376 = vmatprep.subr.mxu0 0.0
      %3377 = vmatpush1.msra.mxu0 0.0
      %3378 = vmatprep.subr.mxu0 0.0
      %3379 = vmatpush1.msra.mxu0 0.0
      %3380 = vmatprep.subr.mxu0 0.0
      %3381 = vmatpush1.msra.mxu0 0.0
      %3382 = vmatprep.subr.mxu0 0.0
      %3383 = vmatpush1.msra.mxu0 0.0
      %3384 = vmatprep.subr.mxu0 0.0
      %3385 = vmatpush1.msra.mxu0 0.0
      %3386 = vmatprep.subr.mxu0 0.0
      %3387 = vmatpush1.msra.mxu0 0.0
      %3388 = vmatprep.subr.mxu0 0.0
      %3389 = vmatpush1.msra.mxu0 0.0
      %3390 = vmatprep.subr.mxu0 0.0
      %3391 = vmatpush1.msra.mxu0 0.0
      %3392 = vmatprep.subr.mxu0 0.0
      %3393 = vmatpush1.msra.mxu0 0.0
      %3394 = vmatprep.subr.mxu0 0.0
      %3395 = vmatpush1.msra.mxu0 0.0
      %3396 = vmatprep.subr.mxu0 0.0
      %3397 = vmatpush1.msra.mxu0 0.0
      %3398 = vmatprep.subr.mxu0 0.0
      %3399 = vmatpush1.msra.mxu0 0.0
      %3400 = vmatprep.subr.mxu0 0.0
      %3401 = vmatpush1.msra.mxu0 0.0
      %3402 = vmatprep.subr.mxu0 0.0
      %3403 = vmatpush1.msra.mxu0 0.0
      %3404 = vmatprep.subr.mxu0 0.0
      %3405 = vmatpush1.msra.mxu0 0.0
      %3406 = vmatprep.subr.mxu0 0.0
      %3407 = vmatpush1.msra.mxu0 0.0
      %3408 = vmatprep.subr.mxu0 0.0
      %3409 = vmatpush1.msra.mxu0 0.0
      %3410 = vmatprep.subr.mxu0 0.0
      %3411 = vmatpush1.msra.mxu0 0.0
      %3412 = vmatprep.subr.mxu0 0.0
      %3413 = vmatpush1.msra.mxu0 0.0
      %3414 = vmatprep.subr.mxu0 0.0
      %3415 = vmatpush1.msra.mxu0 0.0
      %3416 = vmatprep.subr.mxu0 0.0
      %3417 = vmatpush1.msra.mxu0 0.0
      %3418 = vmatprep.subr.mxu0 0.0
      %3419 = vmatpush1.msra.mxu0 0.0
      %3420 = vmatprep.subr.mxu0 0.0
      %3421 = vmatpush1.msra.mxu0 0.0
      %3422 = vmatprep.subr.mxu0 0.0
      %3423 = vmatpush1.msra.mxu0 0.0
      %3424 = vmatprep.mubr.f32.mxu0 0.0
      %3425 = vmatmul.mubr.f32.gmra.mrb[0].mxu0 %v3262
      %v3426 = vpop.f32.mrb[0].mxu0
      %v3427 = vadd.f32 0.0, %v3426
      %v3428 = vpop.f32.mrb[0].mxu0
      %3429 = vmatprep.mubr.f32.mxu0 0.0
      %3430 = vmatmul.mubr.f32.gmra.mrb[0].mxu0 %v3265
      %v3431 = vpop.f32.mrb[0].mxu0
      %v3432 = vadd.f32 0.0, %v3431
      %v3433 = vpop.f32.mrb[0].mxu0
      %3434 = vmatprep.mubr.f32.mxu0 0.0
      %3435 = vmatmul.mubr.f32.gmra.mrb[0].mxu0 %v3268
      %v3436 = vpop.f32.mrb[0].mxu0
      %v3437 = vadd.f32 0.0, %v3436
      %v3438 = vpop.f32.mrb[0].mxu0
      %3439 = vmatprep.mubr.f32.mxu0 0.0
      %3440 = vmatmul.mubr.f32.gmra.mrb[0].mxu0 %v3271
      %v3441 = vpop.f32.mrb[0].mxu0
      %v3442 = vadd.f32 0.0, %v3441
      %v3443 = vpop.f32.mrb[0].mxu0
      %3444 = vmatprep.mubr.f32.mxu0 0.0
      %3445 = vmatmul.mubr.f32.gmra.mrb[0].mxu0 %v3274
      %v3446 = vpop.f32.mrb[0].mxu0
      %v3447 = vadd.f32 0.0, %v3446
      %v3448 = vpop.f32.mrb[0].mxu0
      %3449 = vmatprep.mubr.f32.mxu0 0.0
      %3450 = vmatmul.mubr.f32.gmra.mrb[0].mxu0 %v3277
      %v3451 = vpop.f32.mrb[0].mxu0
      %v3452 = vadd.f32 0.0, %v3451
      %v3453 = vpop.f32.mrb[0].mxu0
      %3454 = vmatprep.mubr.f32.mxu0 0.0
      %3455 = vmatmul.mubr.f32.gmra.mrb[0].mxu0 %v3280
      %v3456 = vpop.f32.mrb[0].mxu0
      %v3457 = vadd.f32 0.0, %v3456
      %v3458 = vpop.f32.mrb[0].mxu0
      %3459 = vmatprep.mubr.f32.mxu0 0.0
      %3460 = vmatmul.mubr.f32.gmra.mrb[0].mxu0 %v3283
      %v3461 = vpop.f32.mrb[0].mxu0
      %v3462 = vadd.f32 0.0, %v3461
      %v3463 = vpop.f32.mrb[0].mxu0
      %3464 = vmatprep.mubr.f32.mxu0 0.0
      %3465 = vmatmul.mubr.f32.gmra.mrb[0].mxu0 %v3286
      %v3466 = vpop.f32.mrb[0].mxu0
      %v3467 = vadd.f32 0.0, %v3466
      %v3468 = vpop.f32.mrb[0].mxu0
      %3469 = vmatprep.mubr.f32.mxu0 0.0
      %3470 = vmatmul.mubr.f32.gmra.mrb[0].mxu0 %v3289
      %v3471 = vpop.f32.mrb[0].mxu0
      %v3472 = vadd.f32 0.0, %v3471
      %v3473 = vpop.f32.mrb[0].mxu0
      %3474 = vmatprep.mubr.f32.mxu0 0.0
      %3475 = vmatmul.mubr.f32.gmra.mrb[0].mxu0 %v3292
      %v3476 = vpop.f32.mrb[0].mxu0
      %v3477 = vadd.f32 0.0, %v3476
      %v3478 = vpop.f32.mrb[0].mxu0
      %3479 = vmatprep.mubr.f32.mxu0 0.0
      %3480 = vmatmul.mubr.f32.gmra.mrb[0].mxu0 %v3295
      %v3481 = vpop.f32.mrb[0].mxu0
      %v3482 = vadd.f32 0.0, %v3481
      %v3483 = vpop.f32.mrb[0].mxu0
      %3484 = vmatprep.mubr.f32.mxu0 0.0
      %3485 = vmatmul.mubr.f32.gmra.mrb[0].mxu0 %v3298
      %v3486 = vpop.f32.mrb[0].mxu0
      %v3487 = vadd.f32 0.0, %v3486
      %v3488 = vpop.f32.mrb[0].mxu0
      %3489 = vmatprep.mubr.f32.mxu0 0.0
      %3490 = vmatmul.mubr.f32.gmra.mrb[0].mxu0 %v3301
      %v3491 = vpop.f32.mrb[0].mxu0
      %v3492 = vadd.f32 0.0, %v3491
      %v3493 = vpop.f32.mrb[0].mxu0
      %3494 = vmatprep.mubr.f32.mxu0 0.0
      %3495 = vmatmul.mubr.f32.gmra.mrb[0].mxu0 %v3304
      %v3496 = vpop.f32.mrb[0].mxu0
      %v3497 = vadd.f32 0.0, %v3496
      %v3498 = vpop.f32.mrb[0].mxu0
      %3499 = vmatprep.mubr.f32.mxu0 0.0
      %3500 = vmatmul.mubr.f32.gmra.mrb[0].mxu0 %v3307
      %v3501 = vpop.f32.mrb[0].mxu0
      %v3502 = vadd.f32 0.0, %v3501
      %v3503 = vpop.f32.mrb[0].mxu0
      %3504 = vmatprep.mubr.f32.mxu0 0.0
      %3505 = vmatmul.mubr.f32.gmra.mrb[0].mxu0 %v3310
      %v3506 = vpop.f32.mrb[0].mxu0
      %v3507 = vadd.f32 0.0, %v3506
      %v3508 = vpop.f32.mrb[0].mxu0
      %3509 = vmatprep.mubr.f32.mxu0 0.0
      %3510 = vmatmul.mubr.f32.gmra.mrb[0].mxu0 %v3313
      %v3511 = vpop.f32.mrb[0].mxu0
      %v3512 = vadd.f32 0.0, %v3511
      %v3513 = vpop.f32.mrb[0].mxu0
      %3514 = vmatprep.mubr.f32.mxu0 0.0
      %3515 = vmatmul.mubr.f32.gmra.mrb[0].mxu0 %v3316
      %v3516 = vpop.f32.mrb[0].mxu0
      %v3517 = vadd.f32 0.0, %v3516
      %v3518 = vpop.f32.mrb[0].mxu0
      %3519 = vmatprep.mubr.f32.mxu0 0.0
      %3520 = vmatmul.mubr.f32.gmra.mrb[0].mxu0 %v3319
      %v3521 = vpop.f32.mrb[0].mxu0
      %v3522 = vadd.f32 0.0, %v3521
      %v3523 = vpop.f32.mrb[0].mxu0
      %3524 = vmatprep.mubr.f32.mxu0 0.0
      %3525 = vmatmul.mubr.f32.gmra.mrb[0].mxu0 %v3322
      %v3526 = vpop.f32.mrb[0].mxu0
      %v3527 = vadd.f32 0.0, %v3526
      %v3528 = vpop.f32.mrb[0].mxu0
      %3529 = vmatprep.mubr.f32.mxu0 0.0
      %3530 = vmatmul.mubr.f32.gmra.mrb[0].mxu0 %v3325
      %v3531 = vpop.f32.mrb[0].mxu0
      %v3532 = vadd.f32 0.0, %v3531
      %v3533 = vpop.f32.mrb[0].mxu0
      %3534 = vmatprep.mubr.f32.mxu0 0.0
      %3535 = vmatmul.mubr.f32.gmra.mrb[0].mxu0 %v3328
      %v3536 = vpop.f32.mrb[0].mxu0
      %v3537 = vadd.f32 0.0, %v3536
      %v3538 = vpop.f32.mrb[0].mxu0
      %3539 = vmatprep.mubr.f32.mxu0 0.0
      %3540 = vmatmul.mubr.f32.gmra.mrb[0].mxu0 %v3331
      %v3541 = vpop.f32.mrb[0].mxu0
      %v3542 = vadd.f32 0.0, %v3541
      %v3543 = vpop.f32.mrb[0].mxu0
      %3544 = vmatprep.mubr.f32.mxu0 0.0
      %3545 = vmatmul.mubr.f32.gmra.mrb[0].mxu0 %v3334
      %v3546 = vpop.f32.mrb[0].mxu0
      %v3547 = vadd.f32 0.0, %v3546
      %v3548 = vpop.f32.mrb[0].mxu0
      %3549 = vmatprep.mubr.f32.mxu0 0.0
      %3550 = vmatmul.mubr.f32.gmra.mrb[0].mxu0 %v3337
      %v3551 = vpop.f32.mrb[0].mxu0
      %v3552 = vadd.f32 0.0, %v3551
      %v3553 = vpop.f32.mrb[0].mxu0
      %3554 = vmatprep.mubr.f32.mxu0 0.0
      %3555 = vmatmul.mubr.f32.gmra.mrb[0].mxu0 %v3340
      %v3556 = vpop.f32.mrb[0].mxu0
      %v3557 = vadd.f32 0.0, %v3556
      %v3558 = vpop.f32.mrb[0].mxu0
      %3559 = vmatprep.mubr.f32.mxu0 0.0
      %3560 = vmatmul.mubr.f32.gmra.mrb[0].mxu0 %v3343
      %v3561 = vpop.f32.mrb[0].mxu0
      %v3562 = vadd.f32 0.0, %v3561
      %v3563 = vpop.f32.mrb[0].mxu0
      %3564 = vmatprep.mubr.f32.mxu0 0.0
      %3565 = vmatmul.mubr.f32.gmra.mrb[0].mxu0 %v3346
      %v3566 = vpop.f32.mrb[0].mxu0
      %v3567 = vadd.f32 0.0, %v3566
      %v3568 = vpop.f32.mrb[0].mxu0
      %3569 = vmatprep.mubr.f32.mxu0 0.0
      %3570 = vmatmul.mubr.f32.gmra.mrb[0].mxu0 %v3349
      %v3571 = vpop.f32.mrb[0].mxu0
      %v3572 = vadd.f32 0.0, %v3571
      %v3573 = vpop.f32.mrb[0].mxu0
      %3574 = vmatprep.mubr.f32.mxu0 0.0
      %3575 = vmatmul.mubr.f32.gmra.mrb[0].mxu0 %v3352
      %v3576 = vpop.f32.mrb[0].mxu0
      %v3577 = vadd.f32 0.0, %v3576
      %v3578 = vpop.f32.mrb[0].mxu0
      %3579 = vmatprep.mubr.f32.mxu0 0.0
      %3580 = vmatmul.mubr.f32.gmra.mrb[0].mxu0 %v3355
      %v3581 = vpop.f32.mrb[0].mxu0
      %v3582 = vadd.f32 0.0, %v3581
      %v3583 = vpop.f32.mrb[0].mxu0
      %3584 = vdwg.mxu0
      %v3585 = vadd.f32 %v3195, %v3427
      %v3586 = vadd.f32 %v3196, %v3432
      %v3587 = vadd.f32 %v3197, %v3437
      %v3588 = vadd.f32 %v3198, %v3442
      %v3589 = vadd.f32 %v3199, %v3447
      %v3590 = vadd.f32 %v3200, %v3452
      %v3591 = vadd.f32 %v3201, %v3457
      %v3592 = vadd.f32 %v3202, %v3462
      %v3593 = vadd.f32 %v3203, %v3467
      %v3594 = vadd.f32 %v3204, %v3472
      %v3595 = vadd.f32 %v3205, %v3477
      %v3596 = vadd.f32 %v3206, %v3482
      %v3597 = vadd.f32 %v3207, %v3487
      %v3598 = vadd.f32 %v3208, %v3492
      %v3599 = vadd.f32 %v3209, %v3497
      %v3600 = vadd.f32 %v3210, %v3502
      %v3601 = vadd.f32 %v3211, %v3507
      %v3602 = vadd.f32 %v3212, %v3512
      %v3603 = vadd.f32 %v3213, %v3517
      %v3604 = vadd.f32 %v3214, %v3522
      %v3605 = vadd.f32 %v3215, %v3527
      %v3606 = vadd.f32 %v3216, %v3532
      %v3607 = vadd.f32 %v3217, %v3537
      %v3608 = vadd.f32 %v3218, %v3542
      %v3609 = vadd.f32 %v3219, %v3547
      %v3610 = vadd.f32 %v3220, %v3552
      %v3611 = vadd.f32 %v3221, %v3557
      %v3612 = vadd.f32 %v3222, %v3562
      %v3613 = vadd.f32 %v3223, %v3567
      %v3614 = vadd.f32 %v3224, %v3572
      %v3615 = vadd.f32 %v3225, %v3577
      %v3616 = vadd.f32 %v3226, %v3582
      %v3617 = vld [vmem:[%s2836 + $0x2] sm:$0xff]
      %v3618 = vld [vmem:[%s2836 + $0xa] sm:$0xff]
      %v3619 = vld [vmem:[%s2836 + $0x1a] sm:$0xff]
      %v3620 = vld [vmem:[%s2836 + $0x22] sm:$0xff]
      %v3621 = vld [vmem:[%s2836 + $0x32] sm:$0xff]
      %v3622 = vld [vmem:[%s2836 + $0x3a] sm:$0xff]
      %v3623 = vld [vmem:[%s2836 + $0x4a] sm:$0xff]
      %v3624 = vld [vmem:[%s2836 + $0x52] sm:$0xff]
      %v3625 = vld [vmem:[%s2836 + $0x62] sm:$0xff]
      %v3626 = vld [vmem:[%s2836 + $0x6a] sm:$0xff]
      %v3627 = vld [vmem:[%s2836 + $0x7a] sm:$0xff]
      %v3628 = vld [vmem:[%s2836 + $0x82] sm:$0xff]
      %v3629 = vld [vmem:[%s2836 + $0x92] sm:$0xff]
      %v3630 = vld [vmem:[%s2836 + $0x9a] sm:$0xff]
      %v3631 = vld [vmem:[%s2836 + $0xaa] sm:$0xff]
      %v3632 = vld [vmem:[%s2836 + $0xb2] sm:$0xff]
      %v3633 = vld [vmem:[%s2836 + $0xc2] sm:$0xff]
      %v3634 = vld [vmem:[%s2836 + $0xca] sm:$0xff]
      %v3635 = vld [vmem:[%s2836 + $0xda] sm:$0xff]
      %v3636 = vld [vmem:[%s2836 + $0xe2] sm:$0xff]
      %v3637 = vld [vmem:[%s2836 + $0xf2] sm:$0xff]
      %v3638 = vld [vmem:[%s2836 + $0xfa] sm:$0xff]
      %v3639 = vld [vmem:[%s2836 + $0x10a] sm:$0xff]
      %v3640 = vld [vmem:[%s2836 + $0x112] sm:$0xff]
      %v3641 = vld [vmem:[%s2836 + $0x122] sm:$0xff]
      %v3642 = vld [vmem:[%s2836 + $0x12a] sm:$0xff]
      %v3643 = vld [vmem:[%s2836 + $0x13a] sm:$0xff]
      %v3644 = vld [vmem:[%s2836 + $0x142] sm:$0xff]
      %v3645 = vld [vmem:[%s2836 + $0x152] sm:$0xff]
      %v3646 = vld [vmem:[%s2836 + $0x15a] sm:$0xff]
      %v3647 = vld [vmem:[%s2836 + $0x16a] sm:$0xff]
      %v3648 = vld [vmem:[%s2836 + $0x172] sm:$0xff]
      %s3649 = scalar_lea.vmem %s2, 32
      %v3650 = vld [vmem:[%s3649] sm:$0xf]
      %v3652 = vsel %vm527, %v3617, 0
      %v3655 = vsel %vm527, %v3618, 0
      %v3658 = vsel %vm527, %v3619, 0
      %v3661 = vsel %vm527, %v3620, 0
      %v3664 = vsel %vm527, %v3621, 0
      %v3667 = vsel %vm527, %v3622, 0
      %v3670 = vsel %vm527, %v3623, 0
      %v3673 = vsel %vm527, %v3624, 0
      %v3676 = vsel %vm527, %v3625, 0
      %v3679 = vsel %vm527, %v3626, 0
      %v3682 = vsel %vm527, %v3627, 0
      %v3685 = vsel %vm527, %v3628, 0
      %v3688 = vsel %vm527, %v3629, 0
      %v3691 = vsel %vm527, %v3630, 0
      %v3694 = vsel %vm527, %v3631, 0
      %v3697 = vsel %vm527, %v3632, 0
      %v3700 = vsel %vm527, %v3633, 0
      %v3703 = vsel %vm527, %v3634, 0
      %v3706 = vsel %vm527, %v3635, 0
      %v3709 = vsel %vm527, %v3636, 0
      %v3712 = vsel %vm527, %v3637, 0
      %v3715 = vsel %vm527, %v3638, 0
      %v3718 = vsel %vm527, %v3639, 0
      %v3721 = vsel %vm527, %v3640, 0
      %v3724 = vsel %vm527, %v3641, 0
      %v3727 = vsel %vm527, %v3642, 0
      %v3730 = vsel %vm527, %v3643, 0
      %v3733 = vsel %vm527, %v3644, 0
      %v3736 = vsel %vm527, %v3645, 0
      %v3739 = vsel %vm527, %v3646, 0
      %v3742 = vsel %vm527, %v3647, 0
      %v3745 = vsel %vm527, %v3648, 0
      %v3748 = vsel %vm624, %v3650, 0
      %3750 = vmatprep.subr.mxu0 0.0
      %3751 = vmatpush1.msra.mxu0 %v3748
      %3752 = vmatprep.subr.mxu0 0.0
      %3753 = vmatpush1.msra.mxu0 0.0
      %3754 = vmatprep.subr.mxu0 0.0
      %3755 = vmatpush1.msra.mxu0 0.0
      %3756 = vmatprep.subr.mxu0 0.0
      %3757 = vmatpush1.msra.mxu0 0.0
      %3758 = vmatprep.subr.mxu0 0.0
      %3759 = vmatpush1.msra.mxu0 0.0
      %3760 = vmatprep.subr.mxu0 0.0
      %3761 = vmatpush1.msra.mxu0 0.0
      %3762 = vmatprep.subr.mxu0 0.0
      %3763 = vmatpush1.msra.mxu0 0.0
      %3764 = vmatprep.subr.mxu0 0.0
      %3765 = vmatpush1.msra.mxu0 0.0
      %3766 = vmatprep.subr.mxu0 0.0
      %3767 = vmatpush1.msra.mxu0 0.0
      %3768 = vmatprep.subr.mxu0 0.0
      %3769 = vmatpush1.msra.mxu0 0.0
      %3770 = vmatprep.subr.mxu0 0.0
      %3771 = vmatpush1.msra.mxu0 0.0
      %3772 = vmatprep.subr.mxu0 0.0
      %3773 = vmatpush1.msra.mxu0 0.0
      %3774 = vmatprep.subr.mxu0 0.0
      %3775 = vmatpush1.msra.mxu0 0.0
      %3776 = vmatprep.subr.mxu0 0.0
      %3777 = vmatpush1.msra.mxu0 0.0
      %3778 = vmatprep.subr.mxu0 0.0
      %3779 = vmatpush1.msra.mxu0 0.0
      %3780 = vmatprep.subr.mxu0 0.0
      %3781 = vmatpush1.msra.mxu0 0.0
      %3782 = vmatprep.subr.mxu0 0.0
      %3783 = vmatpush1.msra.mxu0 0.0
      %3784 = vmatprep.subr.mxu0 0.0
      %3785 = vmatpush1.msra.mxu0 0.0
      %3786 = vmatprep.subr.mxu0 0.0
      %3787 = vmatpush1.msra.mxu0 0.0
      %3788 = vmatprep.subr.mxu0 0.0
      %3789 = vmatpush1.msra.mxu0 0.0
      %3790 = vmatprep.subr.mxu0 0.0
      %3791 = vmatpush1.msra.mxu0 0.0
      %3792 = vmatprep.subr.mxu0 0.0
      %3793 = vmatpush1.msra.mxu0 0.0
      %3794 = vmatprep.subr.mxu0 0.0
      %3795 = vmatpush1.msra.mxu0 0.0
      %3796 = vmatprep.subr.mxu0 0.0
      %3797 = vmatpush1.msra.mxu0 0.0
      %3798 = vmatprep.subr.mxu0 0.0
      %3799 = vmatpush1.msra.mxu0 0.0
      %3800 = vmatprep.subr.mxu0 0.0
      %3801 = vmatpush1.msra.mxu0 0.0
      %3802 = vmatprep.subr.mxu0 0.0
      %3803 = vmatpush1.msra.mxu0 0.0
      %3804 = vmatprep.subr.mxu0 0.0
      %3805 = vmatpush1.msra.mxu0 0.0
      %3806 = vmatprep.subr.mxu0 0.0
      %3807 = vmatpush1.msra.mxu0 0.0
      %3808 = vmatprep.subr.mxu0 0.0
      %3809 = vmatpush1.msra.mxu0 0.0
      %3810 = vmatprep.subr.mxu0 0.0
      %3811 = vmatpush1.msra.mxu0 0.0
      %3812 = vmatprep.subr.mxu0 0.0
      %3813 = vmatpush1.msra.mxu0 0.0
      %3814 = vmatprep.mubr.f32.mxu0 0.0
      %3815 = vmatmul.mubr.f32.gmra.mrb[0].mxu0 %v3652
      %v3816 = vpop.f32.mrb[0].mxu0
      %v3817 = vadd.f32 0.0, %v3816
      %v3818 = vpop.f32.mrb[0].mxu0
      %3819 = vmatprep.mubr.f32.mxu0 0.0
      %3820 = vmatmul.mubr.f32.gmra.mrb[0].mxu0 %v3655
      %v3821 = vpop.f32.mrb[0].mxu0
      %v3822 = vadd.f32 0.0, %v3821
      %v3823 = vpop.f32.mrb[0].mxu0
      %3824 = vmatprep.mubr.f32.mxu0 0.0
      %3825 = vmatmul.mubr.f32.gmra.mrb[0].mxu0 %v3658
      %v3826 = vpop.f32.mrb[0].mxu0
      %v3827 = vadd.f32 0.0, %v3826
      %v3828 = vpop.f32.mrb[0].mxu0
      %3829 = vmatprep.mubr.f32.mxu0 0.0
      %3830 = vmatmul.mubr.f32.gmra.mrb[0].mxu0 %v3661
      %v3831 = vpop.f32.mrb[0].mxu0
      %v3832 = vadd.f32 0.0, %v3831
      %v3833 = vpop.f32.mrb[0].mxu0
      %3834 = vmatprep.mubr.f32.mxu0 0.0
      %3835 = vmatmul.mubr.f32.gmra.mrb[0].mxu0 %v3664
      %v3836 = vpop.f32.mrb[0].mxu0
      %v3837 = vadd.f32 0.0, %v3836
      %v3838 = vpop.f32.mrb[0].mxu0
      %3839 = vmatprep.mubr.f32.mxu0 0.0
      %3840 = vmatmul.mubr.f32.gmra.mrb[0].mxu0 %v3667
      %v3841 = vpop.f32.mrb[0].mxu0
      %v3842 = vadd.f32 0.0, %v3841
      %v3843 = vpop.f32.mrb[0].mxu0
      %3844 = vmatprep.mubr.f32.mxu0 0.0
      %3845 = vmatmul.mubr.f32.gmra.mrb[0].mxu0 %v3670
      %v3846 = vpop.f32.mrb[0].mxu0
      %v3847 = vadd.f32 0.0, %v3846
      %v3848 = vpop.f32.mrb[0].mxu0
      %3849 = vmatprep.mubr.f32.mxu0 0.0
      %3850 = vmatmul.mubr.f32.gmra.mrb[0].mxu0 %v3673
      %v3851 = vpop.f32.mrb[0].mxu0
      %v3852 = vadd.f32 0.0, %v3851
      %v3853 = vpop.f32.mrb[0].mxu0
      %3854 = vmatprep.mubr.f32.mxu0 0.0
      %3855 = vmatmul.mubr.f32.gmra.mrb[0].mxu0 %v3676
      %v3856 = vpop.f32.mrb[0].mxu0
      %v3857 = vadd.f32 0.0, %v3856
      %v3858 = vpop.f32.mrb[0].mxu0
      %3859 = vmatprep.mubr.f32.mxu0 0.0
      %3860 = vmatmul.mubr.f32.gmra.mrb[0].mxu0 %v3679
      %v3861 = vpop.f32.mrb[0].mxu0
      %v3862 = vadd.f32 0.0, %v3861
      %v3863 = vpop.f32.mrb[0].mxu0
      %3864 = vmatprep.mubr.f32.mxu0 0.0
      %3865 = vmatmul.mubr.f32.gmra.mrb[0].mxu0 %v3682
      %v3866 = vpop.f32.mrb[0].mxu0
      %v3867 = vadd.f32 0.0, %v3866
      %v3868 = vpop.f32.mrb[0].mxu0
      %3869 = vmatprep.mubr.f32.mxu0 0.0
      %3870 = vmatmul.mubr.f32.gmra.mrb[0].mxu0 %v3685
      %v3871 = vpop.f32.mrb[0].mxu0
      %v3872 = vadd.f32 0.0, %v3871
      %v3873 = vpop.f32.mrb[0].mxu0
      %3874 = vmatprep.mubr.f32.mxu0 0.0
      %3875 = vmatmul.mubr.f32.gmra.mrb[0].mxu0 %v3688
      %v3876 = vpop.f32.mrb[0].mxu0
      %v3877 = vadd.f32 0.0, %v3876
      %v3878 = vpop.f32.mrb[0].mxu0
      %3879 = vmatprep.mubr.f32.mxu0 0.0
      %3880 = vmatmul.mubr.f32.gmra.mrb[0].mxu0 %v3691
      %v3881 = vpop.f32.mrb[0].mxu0
      %v3882 = vadd.f32 0.0, %v3881
      %v3883 = vpop.f32.mrb[0].mxu0
      %3884 = vmatprep.mubr.f32.mxu0 0.0
      %3885 = vmatmul.mubr.f32.gmra.mrb[0].mxu0 %v3694
      %v3886 = vpop.f32.mrb[0].mxu0
      %v3887 = vadd.f32 0.0, %v3886
      %v3888 = vpop.f32.mrb[0].mxu0
      %3889 = vmatprep.mubr.f32.mxu0 0.0
      %3890 = vmatmul.mubr.f32.gmra.mrb[0].mxu0 %v3697
      %v3891 = vpop.f32.mrb[0].mxu0
      %v3892 = vadd.f32 0.0, %v3891
      %v3893 = vpop.f32.mrb[0].mxu0
      %3894 = vmatprep.mubr.f32.mxu0 0.0
      %3895 = vmatmul.mubr.f32.gmra.mrb[0].mxu0 %v3700
      %v3896 = vpop.f32.mrb[0].mxu0
      %v3897 = vadd.f32 0.0, %v3896
      %v3898 = vpop.f32.mrb[0].mxu0
      %3899 = vmatprep.mubr.f32.mxu0 0.0
      %3900 = vmatmul.mubr.f32.gmra.mrb[0].mxu0 %v3703
      %v3901 = vpop.f32.mrb[0].mxu0
      %v3902 = vadd.f32 0.0, %v3901
      %v3903 = vpop.f32.mrb[0].mxu0
      %3904 = vmatprep.mubr.f32.mxu0 0.0
      %3905 = vmatmul.mubr.f32.gmra.mrb[0].mxu0 %v3706
      %v3906 = vpop.f32.mrb[0].mxu0
      %v3907 = vadd.f32 0.0, %v3906
      %v3908 = vpop.f32.mrb[0].mxu0
      %3909 = vmatprep.mubr.f32.mxu0 0.0
      %3910 = vmatmul.mubr.f32.gmra.mrb[0].mxu0 %v3709
      %v3911 = vpop.f32.mrb[0].mxu0
      %v3912 = vadd.f32 0.0, %v3911
      %v3913 = vpop.f32.mrb[0].mxu0
      %3914 = vmatprep.mubr.f32.mxu0 0.0
      %3915 = vmatmul.mubr.f32.gmra.mrb[0].mxu0 %v3712
      %v3916 = vpop.f32.mrb[0].mxu0
      %v3917 = vadd.f32 0.0, %v3916
      %v3918 = vpop.f32.mrb[0].mxu0
      %3919 = vmatprep.mubr.f32.mxu0 0.0
      %3920 = vmatmul.mubr.f32.gmra.mrb[0].mxu0 %v3715
      %v3921 = vpop.f32.mrb[0].mxu0
      %v3922 = vadd.f32 0.0, %v3921
      %v3923 = vpop.f32.mrb[0].mxu0
      %3924 = vmatprep.mubr.f32.mxu0 0.0
      %3925 = vmatmul.mubr.f32.gmra.mrb[0].mxu0 %v3718
      %v3926 = vpop.f32.mrb[0].mxu0
      %v3927 = vadd.f32 0.0, %v3926
      %v3928 = vpop.f32.mrb[0].mxu0
      %3929 = vmatprep.mubr.f32.mxu0 0.0
      %3930 = vmatmul.mubr.f32.gmra.mrb[0].mxu0 %v3721
      %v3931 = vpop.f32.mrb[0].mxu0
      %v3932 = vadd.f32 0.0, %v3931
      %v3933 = vpop.f32.mrb[0].mxu0
      %3934 = vmatprep.mubr.f32.mxu0 0.0
      %3935 = vmatmul.mubr.f32.gmra.mrb[0].mxu0 %v3724
      %v3936 = vpop.f32.mrb[0].mxu0
      %v3937 = vadd.f32 0.0, %v3936
      %v3938 = vpop.f32.mrb[0].mxu0
      %3939 = vmatprep.mubr.f32.mxu0 0.0
      %3940 = vmatmul.mubr.f32.gmra.mrb[0].mxu0 %v3727
      %v3941 = vpop.f32.mrb[0].mxu0
      %v3942 = vadd.f32 0.0, %v3941
      %v3943 = vpop.f32.mrb[0].mxu0
      %3944 = vmatprep.mubr.f32.mxu0 0.0
      %3945 = vmatmul.mubr.f32.gmra.mrb[0].mxu0 %v3730
      %v3946 = vpop.f32.mrb[0].mxu0
      %v3947 = vadd.f32 0.0, %v3946
      %v3948 = vpop.f32.mrb[0].mxu0
      %3949 = vmatprep.mubr.f32.mxu0 0.0
      %3950 = vmatmul.mubr.f32.gmra.mrb[0].mxu0 %v3733
      %v3951 = vpop.f32.mrb[0].mxu0
      %v3952 = vadd.f32 0.0, %v3951
      %v3953 = vpop.f32.mrb[0].mxu0
      %3954 = vmatprep.mubr.f32.mxu0 0.0
      %3955 = vmatmul.mubr.f32.gmra.mrb[0].mxu0 %v3736
      %v3956 = vpop.f32.mrb[0].mxu0
      %v3957 = vadd.f32 0.0, %v3956
      %v3958 = vpop.f32.mrb[0].mxu0
      %3959 = vmatprep.mubr.f32.mxu0 0.0
      %3960 = vmatmul.mubr.f32.gmra.mrb[0].mxu0 %v3739
      %v3961 = vpop.f32.mrb[0].mxu0
      %v3962 = vadd.f32 0.0, %v3961
      %v3963 = vpop.f32.mrb[0].mxu0
      %3964 = vmatprep.mubr.f32.mxu0 0.0
      %3965 = vmatmul.mubr.f32.gmra.mrb[0].mxu0 %v3742
      %v3966 = vpop.f32.mrb[0].mxu0
      %v3967 = vadd.f32 0.0, %v3966
      %v3968 = vpop.f32.mrb[0].mxu0
      %3969 = vmatprep.mubr.f32.mxu0 0.0
      %3970 = vmatmul.mubr.f32.gmra.mrb[0].mxu0 %v3745
      %v3971 = vpop.f32.mrb[0].mxu0
      %v3972 = vadd.f32 0.0, %v3971
      %v3973 = vpop.f32.mrb[0].mxu0
      %3974 = vdwg.mxu0
      %v3975 = vadd.f32 %v3585, %v3817
      %v3976 = vadd.f32 %v3586, %v3822
      %v3977 = vadd.f32 %v3587, %v3827
      %v3978 = vadd.f32 %v3588, %v3832
      %v3979 = vadd.f32 %v3589, %v3837
      %v3980 = vadd.f32 %v3590, %v3842
      %v3981 = vadd.f32 %v3591, %v3847
      %v3982 = vadd.f32 %v3592, %v3852
      %v3983 = vadd.f32 %v3593, %v3857
      %v3984 = vadd.f32 %v3594, %v3862
      %v3985 = vadd.f32 %v3595, %v3867
      %v3986 = vadd.f32 %v3596, %v3872
      %v3987 = vadd.f32 %v3597, %v3877
      %v3988 = vadd.f32 %v3598, %v3882
      %v3989 = vadd.f32 %v3599, %v3887
      %v3990 = vadd.f32 %v3600, %v3892
      %v3991 = vadd.f32 %v3601, %v3897
      %v3992 = vadd.f32 %v3602, %v3902
      %v3993 = vadd.f32 %v3603, %v3907
      %v3994 = vadd.f32 %v3604, %v3912
      %v3995 = vadd.f32 %v3605, %v3917
      %v3996 = vadd.f32 %v3606, %v3922
      %v3997 = vadd.f32 %v3607, %v3927
      %v3998 = vadd.f32 %v3608, %v3932
      %v3999 = vadd.f32 %v3609, %v3937
      %v4000 = vadd.f32 %v3610, %v3942
      %v4001 = vadd.f32 %v3611, %v3947
      %v4002 = vadd.f32 %v3612, %v3952
      %v4003 = vadd.f32 %v3613, %v3957
      %v4004 = vadd.f32 %v3614, %v3962
      %v4005 = vadd.f32 %v3615, %v3967
      %v4006 = vadd.f32 %v3616, %v3972
      %v4007 = vld [vmem:[#allocation2] sm:$0xff]
      %v4008 = vld [vmem:[#allocation2 + $0x8] sm:$0xff]
      %v4009 = vld [vmem:[#allocation2 + $0x18] sm:$0xff]
      %v4010 = vld [vmem:[#allocation2 + $0x20] sm:$0xff]
      %v4011 = vld [vmem:[#allocation2 + $0x30] sm:$0xff]
      %v4012 = vld [vmem:[#allocation2 + $0x38] sm:$0xff]
      %v4013 = vld [vmem:[#allocation2 + $0x48] sm:$0xff]
      %v4014 = vld [vmem:[#allocation2 + $0x50] sm:$0xff]
      %v4015 = vld [vmem:[#allocation2 + $0x60] sm:$0xff]
      %v4016 = vld [vmem:[#allocation2 + $0x68] sm:$0xff]
      %v4017 = vld [vmem:[#allocation2 + $0x78] sm:$0xff]
      %v4018 = vld [vmem:[#allocation2 + $0x80] sm:$0xff]
      %v4019 = vld [vmem:[#allocation2 + $0x90] sm:$0xff]
      %v4020 = vld [vmem:[#allocation2 + $0x98] sm:$0xff]
      %v4021 = vld [vmem:[#allocation2 + $0xa8] sm:$0xff]
      %v4022 = vld [vmem:[#allocation2 + $0xb0] sm:$0xff]
      %v4023 = vld [vmem:[#allocation2 + $0xc0] sm:$0xff]
      %v4024 = vld [vmem:[#allocation2 + $0xc8] sm:$0xff]
      %v4025 = vld [vmem:[#allocation2 + $0xd8] sm:$0xff]
      %v4026 = vld [vmem:[#allocation2 + $0xe0] sm:$0xff]
      %v4027 = vld [vmem:[#allocation2 + $0xf0] sm:$0xff]
      %v4028 = vld [vmem:[#allocation2 + $0xf8] sm:$0xff]
      %v4029 = vld [vmem:[#allocation2 + $0x108] sm:$0xff]
      %v4030 = vld [vmem:[#allocation2 + $0x110] sm:$0xff]
      %v4031 = vld [vmem:[#allocation2 + $0x120] sm:$0xff]
      %v4032 = vld [vmem:[#allocation2 + $0x128] sm:$0xff]
      %v4033 = vld [vmem:[#allocation2 + $0x138] sm:$0xff]
      %v4034 = vld [vmem:[#allocation2 + $0x140] sm:$0xff]
      %v4035 = vld [vmem:[#allocation2 + $0x150] sm:$0xff]
      %v4036 = vld [vmem:[#allocation2 + $0x158] sm:$0xff]
      %v4037 = vld [vmem:[#allocation2 + $0x168] sm:$0xff]
      %v4038 = vld [vmem:[#allocation2 + $0x170] sm:$0xff]
      %v4039 = vld [vmem:[%s3] sm:$0xff]
      %v4040 = vld [vmem:[#allocation2 + $0x1] sm:$0xff]
      %v4041 = vld [vmem:[#allocation2 + $0x9] sm:$0xff]
      %v4042 = vld [vmem:[#allocation2 + $0x19] sm:$0xff]
      %v4043 = vld [vmem:[#allocation2 + $0x21] sm:$0xff]
      %v4044 = vld [vmem:[#allocation2 + $0x31] sm:$0xff]
      %v4045 = vld [vmem:[#allocation2 + $0x39] sm:$0xff]
      %v4046 = vld [vmem:[#allocation2 + $0x49] sm:$0xff]
      %v4047 = vld [vmem:[#allocation2 + $0x51] sm:$0xff]
      %v4048 = vld [vmem:[#allocation2 + $0x61] sm:$0xff]
      %v4049 = vld [vmem:[#allocation2 + $0x69] sm:$0xff]
      %v4050 = vld [vmem:[#allocation2 + $0x79] sm:$0xff]
      %v4051 = vld [vmem:[#allocation2 + $0x81] sm:$0xff]
      %v4052 = vld [vmem:[#allocation2 + $0x91] sm:$0xff]
      %v4053 = vld [vmem:[#allocation2 + $0x99] sm:$0xff]
      %v4054 = vld [vmem:[#allocation2 + $0xa9] sm:$0xff]
      %v4055 = vld [vmem:[#allocation2 + $0xb1] sm:$0xff]
      %v4056 = vld [vmem:[#allocation2 + $0xc1] sm:$0xff]
      %v4057 = vld [vmem:[#allocation2 + $0xc9] sm:$0xff]
      %v4058 = vld [vmem:[#allocation2 + $0xd9] sm:$0xff]
      %v4059 = vld [vmem:[#allocation2 + $0xe1] sm:$0xff]
      %v4060 = vld [vmem:[#allocation2 + $0xf1] sm:$0xff]
      %v4061 = vld [vmem:[#allocation2 + $0xf9] sm:$0xff]
      %v4062 = vld [vmem:[#allocation2 + $0x109] sm:$0xff]
      %v4063 = vld [vmem:[#allocation2 + $0x111] sm:$0xff]
      %v4064 = vld [vmem:[#allocation2 + $0x121] sm:$0xff]
      %v4065 = vld [vmem:[#allocation2 + $0x129] sm:$0xff]
      %v4066 = vld [vmem:[#allocation2 + $0x139] sm:$0xff]
      %v4067 = vld [vmem:[#allocation2 + $0x141] sm:$0xff]
      %v4068 = vld [vmem:[#allocation2 + $0x151] sm:$0xff]
      %v4069 = vld [vmem:[#allocation2 + $0x159] sm:$0xff]
      %v4070 = vld [vmem:[#allocation2 + $0x169] sm:$0xff]
      %v4071 = vld [vmem:[#allocation2 + $0x171] sm:$0xff]
      %s4072 = scalar_lea.vmem %s3, 8
      %v4073 = vld [vmem:[%s4072] sm:$0xff]
      %vm4074 = vcmask 64512
      %v4076 = vsel %vm4074, %v4040, 0
      %v4079 = vsel %vm4074, %v4041, 0
      %v4082 = vsel %vm4074, %v4042, 0
      %v4085 = vsel %vm4074, %v4043, 0
      %v4088 = vsel %vm4074, %v4044, 0
      %v4091 = vsel %vm4074, %v4045, 0
      %v4094 = vsel %vm4074, %v4046, 0
      %v4097 = vsel %vm4074, %v4047, 0
      %v4100 = vsel %vm4074, %v4048, 0
      %v4103 = vsel %vm4074, %v4049, 0
      %v4106 = vsel %vm4074, %v4050, 0
      %v4109 = vsel %vm4074, %v4051, 0
      %v4112 = vsel %vm4074, %v4052, 0
      %v4115 = vsel %vm4074, %v4053, 0
      %v4118 = vsel %vm4074, %v4054, 0
      %v4121 = vsel %vm4074, %v4055, 0
      %v4124 = vsel %vm4074, %v4056, 0
      %v4127 = vsel %vm4074, %v4057, 0
      %v4130 = vsel %vm4074, %v4058, 0
      %v4133 = vsel %vm4074, %v4059, 0
      %v4136 = vsel %vm4074, %v4060, 0
      %v4139 = vsel %vm4074, %v4061, 0
      %v4142 = vsel %vm4074, %v4062, 0
      %v4145 = vsel %vm4074, %v4063, 0
      %v4148 = vsel %vm4074, %v4064, 0
      %v4151 = vsel %vm4074, %v4065, 0
      %v4154 = vsel %vm4074, %v4066, 0
      %v4157 = vsel %vm4074, %v4067, 0
      %v4160 = vsel %vm4074, %v4068, 0
      %v4163 = vsel %vm4074, %v4069, 0
      %v4166 = vsel %vm4074, %v4070, 0
      %v4169 = vsel %vm4074, %v4071, 0
      %4171 = vmatprep.subr.mxu0 0.0
      %4172 = vmatpush1.msra.mxu0 %v4073
      %4173 = vmatprep.subr.mxu0 0.0
      %4174 = vmatpush1.msra.mxu0 0.0
      %4175 = vmatprep.subr.mxu0 0.0
      %4176 = vmatpush1.msra.mxu0 0.0
      %4177 = vmatprep.subr.mxu0 0.0
      %4178 = vmatpush1.msra.mxu0 0.0
      %4179 = vmatprep.subr.mxu0 0.0
      %4180 = vmatpush1.msra.mxu0 0.0
      %4181 = vmatprep.subr.mxu0 0.0
      %4182 = vmatpush1.msra.mxu0 0.0
      %4183 = vmatprep.subr.mxu0 0.0
      %4184 = vmatpush1.msra.mxu0 0.0
      %4185 = vmatprep.subr.mxu0 0.0
      %4186 = vmatpush1.msra.mxu0 0.0
      %4187 = vmatprep.subr.mxu0 0.0
      %4188 = vmatpush1.msra.mxu0 0.0
      %4189 = vmatprep.subr.mxu0 0.0
      %4190 = vmatpush1.msra.mxu0 0.0
      %4191 = vmatprep.subr.mxu0 0.0
      %4192 = vmatpush1.msra.mxu0 0.0
      %4193 = vmatprep.subr.mxu0 0.0
      %4194 = vmatpush1.msra.mxu0 0.0
      %4195 = vmatprep.subr.mxu0 0.0
      %4196 = vmatpush1.msra.mxu0 0.0
      %4197 = vmatprep.subr.mxu0 0.0
      %4198 = vmatpush1.msra.mxu0 0.0
      %4199 = vmatprep.subr.mxu0 0.0
      %4200 = vmatpush1.msra.mxu0 0.0
      %4201 = vmatprep.subr.mxu0 0.0
      %4202 = vmatpush1.msra.mxu0 0.0
      %4203 = vmatprep.subr.mxu0 0.0
      %4204 = vmatpush1.msra.mxu0 0.0
      %4205 = vmatprep.subr.mxu0 0.0
      %4206 = vmatpush1.msra.mxu0 0.0
      %4207 = vmatprep.subr.mxu0 0.0
      %4208 = vmatpush1.msra.mxu0 0.0
      %4209 = vmatprep.subr.mxu0 0.0
      %4210 = vmatpush1.msra.mxu0 0.0
      %4211 = vmatprep.subr.mxu0 0.0
      %4212 = vmatpush1.msra.mxu0 0.0
      %4213 = vmatprep.subr.mxu0 0.0
      %4214 = vmatpush1.msra.mxu0 0.0
      %4215 = vmatprep.subr.mxu0 0.0
      %4216 = vmatpush1.msra.mxu0 0.0
      %4217 = vmatprep.subr.mxu0 0.0
      %4218 = vmatpush1.msra.mxu0 0.0
      %4219 = vmatprep.subr.mxu0 0.0
      %4220 = vmatpush1.msra.mxu0 0.0
      %4221 = vmatprep.subr.mxu0 0.0
      %4222 = vmatpush1.msra.mxu0 0.0
      %4223 = vmatprep.subr.mxu0 0.0
      %4224 = vmatpush1.msra.mxu0 0.0
      %4225 = vmatprep.subr.mxu0 0.0
      %4226 = vmatpush1.msra.mxu0 0.0
      %4227 = vmatprep.subr.mxu0 0.0
      %4228 = vmatpush1.msra.mxu0 0.0
      %4229 = vmatprep.subr.mxu0 0.0
      %4230 = vmatpush1.msra.mxu0 0.0
      %4231 = vmatprep.subr.mxu0 0.0
      %4232 = vmatpush1.msra.mxu0 0.0
      %4233 = vmatprep.subr.mxu0 0.0
      %4234 = vmatpush1.msra.mxu0 0.0
      %4235 = vmatprep.mubr.f32.mxu0 0.0
      %4236 = vmatmul.mubr.f32.gmra.mrb[0].mxu0 %v4076
      %v4237 = vpop.f32.mrb[0].mxu0
      %v4238 = vadd.f32 0.0, %v4237
      %v4239 = vpop.f32.mrb[0].mxu0
      %4240 = vmatprep.mubr.f32.mxu0 0.0
      %4241 = vmatmul.mubr.f32.gmra.mrb[0].mxu0 %v4079
      %v4242 = vpop.f32.mrb[0].mxu0
      %v4243 = vadd.f32 0.0, %v4242
      %v4244 = vpop.f32.mrb[0].mxu0
      %4245 = vmatprep.mubr.f32.mxu0 0.0
      %4246 = vmatmul.mubr.f32.gmra.mrb[0].mxu0 %v4082
      %v4247 = vpop.f32.mrb[0].mxu0
      %v4248 = vadd.f32 0.0, %v4247
      %v4249 = vpop.f32.mrb[0].mxu0
      %4250 = vmatprep.mubr.f32.mxu0 0.0
      %4251 = vmatmul.mubr.f32.gmra.mrb[0].mxu0 %v4085
      %v4252 = vpop.f32.mrb[0].mxu0
      %v4253 = vadd.f32 0.0, %v4252
      %v4254 = vpop.f32.mrb[0].mxu0
      %4255 = vmatprep.mubr.f32.mxu0 0.0
      %4256 = vmatmul.mubr.f32.gmra.mrb[0].mxu0 %v4088
      %v4257 = vpop.f32.mrb[0].mxu0
      %v4258 = vadd.f32 0.0, %v4257
      %v4259 = vpop.f32.mrb[0].mxu0
      %4260 = vmatprep.mubr.f32.mxu0 0.0
      %4261 = vmatmul.mubr.f32.gmra.mrb[0].mxu0 %v4091
      %v4262 = vpop.f32.mrb[0].mxu0
      %v4263 = vadd.f32 0.0, %v4262
      %v4264 = vpop.f32.mrb[0].mxu0
      %4265 = vmatprep.mubr.f32.mxu0 0.0
      %4266 = vmatmul.mubr.f32.gmra.mrb[0].mxu0 %v4094
      %v4267 = vpop.f32.mrb[0].mxu0
      %v4268 = vadd.f32 0.0, %v4267
      %v4269 = vpop.f32.mrb[0].mxu0
      %4270 = vmatprep.mubr.f32.mxu0 0.0
      %4271 = vmatmul.mubr.f32.gmra.mrb[0].mxu0 %v4097
      %v4272 = vpop.f32.mrb[0].mxu0
      %v4273 = vadd.f32 0.0, %v4272
      %v4274 = vpop.f32.mrb[0].mxu0
      %4275 = vmatprep.mubr.f32.mxu0 0.0
      %4276 = vmatmul.mubr.f32.gmra.mrb[0].mxu0 %v4100
      %v4277 = vpop.f32.mrb[0].mxu0
      %v4278 = vadd.f32 0.0, %v4277
      %v4279 = vpop.f32.mrb[0].mxu0
      %4280 = vmatprep.mubr.f32.mxu0 0.0
      %4281 = vmatmul.mubr.f32.gmra.mrb[0].mxu0 %v4103
      %v4282 = vpop.f32.mrb[0].mxu0
      %v4283 = vadd.f32 0.0, %v4282
      %v4284 = vpop.f32.mrb[0].mxu0
      %4285 = vmatprep.mubr.f32.mxu0 0.0
      %4286 = vmatmul.mubr.f32.gmra.mrb[0].mxu0 %v4106
      %v4287 = vpop.f32.mrb[0].mxu0
      %v4288 = vadd.f32 0.0, %v4287
      %v4289 = vpop.f32.mrb[0].mxu0
      %4290 = vmatprep.mubr.f32.mxu0 0.0
      %4291 = vmatmul.mubr.f32.gmra.mrb[0].mxu0 %v4109
      %v4292 = vpop.f32.mrb[0].mxu0
      %v4293 = vadd.f32 0.0, %v4292
      %v4294 = vpop.f32.mrb[0].mxu0
      %4295 = vmatprep.mubr.f32.mxu0 0.0
      %4296 = vmatmul.mubr.f32.gmra.mrb[0].mxu0 %v4112
      %v4297 = vpop.f32.mrb[0].mxu0
      %v4298 = vadd.f32 0.0, %v4297
      %v4299 = vpop.f32.mrb[0].mxu0
      %4300 = vmatprep.mubr.f32.mxu0 0.0
      %4301 = vmatmul.mubr.f32.gmra.mrb[0].mxu0 %v4115
      %v4302 = vpop.f32.mrb[0].mxu0
      %v4303 = vadd.f32 0.0, %v4302
      %v4304 = vpop.f32.mrb[0].mxu0
      %4305 = vmatprep.mubr.f32.mxu0 0.0
      %4306 = vmatmul.mubr.f32.gmra.mrb[0].mxu0 %v4118
      %v4307 = vpop.f32.mrb[0].mxu0
      %v4308 = vadd.f32 0.0, %v4307
      %v4309 = vpop.f32.mrb[0].mxu0
      %4310 = vmatprep.mubr.f32.mxu0 0.0
      %4311 = vmatmul.mubr.f32.gmra.mrb[0].mxu0 %v4121
      %v4312 = vpop.f32.mrb[0].mxu0
      %v4313 = vadd.f32 0.0, %v4312
      %v4314 = vpop.f32.mrb[0].mxu0
      %4315 = vmatprep.mubr.f32.mxu0 0.0
      %4316 = vmatmul.mubr.f32.gmra.mrb[0].mxu0 %v4124
      %v4317 = vpop.f32.mrb[0].mxu0
      %v4318 = vadd.f32 0.0, %v4317
      %v4319 = vpop.f32.mrb[0].mxu0
      %4320 = vmatprep.mubr.f32.mxu0 0.0
      %4321 = vmatmul.mubr.f32.gmra.mrb[0].mxu0 %v4127
      %v4322 = vpop.f32.mrb[0].mxu0
      %v4323 = vadd.f32 0.0, %v4322
      %v4324 = vpop.f32.mrb[0].mxu0
      %4325 = vmatprep.mubr.f32.mxu0 0.0
      %4326 = vmatmul.mubr.f32.gmra.mrb[0].mxu0 %v4130
      %v4327 = vpop.f32.mrb[0].mxu0
      %v4328 = vadd.f32 0.0, %v4327
      %v4329 = vpop.f32.mrb[0].mxu0
      %4330 = vmatprep.mubr.f32.mxu0 0.0
      %4331 = vmatmul.mubr.f32.gmra.mrb[0].mxu0 %v4133
      %v4332 = vpop.f32.mrb[0].mxu0
      %v4333 = vadd.f32 0.0, %v4332
      %v4334 = vpop.f32.mrb[0].mxu0
      %4335 = vmatprep.mubr.f32.mxu0 0.0
      %4336 = vmatmul.mubr.f32.gmra.mrb[0].mxu0 %v4136
      %v4337 = vpop.f32.mrb[0].mxu0
      %v4338 = vadd.f32 0.0, %v4337
      %v4339 = vpop.f32.mrb[0].mxu0
      %4340 = vmatprep.mubr.f32.mxu0 0.0
      %4341 = vmatmul.mubr.f32.gmra.mrb[0].mxu0 %v4139
      %v4342 = vpop.f32.mrb[0].mxu0
      %v4343 = vadd.f32 0.0, %v4342
      %v4344 = vpop.f32.mrb[0].mxu0
      %4345 = vmatprep.mubr.f32.mxu0 0.0
      %4346 = vmatmul.mubr.f32.gmra.mrb[0].mxu0 %v4142
      %v4347 = vpop.f32.mrb[0].mxu0
      %v4348 = vadd.f32 0.0, %v4347
      %v4349 = vpop.f32.mrb[0].mxu0
      %4350 = vmatprep.mubr.f32.mxu0 0.0
      %4351 = vmatmul.mubr.f32.gmra.mrb[0].mxu0 %v4145
      %v4352 = vpop.f32.mrb[0].mxu0
      %v4353 = vadd.f32 0.0, %v4352
      %v4354 = vpop.f32.mrb[0].mxu0
      %4355 = vmatprep.mubr.f32.mxu0 0.0
      %4356 = vmatmul.mubr.f32.gmra.mrb[0].mxu0 %v4148
      %v4357 = vpop.f32.mrb[0].mxu0
      %v4358 = vadd.f32 0.0, %v4357
      %v4359 = vpop.f32.mrb[0].mxu0
      %4360 = vmatprep.mubr.f32.mxu0 0.0
      %4361 = vmatmul.mubr.f32.gmra.mrb[0].mxu0 %v4151
      %v4362 = vpop.f32.mrb[0].mxu0
      %v4363 = vadd.f32 0.0, %v4362
      %v4364 = vpop.f32.mrb[0].mxu0
      %4365 = vmatprep.mubr.f32.mxu0 0.0
      %4366 = vmatmul.mubr.f32.gmra.mrb[0].mxu0 %v4154
      %v4367 = vpop.f32.mrb[0].mxu0
      %v4368 = vadd.f32 0.0, %v4367
      %v4369 = vpop.f32.mrb[0].mxu0
      %4370 = vmatprep.mubr.f32.mxu0 0.0
      %4371 = vmatmul.mubr.f32.gmra.mrb[0].mxu0 %v4157
      %v4372 = vpop.f32.mrb[0].mxu0
      %v4373 = vadd.f32 0.0, %v4372
      %v4374 = vpop.f32.mrb[0].mxu0
      %4375 = vmatprep.mubr.f32.mxu0 0.0
      %4376 = vmatmul.mubr.f32.gmra.mrb[0].mxu0 %v4160
      %v4377 = vpop.f32.mrb[0].mxu0
      %v4378 = vadd.f32 0.0, %v4377
      %v4379 = vpop.f32.mrb[0].mxu0
      %4380 = vmatprep.mubr.f32.mxu0 0.0
      %4381 = vmatmul.mubr.f32.gmra.mrb[0].mxu0 %v4163
      %v4382 = vpop.f32.mrb[0].mxu0
      %v4383 = vadd.f32 0.0, %v4382
      %v4384 = vpop.f32.mrb[0].mxu0
      %4385 = vmatprep.mubr.f32.mxu0 0.0
      %4386 = vmatmul.mubr.f32.gmra.mrb[0].mxu0 %v4166
      %v4387 = vpop.f32.mrb[0].mxu0
      %v4388 = vadd.f32 0.0, %v4387
      %v4389 = vpop.f32.mrb[0].mxu0
      %4390 = vmatprep.mubr.f32.mxu0 0.0
      %4391 = vmatmul.mubr.f32.gmra.mrb[0].mxu0 %v4169
      %v4392 = vpop.f32.mrb[0].mxu0
      %v4393 = vadd.f32 0.0, %v4392
      %v4394 = vpop.f32.mrb[0].mxu0
      %4395 = vdwg.mxu0
      %v4397 = vsel %vm4074, %v4007, 0
      %v4400 = vsel %vm4074, %v4008, 0
      %v4403 = vsel %vm4074, %v4009, 0
      %v4406 = vsel %vm4074, %v4010, 0
      %v4409 = vsel %vm4074, %v4011, 0
      %v4412 = vsel %vm4074, %v4012, 0
      %v4415 = vsel %vm4074, %v4013, 0
      %v4418 = vsel %vm4074, %v4014, 0
      %v4421 = vsel %vm4074, %v4015, 0
      %v4424 = vsel %vm4074, %v4016, 0
      %v4427 = vsel %vm4074, %v4017, 0
      %v4430 = vsel %vm4074, %v4018, 0
      %v4433 = vsel %vm4074, %v4019, 0
      %v4436 = vsel %vm4074, %v4020, 0
      %v4439 = vsel %vm4074, %v4021, 0
      %v4442 = vsel %vm4074, %v4022, 0
      %v4445 = vsel %vm4074, %v4023, 0
      %v4448 = vsel %vm4074, %v4024, 0
      %v4451 = vsel %vm4074, %v4025, 0
      %v4454 = vsel %vm4074, %v4026, 0
      %v4457 = vsel %vm4074, %v4027, 0
      %v4460 = vsel %vm4074, %v4028, 0
      %v4463 = vsel %vm4074, %v4029, 0
      %v4466 = vsel %vm4074, %v4030, 0
      %v4469 = vsel %vm4074, %v4031, 0
      %v4472 = vsel %vm4074, %v4032, 0
      %v4475 = vsel %vm4074, %v4033, 0
      %v4478 = vsel %vm4074, %v4034, 0
      %v4481 = vsel %vm4074, %v4035, 0
      %v4484 = vsel %vm4074, %v4036, 0
      %v4487 = vsel %vm4074, %v4037, 0
      %v4490 = vsel %vm4074, %v4038, 0
      %4492 = vmatprep.subr.mxu0 0.0
      %4493 = vmatpush1.msra.mxu0 %v4039
      %4494 = vmatprep.subr.mxu0 0.0
      %4495 = vmatpush1.msra.mxu0 0.0
      %4496 = vmatprep.subr.mxu0 0.0
      %4497 = vmatpush1.msra.mxu0 0.0
      %4498 = vmatprep.subr.mxu0 0.0
      %4499 = vmatpush1.msra.mxu0 0.0
      %4500 = vmatprep.subr.mxu0 0.0
      %4501 = vmatpush1.msra.mxu0 0.0
      %4502 = vmatprep.subr.mxu0 0.0
      %4503 = vmatpush1.msra.mxu0 0.0
      %4504 = vmatprep.subr.mxu0 0.0
      %4505 = vmatpush1.msra.mxu0 0.0
      %4506 = vmatprep.subr.mxu0 0.0
      %4507 = vmatpush1.msra.mxu0 0.0
      %4508 = vmatprep.subr.mxu0 0.0
      %4509 = vmatpush1.msra.mxu0 0.0
      %4510 = vmatprep.subr.mxu0 0.0
      %4511 = vmatpush1.msra.mxu0 0.0
      %4512 = vmatprep.subr.mxu0 0.0
      %4513 = vmatpush1.msra.mxu0 0.0
      %4514 = vmatprep.subr.mxu0 0.0
      %4515 = vmatpush1.msra.mxu0 0.0
      %4516 = vmatprep.subr.mxu0 0.0
      %4517 = vmatpush1.msra.mxu0 0.0
      %4518 = vmatprep.subr.mxu0 0.0
      %4519 = vmatpush1.msra.mxu0 0.0
      %4520 = vmatprep.subr.mxu0 0.0
      %4521 = vmatpush1.msra.mxu0 0.0
      %4522 = vmatprep.subr.mxu0 0.0
      %4523 = vmatpush1.msra.mxu0 0.0
      %4524 = vmatprep.subr.mxu0 0.0
      %4525 = vmatpush1.msra.mxu0 0.0
      %4526 = vmatprep.subr.mxu0 0.0
      %4527 = vmatpush1.msra.mxu0 0.0
      %4528 = vmatprep.subr.mxu0 0.0
      %4529 = vmatpush1.msra.mxu0 0.0
      %4530 = vmatprep.subr.mxu0 0.0
      %4531 = vmatpush1.msra.mxu0 0.0
      %4532 = vmatprep.subr.mxu0 0.0
      %4533 = vmatpush1.msra.mxu0 0.0
      %4534 = vmatprep.subr.mxu0 0.0
      %4535 = vmatpush1.msra.mxu0 0.0
      %4536 = vmatprep.subr.mxu0 0.0
      %4537 = vmatpush1.msra.mxu0 0.0
      %4538 = vmatprep.subr.mxu0 0.0
      %4539 = vmatpush1.msra.mxu0 0.0
      %4540 = vmatprep.subr.mxu0 0.0
      %4541 = vmatpush1.msra.mxu0 0.0
      %4542 = vmatprep.subr.mxu0 0.0
      %4543 = vmatpush1.msra.mxu0 0.0
      %4544 = vmatprep.subr.mxu0 0.0
      %4545 = vmatpush1.msra.mxu0 0.0
      %4546 = vmatprep.subr.mxu0 0.0
      %4547 = vmatpush1.msra.mxu0 0.0
      %4548 = vmatprep.subr.mxu0 0.0
      %4549 = vmatpush1.msra.mxu0 0.0
      %4550 = vmatprep.subr.mxu0 0.0
      %4551 = vmatpush1.msra.mxu0 0.0
      %4552 = vmatprep.subr.mxu0 0.0
      %4553 = vmatpush1.msra.mxu0 0.0
      %4554 = vmatprep.subr.mxu0 0.0
      %4555 = vmatpush1.msra.mxu0 0.0
      %4556 = vmatprep.mubr.f32.mxu0 0.0
      %4557 = vmatmul.mubr.f32.gmra.mrb[0].mxu0 %v4397
      %v4558 = vpop.f32.mrb[0].mxu0
      %v4559 = vadd.f32 %v4238, %v4558
      %v4560 = vpop.f32.mrb[0].mxu0
      %4561 = vmatprep.mubr.f32.mxu0 0.0
      %4562 = vmatmul.mubr.f32.gmra.mrb[0].mxu0 %v4400
      %v4563 = vpop.f32.mrb[0].mxu0
      %v4564 = vadd.f32 %v4243, %v4563
      %v4565 = vpop.f32.mrb[0].mxu0
      %4566 = vmatprep.mubr.f32.mxu0 0.0
      %4567 = vmatmul.mubr.f32.gmra.mrb[0].mxu0 %v4403
      %v4568 = vpop.f32.mrb[0].mxu0
      %v4569 = vadd.f32 %v4248, %v4568
      %v4570 = vpop.f32.mrb[0].mxu0
      %4571 = vmatprep.mubr.f32.mxu0 0.0
      %4572 = vmatmul.mubr.f32.gmra.mrb[0].mxu0 %v4406
      %v4573 = vpop.f32.mrb[0].mxu0
      %v4574 = vadd.f32 %v4253, %v4573
      %v4575 = vpop.f32.mrb[0].mxu0
      %4576 = vmatprep.mubr.f32.mxu0 0.0
      %4577 = vmatmul.mubr.f32.gmra.mrb[0].mxu0 %v4409
      %v4578 = vpop.f32.mrb[0].mxu0
      %v4579 = vadd.f32 %v4258, %v4578
      %v4580 = vpop.f32.mrb[0].mxu0
      %4581 = vmatprep.mubr.f32.mxu0 0.0
      %4582 = vmatmul.mubr.f32.gmra.mrb[0].mxu0 %v4412
      %v4583 = vpop.f32.mrb[0].mxu0
      %v4584 = vadd.f32 %v4263, %v4583
      %v4585 = vpop.f32.mrb[0].mxu0
      %4586 = vmatprep.mubr.f32.mxu0 0.0
      %4587 = vmatmul.mubr.f32.gmra.mrb[0].mxu0 %v4415
      %v4588 = vpop.f32.mrb[0].mxu0
      %v4589 = vadd.f32 %v4268, %v4588
      %v4590 = vpop.f32.mrb[0].mxu0
      %4591 = vmatprep.mubr.f32.mxu0 0.0
      %4592 = vmatmul.mubr.f32.gmra.mrb[0].mxu0 %v4418
      %v4593 = vpop.f32.mrb[0].mxu0
      %v4594 = vadd.f32 %v4273, %v4593
      %v4595 = vpop.f32.mrb[0].mxu0
      %4596 = vmatprep.mubr.f32.mxu0 0.0
      %4597 = vmatmul.mubr.f32.gmra.mrb[0].mxu0 %v4421
      %v4598 = vpop.f32.mrb[0].mxu0
      %v4599 = vadd.f32 %v4278, %v4598
      %v4600 = vpop.f32.mrb[0].mxu0
      %4601 = vmatprep.mubr.f32.mxu0 0.0
      %4602 = vmatmul.mubr.f32.gmra.mrb[0].mxu0 %v4424
      %v4603 = vpop.f32.mrb[0].mxu0
      %v4604 = vadd.f32 %v4283, %v4603
      %v4605 = vpop.f32.mrb[0].mxu0
      %4606 = vmatprep.mubr.f32.mxu0 0.0
      %4607 = vmatmul.mubr.f32.gmra.mrb[0].mxu0 %v4427
      %v4608 = vpop.f32.mrb[0].mxu0
      %v4609 = vadd.f32 %v4288, %v4608
      %v4610 = vpop.f32.mrb[0].mxu0
      %4611 = vmatprep.mubr.f32.mxu0 0.0
      %4612 = vmatmul.mubr.f32.gmra.mrb[0].mxu0 %v4430
      %v4613 = vpop.f32.mrb[0].mxu0
      %v4614 = vadd.f32 %v4293, %v4613
      %v4615 = vpop.f32.mrb[0].mxu0
      %4616 = vmatprep.mubr.f32.mxu0 0.0
      %4617 = vmatmul.mubr.f32.gmra.mrb[0].mxu0 %v4433
      %v4618 = vpop.f32.mrb[0].mxu0
      %v4619 = vadd.f32 %v4298, %v4618
      %v4620 = vpop.f32.mrb[0].mxu0
      %4621 = vmatprep.mubr.f32.mxu0 0.0
      %4622 = vmatmul.mubr.f32.gmra.mrb[0].mxu0 %v4436
      %v4623 = vpop.f32.mrb[0].mxu0
      %v4624 = vadd.f32 %v4303, %v4623
      %v4625 = vpop.f32.mrb[0].mxu0
      %4626 = vmatprep.mubr.f32.mxu0 0.0
      %4627 = vmatmul.mubr.f32.gmra.mrb[0].mxu0 %v4439
      %v4628 = vpop.f32.mrb[0].mxu0
      %v4629 = vadd.f32 %v4308, %v4628
      %v4630 = vpop.f32.mrb[0].mxu0
      %4631 = vmatprep.mubr.f32.mxu0 0.0
      %4632 = vmatmul.mubr.f32.gmra.mrb[0].mxu0 %v4442
      %v4633 = vpop.f32.mrb[0].mxu0
      %v4634 = vadd.f32 %v4313, %v4633
      %v4635 = vpop.f32.mrb[0].mxu0
      %4636 = vmatprep.mubr.f32.mxu0 0.0
      %4637 = vmatmul.mubr.f32.gmra.mrb[0].mxu0 %v4445
      %v4638 = vpop.f32.mrb[0].mxu0
      %v4639 = vadd.f32 %v4318, %v4638
      %v4640 = vpop.f32.mrb[0].mxu0
      %4641 = vmatprep.mubr.f32.mxu0 0.0
      %4642 = vmatmul.mubr.f32.gmra.mrb[0].mxu0 %v4448
      %v4643 = vpop.f32.mrb[0].mxu0
      %v4644 = vadd.f32 %v4323, %v4643
      %v4645 = vpop.f32.mrb[0].mxu0
      %4646 = vmatprep.mubr.f32.mxu0 0.0
      %4647 = vmatmul.mubr.f32.gmra.mrb[0].mxu0 %v4451
      %v4648 = vpop.f32.mrb[0].mxu0
      %v4649 = vadd.f32 %v4328, %v4648
      %v4650 = vpop.f32.mrb[0].mxu0
      %4651 = vmatprep.mubr.f32.mxu0 0.0
      %4652 = vmatmul.mubr.f32.gmra.mrb[0].mxu0 %v4454
      %v4653 = vpop.f32.mrb[0].mxu0
      %v4654 = vadd.f32 %v4333, %v4653
      %v4655 = vpop.f32.mrb[0].mxu0
      %4656 = vmatprep.mubr.f32.mxu0 0.0
      %4657 = vmatmul.mubr.f32.gmra.mrb[0].mxu0 %v4457
      %v4658 = vpop.f32.mrb[0].mxu0
      %v4659 = vadd.f32 %v4338, %v4658
      %v4660 = vpop.f32.mrb[0].mxu0
      %4661 = vmatprep.mubr.f32.mxu0 0.0
      %4662 = vmatmul.mubr.f32.gmra.mrb[0].mxu0 %v4460
      %v4663 = vpop.f32.mrb[0].mxu0
      %v4664 = vadd.f32 %v4343, %v4663
      %v4665 = vpop.f32.mrb[0].mxu0
      %4666 = vmatprep.mubr.f32.mxu0 0.0
      %4667 = vmatmul.mubr.f32.gmra.mrb[0].mxu0 %v4463
      %v4668 = vpop.f32.mrb[0].mxu0
      %v4669 = vadd.f32 %v4348, %v4668
      %v4670 = vpop.f32.mrb[0].mxu0
      %4671 = vmatprep.mubr.f32.mxu0 0.0
      %4672 = vmatmul.mubr.f32.gmra.mrb[0].mxu0 %v4466
      %v4673 = vpop.f32.mrb[0].mxu0
      %v4674 = vadd.f32 %v4353, %v4673
      %v4675 = vpop.f32.mrb[0].mxu0
      %4676 = vmatprep.mubr.f32.mxu0 0.0
      %4677 = vmatmul.mubr.f32.gmra.mrb[0].mxu0 %v4469
      %v4678 = vpop.f32.mrb[0].mxu0
      %v4679 = vadd.f32 %v4358, %v4678
      %v4680 = vpop.f32.mrb[0].mxu0
      %4681 = vmatprep.mubr.f32.mxu0 0.0
      %4682 = vmatmul.mubr.f32.gmra.mrb[0].mxu0 %v4472
      %v4683 = vpop.f32.mrb[0].mxu0
      %v4684 = vadd.f32 %v4363, %v4683
      %v4685 = vpop.f32.mrb[0].mxu0
      %4686 = vmatprep.mubr.f32.mxu0 0.0
      %4687 = vmatmul.mubr.f32.gmra.mrb[0].mxu0 %v4475
      %v4688 = vpop.f32.mrb[0].mxu0
      %v4689 = vadd.f32 %v4368, %v4688
      %v4690 = vpop.f32.mrb[0].mxu0
      %4691 = vmatprep.mubr.f32.mxu0 0.0
      %4692 = vmatmul.mubr.f32.gmra.mrb[0].mxu0 %v4478
      %v4693 = vpop.f32.mrb[0].mxu0
      %v4694 = vadd.f32 %v4373, %v4693
      %v4695 = vpop.f32.mrb[0].mxu0
      %4696 = vmatprep.mubr.f32.mxu0 0.0
      %4697 = vmatmul.mubr.f32.gmra.mrb[0].mxu0 %v4481
      %v4698 = vpop.f32.mrb[0].mxu0
      %v4699 = vadd.f32 %v4378, %v4698
      %v4700 = vpop.f32.mrb[0].mxu0
      %4701 = vmatprep.mubr.f32.mxu0 0.0
      %4702 = vmatmul.mubr.f32.gmra.mrb[0].mxu0 %v4484
      %v4703 = vpop.f32.mrb[0].mxu0
      %v4704 = vadd.f32 %v4383, %v4703
      %v4705 = vpop.f32.mrb[0].mxu0
      %4706 = vmatprep.mubr.f32.mxu0 0.0
      %4707 = vmatmul.mubr.f32.gmra.mrb[0].mxu0 %v4487
      %v4708 = vpop.f32.mrb[0].mxu0
      %v4709 = vadd.f32 %v4388, %v4708
      %v4710 = vpop.f32.mrb[0].mxu0
      %4711 = vmatprep.mubr.f32.mxu0 0.0
      %4712 = vmatmul.mubr.f32.gmra.mrb[0].mxu0 %v4490
      %v4713 = vpop.f32.mrb[0].mxu0
      %v4714 = vadd.f32 %v4393, %v4713
      %v4715 = vpop.f32.mrb[0].mxu0
      %4716 = vdwg.mxu0
      %v4717 = vld [vmem:[#allocation2 + $0x2] sm:$0xff]
      %v4718 = vld [vmem:[#allocation2 + $0xa] sm:$0xff]
      %v4719 = vld [vmem:[#allocation2 + $0x1a] sm:$0xff]
      %v4720 = vld [vmem:[#allocation2 + $0x22] sm:$0xff]
      %v4721 = vld [vmem:[#allocation2 + $0x32] sm:$0xff]
      %v4722 = vld [vmem:[#allocation2 + $0x3a] sm:$0xff]
      %v4723 = vld [vmem:[#allocation2 + $0x4a] sm:$0xff]
      %v4724 = vld [vmem:[#allocation2 + $0x52] sm:$0xff]
      %v4725 = vld [vmem:[#allocation2 + $0x62] sm:$0xff]
      %v4726 = vld [vmem:[#allocation2 + $0x6a] sm:$0xff]
      %v4727 = vld [vmem:[#allocation2 + $0x7a] sm:$0xff]
      %v4728 = vld [vmem:[#allocation2 + $0x82] sm:$0xff]
      %v4729 = vld [vmem:[#allocation2 + $0x92] sm:$0xff]
      %v4730 = vld [vmem:[#allocation2 + $0x9a] sm:$0xff]
      %v4731 = vld [vmem:[#allocation2 + $0xaa] sm:$0xff]
      %v4732 = vld [vmem:[#allocation2 + $0xb2] sm:$0xff]
      %v4733 = vld [vmem:[#allocation2 + $0xc2] sm:$0xff]
      %v4734 = vld [vmem:[#allocation2 + $0xca] sm:$0xff]
      %v4735 = vld [vmem:[#allocation2 + $0xda] sm:$0xff]
      %v4736 = vld [vmem:[#allocation2 + $0xe2] sm:$0xff]
      %v4737 = vld [vmem:[#allocation2 + $0xf2] sm:$0xff]
      %v4738 = vld [vmem:[#allocation2 + $0xfa] sm:$0xff]
      %v4739 = vld [vmem:[#allocation2 + $0x10a] sm:$0xff]
      %v4740 = vld [vmem:[#allocation2 + $0x112] sm:$0xff]
      %v4741 = vld [vmem:[#allocation2 + $0x122] sm:$0xff]
      %v4742 = vld [vmem:[#allocation2 + $0x12a] sm:$0xff]
      %v4743 = vld [vmem:[#allocation2 + $0x13a] sm:$0xff]
      %v4744 = vld [vmem:[#allocation2 + $0x142] sm:$0xff]
      %v4745 = vld [vmem:[#allocation2 + $0x152] sm:$0xff]
      %v4746 = vld [vmem:[#allocation2 + $0x15a] sm:$0xff]
      %v4747 = vld [vmem:[#allocation2 + $0x16a] sm:$0xff]
      %v4748 = vld [vmem:[#allocation2 + $0x172] sm:$0xff]
      %s4749 = scalar_lea.vmem %s3, 16
      %v4750 = vld [vmem:[%s4749] sm:$0xff]
      %v4752 = vsel %vm4074, %v4717, 0
      %v4755 = vsel %vm4074, %v4718, 0
      %v4758 = vsel %vm4074, %v4719, 0
      %v4761 = vsel %vm4074, %v4720, 0
      %v4764 = vsel %vm4074, %v4721, 0
      %v4767 = vsel %vm4074, %v4722, 0
      %v4770 = vsel %vm4074, %v4723, 0
      %v4773 = vsel %vm4074, %v4724, 0
      %v4776 = vsel %vm4074, %v4725, 0
      %v4779 = vsel %vm4074, %v4726, 0
      %v4782 = vsel %vm4074, %v4727, 0
      %v4785 = vsel %vm4074, %v4728, 0
      %v4788 = vsel %vm4074, %v4729, 0
      %v4791 = vsel %vm4074, %v4730, 0
      %v4794 = vsel %vm4074, %v4731, 0
      %v4797 = vsel %vm4074, %v4732, 0
      %v4800 = vsel %vm4074, %v4733, 0
      %v4803 = vsel %vm4074, %v4734, 0
      %v4806 = vsel %vm4074, %v4735, 0
      %v4809 = vsel %vm4074, %v4736, 0
      %v4812 = vsel %vm4074, %v4737, 0
      %v4815 = vsel %vm4074, %v4738, 0
      %v4818 = vsel %vm4074, %v4739, 0
      %v4821 = vsel %vm4074, %v4740, 0
      %v4824 = vsel %vm4074, %v4741, 0
      %v4827 = vsel %vm4074, %v4742, 0
      %v4830 = vsel %vm4074, %v4743, 0
      %v4833 = vsel %vm4074, %v4744, 0
      %v4836 = vsel %vm4074, %v4745, 0
      %v4839 = vsel %vm4074, %v4746, 0
      %v4842 = vsel %vm4074, %v4747, 0
      %v4845 = vsel %vm4074, %v4748, 0
      %4847 = vmatprep.subr.mxu0 0.0
      %4848 = vmatpush1.msra.mxu0 %v4750
      %4849 = vmatprep.subr.mxu0 0.0
      %4850 = vmatpush1.msra.mxu0 0.0
      %4851 = vmatprep.subr.mxu0 0.0
      %4852 = vmatpush1.msra.mxu0 0.0
      %4853 = vmatprep.subr.mxu0 0.0
      %4854 = vmatpush1.msra.mxu0 0.0
      %4855 = vmatprep.subr.mxu0 0.0
      %4856 = vmatpush1.msra.mxu0 0.0
      %4857 = vmatprep.subr.mxu0 0.0
      %4858 = vmatpush1.msra.mxu0 0.0
      %4859 = vmatprep.subr.mxu0 0.0
      %4860 = vmatpush1.msra.mxu0 0.0
      %4861 = vmatprep.subr.mxu0 0.0
      %4862 = vmatpush1.msra.mxu0 0.0
      %4863 = vmatprep.subr.mxu0 0.0
      %4864 = vmatpush1.msra.mxu0 0.0
      %4865 = vmatprep.subr.mxu0 0.0
      %4866 = vmatpush1.msra.mxu0 0.0
      %4867 = vmatprep.subr.mxu0 0.0
      %4868 = vmatpush1.msra.mxu0 0.0
      %4869 = vmatprep.subr.mxu0 0.0
      %4870 = vmatpush1.msra.mxu0 0.0
      %4871 = vmatprep.subr.mxu0 0.0
      %4872 = vmatpush1.msra.mxu0 0.0
      %4873 = vmatprep.subr.mxu0 0.0
      %4874 = vmatpush1.msra.mxu0 0.0
      %4875 = vmatprep.subr.mxu0 0.0
      %4876 = vmatpush1.msra.mxu0 0.0
      %4877 = vmatprep.subr.mxu0 0.0
      %4878 = vmatpush1.msra.mxu0 0.0
      %4879 = vmatprep.subr.mxu0 0.0
      %4880 = vmatpush1.msra.mxu0 0.0
      %4881 = vmatprep.subr.mxu0 0.0
      %4882 = vmatpush1.msra.mxu0 0.0
      %4883 = vmatprep.subr.mxu0 0.0
      %4884 = vmatpush1.msra.mxu0 0.0
      %4885 = vmatprep.subr.mxu0 0.0
      %4886 = vmatpush1.msra.mxu0 0.0
      %4887 = vmatprep.subr.mxu0 0.0
      %4888 = vmatpush1.msra.mxu0 0.0
      %4889 = vmatprep.subr.mxu0 0.0
      %4890 = vmatpush1.msra.mxu0 0.0
      %4891 = vmatprep.subr.mxu0 0.0
      %4892 = vmatpush1.msra.mxu0 0.0
      %4893 = vmatprep.subr.mxu0 0.0
      %4894 = vmatpush1.msra.mxu0 0.0
      %4895 = vmatprep.subr.mxu0 0.0
      %4896 = vmatpush1.msra.mxu0 0.0
      %4897 = vmatprep.subr.mxu0 0.0
      %4898 = vmatpush1.msra.mxu0 0.0
      %4899 = vmatprep.subr.mxu0 0.0
      %4900 = vmatpush1.msra.mxu0 0.0
      %4901 = vmatprep.subr.mxu0 0.0
      %4902 = vmatpush1.msra.mxu0 0.0
      %4903 = vmatprep.subr.mxu0 0.0
      %4904 = vmatpush1.msra.mxu0 0.0
      %4905 = vmatprep.subr.mxu0 0.0
      %4906 = vmatpush1.msra.mxu0 0.0
      %4907 = vmatprep.subr.mxu0 0.0
      %4908 = vmatpush1.msra.mxu0 0.0
      %4909 = vmatprep.subr.mxu0 0.0
      %4910 = vmatpush1.msra.mxu0 0.0
      %4911 = vmatprep.mubr.f32.mxu0 0.0
      %4912 = vmatmul.mubr.f32.gmra.mrb[0].mxu0 %v4752
      %v4913 = vpop.f32.mrb[0].mxu0
      %v4914 = vadd.f32 0.0, %v4913
      %v4915 = vpop.f32.mrb[0].mxu0
      %4916 = vmatprep.mubr.f32.mxu0 0.0
      %4917 = vmatmul.mubr.f32.gmra.mrb[0].mxu0 %v4755
      %v4918 = vpop.f32.mrb[0].mxu0
      %v4919 = vadd.f32 0.0, %v4918
      %v4920 = vpop.f32.mrb[0].mxu0
      %4921 = vmatprep.mubr.f32.mxu0 0.0
      %4922 = vmatmul.mubr.f32.gmra.mrb[0].mxu0 %v4758
      %v4923 = vpop.f32.mrb[0].mxu0
      %v4924 = vadd.f32 0.0, %v4923
      %v4925 = vpop.f32.mrb[0].mxu0
      %4926 = vmatprep.mubr.f32.mxu0 0.0
      %4927 = vmatmul.mubr.f32.gmra.mrb[0].mxu0 %v4761
      %v4928 = vpop.f32.mrb[0].mxu0
      %v4929 = vadd.f32 0.0, %v4928
      %v4930 = vpop.f32.mrb[0].mxu0
      %4931 = vmatprep.mubr.f32.mxu0 0.0
      %4932 = vmatmul.mubr.f32.gmra.mrb[0].mxu0 %v4764
      %v4933 = vpop.f32.mrb[0].mxu0
      %v4934 = vadd.f32 0.0, %v4933
      %v4935 = vpop.f32.mrb[0].mxu0
      %4936 = vmatprep.mubr.f32.mxu0 0.0
      %4937 = vmatmul.mubr.f32.gmra.mrb[0].mxu0 %v4767
      %v4938 = vpop.f32.mrb[0].mxu0
      %v4939 = vadd.f32 0.0, %v4938
      %v4940 = vpop.f32.mrb[0].mxu0
      %4941 = vmatprep.mubr.f32.mxu0 0.0
      %4942 = vmatmul.mubr.f32.gmra.mrb[0].mxu0 %v4770
      %v4943 = vpop.f32.mrb[0].mxu0
      %v4944 = vadd.f32 0.0, %v4943
      %v4945 = vpop.f32.mrb[0].mxu0
      %4946 = vmatprep.mubr.f32.mxu0 0.0
      %4947 = vmatmul.mubr.f32.gmra.mrb[0].mxu0 %v4773
      %v4948 = vpop.f32.mrb[0].mxu0
      %v4949 = vadd.f32 0.0, %v4948
      %v4950 = vpop.f32.mrb[0].mxu0
      %4951 = vmatprep.mubr.f32.mxu0 0.0
      %4952 = vmatmul.mubr.f32.gmra.mrb[0].mxu0 %v4776
      %v4953 = vpop.f32.mrb[0].mxu0
      %v4954 = vadd.f32 0.0, %v4953
      %v4955 = vpop.f32.mrb[0].mxu0
      %4956 = vmatprep.mubr.f32.mxu0 0.0
      %4957 = vmatmul.mubr.f32.gmra.mrb[0].mxu0 %v4779
      %v4958 = vpop.f32.mrb[0].mxu0
      %v4959 = vadd.f32 0.0, %v4958
      %v4960 = vpop.f32.mrb[0].mxu0
      %4961 = vmatprep.mubr.f32.mxu0 0.0
      %4962 = vmatmul.mubr.f32.gmra.mrb[0].mxu0 %v4782
      %v4963 = vpop.f32.mrb[0].mxu0
      %v4964 = vadd.f32 0.0, %v4963
      %v4965 = vpop.f32.mrb[0].mxu0
      %4966 = vmatprep.mubr.f32.mxu0 0.0
      %4967 = vmatmul.mubr.f32.gmra.mrb[0].mxu0 %v4785
      %v4968 = vpop.f32.mrb[0].mxu0
      %v4969 = vadd.f32 0.0, %v4968
      %v4970 = vpop.f32.mrb[0].mxu0
      %4971 = vmatprep.mubr.f32.mxu0 0.0
      %4972 = vmatmul.mubr.f32.gmra.mrb[0].mxu0 %v4788
      %v4973 = vpop.f32.mrb[0].mxu0
      %v4974 = vadd.f32 0.0, %v4973
      %v4975 = vpop.f32.mrb[0].mxu0
      %4976 = vmatprep.mubr.f32.mxu0 0.0
      %4977 = vmatmul.mubr.f32.gmra.mrb[0].mxu0 %v4791
      %v4978 = vpop.f32.mrb[0].mxu0
      %v4979 = vadd.f32 0.0, %v4978
      %v4980 = vpop.f32.mrb[0].mxu0
      %4981 = vmatprep.mubr.f32.mxu0 0.0
      %4982 = vmatmul.mubr.f32.gmra.mrb[0].mxu0 %v4794
      %v4983 = vpop.f32.mrb[0].mxu0
      %v4984 = vadd.f32 0.0, %v4983
      %v4985 = vpop.f32.mrb[0].mxu0
      %4986 = vmatprep.mubr.f32.mxu0 0.0
      %4987 = vmatmul.mubr.f32.gmra.mrb[0].mxu0 %v4797
      %v4988 = vpop.f32.mrb[0].mxu0
      %v4989 = vadd.f32 0.0, %v4988
      %v4990 = vpop.f32.mrb[0].mxu0
      %4991 = vmatprep.mubr.f32.mxu0 0.0
      %4992 = vmatmul.mubr.f32.gmra.mrb[0].mxu0 %v4800
      %v4993 = vpop.f32.mrb[0].mxu0
      %v4994 = vadd.f32 0.0, %v4993
      %v4995 = vpop.f32.mrb[0].mxu0
      %4996 = vmatprep.mubr.f32.mxu0 0.0
      %4997 = vmatmul.mubr.f32.gmra.mrb[0].mxu0 %v4803
      %v4998 = vpop.f32.mrb[0].mxu0
      %v4999 = vadd.f32 0.0, %v4998
      %v5000 = vpop.f32.mrb[0].mxu0
      %5001 = vmatprep.mubr.f32.mxu0 0.0
      %5002 = vmatmul.mubr.f32.gmra.mrb[0].mxu0 %v4806
      %v5003 = vpop.f32.mrb[0].mxu0
      %v5004 = vadd.f32 0.0, %v5003
      %v5005 = vpop.f32.mrb[0].mxu0
      %5006 = vmatprep.mubr.f32.mxu0 0.0
      %5007 = vmatmul.mubr.f32.gmra.mrb[0].mxu0 %v4809
      %v5008 = vpop.f32.mrb[0].mxu0
      %v5009 = vadd.f32 0.0, %v5008
      %v5010 = vpop.f32.mrb[0].mxu0
      %5011 = vmatprep.mubr.f32.mxu0 0.0
      %5012 = vmatmul.mubr.f32.gmra.mrb[0].mxu0 %v4812
      %v5013 = vpop.f32.mrb[0].mxu0
      %v5014 = vadd.f32 0.0, %v5013
      %v5015 = vpop.f32.mrb[0].mxu0
      %5016 = vmatprep.mubr.f32.mxu0 0.0
      %5017 = vmatmul.mubr.f32.gmra.mrb[0].mxu0 %v4815
      %v5018 = vpop.f32.mrb[0].mxu0
      %v5019 = vadd.f32 0.0, %v5018
      %v5020 = vpop.f32.mrb[0].mxu0
      %5021 = vmatprep.mubr.f32.mxu0 0.0
      %5022 = vmatmul.mubr.f32.gmra.mrb[0].mxu0 %v4818
      %v5023 = vpop.f32.mrb[0].mxu0
      %v5024 = vadd.f32 0.0, %v5023
      %v5025 = vpop.f32.mrb[0].mxu0
      %5026 = vmatprep.mubr.f32.mxu0 0.0
      %5027 = vmatmul.mubr.f32.gmra.mrb[0].mxu0 %v4821
      %v5028 = vpop.f32.mrb[0].mxu0
      %v5029 = vadd.f32 0.0, %v5028
      %v5030 = vpop.f32.mrb[0].mxu0
      %5031 = vmatprep.mubr.f32.mxu0 0.0
      %5032 = vmatmul.mubr.f32.gmra.mrb[0].mxu0 %v4824
      %v5033 = vpop.f32.mrb[0].mxu0
      %v5034 = vadd.f32 0.0, %v5033
      %v5035 = vpop.f32.mrb[0].mxu0
      %5036 = vmatprep.mubr.f32.mxu0 0.0
      %5037 = vmatmul.mubr.f32.gmra.mrb[0].mxu0 %v4827
      %v5038 = vpop.f32.mrb[0].mxu0
      %v5039 = vadd.f32 0.0, %v5038
      %v5040 = vpop.f32.mrb[0].mxu0
      %5041 = vmatprep.mubr.f32.mxu0 0.0
      %5042 = vmatmul.mubr.f32.gmra.mrb[0].mxu0 %v4830
      %v5043 = vpop.f32.mrb[0].mxu0
      %v5044 = vadd.f32 0.0, %v5043
      %v5045 = vpop.f32.mrb[0].mxu0
      %5046 = vmatprep.mubr.f32.mxu0 0.0
      %5047 = vmatmul.mubr.f32.gmra.mrb[0].mxu0 %v4833
      %v5048 = vpop.f32.mrb[0].mxu0
      %v5049 = vadd.f32 0.0, %v5048
      %v5050 = vpop.f32.mrb[0].mxu0
      %5051 = vmatprep.mubr.f32.mxu0 0.0
      %5052 = vmatmul.mubr.f32.gmra.mrb[0].mxu0 %v4836
      %v5053 = vpop.f32.mrb[0].mxu0
      %v5054 = vadd.f32 0.0, %v5053
      %v5055 = vpop.f32.mrb[0].mxu0
      %5056 = vmatprep.mubr.f32.mxu0 0.0
      %5057 = vmatmul.mubr.f32.gmra.mrb[0].mxu0 %v4839
      %v5058 = vpop.f32.mrb[0].mxu0
      %v5059 = vadd.f32 0.0, %v5058
      %v5060 = vpop.f32.mrb[0].mxu0
      %5061 = vmatprep.mubr.f32.mxu0 0.0
      %5062 = vmatmul.mubr.f32.gmra.mrb[0].mxu0 %v4842
      %v5063 = vpop.f32.mrb[0].mxu0
      %v5064 = vadd.f32 0.0, %v5063
      %v5065 = vpop.f32.mrb[0].mxu0
      %5066 = vmatprep.mubr.f32.mxu0 0.0
      %5067 = vmatmul.mubr.f32.gmra.mrb[0].mxu0 %v4845
      %v5068 = vpop.f32.mrb[0].mxu0
      %v5069 = vadd.f32 0.0, %v5068
      %v5070 = vpop.f32.mrb[0].mxu0
      %5071 = vdwg.mxu0
      %v5072 = vadd.f32 %v4559, %v4914
      %v5073 = vadd.f32 %v4564, %v4919
      %v5074 = vadd.f32 %v4569, %v4924
      %v5075 = vadd.f32 %v4574, %v4929
      %v5076 = vadd.f32 %v4579, %v4934
      %v5077 = vadd.f32 %v4584, %v4939
      %v5078 = vadd.f32 %v4589, %v4944
      %v5079 = vadd.f32 %v4594, %v4949
      %v5080 = vadd.f32 %v4599, %v4954
      %v5081 = vadd.f32 %v4604, %v4959
      %v5082 = vadd.f32 %v4609, %v4964
      %v5083 = vadd.f32 %v4614, %v4969
      %v5084 = vadd.f32 %v4619, %v4974
      %v5085 = vadd.f32 %v4624, %v4979
      %v5086 = vadd.f32 %v4629, %v4984
      %v5087 = vadd.f32 %v4634, %v4989
      %v5088 = vadd.f32 %v4639, %v4994
      %v5089 = vadd.f32 %v4644, %v4999
      %v5090 = vadd.f32 %v4649, %v5004
      %v5091 = vadd.f32 %v4654, %v5009
      %v5092 = vadd.f32 %v4659, %v5014
      %v5093 = vadd.f32 %v4664, %v5019
      %v5094 = vadd.f32 %v4669, %v5024
      %v5095 = vadd.f32 %v4674, %v5029
      %v5096 = vadd.f32 %v4679, %v5034
      %v5097 = vadd.f32 %v4684, %v5039
      %v5098 = vadd.f32 %v4689, %v5044
      %v5099 = vadd.f32 %v4694, %v5049
      %v5100 = vadd.f32 %v4699, %v5054
      %v5101 = vadd.f32 %v4704, %v5059
      %v5102 = vadd.f32 %v4709, %v5064
      %v5103 = vadd.f32 %v4714, %v5069
      %s5104 = scalar_lea.vmem [#allocation2], 24
      %v5105 = vld [vmem:[%s5104] sm:$0xff]
      %v5106 = vld [vmem:[%s5104 + $0x8] sm:$0xff]
      %v5107 = vld [vmem:[%s5104 + $0x18] sm:$0xff]
      %v5108 = vld [vmem:[%s5104 + $0x20] sm:$0xff]
      %v5109 = vld [vmem:[%s5104 + $0x30] sm:$0xff]
      %v5110 = vld [vmem:[%s5104 + $0x38] sm:$0xff]
      %v5111 = vld [vmem:[%s5104 + $0x48] sm:$0xff]
      %v5112 = vld [vmem:[%s5104 + $0x50] sm:$0xff]
      %v5113 = vld [vmem:[%s5104 + $0x60] sm:$0xff]
      %v5114 = vld [vmem:[%s5104 + $0x68] sm:$0xff]
      %v5115 = vld [vmem:[%s5104 + $0x78] sm:$0xff]
      %v5116 = vld [vmem:[%s5104 + $0x80] sm:$0xff]
      %v5117 = vld [vmem:[%s5104 + $0x90] sm:$0xff]
      %v5118 = vld [vmem:[%s5104 + $0x98] sm:$0xff]
      %v5119 = vld [vmem:[%s5104 + $0xa8] sm:$0xff]
      %v5120 = vld [vmem:[%s5104 + $0xb0] sm:$0xff]
      %v5121 = vld [vmem:[%s5104 + $0xc0] sm:$0xff]
      %v5122 = vld [vmem:[%s5104 + $0xc8] sm:$0xff]
      %v5123 = vld [vmem:[%s5104 + $0xd8] sm:$0xff]
      %v5124 = vld [vmem:[%s5104 + $0xe0] sm:$0xff]
      %v5125 = vld [vmem:[%s5104 + $0xf0] sm:$0xff]
      %v5126 = vld [vmem:[%s5104 + $0xf8] sm:$0xff]
      %v5127 = vld [vmem:[%s5104 + $0x108] sm:$0xff]
      %v5128 = vld [vmem:[%s5104 + $0x110] sm:$0xff]
      %v5129 = vld [vmem:[%s5104 + $0x120] sm:$0xff]
      %v5130 = vld [vmem:[%s5104 + $0x128] sm:$0xff]
      %v5131 = vld [vmem:[%s5104 + $0x138] sm:$0xff]
      %v5132 = vld [vmem:[%s5104 + $0x140] sm:$0xff]
      %v5133 = vld [vmem:[%s5104 + $0x150] sm:$0xff]
      %v5134 = vld [vmem:[%s5104 + $0x158] sm:$0xff]
      %v5135 = vld [vmem:[%s5104 + $0x168] sm:$0xff]
      %v5136 = vld [vmem:[%s5104 + $0x170] sm:$0xff]
      %s5137 = scalar_lea.vmem %s3, 24
      %v5138 = vld [vmem:[%s5137] sm:$0xff]
      %v5140 = vsel %vm4074, %v5105, 0
      %v5143 = vsel %vm4074, %v5106, 0
      %v5146 = vsel %vm4074, %v5107, 0
      %v5149 = vsel %vm4074, %v5108, 0
      %v5152 = vsel %vm4074, %v5109, 0
      %v5155 = vsel %vm4074, %v5110, 0
      %v5158 = vsel %vm4074, %v5111, 0
      %v5161 = vsel %vm4074, %v5112, 0
      %v5164 = vsel %vm4074, %v5113, 0
      %v5167 = vsel %vm4074, %v5114, 0
      %v5170 = vsel %vm4074, %v5115, 0
      %v5173 = vsel %vm4074, %v5116, 0
      %v5176 = vsel %vm4074, %v5117, 0
      %v5179 = vsel %vm4074, %v5118, 0
      %v5182 = vsel %vm4074, %v5119, 0
      %v5185 = vsel %vm4074, %v5120, 0
      %v5188 = vsel %vm4074, %v5121, 0
      %v5191 = vsel %vm4074, %v5122, 0
      %v5194 = vsel %vm4074, %v5123, 0
      %v5197 = vsel %vm4074, %v5124, 0
      %v5200 = vsel %vm4074, %v5125, 0
      %v5203 = vsel %vm4074, %v5126, 0
      %v5206 = vsel %vm4074, %v5127, 0
      %v5209 = vsel %vm4074, %v5128, 0
      %v5212 = vsel %vm4074, %v5129, 0
      %v5215 = vsel %vm4074, %v5130, 0
      %v5218 = vsel %vm4074, %v5131, 0
      %v5221 = vsel %vm4074, %v5132, 0
      %v5224 = vsel %vm4074, %v5133, 0
      %v5227 = vsel %vm4074, %v5134, 0
      %v5230 = vsel %vm4074, %v5135, 0
      %v5233 = vsel %vm4074, %v5136, 0
      %5235 = vmatprep.subr.mxu0 0.0
      %5236 = vmatpush1.msra.mxu0 %v5138
      %5237 = vmatprep.subr.mxu0 0.0
      %5238 = vmatpush1.msra.mxu0 0.0
      %5239 = vmatprep.subr.mxu0 0.0
      %5240 = vmatpush1.msra.mxu0 0.0
      %5241 = vmatprep.subr.mxu0 0.0
      %5242 = vmatpush1.msra.mxu0 0.0
      %5243 = vmatprep.subr.mxu0 0.0
      %5244 = vmatpush1.msra.mxu0 0.0
      %5245 = vmatprep.subr.mxu0 0.0
      %5246 = vmatpush1.msra.mxu0 0.0
      %5247 = vmatprep.subr.mxu0 0.0
      %5248 = vmatpush1.msra.mxu0 0.0
      %5249 = vmatprep.subr.mxu0 0.0
      %5250 = vmatpush1.msra.mxu0 0.0
      %5251 = vmatprep.subr.mxu0 0.0
      %5252 = vmatpush1.msra.mxu0 0.0
      %5253 = vmatprep.subr.mxu0 0.0
      %5254 = vmatpush1.msra.mxu0 0.0
      %5255 = vmatprep.subr.mxu0 0.0
      %5256 = vmatpush1.msra.mxu0 0.0
      %5257 = vmatprep.subr.mxu0 0.0
      %5258 = vmatpush1.msra.mxu0 0.0
      %5259 = vmatprep.subr.mxu0 0.0
      %5260 = vmatpush1.msra.mxu0 0.0
      %5261 = vmatprep.subr.mxu0 0.0
      %5262 = vmatpush1.msra.mxu0 0.0
      %5263 = vmatprep.subr.mxu0 0.0
      %5264 = vmatpush1.msra.mxu0 0.0
      %5265 = vmatprep.subr.mxu0 0.0
      %5266 = vmatpush1.msra.mxu0 0.0
      %5267 = vmatprep.subr.mxu0 0.0
      %5268 = vmatpush1.msra.mxu0 0.0
      %5269 = vmatprep.subr.mxu0 0.0
      %5270 = vmatpush1.msra.mxu0 0.0
      %5271 = vmatprep.subr.mxu0 0.0
      %5272 = vmatpush1.msra.mxu0 0.0
      %5273 = vmatprep.subr.mxu0 0.0
      %5274 = vmatpush1.msra.mxu0 0.0
      %5275 = vmatprep.subr.mxu0 0.0
      %5276 = vmatpush1.msra.mxu0 0.0
      %5277 = vmatprep.subr.mxu0 0.0
      %5278 = vmatpush1.msra.mxu0 0.0
      %5279 = vmatprep.subr.mxu0 0.0
      %5280 = vmatpush1.msra.mxu0 0.0
      %5281 = vmatprep.subr.mxu0 0.0
      %5282 = vmatpush1.msra.mxu0 0.0
      %5283 = vmatprep.subr.mxu0 0.0
      %5284 = vmatpush1.msra.mxu0 0.0
      %5285 = vmatprep.subr.mxu0 0.0
      %5286 = vmatpush1.msra.mxu0 0.0
      %5287 = vmatprep.subr.mxu0 0.0
      %5288 = vmatpush1.msra.mxu0 0.0
      %5289 = vmatprep.subr.mxu0 0.0
      %5290 = vmatpush1.msra.mxu0 0.0
      %5291 = vmatprep.subr.mxu0 0.0
      %5292 = vmatpush1.msra.mxu0 0.0
      %5293 = vmatprep.subr.mxu0 0.0
      %5294 = vmatpush1.msra.mxu0 0.0
      %5295 = vmatprep.subr.mxu0 0.0
      %5296 = vmatpush1.msra.mxu0 0.0
      %5297 = vmatprep.subr.mxu0 0.0
      %5298 = vmatpush1.msra.mxu0 0.0
      %5299 = vmatprep.mubr.f32.mxu0 0.0
      %5300 = vmatmul.mubr.f32.gmra.mrb[0].mxu0 %v5140
      %v5301 = vpop.f32.mrb[0].mxu0
      %v5302 = vadd.f32 0.0, %v5301
      %v5303 = vpop.f32.mrb[0].mxu0
      %5304 = vmatprep.mubr.f32.mxu0 0.0
      %5305 = vmatmul.mubr.f32.gmra.mrb[0].mxu0 %v5143
      %v5306 = vpop.f32.mrb[0].mxu0
      %v5307 = vadd.f32 0.0, %v5306
      %v5308 = vpop.f32.mrb[0].mxu0
      %5309 = vmatprep.mubr.f32.mxu0 0.0
      %5310 = vmatmul.mubr.f32.gmra.mrb[0].mxu0 %v5146
      %v5311 = vpop.f32.mrb[0].mxu0
      %v5312 = vadd.f32 0.0, %v5311
      %v5313 = vpop.f32.mrb[0].mxu0
      %5314 = vmatprep.mubr.f32.mxu0 0.0
      %5315 = vmatmul.mubr.f32.gmra.mrb[0].mxu0 %v5149
      %v5316 = vpop.f32.mrb[0].mxu0
      %v5317 = vadd.f32 0.0, %v5316
      %v5318 = vpop.f32.mrb[0].mxu0
      %5319 = vmatprep.mubr.f32.mxu0 0.0
      %5320 = vmatmul.mubr.f32.gmra.mrb[0].mxu0 %v5152
      %v5321 = vpop.f32.mrb[0].mxu0
      %v5322 = vadd.f32 0.0, %v5321
      %v5323 = vpop.f32.mrb[0].mxu0
      %5324 = vmatprep.mubr.f32.mxu0 0.0
      %5325 = vmatmul.mubr.f32.gmra.mrb[0].mxu0 %v5155
      %v5326 = vpop.f32.mrb[0].mxu0
      %v5327 = vadd.f32 0.0, %v5326
      %v5328 = vpop.f32.mrb[0].mxu0
      %5329 = vmatprep.mubr.f32.mxu0 0.0
      %5330 = vmatmul.mubr.f32.gmra.mrb[0].mxu0 %v5158
      %v5331 = vpop.f32.mrb[0].mxu0
      %v5332 = vadd.f32 0.0, %v5331
      %v5333 = vpop.f32.mrb[0].mxu0
      %5334 = vmatprep.mubr.f32.mxu0 0.0
      %5335 = vmatmul.mubr.f32.gmra.mrb[0].mxu0 %v5161
      %v5336 = vpop.f32.mrb[0].mxu0
      %v5337 = vadd.f32 0.0, %v5336
      %v5338 = vpop.f32.mrb[0].mxu0
      %5339 = vmatprep.mubr.f32.mxu0 0.0
      %5340 = vmatmul.mubr.f32.gmra.mrb[0].mxu0 %v5164
      %v5341 = vpop.f32.mrb[0].mxu0
      %v5342 = vadd.f32 0.0, %v5341
      %v5343 = vpop.f32.mrb[0].mxu0
      %5344 = vmatprep.mubr.f32.mxu0 0.0
      %5345 = vmatmul.mubr.f32.gmra.mrb[0].mxu0 %v5167
      %v5346 = vpop.f32.mrb[0].mxu0
      %v5347 = vadd.f32 0.0, %v5346
      %v5348 = vpop.f32.mrb[0].mxu0
      %5349 = vmatprep.mubr.f32.mxu0 0.0
      %5350 = vmatmul.mubr.f32.gmra.mrb[0].mxu0 %v5170
      %v5351 = vpop.f32.mrb[0].mxu0
      %v5352 = vadd.f32 0.0, %v5351
      %v5353 = vpop.f32.mrb[0].mxu0
      %5354 = vmatprep.mubr.f32.mxu0 0.0
      %5355 = vmatmul.mubr.f32.gmra.mrb[0].mxu0 %v5173
      %v5356 = vpop.f32.mrb[0].mxu0
      %v5357 = vadd.f32 0.0, %v5356
      %v5358 = vpop.f32.mrb[0].mxu0
      %5359 = vmatprep.mubr.f32.mxu0 0.0
      %5360 = vmatmul.mubr.f32.gmra.mrb[0].mxu0 %v5176
      %v5361 = vpop.f32.mrb[0].mxu0
      %v5362 = vadd.f32 0.0, %v5361
      %v5363 = vpop.f32.mrb[0].mxu0
      %5364 = vmatprep.mubr.f32.mxu0 0.0
      %5365 = vmatmul.mubr.f32.gmra.mrb[0].mxu0 %v5179
      %v5366 = vpop.f32.mrb[0].mxu0
      %v5367 = vadd.f32 0.0, %v5366
      %v5368 = vpop.f32.mrb[0].mxu0
      %5369 = vmatprep.mubr.f32.mxu0 0.0
      %5370 = vmatmul.mubr.f32.gmra.mrb[0].mxu0 %v5182
      %v5371 = vpop.f32.mrb[0].mxu0
      %v5372 = vadd.f32 0.0, %v5371
      %v5373 = vpop.f32.mrb[0].mxu0
      %5374 = vmatprep.mubr.f32.mxu0 0.0
      %5375 = vmatmul.mubr.f32.gmra.mrb[0].mxu0 %v5185
      %v5376 = vpop.f32.mrb[0].mxu0
      %v5377 = vadd.f32 0.0, %v5376
      %v5378 = vpop.f32.mrb[0].mxu0
      %5379 = vmatprep.mubr.f32.mxu0 0.0
      %5380 = vmatmul.mubr.f32.gmra.mrb[0].mxu0 %v5188
      %v5381 = vpop.f32.mrb[0].mxu0
      %v5382 = vadd.f32 0.0, %v5381
      %v5383 = vpop.f32.mrb[0].mxu0
      %5384 = vmatprep.mubr.f32.mxu0 0.0
      %5385 = vmatmul.mubr.f32.gmra.mrb[0].mxu0 %v5191
      %v5386 = vpop.f32.mrb[0].mxu0
      %v5387 = vadd.f32 0.0, %v5386
      %v5388 = vpop.f32.mrb[0].mxu0
      %5389 = vmatprep.mubr.f32.mxu0 0.0
      %5390 = vmatmul.mubr.f32.gmra.mrb[0].mxu0 %v5194
      %v5391 = vpop.f32.mrb[0].mxu0
      %v5392 = vadd.f32 0.0, %v5391
      %v5393 = vpop.f32.mrb[0].mxu0
      %5394 = vmatprep.mubr.f32.mxu0 0.0
      %5395 = vmatmul.mubr.f32.gmra.mrb[0].mxu0 %v5197
      %v5396 = vpop.f32.mrb[0].mxu0
      %v5397 = vadd.f32 0.0, %v5396
      %v5398 = vpop.f32.mrb[0].mxu0
      %5399 = vmatprep.mubr.f32.mxu0 0.0
      %5400 = vmatmul.mubr.f32.gmra.mrb[0].mxu0 %v5200
      %v5401 = vpop.f32.mrb[0].mxu0
      %v5402 = vadd.f32 0.0, %v5401
      %v5403 = vpop.f32.mrb[0].mxu0
      %5404 = vmatprep.mubr.f32.mxu0 0.0
      %5405 = vmatmul.mubr.f32.gmra.mrb[0].mxu0 %v5203
      %v5406 = vpop.f32.mrb[0].mxu0
      %v5407 = vadd.f32 0.0, %v5406
      %v5408 = vpop.f32.mrb[0].mxu0
      %5409 = vmatprep.mubr.f32.mxu0 0.0
      %5410 = vmatmul.mubr.f32.gmra.mrb[0].mxu0 %v5206
      %v5411 = vpop.f32.mrb[0].mxu0
      %v5412 = vadd.f32 0.0, %v5411
      %v5413 = vpop.f32.mrb[0].mxu0
      %5414 = vmatprep.mubr.f32.mxu0 0.0
      %5415 = vmatmul.mubr.f32.gmra.mrb[0].mxu0 %v5209
      %v5416 = vpop.f32.mrb[0].mxu0
      %v5417 = vadd.f32 0.0, %v5416
      %v5418 = vpop.f32.mrb[0].mxu0
      %5419 = vmatprep.mubr.f32.mxu0 0.0
      %5420 = vmatmul.mubr.f32.gmra.mrb[0].mxu0 %v5212
      %v5421 = vpop.f32.mrb[0].mxu0
      %v5422 = vadd.f32 0.0, %v5421
      %v5423 = vpop.f32.mrb[0].mxu0
      %5424 = vmatprep.mubr.f32.mxu0 0.0
      %5425 = vmatmul.mubr.f32.gmra.mrb[0].mxu0 %v5215
      %v5426 = vpop.f32.mrb[0].mxu0
      %v5427 = vadd.f32 0.0, %v5426
      %v5428 = vpop.f32.mrb[0].mxu0
      %5429 = vmatprep.mubr.f32.mxu0 0.0
      %5430 = vmatmul.mubr.f32.gmra.mrb[0].mxu0 %v5218
      %v5431 = vpop.f32.mrb[0].mxu0
      %v5432 = vadd.f32 0.0, %v5431
      %v5433 = vpop.f32.mrb[0].mxu0
      %5434 = vmatprep.mubr.f32.mxu0 0.0
      %5435 = vmatmul.mubr.f32.gmra.mrb[0].mxu0 %v5221
      %v5436 = vpop.f32.mrb[0].mxu0
      %v5437 = vadd.f32 0.0, %v5436
      %v5438 = vpop.f32.mrb[0].mxu0
      %5439 = vmatprep.mubr.f32.mxu0 0.0
      %5440 = vmatmul.mubr.f32.gmra.mrb[0].mxu0 %v5224
      %v5441 = vpop.f32.mrb[0].mxu0
      %v5442 = vadd.f32 0.0, %v5441
      %v5443 = vpop.f32.mrb[0].mxu0
      %5444 = vmatprep.mubr.f32.mxu0 0.0
      %5445 = vmatmul.mubr.f32.gmra.mrb[0].mxu0 %v5227
      %v5446 = vpop.f32.mrb[0].mxu0
      %v5447 = vadd.f32 0.0, %v5446
      %v5448 = vpop.f32.mrb[0].mxu0
      %5449 = vmatprep.mubr.f32.mxu0 0.0
      %5450 = vmatmul.mubr.f32.gmra.mrb[0].mxu0 %v5230
      %v5451 = vpop.f32.mrb[0].mxu0
      %v5452 = vadd.f32 0.0, %v5451
      %v5453 = vpop.f32.mrb[0].mxu0
      %5454 = vmatprep.mubr.f32.mxu0 0.0
      %5455 = vmatmul.mubr.f32.gmra.mrb[0].mxu0 %v5233
      %v5456 = vpop.f32.mrb[0].mxu0
      %v5457 = vadd.f32 0.0, %v5456
      %v5458 = vpop.f32.mrb[0].mxu0
      %5459 = vdwg.mxu0
      %v5460 = vadd.f32 %v5072, %v5302
      %v5461 = vadd.f32 %v5073, %v5307
      %v5462 = vadd.f32 %v5074, %v5312
      %v5463 = vadd.f32 %v5075, %v5317
      %v5464 = vadd.f32 %v5076, %v5322
      %v5465 = vadd.f32 %v5077, %v5327
      %v5466 = vadd.f32 %v5078, %v5332
      %v5467 = vadd.f32 %v5079, %v5337
      %v5468 = vadd.f32 %v5080, %v5342
      %v5469 = vadd.f32 %v5081, %v5347
      %v5470 = vadd.f32 %v5082, %v5352
      %v5471 = vadd.f32 %v5083, %v5357
      %v5472 = vadd.f32 %v5084, %v5362
      %v5473 = vadd.f32 %v5085, %v5367
      %v5474 = vadd.f32 %v5086, %v5372
      %v5475 = vadd.f32 %v5087, %v5377
      %v5476 = vadd.f32 %v5088, %v5382
      %v5477 = vadd.f32 %v5089, %v5387
      %v5478 = vadd.f32 %v5090, %v5392
      %v5479 = vadd.f32 %v5091, %v5397
      %v5480 = vadd.f32 %v5092, %v5402
      %v5481 = vadd.f32 %v5093, %v5407
      %v5482 = vadd.f32 %v5094, %v5412
      %v5483 = vadd.f32 %v5095, %v5417
      %v5484 = vadd.f32 %v5096, %v5422
      %v5485 = vadd.f32 %v5097, %v5427
      %v5486 = vadd.f32 %v5098, %v5432
      %v5487 = vadd.f32 %v5099, %v5437
      %v5488 = vadd.f32 %v5100, %v5442
      %v5489 = vadd.f32 %v5101, %v5447
      %v5490 = vadd.f32 %v5102, %v5452
      %v5491 = vadd.f32 %v5103, %v5457
      %v5492 = vld [vmem:[%s5104 + $0x1] sm:$0xff]
      %v5493 = vld [vmem:[%s5104 + $0x9] sm:$0xff]
      %v5494 = vld [vmem:[%s5104 + $0x19] sm:$0xff]
      %v5495 = vld [vmem:[%s5104 + $0x21] sm:$0xff]
      %v5496 = vld [vmem:[%s5104 + $0x31] sm:$0xff]
      %v5497 = vld [vmem:[%s5104 + $0x39] sm:$0xff]
      %v5498 = vld [vmem:[%s5104 + $0x49] sm:$0xff]
      %v5499 = vld [vmem:[%s5104 + $0x51] sm:$0xff]
      %v5500 = vld [vmem:[%s5104 + $0x61] sm:$0xff]
      %v5501 = vld [vmem:[%s5104 + $0x69] sm:$0xff]
      %v5502 = vld [vmem:[%s5104 + $0x79] sm:$0xff]
      %v5503 = vld [vmem:[%s5104 + $0x81] sm:$0xff]
      %v5504 = vld [vmem:[%s5104 + $0x91] sm:$0xff]
      %v5505 = vld [vmem:[%s5104 + $0x99] sm:$0xff]
      %v5506 = vld [vmem:[%s5104 + $0xa9] sm:$0xff]
      %v5507 = vld [vmem:[%s5104 + $0xb1] sm:$0xff]
      %v5508 = vld [vmem:[%s5104 + $0xc1] sm:$0xff]
      %v5509 = vld [vmem:[%s5104 + $0xc9] sm:$0xff]
      %v5510 = vld [vmem:[%s5104 + $0xd9] sm:$0xff]
      %v5511 = vld [vmem:[%s5104 + $0xe1] sm:$0xff]
      %v5512 = vld [vmem:[%s5104 + $0xf1] sm:$0xff]
      %v5513 = vld [vmem:[%s5104 + $0xf9] sm:$0xff]
      %v5514 = vld [vmem:[%s5104 + $0x109] sm:$0xff]
      %v5515 = vld [vmem:[%s5104 + $0x111] sm:$0xff]
      %v5516 = vld [vmem:[%s5104 + $0x121] sm:$0xff]
      %v5517 = vld [vmem:[%s5104 + $0x129] sm:$0xff]
      %v5518 = vld [vmem:[%s5104 + $0x139] sm:$0xff]
      %v5519 = vld [vmem:[%s5104 + $0x141] sm:$0xff]
      %v5520 = vld [vmem:[%s5104 + $0x151] sm:$0xff]
      %v5521 = vld [vmem:[%s5104 + $0x159] sm:$0xff]
      %v5522 = vld [vmem:[%s5104 + $0x169] sm:$0xff]
      %v5523 = vld [vmem:[%s5104 + $0x171] sm:$0xff]
      %s5524 = scalar_lea.vmem %s3, 32
      %v5525 = vld [vmem:[%s5524] sm:$0xff]
      %v5527 = vsel %vm4074, %v5492, 0
      %v5530 = vsel %vm4074, %v5493, 0
      %v5533 = vsel %vm4074, %v5494, 0
      %v5536 = vsel %vm4074, %v5495, 0
      %v5539 = vsel %vm4074, %v5496, 0
      %v5542 = vsel %vm4074, %v5497, 0
      %v5545 = vsel %vm4074, %v5498, 0
      %v5548 = vsel %vm4074, %v5499, 0
      %v5551 = vsel %vm4074, %v5500, 0
      %v5554 = vsel %vm4074, %v5501, 0
      %v5557 = vsel %vm4074, %v5502, 0
      %v5560 = vsel %vm4074, %v5503, 0
      %v5563 = vsel %vm4074, %v5504, 0
      %v5566 = vsel %vm4074, %v5505, 0
      %v5569 = vsel %vm4074, %v5506, 0
      %v5572 = vsel %vm4074, %v5507, 0
      %v5575 = vsel %vm4074, %v5508, 0
      %v5578 = vsel %vm4074, %v5509, 0
      %v5581 = vsel %vm4074, %v5510, 0
      %v5584 = vsel %vm4074, %v5511, 0
      %v5587 = vsel %vm4074, %v5512, 0
      %v5590 = vsel %vm4074, %v5513, 0
      %v5593 = vsel %vm4074, %v5514, 0
      %v5596 = vsel %vm4074, %v5515, 0
      %v5599 = vsel %vm4074, %v5516, 0
      %v5602 = vsel %vm4074, %v5517, 0
      %v5605 = vsel %vm4074, %v5518, 0
      %v5608 = vsel %vm4074, %v5519, 0
      %v5611 = vsel %vm4074, %v5520, 0
      %v5614 = vsel %vm4074, %v5521, 0
      %v5617 = vsel %vm4074, %v5522, 0
      %v5620 = vsel %vm4074, %v5523, 0
      %5622 = vmatprep.subr.mxu0 0.0
      %5623 = vmatpush1.msra.mxu0 %v5525
      %5624 = vmatprep.subr.mxu0 0.0
      %5625 = vmatpush1.msra.mxu0 0.0
      %5626 = vmatprep.subr.mxu0 0.0
      %5627 = vmatpush1.msra.mxu0 0.0
      %5628 = vmatprep.subr.mxu0 0.0
      %5629 = vmatpush1.msra.mxu0 0.0
      %5630 = vmatprep.subr.mxu0 0.0
      %5631 = vmatpush1.msra.mxu0 0.0
      %5632 = vmatprep.subr.mxu0 0.0
      %5633 = vmatpush1.msra.mxu0 0.0
      %5634 = vmatprep.subr.mxu0 0.0
      %5635 = vmatpush1.msra.mxu0 0.0
      %5636 = vmatprep.subr.mxu0 0.0
      %5637 = vmatpush1.msra.mxu0 0.0
      %5638 = vmatprep.subr.mxu0 0.0
      %5639 = vmatpush1.msra.mxu0 0.0
      %5640 = vmatprep.subr.mxu0 0.0
      %5641 = vmatpush1.msra.mxu0 0.0
      %5642 = vmatprep.subr.mxu0 0.0
      %5643 = vmatpush1.msra.mxu0 0.0
      %5644 = vmatprep.subr.mxu0 0.0
      %5645 = vmatpush1.msra.mxu0 0.0
      %5646 = vmatprep.subr.mxu0 0.0
      %5647 = vmatpush1.msra.mxu0 0.0
      %5648 = vmatprep.subr.mxu0 0.0
      %5649 = vmatpush1.msra.mxu0 0.0
      %5650 = vmatprep.subr.mxu0 0.0
      %5651 = vmatpush1.msra.mxu0 0.0
      %5652 = vmatprep.subr.mxu0 0.0
      %5653 = vmatpush1.msra.mxu0 0.0
      %5654 = vmatprep.subr.mxu0 0.0
      %5655 = vmatpush1.msra.mxu0 0.0
      %5656 = vmatprep.subr.mxu0 0.0
      %5657 = vmatpush1.msra.mxu0 0.0
      %5658 = vmatprep.subr.mxu0 0.0
      %5659 = vmatpush1.msra.mxu0 0.0
      %5660 = vmatprep.subr.mxu0 0.0
      %5661 = vmatpush1.msra.mxu0 0.0
      %5662 = vmatprep.subr.mxu0 0.0
      %5663 = vmatpush1.msra.mxu0 0.0
      %5664 = vmatprep.subr.mxu0 0.0
      %5665 = vmatpush1.msra.mxu0 0.0
      %5666 = vmatprep.subr.mxu0 0.0
      %5667 = vmatpush1.msra.mxu0 0.0
      %5668 = vmatprep.subr.mxu0 0.0
      %5669 = vmatpush1.msra.mxu0 0.0
      %5670 = vmatprep.subr.mxu0 0.0
      %5671 = vmatpush1.msra.mxu0 0.0
      %5672 = vmatprep.subr.mxu0 0.0
      %5673 = vmatpush1.msra.mxu0 0.0
      %5674 = vmatprep.subr.mxu0 0.0
      %5675 = vmatpush1.msra.mxu0 0.0
      %5676 = vmatprep.subr.mxu0 0.0
      %5677 = vmatpush1.msra.mxu0 0.0
      %5678 = vmatprep.subr.mxu0 0.0
      %5679 = vmatpush1.msra.mxu0 0.0
      %5680 = vmatprep.subr.mxu0 0.0
      %5681 = vmatpush1.msra.mxu0 0.0
      %5682 = vmatprep.subr.mxu0 0.0
      %5683 = vmatpush1.msra.mxu0 0.0
      %5684 = vmatprep.subr.mxu0 0.0
      %5685 = vmatpush1.msra.mxu0 0.0
      %5686 = vmatprep.mubr.f32.mxu0 0.0
      %5687 = vmatmul.mubr.f32.gmra.mrb[0].mxu0 %v5527
      %v5688 = vpop.f32.mrb[0].mxu0
      %v5689 = vadd.f32 0.0, %v5688
      %v5690 = vpop.f32.mrb[0].mxu0
      %5691 = vmatprep.mubr.f32.mxu0 0.0
      %5692 = vmatmul.mubr.f32.gmra.mrb[0].mxu0 %v5530
      %v5693 = vpop.f32.mrb[0].mxu0
      %v5694 = vadd.f32 0.0, %v5693
      %v5695 = vpop.f32.mrb[0].mxu0
      %5696 = vmatprep.mubr.f32.mxu0 0.0
      %5697 = vmatmul.mubr.f32.gmra.mrb[0].mxu0 %v5533
      %v5698 = vpop.f32.mrb[0].mxu0
      %v5699 = vadd.f32 0.0, %v5698
      %v5700 = vpop.f32.mrb[0].mxu0
      %5701 = vmatprep.mubr.f32.mxu0 0.0
      %5702 = vmatmul.mubr.f32.gmra.mrb[0].mxu0 %v5536
      %v5703 = vpop.f32.mrb[0].mxu0
      %v5704 = vadd.f32 0.0, %v5703
      %v5705 = vpop.f32.mrb[0].mxu0
      %5706 = vmatprep.mubr.f32.mxu0 0.0
      %5707 = vmatmul.mubr.f32.gmra.mrb[0].mxu0 %v5539
      %v5708 = vpop.f32.mrb[0].mxu0
      %v5709 = vadd.f32 0.0, %v5708
      %v5710 = vpop.f32.mrb[0].mxu0
      %5711 = vmatprep.mubr.f32.mxu0 0.0
      %5712 = vmatmul.mubr.f32.gmra.mrb[0].mxu0 %v5542
      %v5713 = vpop.f32.mrb[0].mxu0
      %v5714 = vadd.f32 0.0, %v5713
      %v5715 = vpop.f32.mrb[0].mxu0
      %5716 = vmatprep.mubr.f32.mxu0 0.0
      %5717 = vmatmul.mubr.f32.gmra.mrb[0].mxu0 %v5545
      %v5718 = vpop.f32.mrb[0].mxu0
      %v5719 = vadd.f32 0.0, %v5718
      %v5720 = vpop.f32.mrb[0].mxu0
      %5721 = vmatprep.mubr.f32.mxu0 0.0
      %5722 = vmatmul.mubr.f32.gmra.mrb[0].mxu0 %v5548
      %v5723 = vpop.f32.mrb[0].mxu0
      %v5724 = vadd.f32 0.0, %v5723
      %v5725 = vpop.f32.mrb[0].mxu0
      %5726 = vmatprep.mubr.f32.mxu0 0.0
      %5727 = vmatmul.mubr.f32.gmra.mrb[0].mxu0 %v5551
      %v5728 = vpop.f32.mrb[0].mxu0
      %v5729 = vadd.f32 0.0, %v5728
      %v5730 = vpop.f32.mrb[0].mxu0
      %5731 = vmatprep.mubr.f32.mxu0 0.0
      %5732 = vmatmul.mubr.f32.gmra.mrb[0].mxu0 %v5554
      %v5733 = vpop.f32.mrb[0].mxu0
      %v5734 = vadd.f32 0.0, %v5733
      %v5735 = vpop.f32.mrb[0].mxu0
      %5736 = vmatprep.mubr.f32.mxu0 0.0
      %5737 = vmatmul.mubr.f32.gmra.mrb[0].mxu0 %v5557
      %v5738 = vpop.f32.mrb[0].mxu0
      %v5739 = vadd.f32 0.0, %v5738
      %v5740 = vpop.f32.mrb[0].mxu0
      %5741 = vmatprep.mubr.f32.mxu0 0.0
      %5742 = vmatmul.mubr.f32.gmra.mrb[0].mxu0 %v5560
      %v5743 = vpop.f32.mrb[0].mxu0
      %v5744 = vadd.f32 0.0, %v5743
      %v5745 = vpop.f32.mrb[0].mxu0
      %5746 = vmatprep.mubr.f32.mxu0 0.0
      %5747 = vmatmul.mubr.f32.gmra.mrb[0].mxu0 %v5563
      %v5748 = vpop.f32.mrb[0].mxu0
      %v5749 = vadd.f32 0.0, %v5748
      %v5750 = vpop.f32.mrb[0].mxu0
      %5751 = vmatprep.mubr.f32.mxu0 0.0
      %5752 = vmatmul.mubr.f32.gmra.mrb[0].mxu0 %v5566
      %v5753 = vpop.f32.mrb[0].mxu0
      %v5754 = vadd.f32 0.0, %v5753
      %v5755 = vpop.f32.mrb[0].mxu0
      %5756 = vmatprep.mubr.f32.mxu0 0.0
      %5757 = vmatmul.mubr.f32.gmra.mrb[0].mxu0 %v5569
      %v5758 = vpop.f32.mrb[0].mxu0
      %v5759 = vadd.f32 0.0, %v5758
      %v5760 = vpop.f32.mrb[0].mxu0
      %5761 = vmatprep.mubr.f32.mxu0 0.0
      %5762 = vmatmul.mubr.f32.gmra.mrb[0].mxu0 %v5572
      %v5763 = vpop.f32.mrb[0].mxu0
      %v5764 = vadd.f32 0.0, %v5763
      %v5765 = vpop.f32.mrb[0].mxu0
      %5766 = vmatprep.mubr.f32.mxu0 0.0
      %5767 = vmatmul.mubr.f32.gmra.mrb[0].mxu0 %v5575
      %v5768 = vpop.f32.mrb[0].mxu0
      %v5769 = vadd.f32 0.0, %v5768
      %v5770 = vpop.f32.mrb[0].mxu0
      %5771 = vmatprep.mubr.f32.mxu0 0.0
      %5772 = vmatmul.mubr.f32.gmra.mrb[0].mxu0 %v5578
      %v5773 = vpop.f32.mrb[0].mxu0
      %v5774 = vadd.f32 0.0, %v5773
      %v5775 = vpop.f32.mrb[0].mxu0
      %5776 = vmatprep.mubr.f32.mxu0 0.0
      %5777 = vmatmul.mubr.f32.gmra.mrb[0].mxu0 %v5581
      %v5778 = vpop.f32.mrb[0].mxu0
      %v5779 = vadd.f32 0.0, %v5778
      %v5780 = vpop.f32.mrb[0].mxu0
      %5781 = vmatprep.mubr.f32.mxu0 0.0
      %5782 = vmatmul.mubr.f32.gmra.mrb[0].mxu0 %v5584
      %v5783 = vpop.f32.mrb[0].mxu0
      %v5784 = vadd.f32 0.0, %v5783
      %v5785 = vpop.f32.mrb[0].mxu0
      %5786 = vmatprep.mubr.f32.mxu0 0.0
      %5787 = vmatmul.mubr.f32.gmra.mrb[0].mxu0 %v5587
      %v5788 = vpop.f32.mrb[0].mxu0
      %v5789 = vadd.f32 0.0, %v5788
      %v5790 = vpop.f32.mrb[0].mxu0
      %5791 = vmatprep.mubr.f32.mxu0 0.0
      %5792 = vmatmul.mubr.f32.gmra.mrb[0].mxu0 %v5590
      %v5793 = vpop.f32.mrb[0].mxu0
      %v5794 = vadd.f32 0.0, %v5793
      %v5795 = vpop.f32.mrb[0].mxu0
      %5796 = vmatprep.mubr.f32.mxu0 0.0
      %5797 = vmatmul.mubr.f32.gmra.mrb[0].mxu0 %v5593
      %v5798 = vpop.f32.mrb[0].mxu0
      %v5799 = vadd.f32 0.0, %v5798
      %v5800 = vpop.f32.mrb[0].mxu0
      %5801 = vmatprep.mubr.f32.mxu0 0.0
      %5802 = vmatmul.mubr.f32.gmra.mrb[0].mxu0 %v5596
      %v5803 = vpop.f32.mrb[0].mxu0
      %v5804 = vadd.f32 0.0, %v5803
      %v5805 = vpop.f32.mrb[0].mxu0
      %5806 = vmatprep.mubr.f32.mxu0 0.0
      %5807 = vmatmul.mubr.f32.gmra.mrb[0].mxu0 %v5599
      %v5808 = vpop.f32.mrb[0].mxu0
      %v5809 = vadd.f32 0.0, %v5808
      %v5810 = vpop.f32.mrb[0].mxu0
      %5811 = vmatprep.mubr.f32.mxu0 0.0
      %5812 = vmatmul.mubr.f32.gmra.mrb[0].mxu0 %v5602
      %v5813 = vpop.f32.mrb[0].mxu0
      %v5814 = vadd.f32 0.0, %v5813
      %v5815 = vpop.f32.mrb[0].mxu0
      %5816 = vmatprep.mubr.f32.mxu0 0.0
      %5817 = vmatmul.mubr.f32.gmra.mrb[0].mxu0 %v5605
      %v5818 = vpop.f32.mrb[0].mxu0
      %v5819 = vadd.f32 0.0, %v5818
      %v5820 = vpop.f32.mrb[0].mxu0
      %5821 = vmatprep.mubr.f32.mxu0 0.0
      %5822 = vmatmul.mubr.f32.gmra.mrb[0].mxu0 %v5608
      %v5823 = vpop.f32.mrb[0].mxu0
      %v5824 = vadd.f32 0.0, %v5823
      %v5825 = vpop.f32.mrb[0].mxu0
      %5826 = vmatprep.mubr.f32.mxu0 0.0
      %5827 = vmatmul.mubr.f32.gmra.mrb[0].mxu0 %v5611
      %v5828 = vpop.f32.mrb[0].mxu0
      %v5829 = vadd.f32 0.0, %v5828
      %v5830 = vpop.f32.mrb[0].mxu0
      %5831 = vmatprep.mubr.f32.mxu0 0.0
      %5832 = vmatmul.mubr.f32.gmra.mrb[0].mxu0 %v5614
      %v5833 = vpop.f32.mrb[0].mxu0
      %v5834 = vadd.f32 0.0, %v5833
      %v5835 = vpop.f32.mrb[0].mxu0
      %5836 = vmatprep.mubr.f32.mxu0 0.0
      %5837 = vmatmul.mubr.f32.gmra.mrb[0].mxu0 %v5617
      %v5838 = vpop.f32.mrb[0].mxu0
      %v5839 = vadd.f32 0.0, %v5838
      %v5840 = vpop.f32.mrb[0].mxu0
      %5841 = vmatprep.mubr.f32.mxu0 0.0
      %5842 = vmatmul.mubr.f32.gmra.mrb[0].mxu0 %v5620
      %v5843 = vpop.f32.mrb[0].mxu0
      %v5844 = vadd.f32 0.0, %v5843
      %v5845 = vpop.f32.mrb[0].mxu0
      %5846 = vdwg.mxu0
      %v5847 = vadd.f32 %v5460, %v5689
      %v5848 = vadd.f32 %v5461, %v5694
      %v5849 = vadd.f32 %v5462, %v5699
      %v5850 = vadd.f32 %v5463, %v5704
      %v5851 = vadd.f32 %v5464, %v5709
      %v5852 = vadd.f32 %v5465, %v5714
      %v5853 = vadd.f32 %v5466, %v5719
      %v5854 = vadd.f32 %v5467, %v5724
      %v5855 = vadd.f32 %v5468, %v5729
      %v5856 = vadd.f32 %v5469, %v5734
      %v5857 = vadd.f32 %v5470, %v5739
      %v5858 = vadd.f32 %v5471, %v5744
      %v5859 = vadd.f32 %v5472, %v5749
      %v5860 = vadd.f32 %v5473, %v5754
      %v5861 = vadd.f32 %v5474, %v5759
      %v5862 = vadd.f32 %v5475, %v5764
      %v5863 = vadd.f32 %v5476, %v5769
      %v5864 = vadd.f32 %v5477, %v5774
      %v5865 = vadd.f32 %v5478, %v5779
      %v5866 = vadd.f32 %v5479, %v5784
      %v5867 = vadd.f32 %v5480, %v5789
      %v5868 = vadd.f32 %v5481, %v5794
      %v5869 = vadd.f32 %v5482, %v5799
      %v5870 = vadd.f32 %v5483, %v5804
      %v5871 = vadd.f32 %v5484, %v5809
      %v5872 = vadd.f32 %v5485, %v5814
      %v5873 = vadd.f32 %v5486, %v5819
      %v5874 = vadd.f32 %v5487, %v5824
      %v5875 = vadd.f32 %v5488, %v5829
      %v5876 = vadd.f32 %v5489, %v5834
      %v5877 = vadd.f32 %v5490, %v5839
      %v5878 = vadd.f32 %v5491, %v5844
      %v5879 = vld [vmem:[%s5104 + $0x2] sm:$0xff]
      %v5880 = vld [vmem:[%s5104 + $0xa] sm:$0xff]
      %v5881 = vld [vmem:[%s5104 + $0x1a] sm:$0xff]
      %v5882 = vld [vmem:[%s5104 + $0x22] sm:$0xff]
      %v5883 = vld [vmem:[%s5104 + $0x32] sm:$0xff]
      %v5884 = vld [vmem:[%s5104 + $0x3a] sm:$0xff]
      %v5885 = vld [vmem:[%s5104 + $0x4a] sm:$0xff]
      %v5886 = vld [vmem:[%s5104 + $0x52] sm:$0xff]
      %v5887 = vld [vmem:[%s5104 + $0x62] sm:$0xff]
      %v5888 = vld [vmem:[%s5104 + $0x6a] sm:$0xff]
      %v5889 = vld [vmem:[%s5104 + $0x7a] sm:$0xff]
      %v5890 = vld [vmem:[%s5104 + $0x82] sm:$0xff]
      %v5891 = vld [vmem:[%s5104 + $0x92] sm:$0xff]
      %v5892 = vld [vmem:[%s5104 + $0x9a] sm:$0xff]
      %v5893 = vld [vmem:[%s5104 + $0xaa] sm:$0xff]
      %v5894 = vld [vmem:[%s5104 + $0xb2] sm:$0xff]
      %v5895 = vld [vmem:[%s5104 + $0xc2] sm:$0xff]
      %v5896 = vld [vmem:[%s5104 + $0xca] sm:$0xff]
      %v5897 = vld [vmem:[%s5104 + $0xda] sm:$0xff]
      %v5898 = vld [vmem:[%s5104 + $0xe2] sm:$0xff]
      %v5899 = vld [vmem:[%s5104 + $0xf2] sm:$0xff]
      %v5900 = vld [vmem:[%s5104 + $0xfa] sm:$0xff]
      %v5901 = vld [vmem:[%s5104 + $0x10a] sm:$0xff]
      %v5902 = vld [vmem:[%s5104 + $0x112] sm:$0xff]
      %v5903 = vld [vmem:[%s5104 + $0x122] sm:$0xff]
      %v5904 = vld [vmem:[%s5104 + $0x12a] sm:$0xff]
      %v5905 = vld [vmem:[%s5104 + $0x13a] sm:$0xff]
      %v5906 = vld [vmem:[%s5104 + $0x142] sm:$0xff]
      %v5907 = vld [vmem:[%s5104 + $0x152] sm:$0xff]
      %v5908 = vld [vmem:[%s5104 + $0x15a] sm:$0xff]
      %v5909 = vld [vmem:[%s5104 + $0x16a] sm:$0xff]
      %v5910 = vld [vmem:[%s5104 + $0x172] sm:$0xff]
      %s5911 = scalar_lea.vmem %s3, 40
      %v5912 = vld [vmem:[%s5911] sm:$0xff]
      %v5914 = vsel %vm4074, %v5879, 0
      %v5917 = vsel %vm4074, %v5880, 0
      %v5920 = vsel %vm4074, %v5881, 0
      %v5923 = vsel %vm4074, %v5882, 0
      %v5926 = vsel %vm4074, %v5883, 0
      %v5929 = vsel %vm4074, %v5884, 0
      %v5932 = vsel %vm4074, %v5885, 0
      %v5935 = vsel %vm4074, %v5886, 0
      %v5938 = vsel %vm4074, %v5887, 0
      %v5941 = vsel %vm4074, %v5888, 0
      %v5944 = vsel %vm4074, %v5889, 0
      %v5947 = vsel %vm4074, %v5890, 0
      %v5950 = vsel %vm4074, %v5891, 0
      %v5953 = vsel %vm4074, %v5892, 0
      %v5956 = vsel %vm4074, %v5893, 0
      %v5959 = vsel %vm4074, %v5894, 0
      %v5962 = vsel %vm4074, %v5895, 0
      %v5965 = vsel %vm4074, %v5896, 0
      %v5968 = vsel %vm4074, %v5897, 0
      %v5971 = vsel %vm4074, %v5898, 0
      %v5974 = vsel %vm4074, %v5899, 0
      %v5977 = vsel %vm4074, %v5900, 0
      %v5980 = vsel %vm4074, %v5901, 0
      %v5983 = vsel %vm4074, %v5902, 0
      %v5986 = vsel %vm4074, %v5903, 0
      %v5989 = vsel %vm4074, %v5904, 0
      %v5992 = vsel %vm4074, %v5905, 0
      %v5995 = vsel %vm4074, %v5906, 0
      %v5998 = vsel %vm4074, %v5907, 0
      %v6001 = vsel %vm4074, %v5908, 0
      %v6004 = vsel %vm4074, %v5909, 0
      %v6007 = vsel %vm4074, %v5910, 0
      %6009 = vmatprep.subr.mxu0 0.0
      %6010 = vmatpush1.msra.mxu0 %v5912
      %6011 = vmatprep.subr.mxu0 0.0
      %6012 = vmatpush1.msra.mxu0 0.0
      %6013 = vmatprep.subr.mxu0 0.0
      %6014 = vmatpush1.msra.mxu0 0.0
      %6015 = vmatprep.subr.mxu0 0.0
      %6016 = vmatpush1.msra.mxu0 0.0
      %6017 = vmatprep.subr.mxu0 0.0
      %6018 = vmatpush1.msra.mxu0 0.0
      %6019 = vmatprep.subr.mxu0 0.0
      %6020 = vmatpush1.msra.mxu0 0.0
      %6021 = vmatprep.subr.mxu0 0.0
      %6022 = vmatpush1.msra.mxu0 0.0
      %6023 = vmatprep.subr.mxu0 0.0
      %6024 = vmatpush1.msra.mxu0 0.0
      %6025 = vmatprep.subr.mxu0 0.0
      %6026 = vmatpush1.msra.mxu0 0.0
      %6027 = vmatprep.subr.mxu0 0.0
      %6028 = vmatpush1.msra.mxu0 0.0
      %6029 = vmatprep.subr.mxu0 0.0
      %6030 = vmatpush1.msra.mxu0 0.0
      %6031 = vmatprep.subr.mxu0 0.0
      %6032 = vmatpush1.msra.mxu0 0.0
      %6033 = vmatprep.subr.mxu0 0.0
      %6034 = vmatpush1.msra.mxu0 0.0
      %6035 = vmatprep.subr.mxu0 0.0
      %6036 = vmatpush1.msra.mxu0 0.0
      %6037 = vmatprep.subr.mxu0 0.0
      %6038 = vmatpush1.msra.mxu0 0.0
      %6039 = vmatprep.subr.mxu0 0.0
      %6040 = vmatpush1.msra.mxu0 0.0
      %6041 = vmatprep.subr.mxu0 0.0
      %6042 = vmatpush1.msra.mxu0 0.0
      %6043 = vmatprep.subr.mxu0 0.0
      %6044 = vmatpush1.msra.mxu0 0.0
      %6045 = vmatprep.subr.mxu0 0.0
      %6046 = vmatpush1.msra.mxu0 0.0
      %6047 = vmatprep.subr.mxu0 0.0
      %6048 = vmatpush1.msra.mxu0 0.0
      %6049 = vmatprep.subr.mxu0 0.0
      %6050 = vmatpush1.msra.mxu0 0.0
      %6051 = vmatprep.subr.mxu0 0.0
      %6052 = vmatpush1.msra.mxu0 0.0
      %6053 = vmatprep.subr.mxu0 0.0
      %6054 = vmatpush1.msra.mxu0 0.0
      %6055 = vmatprep.subr.mxu0 0.0
      %6056 = vmatpush1.msra.mxu0 0.0
      %6057 = vmatprep.subr.mxu0 0.0
      %6058 = vmatpush1.msra.mxu0 0.0
      %6059 = vmatprep.subr.mxu0 0.0
      %6060 = vmatpush1.msra.mxu0 0.0
      %6061 = vmatprep.subr.mxu0 0.0
      %6062 = vmatpush1.msra.mxu0 0.0
      %6063 = vmatprep.subr.mxu0 0.0
      %6064 = vmatpush1.msra.mxu0 0.0
      %6065 = vmatprep.subr.mxu0 0.0
      %6066 = vmatpush1.msra.mxu0 0.0
      %6067 = vmatprep.subr.mxu0 0.0
      %6068 = vmatpush1.msra.mxu0 0.0
      %6069 = vmatprep.subr.mxu0 0.0
      %6070 = vmatpush1.msra.mxu0 0.0
      %6071 = vmatprep.subr.mxu0 0.0
      %6072 = vmatpush1.msra.mxu0 0.0
      %6073 = vmatprep.mubr.f32.mxu0 0.0
      %6074 = vmatmul.mubr.f32.gmra.mrb[0].mxu0 %v5914
      %v6075 = vpop.f32.mrb[0].mxu0
      %v6076 = vadd.f32 0.0, %v6075
      %v6077 = vpop.f32.mrb[0].mxu0
      %6078 = vmatprep.mubr.f32.mxu0 0.0
      %6079 = vmatmul.mubr.f32.gmra.mrb[0].mxu0 %v5917
      %v6080 = vpop.f32.mrb[0].mxu0
      %v6081 = vadd.f32 0.0, %v6080
      %v6082 = vpop.f32.mrb[0].mxu0
      %6083 = vmatprep.mubr.f32.mxu0 0.0
      %6084 = vmatmul.mubr.f32.gmra.mrb[0].mxu0 %v5920
      %v6085 = vpop.f32.mrb[0].mxu0
      %v6086 = vadd.f32 0.0, %v6085
      %v6087 = vpop.f32.mrb[0].mxu0
      %6088 = vmatprep.mubr.f32.mxu0 0.0
      %6089 = vmatmul.mubr.f32.gmra.mrb[0].mxu0 %v5923
      %v6090 = vpop.f32.mrb[0].mxu0
      %v6091 = vadd.f32 0.0, %v6090
      %v6092 = vpop.f32.mrb[0].mxu0
      %6093 = vmatprep.mubr.f32.mxu0 0.0
      %6094 = vmatmul.mubr.f32.gmra.mrb[0].mxu0 %v5926
      %v6095 = vpop.f32.mrb[0].mxu0
      %v6096 = vadd.f32 0.0, %v6095
      %v6097 = vpop.f32.mrb[0].mxu0
      %6098 = vmatprep.mubr.f32.mxu0 0.0
      %6099 = vmatmul.mubr.f32.gmra.mrb[0].mxu0 %v5929
      %v6100 = vpop.f32.mrb[0].mxu0
      %v6101 = vadd.f32 0.0, %v6100
      %v6102 = vpop.f32.mrb[0].mxu0
      %6103 = vmatprep.mubr.f32.mxu0 0.0
      %6104 = vmatmul.mubr.f32.gmra.mrb[0].mxu0 %v5932
      %v6105 = vpop.f32.mrb[0].mxu0
      %v6106 = vadd.f32 0.0, %v6105
      %v6107 = vpop.f32.mrb[0].mxu0
      %6108 = vmatprep.mubr.f32.mxu0 0.0
      %6109 = vmatmul.mubr.f32.gmra.mrb[0].mxu0 %v5935
      %v6110 = vpop.f32.mrb[0].mxu0
      %v6111 = vadd.f32 0.0, %v6110
      %v6112 = vpop.f32.mrb[0].mxu0
      %6113 = vmatprep.mubr.f32.mxu0 0.0
      %6114 = vmatmul.mubr.f32.gmra.mrb[0].mxu0 %v5938
      %v6115 = vpop.f32.mrb[0].mxu0
      %v6116 = vadd.f32 0.0, %v6115
      %v6117 = vpop.f32.mrb[0].mxu0
      %6118 = vmatprep.mubr.f32.mxu0 0.0
      %6119 = vmatmul.mubr.f32.gmra.mrb[0].mxu0 %v5941
      %v6120 = vpop.f32.mrb[0].mxu0
      %v6121 = vadd.f32 0.0, %v6120
      %v6122 = vpop.f32.mrb[0].mxu0
      %6123 = vmatprep.mubr.f32.mxu0 0.0
      %6124 = vmatmul.mubr.f32.gmra.mrb[0].mxu0 %v5944
      %v6125 = vpop.f32.mrb[0].mxu0
      %v6126 = vadd.f32 0.0, %v6125
      %v6127 = vpop.f32.mrb[0].mxu0
      %6128 = vmatprep.mubr.f32.mxu0 0.0
      %6129 = vmatmul.mubr.f32.gmra.mrb[0].mxu0 %v5947
      %v6130 = vpop.f32.mrb[0].mxu0
      %v6131 = vadd.f32 0.0, %v6130
      %v6132 = vpop.f32.mrb[0].mxu0
      %6133 = vmatprep.mubr.f32.mxu0 0.0
      %6134 = vmatmul.mubr.f32.gmra.mrb[0].mxu0 %v5950
      %v6135 = vpop.f32.mrb[0].mxu0
      %v6136 = vadd.f32 0.0, %v6135
      %v6137 = vpop.f32.mrb[0].mxu0
      %6138 = vmatprep.mubr.f32.mxu0 0.0
      %6139 = vmatmul.mubr.f32.gmra.mrb[0].mxu0 %v5953
      %v6140 = vpop.f32.mrb[0].mxu0
      %v6141 = vadd.f32 0.0, %v6140
      %v6142 = vpop.f32.mrb[0].mxu0
      %6143 = vmatprep.mubr.f32.mxu0 0.0
      %6144 = vmatmul.mubr.f32.gmra.mrb[0].mxu0 %v5956
      %v6145 = vpop.f32.mrb[0].mxu0
      %v6146 = vadd.f32 0.0, %v6145
      %v6147 = vpop.f32.mrb[0].mxu0
      %6148 = vmatprep.mubr.f32.mxu0 0.0
      %6149 = vmatmul.mubr.f32.gmra.mrb[0].mxu0 %v5959
      %v6150 = vpop.f32.mrb[0].mxu0
      %v6151 = vadd.f32 0.0, %v6150
      %v6152 = vpop.f32.mrb[0].mxu0
      %6153 = vmatprep.mubr.f32.mxu0 0.0
      %6154 = vmatmul.mubr.f32.gmra.mrb[0].mxu0 %v5962
      %v6155 = vpop.f32.mrb[0].mxu0
      %v6156 = vadd.f32 0.0, %v6155
      %v6157 = vpop.f32.mrb[0].mxu0
      %6158 = vmatprep.mubr.f32.mxu0 0.0
      %6159 = vmatmul.mubr.f32.gmra.mrb[0].mxu0 %v5965
      %v6160 = vpop.f32.mrb[0].mxu0
      %v6161 = vadd.f32 0.0, %v6160
      %v6162 = vpop.f32.mrb[0].mxu0
      %6163 = vmatprep.mubr.f32.mxu0 0.0
      %6164 = vmatmul.mubr.f32.gmra.mrb[0].mxu0 %v5968
      %v6165 = vpop.f32.mrb[0].mxu0
      %v6166 = vadd.f32 0.0, %v6165
      %v6167 = vpop.f32.mrb[0].mxu0
      %6168 = vmatprep.mubr.f32.mxu0 0.0
      %6169 = vmatmul.mubr.f32.gmra.mrb[0].mxu0 %v5971
      %v6170 = vpop.f32.mrb[0].mxu0
      %v6171 = vadd.f32 0.0, %v6170
      %v6172 = vpop.f32.mrb[0].mxu0
      %6173 = vmatprep.mubr.f32.mxu0 0.0
      %6174 = vmatmul.mubr.f32.gmra.mrb[0].mxu0 %v5974
      %v6175 = vpop.f32.mrb[0].mxu0
      %v6176 = vadd.f32 0.0, %v6175
      %v6177 = vpop.f32.mrb[0].mxu0
      %6178 = vmatprep.mubr.f32.mxu0 0.0
      %6179 = vmatmul.mubr.f32.gmra.mrb[0].mxu0 %v5977
      %v6180 = vpop.f32.mrb[0].mxu0
      %v6181 = vadd.f32 0.0, %v6180
      %v6182 = vpop.f32.mrb[0].mxu0
      %6183 = vmatprep.mubr.f32.mxu0 0.0
      %6184 = vmatmul.mubr.f32.gmra.mrb[0].mxu0 %v5980
      %v6185 = vpop.f32.mrb[0].mxu0
      %v6186 = vadd.f32 0.0, %v6185
      %v6187 = vpop.f32.mrb[0].mxu0
      %6188 = vmatprep.mubr.f32.mxu0 0.0
      %6189 = vmatmul.mubr.f32.gmra.mrb[0].mxu0 %v5983
      %v6190 = vpop.f32.mrb[0].mxu0
      %v6191 = vadd.f32 0.0, %v6190
      %v6192 = vpop.f32.mrb[0].mxu0
      %6193 = vmatprep.mubr.f32.mxu0 0.0
      %6194 = vmatmul.mubr.f32.gmra.mrb[0].mxu0 %v5986
      %v6195 = vpop.f32.mrb[0].mxu0
      %v6196 = vadd.f32 0.0, %v6195
      %v6197 = vpop.f32.mrb[0].mxu0
      %6198 = vmatprep.mubr.f32.mxu0 0.0
      %6199 = vmatmul.mubr.f32.gmra.mrb[0].mxu0 %v5989
      %v6200 = vpop.f32.mrb[0].mxu0
      %v6201 = vadd.f32 0.0, %v6200
      %v6202 = vpop.f32.mrb[0].mxu0
      %6203 = vmatprep.mubr.f32.mxu0 0.0
      %6204 = vmatmul.mubr.f32.gmra.mrb[0].mxu0 %v5992
      %v6205 = vpop.f32.mrb[0].mxu0
      %v6206 = vadd.f32 0.0, %v6205
      %v6207 = vpop.f32.mrb[0].mxu0
      %6208 = vmatprep.mubr.f32.mxu0 0.0
      %6209 = vmatmul.mubr.f32.gmra.mrb[0].mxu0 %v5995
      %v6210 = vpop.f32.mrb[0].mxu0
      %v6211 = vadd.f32 0.0, %v6210
      %v6212 = vpop.f32.mrb[0].mxu0
      %6213 = vmatprep.mubr.f32.mxu0 0.0
      %6214 = vmatmul.mubr.f32.gmra.mrb[0].mxu0 %v5998
      %v6215 = vpop.f32.mrb[0].mxu0
      %v6216 = vadd.f32 0.0, %v6215
      %v6217 = vpop.f32.mrb[0].mxu0
      %6218 = vmatprep.mubr.f32.mxu0 0.0
      %6219 = vmatmul.mubr.f32.gmra.mrb[0].mxu0 %v6001
      %v6220 = vpop.f32.mrb[0].mxu0
      %v6221 = vadd.f32 0.0, %v6220
      %v6222 = vpop.f32.mrb[0].mxu0
      %6223 = vmatprep.mubr.f32.mxu0 0.0
      %6224 = vmatmul.mubr.f32.gmra.mrb[0].mxu0 %v6004
      %v6225 = vpop.f32.mrb[0].mxu0
      %v6226 = vadd.f32 0.0, %v6225
      %v6227 = vpop.f32.mrb[0].mxu0
      %6228 = vmatprep.mubr.f32.mxu0 0.0
      %6229 = vmatmul.mubr.f32.gmra.mrb[0].mxu0 %v6007
      %v6230 = vpop.f32.mrb[0].mxu0
      %v6231 = vadd.f32 0.0, %v6230
      %v6232 = vpop.f32.mrb[0].mxu0
      %6233 = vdwg.mxu0
      %v6234 = vadd.f32 %v5847, %v6076
      %v6235 = vadd.f32 %v5848, %v6081
      %v6236 = vadd.f32 %v5849, %v6086
      %v6237 = vadd.f32 %v5850, %v6091
      %v6238 = vadd.f32 %v5851, %v6096
      %v6239 = vadd.f32 %v5852, %v6101
      %v6240 = vadd.f32 %v5853, %v6106
      %v6241 = vadd.f32 %v5854, %v6111
      %v6242 = vadd.f32 %v5855, %v6116
      %v6243 = vadd.f32 %v5856, %v6121
      %v6244 = vadd.f32 %v5857, %v6126
      %v6245 = vadd.f32 %v5858, %v6131
      %v6246 = vadd.f32 %v5859, %v6136
      %v6247 = vadd.f32 %v5860, %v6141
      %v6248 = vadd.f32 %v5861, %v6146
      %v6249 = vadd.f32 %v5862, %v6151
      %v6250 = vadd.f32 %v5863, %v6156
      %v6251 = vadd.f32 %v5864, %v6161
      %v6252 = vadd.f32 %v5865, %v6166
      %v6253 = vadd.f32 %v5866, %v6171
      %v6254 = vadd.f32 %v5867, %v6176
      %v6255 = vadd.f32 %v5868, %v6181
      %v6256 = vadd.f32 %v5869, %v6186
      %v6257 = vadd.f32 %v5870, %v6191
      %v6258 = vadd.f32 %v5871, %v6196
      %v6259 = vadd.f32 %v5872, %v6201
      %v6260 = vadd.f32 %v5873, %v6206
      %v6261 = vadd.f32 %v5874, %v6211
      %v6262 = vadd.f32 %v5875, %v6216
      %v6263 = vadd.f32 %v5876, %v6221
      %v6264 = vadd.f32 %v5877, %v6226
      %v6265 = vadd.f32 %v5878, %v6231
      %s6266 = scalar_lea.vmem [#allocation2], 48
      %v6267 = vld [vmem:[%s6266] sm:$0xff]
      %v6268 = vld [vmem:[%s6266 + $0x8] sm:$0xff]
      %v6269 = vld [vmem:[%s6266 + $0x18] sm:$0xff]
      %v6270 = vld [vmem:[%s6266 + $0x20] sm:$0xff]
      %v6271 = vld [vmem:[%s6266 + $0x30] sm:$0xff]
      %v6272 = vld [vmem:[%s6266 + $0x38] sm:$0xff]
      %v6273 = vld [vmem:[%s6266 + $0x48] sm:$0xff]
      %v6274 = vld [vmem:[%s6266 + $0x50] sm:$0xff]
      %v6275 = vld [vmem:[%s6266 + $0x60] sm:$0xff]
      %v6276 = vld [vmem:[%s6266 + $0x68] sm:$0xff]
      %v6277 = vld [vmem:[%s6266 + $0x78] sm:$0xff]
      %v6278 = vld [vmem:[%s6266 + $0x80] sm:$0xff]
      %v6279 = vld [vmem:[%s6266 + $0x90] sm:$0xff]
      %v6280 = vld [vmem:[%s6266 + $0x98] sm:$0xff]
      %v6281 = vld [vmem:[%s6266 + $0xa8] sm:$0xff]
      %v6282 = vld [vmem:[%s6266 + $0xb0] sm:$0xff]
      %v6283 = vld [vmem:[%s6266 + $0xc0] sm:$0xff]
      %v6284 = vld [vmem:[%s6266 + $0xc8] sm:$0xff]
      %v6285 = vld [vmem:[%s6266 + $0xd8] sm:$0xff]
      %v6286 = vld [vmem:[%s6266 + $0xe0] sm:$0xff]
      %v6287 = vld [vmem:[%s6266 + $0xf0] sm:$0xff]
      %v6288 = vld [vmem:[%s6266 + $0xf8] sm:$0xff]
      %v6289 = vld [vmem:[%s6266 + $0x108] sm:$0xff]
      %v6290 = vld [vmem:[%s6266 + $0x110] sm:$0xff]
      %v6291 = vld [vmem:[%s6266 + $0x120] sm:$0xff]
      %v6292 = vld [vmem:[%s6266 + $0x128] sm:$0xff]
      %v6293 = vld [vmem:[%s6266 + $0x138] sm:$0xff]
      %v6294 = vld [vmem:[%s6266 + $0x140] sm:$0xff]
      %v6295 = vld [vmem:[%s6266 + $0x150] sm:$0xff]
      %v6296 = vld [vmem:[%s6266 + $0x158] sm:$0xff]
      %v6297 = vld [vmem:[%s6266 + $0x168] sm:$0xff]
      %v6298 = vld [vmem:[%s6266 + $0x170] sm:$0xff]
      %s6299 = scalar_lea.vmem %s3, 48
      %v6300 = vld [vmem:[%s6299] sm:$0xff]
      %v6302 = vsel %vm4074, %v6267, 0
      %v6305 = vsel %vm4074, %v6268, 0
      %v6308 = vsel %vm4074, %v6269, 0
      %v6311 = vsel %vm4074, %v6270, 0
      %v6314 = vsel %vm4074, %v6271, 0
      %v6317 = vsel %vm4074, %v6272, 0
      %v6320 = vsel %vm4074, %v6273, 0
      %v6323 = vsel %vm4074, %v6274, 0
      %v6326 = vsel %vm4074, %v6275, 0
      %v6329 = vsel %vm4074, %v6276, 0
      %v6332 = vsel %vm4074, %v6277, 0
      %v6335 = vsel %vm4074, %v6278, 0
      %v6338 = vsel %vm4074, %v6279, 0
      %v6341 = vsel %vm4074, %v6280, 0
      %v6344 = vsel %vm4074, %v6281, 0
      %v6347 = vsel %vm4074, %v6282, 0
      %v6350 = vsel %vm4074, %v6283, 0
      %v6353 = vsel %vm4074, %v6284, 0
      %v6356 = vsel %vm4074, %v6285, 0
      %v6359 = vsel %vm4074, %v6286, 0
      %v6362 = vsel %vm4074, %v6287, 0
      %v6365 = vsel %vm4074, %v6288, 0
      %v6368 = vsel %vm4074, %v6289, 0
      %v6371 = vsel %vm4074, %v6290, 0
      %v6374 = vsel %vm4074, %v6291, 0
      %v6377 = vsel %vm4074, %v6292, 0
      %v6380 = vsel %vm4074, %v6293, 0
      %v6383 = vsel %vm4074, %v6294, 0
      %v6386 = vsel %vm4074, %v6295, 0
      %v6389 = vsel %vm4074, %v6296, 0
      %v6392 = vsel %vm4074, %v6297, 0
      %v6395 = vsel %vm4074, %v6298, 0
      %6397 = vmatprep.subr.mxu0 0.0
      %6398 = vmatpush1.msra.mxu0 %v6300
      %6399 = vmatprep.subr.mxu0 0.0
      %6400 = vmatpush1.msra.mxu0 0.0
      %6401 = vmatprep.subr.mxu0 0.0
      %6402 = vmatpush1.msra.mxu0 0.0
      %6403 = vmatprep.subr.mxu0 0.0
      %6404 = vmatpush1.msra.mxu0 0.0
      %6405 = vmatprep.subr.mxu0 0.0
      %6406 = vmatpush1.msra.mxu0 0.0
      %6407 = vmatprep.subr.mxu0 0.0
      %6408 = vmatpush1.msra.mxu0 0.0
      %6409 = vmatprep.subr.mxu0 0.0
      %6410 = vmatpush1.msra.mxu0 0.0
      %6411 = vmatprep.subr.mxu0 0.0
      %6412 = vmatpush1.msra.mxu0 0.0
      %6413 = vmatprep.subr.mxu0 0.0
      %6414 = vmatpush1.msra.mxu0 0.0
      %6415 = vmatprep.subr.mxu0 0.0
      %6416 = vmatpush1.msra.mxu0 0.0
      %6417 = vmatprep.subr.mxu0 0.0
      %6418 = vmatpush1.msra.mxu0 0.0
      %6419 = vmatprep.subr.mxu0 0.0
      %6420 = vmatpush1.msra.mxu0 0.0
      %6421 = vmatprep.subr.mxu0 0.0
      %6422 = vmatpush1.msra.mxu0 0.0
      %6423 = vmatprep.subr.mxu0 0.0
      %6424 = vmatpush1.msra.mxu0 0.0
      %6425 = vmatprep.subr.mxu0 0.0
      %6426 = vmatpush1.msra.mxu0 0.0
      %6427 = vmatprep.subr.mxu0 0.0
      %6428 = vmatpush1.msra.mxu0 0.0
      %6429 = vmatprep.subr.mxu0 0.0
      %6430 = vmatpush1.msra.mxu0 0.0
      %6431 = vmatprep.subr.mxu0 0.0
      %6432 = vmatpush1.msra.mxu0 0.0
      %6433 = vmatprep.subr.mxu0 0.0
      %6434 = vmatpush1.msra.mxu0 0.0
      %6435 = vmatprep.subr.mxu0 0.0
      %6436 = vmatpush1.msra.mxu0 0.0
      %6437 = vmatprep.subr.mxu0 0.0
      %6438 = vmatpush1.msra.mxu0 0.0
      %6439 = vmatprep.subr.mxu0 0.0
      %6440 = vmatpush1.msra.mxu0 0.0
      %6441 = vmatprep.subr.mxu0 0.0
      %6442 = vmatpush1.msra.mxu0 0.0
      %6443 = vmatprep.subr.mxu0 0.0
      %6444 = vmatpush1.msra.mxu0 0.0
      %6445 = vmatprep.subr.mxu0 0.0
      %6446 = vmatpush1.msra.mxu0 0.0
      %6447 = vmatprep.subr.mxu0 0.0
      %6448 = vmatpush1.msra.mxu0 0.0
      %6449 = vmatprep.subr.mxu0 0.0
      %6450 = vmatpush1.msra.mxu0 0.0
      %6451 = vmatprep.subr.mxu0 0.0
      %6452 = vmatpush1.msra.mxu0 0.0
      %6453 = vmatprep.subr.mxu0 0.0
      %6454 = vmatpush1.msra.mxu0 0.0
      %6455 = vmatprep.subr.mxu0 0.0
      %6456 = vmatpush1.msra.mxu0 0.0
      %6457 = vmatprep.subr.mxu0 0.0
      %6458 = vmatpush1.msra.mxu0 0.0
      %6459 = vmatprep.subr.mxu0 0.0
      %6460 = vmatpush1.msra.mxu0 0.0
      %6461 = vmatprep.mubr.f32.mxu0 0.0
      %6462 = vmatmul.mubr.f32.gmra.mrb[0].mxu0 %v6302
      %v6463 = vpop.f32.mrb[0].mxu0
      %v6464 = vadd.f32 0.0, %v6463
      %v6465 = vpop.f32.mrb[0].mxu0
      %6466 = vmatprep.mubr.f32.mxu0 0.0
      %6467 = vmatmul.mubr.f32.gmra.mrb[0].mxu0 %v6305
      %v6468 = vpop.f32.mrb[0].mxu0
      %v6469 = vadd.f32 0.0, %v6468
      %v6470 = vpop.f32.mrb[0].mxu0
      %6471 = vmatprep.mubr.f32.mxu0 0.0
      %6472 = vmatmul.mubr.f32.gmra.mrb[0].mxu0 %v6308
      %v6473 = vpop.f32.mrb[0].mxu0
      %v6474 = vadd.f32 0.0, %v6473
      %v6475 = vpop.f32.mrb[0].mxu0
      %6476 = vmatprep.mubr.f32.mxu0 0.0
      %6477 = vmatmul.mubr.f32.gmra.mrb[0].mxu0 %v6311
      %v6478 = vpop.f32.mrb[0].mxu0
      %v6479 = vadd.f32 0.0, %v6478
      %v6480 = vpop.f32.mrb[0].mxu0
      %6481 = vmatprep.mubr.f32.mxu0 0.0
      %6482 = vmatmul.mubr.f32.gmra.mrb[0].mxu0 %v6314
      %v6483 = vpop.f32.mrb[0].mxu0
      %v6484 = vadd.f32 0.0, %v6483
      %v6485 = vpop.f32.mrb[0].mxu0
      %6486 = vmatprep.mubr.f32.mxu0 0.0
      %6487 = vmatmul.mubr.f32.gmra.mrb[0].mxu0 %v6317
      %v6488 = vpop.f32.mrb[0].mxu0
      %v6489 = vadd.f32 0.0, %v6488
      %v6490 = vpop.f32.mrb[0].mxu0
      %6491 = vmatprep.mubr.f32.mxu0 0.0
      %6492 = vmatmul.mubr.f32.gmra.mrb[0].mxu0 %v6320
      %v6493 = vpop.f32.mrb[0].mxu0
      %v6494 = vadd.f32 0.0, %v6493
      %v6495 = vpop.f32.mrb[0].mxu0
      %6496 = vmatprep.mubr.f32.mxu0 0.0
      %6497 = vmatmul.mubr.f32.gmra.mrb[0].mxu0 %v6323
      %v6498 = vpop.f32.mrb[0].mxu0
      %v6499 = vadd.f32 0.0, %v6498
      %v6500 = vpop.f32.mrb[0].mxu0
      %6501 = vmatprep.mubr.f32.mxu0 0.0
      %6502 = vmatmul.mubr.f32.gmra.mrb[0].mxu0 %v6326
      %v6503 = vpop.f32.mrb[0].mxu0
      %v6504 = vadd.f32 0.0, %v6503
      %v6505 = vpop.f32.mrb[0].mxu0
      %6506 = vmatprep.mubr.f32.mxu0 0.0
      %6507 = vmatmul.mubr.f32.gmra.mrb[0].mxu0 %v6329
      %v6508 = vpop.f32.mrb[0].mxu0
      %v6509 = vadd.f32 0.0, %v6508
      %v6510 = vpop.f32.mrb[0].mxu0
      %6511 = vmatprep.mubr.f32.mxu0 0.0
      %6512 = vmatmul.mubr.f32.gmra.mrb[0].mxu0 %v6332
      %v6513 = vpop.f32.mrb[0].mxu0
      %v6514 = vadd.f32 0.0, %v6513
      %v6515 = vpop.f32.mrb[0].mxu0
      %6516 = vmatprep.mubr.f32.mxu0 0.0
      %6517 = vmatmul.mubr.f32.gmra.mrb[0].mxu0 %v6335
      %v6518 = vpop.f32.mrb[0].mxu0
      %v6519 = vadd.f32 0.0, %v6518
      %v6520 = vpop.f32.mrb[0].mxu0
      %6521 = vmatprep.mubr.f32.mxu0 0.0
      %6522 = vmatmul.mubr.f32.gmra.mrb[0].mxu0 %v6338
      %v6523 = vpop.f32.mrb[0].mxu0
      %v6524 = vadd.f32 0.0, %v6523
      %v6525 = vpop.f32.mrb[0].mxu0
      %6526 = vmatprep.mubr.f32.mxu0 0.0
      %6527 = vmatmul.mubr.f32.gmra.mrb[0].mxu0 %v6341
      %v6528 = vpop.f32.mrb[0].mxu0
      %v6529 = vadd.f32 0.0, %v6528
      %v6530 = vpop.f32.mrb[0].mxu0
      %6531 = vmatprep.mubr.f32.mxu0 0.0
      %6532 = vmatmul.mubr.f32.gmra.mrb[0].mxu0 %v6344
      %v6533 = vpop.f32.mrb[0].mxu0
      %v6534 = vadd.f32 0.0, %v6533
      %v6535 = vpop.f32.mrb[0].mxu0
      %6536 = vmatprep.mubr.f32.mxu0 0.0
      %6537 = vmatmul.mubr.f32.gmra.mrb[0].mxu0 %v6347
      %v6538 = vpop.f32.mrb[0].mxu0
      %v6539 = vadd.f32 0.0, %v6538
      %v6540 = vpop.f32.mrb[0].mxu0
      %6541 = vmatprep.mubr.f32.mxu0 0.0
      %6542 = vmatmul.mubr.f32.gmra.mrb[0].mxu0 %v6350
      %v6543 = vpop.f32.mrb[0].mxu0
      %v6544 = vadd.f32 0.0, %v6543
      %v6545 = vpop.f32.mrb[0].mxu0
      %6546 = vmatprep.mubr.f32.mxu0 0.0
      %6547 = vmatmul.mubr.f32.gmra.mrb[0].mxu0 %v6353
      %v6548 = vpop.f32.mrb[0].mxu0
      %v6549 = vadd.f32 0.0, %v6548
      %v6550 = vpop.f32.mrb[0].mxu0
      %6551 = vmatprep.mubr.f32.mxu0 0.0
      %6552 = vmatmul.mubr.f32.gmra.mrb[0].mxu0 %v6356
      %v6553 = vpop.f32.mrb[0].mxu0
      %v6554 = vadd.f32 0.0, %v6553
      %v6555 = vpop.f32.mrb[0].mxu0
      %6556 = vmatprep.mubr.f32.mxu0 0.0
      %6557 = vmatmul.mubr.f32.gmra.mrb[0].mxu0 %v6359
      %v6558 = vpop.f32.mrb[0].mxu0
      %v6559 = vadd.f32 0.0, %v6558
      %v6560 = vpop.f32.mrb[0].mxu0
      %6561 = vmatprep.mubr.f32.mxu0 0.0
      %6562 = vmatmul.mubr.f32.gmra.mrb[0].mxu0 %v6362
      %v6563 = vpop.f32.mrb[0].mxu0
      %v6564 = vadd.f32 0.0, %v6563
      %v6565 = vpop.f32.mrb[0].mxu0
      %6566 = vmatprep.mubr.f32.mxu0 0.0
      %6567 = vmatmul.mubr.f32.gmra.mrb[0].mxu0 %v6365
      %v6568 = vpop.f32.mrb[0].mxu0
      %v6569 = vadd.f32 0.0, %v6568
      %v6570 = vpop.f32.mrb[0].mxu0
      %6571 = vmatprep.mubr.f32.mxu0 0.0
      %6572 = vmatmul.mubr.f32.gmra.mrb[0].mxu0 %v6368
      %v6573 = vpop.f32.mrb[0].mxu0
      %v6574 = vadd.f32 0.0, %v6573
      %v6575 = vpop.f32.mrb[0].mxu0
      %6576 = vmatprep.mubr.f32.mxu0 0.0
      %6577 = vmatmul.mubr.f32.gmra.mrb[0].mxu0 %v6371
      %v6578 = vpop.f32.mrb[0].mxu0
      %v6579 = vadd.f32 0.0, %v6578
      %v6580 = vpop.f32.mrb[0].mxu0
      %6581 = vmatprep.mubr.f32.mxu0 0.0
      %6582 = vmatmul.mubr.f32.gmra.mrb[0].mxu0 %v6374
      %v6583 = vpop.f32.mrb[0].mxu0
      %v6584 = vadd.f32 0.0, %v6583
      %v6585 = vpop.f32.mrb[0].mxu0
      %6586 = vmatprep.mubr.f32.mxu0 0.0
      %6587 = vmatmul.mubr.f32.gmra.mrb[0].mxu0 %v6377
      %v6588 = vpop.f32.mrb[0].mxu0
      %v6589 = vadd.f32 0.0, %v6588
      %v6590 = vpop.f32.mrb[0].mxu0
      %6591 = vmatprep.mubr.f32.mxu0 0.0
      %6592 = vmatmul.mubr.f32.gmra.mrb[0].mxu0 %v6380
      %v6593 = vpop.f32.mrb[0].mxu0
      %v6594 = vadd.f32 0.0, %v6593
      %v6595 = vpop.f32.mrb[0].mxu0
      %6596 = vmatprep.mubr.f32.mxu0 0.0
      %6597 = vmatmul.mubr.f32.gmra.mrb[0].mxu0 %v6383
      %v6598 = vpop.f32.mrb[0].mxu0
      %v6599 = vadd.f32 0.0, %v6598
      %v6600 = vpop.f32.mrb[0].mxu0
      %6601 = vmatprep.mubr.f32.mxu0 0.0
      %6602 = vmatmul.mubr.f32.gmra.mrb[0].mxu0 %v6386
      %v6603 = vpop.f32.mrb[0].mxu0
      %v6604 = vadd.f32 0.0, %v6603
      %v6605 = vpop.f32.mrb[0].mxu0
      %6606 = vmatprep.mubr.f32.mxu0 0.0
      %6607 = vmatmul.mubr.f32.gmra.mrb[0].mxu0 %v6389
      %v6608 = vpop.f32.mrb[0].mxu0
      %v6609 = vadd.f32 0.0, %v6608
      %v6610 = vpop.f32.mrb[0].mxu0
      %6611 = vmatprep.mubr.f32.mxu0 0.0
      %6612 = vmatmul.mubr.f32.gmra.mrb[0].mxu0 %v6392
      %v6613 = vpop.f32.mrb[0].mxu0
      %v6614 = vadd.f32 0.0, %v6613
      %v6615 = vpop.f32.mrb[0].mxu0
      %6616 = vmatprep.mubr.f32.mxu0 0.0
      %6617 = vmatmul.mubr.f32.gmra.mrb[0].mxu0 %v6395
      %v6618 = vpop.f32.mrb[0].mxu0
      %v6619 = vadd.f32 0.0, %v6618
      %v6620 = vpop.f32.mrb[0].mxu0
      %6621 = vdwg.mxu0
      %v6622 = vadd.f32 %v6234, %v6464
      %v6623 = vadd.f32 %v6235, %v6469
      %v6624 = vadd.f32 %v6236, %v6474
      %v6625 = vadd.f32 %v6237, %v6479
      %v6626 = vadd.f32 %v6238, %v6484
      %v6627 = vadd.f32 %v6239, %v6489
      %v6628 = vadd.f32 %v6240, %v6494
      %v6629 = vadd.f32 %v6241, %v6499
      %v6630 = vadd.f32 %v6242, %v6504
      %v6631 = vadd.f32 %v6243, %v6509
      %v6632 = vadd.f32 %v6244, %v6514
      %v6633 = vadd.f32 %v6245, %v6519
      %v6634 = vadd.f32 %v6246, %v6524
      %v6635 = vadd.f32 %v6247, %v6529
      %v6636 = vadd.f32 %v6248, %v6534
      %v6637 = vadd.f32 %v6249, %v6539
      %v6638 = vadd.f32 %v6250, %v6544
      %v6639 = vadd.f32 %v6251, %v6549
      %v6640 = vadd.f32 %v6252, %v6554
      %v6641 = vadd.f32 %v6253, %v6559
      %v6642 = vadd.f32 %v6254, %v6564
      %v6643 = vadd.f32 %v6255, %v6569
      %v6644 = vadd.f32 %v6256, %v6574
      %v6645 = vadd.f32 %v6257, %v6579
      %v6646 = vadd.f32 %v6258, %v6584
      %v6647 = vadd.f32 %v6259, %v6589
      %v6648 = vadd.f32 %v6260, %v6594
      %v6649 = vadd.f32 %v6261, %v6599
      %v6650 = vadd.f32 %v6262, %v6604
      %v6651 = vadd.f32 %v6263, %v6609
      %v6652 = vadd.f32 %v6264, %v6614
      %v6653 = vadd.f32 %v6265, %v6619
      %v6654 = vld [vmem:[%s6266 + $0x1] sm:$0xff]
      %v6655 = vld [vmem:[%s6266 + $0x9] sm:$0xff]
      %v6656 = vld [vmem:[%s6266 + $0x19] sm:$0xff]
      %v6657 = vld [vmem:[%s6266 + $0x21] sm:$0xff]
      %v6658 = vld [vmem:[%s6266 + $0x31] sm:$0xff]
      %v6659 = vld [vmem:[%s6266 + $0x39] sm:$0xff]
      %v6660 = vld [vmem:[%s6266 + $0x49] sm:$0xff]
      %v6661 = vld [vmem:[%s6266 + $0x51] sm:$0xff]
      %v6662 = vld [vmem:[%s6266 + $0x61] sm:$0xff]
      %v6663 = vld [vmem:[%s6266 + $0x69] sm:$0xff]
      %v6664 = vld [vmem:[%s6266 + $0x79] sm:$0xff]
      %v6665 = vld [vmem:[%s6266 + $0x81] sm:$0xff]
      %v6666 = vld [vmem:[%s6266 + $0x91] sm:$0xff]
      %v6667 = vld [vmem:[%s6266 + $0x99] sm:$0xff]
      %v6668 = vld [vmem:[%s6266 + $0xa9] sm:$0xff]
      %v6669 = vld [vmem:[%s6266 + $0xb1] sm:$0xff]
      %v6670 = vld [vmem:[%s6266 + $0xc1] sm:$0xff]
      %v6671 = vld [vmem:[%s6266 + $0xc9] sm:$0xff]
      %v6672 = vld [vmem:[%s6266 + $0xd9] sm:$0xff]
      %v6673 = vld [vmem:[%s6266 + $0xe1] sm:$0xff]
      %v6674 = vld [vmem:[%s6266 + $0xf1] sm:$0xff]
      %v6675 = vld [vmem:[%s6266 + $0xf9] sm:$0xff]
      %v6676 = vld [vmem:[%s6266 + $0x109] sm:$0xff]
      %v6677 = vld [vmem:[%s6266 + $0x111] sm:$0xff]
      %v6678 = vld [vmem:[%s6266 + $0x121] sm:$0xff]
      %v6679 = vld [vmem:[%s6266 + $0x129] sm:$0xff]
      %v6680 = vld [vmem:[%s6266 + $0x139] sm:$0xff]
      %v6681 = vld [vmem:[%s6266 + $0x141] sm:$0xff]
      %v6682 = vld [vmem:[%s6266 + $0x151] sm:$0xff]
      %v6683 = vld [vmem:[%s6266 + $0x159] sm:$0xff]
      %v6684 = vld [vmem:[%s6266 + $0x169] sm:$0xff]
      %v6685 = vld [vmem:[%s6266 + $0x171] sm:$0xff]
      %s6686 = scalar_lea.vmem %s3, 56
      %v6687 = vld [vmem:[%s6686] sm:$0xff]
      %v6689 = vsel %vm4074, %v6654, 0
      %v6692 = vsel %vm4074, %v6655, 0
      %v6695 = vsel %vm4074, %v6656, 0
      %v6698 = vsel %vm4074, %v6657, 0
      %v6701 = vsel %vm4074, %v6658, 0
      %v6704 = vsel %vm4074, %v6659, 0
      %v6707 = vsel %vm4074, %v6660, 0
      %v6710 = vsel %vm4074, %v6661, 0
      %v6713 = vsel %vm4074, %v6662, 0
      %v6716 = vsel %vm4074, %v6663, 0
      %v6719 = vsel %vm4074, %v6664, 0
      %v6722 = vsel %vm4074, %v6665, 0
      %v6725 = vsel %vm4074, %v6666, 0
      %v6728 = vsel %vm4074, %v6667, 0
      %v6731 = vsel %vm4074, %v6668, 0
      %v6734 = vsel %vm4074, %v6669, 0
      %v6737 = vsel %vm4074, %v6670, 0
      %v6740 = vsel %vm4074, %v6671, 0
      %v6743 = vsel %vm4074, %v6672, 0
      %v6746 = vsel %vm4074, %v6673, 0
      %v6749 = vsel %vm4074, %v6674, 0
      %v6752 = vsel %vm4074, %v6675, 0
      %v6755 = vsel %vm4074, %v6676, 0
      %v6758 = vsel %vm4074, %v6677, 0
      %v6761 = vsel %vm4074, %v6678, 0
      %v6764 = vsel %vm4074, %v6679, 0
      %v6767 = vsel %vm4074, %v6680, 0
      %v6770 = vsel %vm4074, %v6681, 0
      %v6773 = vsel %vm4074, %v6682, 0
      %v6776 = vsel %vm4074, %v6683, 0
      %v6779 = vsel %vm4074, %v6684, 0
      %v6782 = vsel %vm4074, %v6685, 0
      %6784 = vmatprep.subr.mxu0 0.0
      %6785 = vmatpush1.msra.mxu0 %v6687
      %6786 = vmatprep.subr.mxu0 0.0
      %6787 = vmatpush1.msra.mxu0 0.0
      %6788 = vmatprep.subr.mxu0 0.0
      %6789 = vmatpush1.msra.mxu0 0.0
      %6790 = vmatprep.subr.mxu0 0.0
      %6791 = vmatpush1.msra.mxu0 0.0
      %6792 = vmatprep.subr.mxu0 0.0
      %6793 = vmatpush1.msra.mxu0 0.0
      %6794 = vmatprep.subr.mxu0 0.0
      %6795 = vmatpush1.msra.mxu0 0.0
      %6796 = vmatprep.subr.mxu0 0.0
      %6797 = vmatpush1.msra.mxu0 0.0
      %6798 = vmatprep.subr.mxu0 0.0
      %6799 = vmatpush1.msra.mxu0 0.0
      %6800 = vmatprep.subr.mxu0 0.0
      %6801 = vmatpush1.msra.mxu0 0.0
      %6802 = vmatprep.subr.mxu0 0.0
      %6803 = vmatpush1.msra.mxu0 0.0
      %6804 = vmatprep.subr.mxu0 0.0
      %6805 = vmatpush1.msra.mxu0 0.0
      %6806 = vmatprep.subr.mxu0 0.0
      %6807 = vmatpush1.msra.mxu0 0.0
      %6808 = vmatprep.subr.mxu0 0.0
      %6809 = vmatpush1.msra.mxu0 0.0
      %6810 = vmatprep.subr.mxu0 0.0
      %6811 = vmatpush1.msra.mxu0 0.0
      %6812 = vmatprep.subr.mxu0 0.0
      %6813 = vmatpush1.msra.mxu0 0.0
      %6814 = vmatprep.subr.mxu0 0.0
      %6815 = vmatpush1.msra.mxu0 0.0
      %6816 = vmatprep.subr.mxu0 0.0
      %6817 = vmatpush1.msra.mxu0 0.0
      %6818 = vmatprep.subr.mxu0 0.0
      %6819 = vmatpush1.msra.mxu0 0.0
      %6820 = vmatprep.subr.mxu0 0.0
      %6821 = vmatpush1.msra.mxu0 0.0
      %6822 = vmatprep.subr.mxu0 0.0
      %6823 = vmatpush1.msra.mxu0 0.0
      %6824 = vmatprep.subr.mxu0 0.0
      %6825 = vmatpush1.msra.mxu0 0.0
      %6826 = vmatprep.subr.mxu0 0.0
      %6827 = vmatpush1.msra.mxu0 0.0
      %6828 = vmatprep.subr.mxu0 0.0
      %6829 = vmatpush1.msra.mxu0 0.0
      %6830 = vmatprep.subr.mxu0 0.0
      %6831 = vmatpush1.msra.mxu0 0.0
      %6832 = vmatprep.subr.mxu0 0.0
      %6833 = vmatpush1.msra.mxu0 0.0
      %6834 = vmatprep.subr.mxu0 0.0
      %6835 = vmatpush1.msra.mxu0 0.0
      %6836 = vmatprep.subr.mxu0 0.0
      %6837 = vmatpush1.msra.mxu0 0.0
      %6838 = vmatprep.subr.mxu0 0.0
      %6839 = vmatpush1.msra.mxu0 0.0
      %6840 = vmatprep.subr.mxu0 0.0
      %6841 = vmatpush1.msra.mxu0 0.0
      %6842 = vmatprep.subr.mxu0 0.0
      %6843 = vmatpush1.msra.mxu0 0.0
      %6844 = vmatprep.subr.mxu0 0.0
      %6845 = vmatpush1.msra.mxu0 0.0
      %6846 = vmatprep.subr.mxu0 0.0
      %6847 = vmatpush1.msra.mxu0 0.0
      %6848 = vmatprep.mubr.f32.mxu0 0.0
      %6849 = vmatmul.mubr.f32.gmra.mrb[0].mxu0 %v6689
      %v6850 = vpop.f32.mrb[0].mxu0
      %v6851 = vadd.f32 0.0, %v6850
      %v6852 = vpop.f32.mrb[0].mxu0
      %6853 = vmatprep.mubr.f32.mxu0 0.0
      %6854 = vmatmul.mubr.f32.gmra.mrb[0].mxu0 %v6692
      %v6855 = vpop.f32.mrb[0].mxu0
      %v6856 = vadd.f32 0.0, %v6855
      %v6857 = vpop.f32.mrb[0].mxu0
      %6858 = vmatprep.mubr.f32.mxu0 0.0
      %6859 = vmatmul.mubr.f32.gmra.mrb[0].mxu0 %v6695
      %v6860 = vpop.f32.mrb[0].mxu0
      %v6861 = vadd.f32 0.0, %v6860
      %v6862 = vpop.f32.mrb[0].mxu0
      %6863 = vmatprep.mubr.f32.mxu0 0.0
      %6864 = vmatmul.mubr.f32.gmra.mrb[0].mxu0 %v6698
      %v6865 = vpop.f32.mrb[0].mxu0
      %v6866 = vadd.f32 0.0, %v6865
      %v6867 = vpop.f32.mrb[0].mxu0
      %6868 = vmatprep.mubr.f32.mxu0 0.0
      %6869 = vmatmul.mubr.f32.gmra.mrb[0].mxu0 %v6701
      %v6870 = vpop.f32.mrb[0].mxu0
      %v6871 = vadd.f32 0.0, %v6870
      %v6872 = vpop.f32.mrb[0].mxu0
      %6873 = vmatprep.mubr.f32.mxu0 0.0
      %6874 = vmatmul.mubr.f32.gmra.mrb[0].mxu0 %v6704
      %v6875 = vpop.f32.mrb[0].mxu0
      %v6876 = vadd.f32 0.0, %v6875
      %v6877 = vpop.f32.mrb[0].mxu0
      %6878 = vmatprep.mubr.f32.mxu0 0.0
      %6879 = vmatmul.mubr.f32.gmra.mrb[0].mxu0 %v6707
      %v6880 = vpop.f32.mrb[0].mxu0
      %v6881 = vadd.f32 0.0, %v6880
      %v6882 = vpop.f32.mrb[0].mxu0
      %6883 = vmatprep.mubr.f32.mxu0 0.0
      %6884 = vmatmul.mubr.f32.gmra.mrb[0].mxu0 %v6710
      %v6885 = vpop.f32.mrb[0].mxu0
      %v6886 = vadd.f32 0.0, %v6885
      %v6887 = vpop.f32.mrb[0].mxu0
      %6888 = vmatprep.mubr.f32.mxu0 0.0
      %6889 = vmatmul.mubr.f32.gmra.mrb[0].mxu0 %v6713
      %v6890 = vpop.f32.mrb[0].mxu0
      %v6891 = vadd.f32 0.0, %v6890
      %v6892 = vpop.f32.mrb[0].mxu0
      %6893 = vmatprep.mubr.f32.mxu0 0.0
      %6894 = vmatmul.mubr.f32.gmra.mrb[0].mxu0 %v6716
      %v6895 = vpop.f32.mrb[0].mxu0
      %v6896 = vadd.f32 0.0, %v6895
      %v6897 = vpop.f32.mrb[0].mxu0
      %6898 = vmatprep.mubr.f32.mxu0 0.0
      %6899 = vmatmul.mubr.f32.gmra.mrb[0].mxu0 %v6719
      %v6900 = vpop.f32.mrb[0].mxu0
      %v6901 = vadd.f32 0.0, %v6900
      %v6902 = vpop.f32.mrb[0].mxu0
      %6903 = vmatprep.mubr.f32.mxu0 0.0
      %6904 = vmatmul.mubr.f32.gmra.mrb[0].mxu0 %v6722
      %v6905 = vpop.f32.mrb[0].mxu0
      %v6906 = vadd.f32 0.0, %v6905
      %v6907 = vpop.f32.mrb[0].mxu0
      %6908 = vmatprep.mubr.f32.mxu0 0.0
      %6909 = vmatmul.mubr.f32.gmra.mrb[0].mxu0 %v6725
      %v6910 = vpop.f32.mrb[0].mxu0
      %v6911 = vadd.f32 0.0, %v6910
      %v6912 = vpop.f32.mrb[0].mxu0
      %6913 = vmatprep.mubr.f32.mxu0 0.0
      %6914 = vmatmul.mubr.f32.gmra.mrb[0].mxu0 %v6728
      %v6915 = vpop.f32.mrb[0].mxu0
      %v6916 = vadd.f32 0.0, %v6915
      %v6917 = vpop.f32.mrb[0].mxu0
      %6918 = vmatprep.mubr.f32.mxu0 0.0
      %6919 = vmatmul.mubr.f32.gmra.mrb[0].mxu0 %v6731
      %v6920 = vpop.f32.mrb[0].mxu0
      %v6921 = vadd.f32 0.0, %v6920
      %v6922 = vpop.f32.mrb[0].mxu0
      %6923 = vmatprep.mubr.f32.mxu0 0.0
      %6924 = vmatmul.mubr.f32.gmra.mrb[0].mxu0 %v6734
      %v6925 = vpop.f32.mrb[0].mxu0
      %v6926 = vadd.f32 0.0, %v6925
      %v6927 = vpop.f32.mrb[0].mxu0
      %6928 = vmatprep.mubr.f32.mxu0 0.0
      %6929 = vmatmul.mubr.f32.gmra.mrb[0].mxu0 %v6737
      %v6930 = vpop.f32.mrb[0].mxu0
      %v6931 = vadd.f32 0.0, %v6930
      %v6932 = vpop.f32.mrb[0].mxu0
      %6933 = vmatprep.mubr.f32.mxu0 0.0
      %6934 = vmatmul.mubr.f32.gmra.mrb[0].mxu0 %v6740
      %v6935 = vpop.f32.mrb[0].mxu0
      %v6936 = vadd.f32 0.0, %v6935
      %v6937 = vpop.f32.mrb[0].mxu0
      %6938 = vmatprep.mubr.f32.mxu0 0.0
      %6939 = vmatmul.mubr.f32.gmra.mrb[0].mxu0 %v6743
      %v6940 = vpop.f32.mrb[0].mxu0
      %v6941 = vadd.f32 0.0, %v6940
      %v6942 = vpop.f32.mrb[0].mxu0
      %6943 = vmatprep.mubr.f32.mxu0 0.0
      %6944 = vmatmul.mubr.f32.gmra.mrb[0].mxu0 %v6746
      %v6945 = vpop.f32.mrb[0].mxu0
      %v6946 = vadd.f32 0.0, %v6945
      %v6947 = vpop.f32.mrb[0].mxu0
      %6948 = vmatprep.mubr.f32.mxu0 0.0
      %6949 = vmatmul.mubr.f32.gmra.mrb[0].mxu0 %v6749
      %v6950 = vpop.f32.mrb[0].mxu0
      %v6951 = vadd.f32 0.0, %v6950
      %v6952 = vpop.f32.mrb[0].mxu0
      %6953 = vmatprep.mubr.f32.mxu0 0.0
      %6954 = vmatmul.mubr.f32.gmra.mrb[0].mxu0 %v6752
      %v6955 = vpop.f32.mrb[0].mxu0
      %v6956 = vadd.f32 0.0, %v6955
      %v6957 = vpop.f32.mrb[0].mxu0
      %6958 = vmatprep.mubr.f32.mxu0 0.0
      %6959 = vmatmul.mubr.f32.gmra.mrb[0].mxu0 %v6755
      %v6960 = vpop.f32.mrb[0].mxu0
      %v6961 = vadd.f32 0.0, %v6960
      %v6962 = vpop.f32.mrb[0].mxu0
      %6963 = vmatprep.mubr.f32.mxu0 0.0
      %6964 = vmatmul.mubr.f32.gmra.mrb[0].mxu0 %v6758
      %v6965 = vpop.f32.mrb[0].mxu0
      %v6966 = vadd.f32 0.0, %v6965
      %v6967 = vpop.f32.mrb[0].mxu0
      %6968 = vmatprep.mubr.f32.mxu0 0.0
      %6969 = vmatmul.mubr.f32.gmra.mrb[0].mxu0 %v6761
      %v6970 = vpop.f32.mrb[0].mxu0
      %v6971 = vadd.f32 0.0, %v6970
      %v6972 = vpop.f32.mrb[0].mxu0
      %6973 = vmatprep.mubr.f32.mxu0 0.0
      %6974 = vmatmul.mubr.f32.gmra.mrb[0].mxu0 %v6764
      %v6975 = vpop.f32.mrb[0].mxu0
      %v6976 = vadd.f32 0.0, %v6975
      %v6977 = vpop.f32.mrb[0].mxu0
      %6978 = vmatprep.mubr.f32.mxu0 0.0
      %6979 = vmatmul.mubr.f32.gmra.mrb[0].mxu0 %v6767
      %v6980 = vpop.f32.mrb[0].mxu0
      %v6981 = vadd.f32 0.0, %v6980
      %v6982 = vpop.f32.mrb[0].mxu0
      %6983 = vmatprep.mubr.f32.mxu0 0.0
      %6984 = vmatmul.mubr.f32.gmra.mrb[0].mxu0 %v6770
      %v6985 = vpop.f32.mrb[0].mxu0
      %v6986 = vadd.f32 0.0, %v6985
      %v6987 = vpop.f32.mrb[0].mxu0
      %6988 = vmatprep.mubr.f32.mxu0 0.0
      %6989 = vmatmul.mubr.f32.gmra.mrb[0].mxu0 %v6773
      %v6990 = vpop.f32.mrb[0].mxu0
      %v6991 = vadd.f32 0.0, %v6990
      %v6992 = vpop.f32.mrb[0].mxu0
      %6993 = vmatprep.mubr.f32.mxu0 0.0
      %6994 = vmatmul.mubr.f32.gmra.mrb[0].mxu0 %v6776
      %v6995 = vpop.f32.mrb[0].mxu0
      %v6996 = vadd.f32 0.0, %v6995
      %v6997 = vpop.f32.mrb[0].mxu0
      %6998 = vmatprep.mubr.f32.mxu0 0.0
      %6999 = vmatmul.mubr.f32.gmra.mrb[0].mxu0 %v6779
      %v7000 = vpop.f32.mrb[0].mxu0
      %v7001 = vadd.f32 0.0, %v7000
      %v7002 = vpop.f32.mrb[0].mxu0
      %7003 = vmatprep.mubr.f32.mxu0 0.0
      %7004 = vmatmul.mubr.f32.gmra.mrb[0].mxu0 %v6782
      %v7005 = vpop.f32.mrb[0].mxu0
      %v7006 = vadd.f32 0.0, %v7005
      %v7007 = vpop.f32.mrb[0].mxu0
      %7008 = vdwg.mxu0
      %v7009 = vadd.f32 %v6622, %v6851
      %v7010 = vadd.f32 %v6623, %v6856
      %v7011 = vadd.f32 %v6624, %v6861
      %v7012 = vadd.f32 %v6625, %v6866
      %v7013 = vadd.f32 %v6626, %v6871
      %v7014 = vadd.f32 %v6627, %v6876
      %v7015 = vadd.f32 %v6628, %v6881
      %v7016 = vadd.f32 %v6629, %v6886
      %v7017 = vadd.f32 %v6630, %v6891
      %v7018 = vadd.f32 %v6631, %v6896
      %v7019 = vadd.f32 %v6632, %v6901
      %v7020 = vadd.f32 %v6633, %v6906
      %v7021 = vadd.f32 %v6634, %v6911
      %v7022 = vadd.f32 %v6635, %v6916
      %v7023 = vadd.f32 %v6636, %v6921
      %v7024 = vadd.f32 %v6637, %v6926
      %v7025 = vadd.f32 %v6638, %v6931
      %v7026 = vadd.f32 %v6639, %v6936
      %v7027 = vadd.f32 %v6640, %v6941
      %v7028 = vadd.f32 %v6641, %v6946
      %v7029 = vadd.f32 %v6642, %v6951
      %v7030 = vadd.f32 %v6643, %v6956
      %v7031 = vadd.f32 %v6644, %v6961
      %v7032 = vadd.f32 %v6645, %v6966
      %v7033 = vadd.f32 %v6646, %v6971
      %v7034 = vadd.f32 %v6647, %v6976
      %v7035 = vadd.f32 %v6648, %v6981
      %v7036 = vadd.f32 %v6649, %v6986
      %v7037 = vadd.f32 %v6650, %v6991
      %v7038 = vadd.f32 %v6651, %v6996
      %v7039 = vadd.f32 %v6652, %v7001
      %v7040 = vadd.f32 %v6653, %v7006
      %v7041 = vld [vmem:[%s6266 + $0x2] sm:$0xff]
      %v7042 = vld [vmem:[%s6266 + $0xa] sm:$0xff]
      %v7043 = vld [vmem:[%s6266 + $0x1a] sm:$0xff]
      %v7044 = vld [vmem:[%s6266 + $0x22] sm:$0xff]
      %v7045 = vld [vmem:[%s6266 + $0x32] sm:$0xff]
      %v7046 = vld [vmem:[%s6266 + $0x3a] sm:$0xff]
      %v7047 = vld [vmem:[%s6266 + $0x4a] sm:$0xff]
      %v7048 = vld [vmem:[%s6266 + $0x52] sm:$0xff]
      %v7049 = vld [vmem:[%s6266 + $0x62] sm:$0xff]
      %v7050 = vld [vmem:[%s6266 + $0x6a] sm:$0xff]
      %v7051 = vld [vmem:[%s6266 + $0x7a] sm:$0xff]
      %v7052 = vld [vmem:[%s6266 + $0x82] sm:$0xff]
      %v7053 = vld [vmem:[%s6266 + $0x92] sm:$0xff]
      %v7054 = vld [vmem:[%s6266 + $0x9a] sm:$0xff]
      %v7055 = vld [vmem:[%s6266 + $0xaa] sm:$0xff]
      %v7056 = vld [vmem:[%s6266 + $0xb2] sm:$0xff]
      %v7057 = vld [vmem:[%s6266 + $0xc2] sm:$0xff]
      %v7058 = vld [vmem:[%s6266 + $0xca] sm:$0xff]
      %v7059 = vld [vmem:[%s6266 + $0xda] sm:$0xff]
      %v7060 = vld [vmem:[%s6266 + $0xe2] sm:$0xff]
      %v7061 = vld [vmem:[%s6266 + $0xf2] sm:$0xff]
      %v7062 = vld [vmem:[%s6266 + $0xfa] sm:$0xff]
      %v7063 = vld [vmem:[%s6266 + $0x10a] sm:$0xff]
      %v7064 = vld [vmem:[%s6266 + $0x112] sm:$0xff]
      %v7065 = vld [vmem:[%s6266 + $0x122] sm:$0xff]
      %v7066 = vld [vmem:[%s6266 + $0x12a] sm:$0xff]
      %v7067 = vld [vmem:[%s6266 + $0x13a] sm:$0xff]
      %v7068 = vld [vmem:[%s6266 + $0x142] sm:$0xff]
      %v7069 = vld [vmem:[%s6266 + $0x152] sm:$0xff]
      %v7070 = vld [vmem:[%s6266 + $0x15a] sm:$0xff]
      %v7071 = vld [vmem:[%s6266 + $0x16a] sm:$0xff]
      %v7072 = vld [vmem:[%s6266 + $0x172] sm:$0xff]
      %s7073 = scalar_lea.vmem %s3, 64
      %v7074 = vld [vmem:[%s7073] sm:$0xff]
      %v7076 = vsel %vm4074, %v7041, 0
      %v7079 = vsel %vm4074, %v7042, 0
      %v7082 = vsel %vm4074, %v7043, 0
      %v7085 = vsel %vm4074, %v7044, 0
      %v7088 = vsel %vm4074, %v7045, 0
      %v7091 = vsel %vm4074, %v7046, 0
      %v7094 = vsel %vm4074, %v7047, 0
      %v7097 = vsel %vm4074, %v7048, 0
      %v7100 = vsel %vm4074, %v7049, 0
      %v7103 = vsel %vm4074, %v7050, 0
      %v7106 = vsel %vm4074, %v7051, 0
      %v7109 = vsel %vm4074, %v7052, 0
      %v7112 = vsel %vm4074, %v7053, 0
      %v7115 = vsel %vm4074, %v7054, 0
      %v7118 = vsel %vm4074, %v7055, 0
      %v7121 = vsel %vm4074, %v7056, 0
      %v7124 = vsel %vm4074, %v7057, 0
      %v7127 = vsel %vm4074, %v7058, 0
      %v7130 = vsel %vm4074, %v7059, 0
      %v7133 = vsel %vm4074, %v7060, 0
      %v7136 = vsel %vm4074, %v7061, 0
      %v7139 = vsel %vm4074, %v7062, 0
      %v7142 = vsel %vm4074, %v7063, 0
      %v7145 = vsel %vm4074, %v7064, 0
      %v7148 = vsel %vm4074, %v7065, 0
      %v7151 = vsel %vm4074, %v7066, 0
      %v7154 = vsel %vm4074, %v7067, 0
      %v7157 = vsel %vm4074, %v7068, 0
      %v7160 = vsel %vm4074, %v7069, 0
      %v7163 = vsel %vm4074, %v7070, 0
      %v7166 = vsel %vm4074, %v7071, 0
      %v7169 = vsel %vm4074, %v7072, 0
      %7171 = vmatprep.subr.mxu0 0.0
      %7172 = vmatpush1.msra.mxu0 %v7074
      %7173 = vmatprep.subr.mxu0 0.0
      %7174 = vmatpush1.msra.mxu0 0.0
      %7175 = vmatprep.subr.mxu0 0.0
      %7176 = vmatpush1.msra.mxu0 0.0
      %7177 = vmatprep.subr.mxu0 0.0
      %7178 = vmatpush1.msra.mxu0 0.0
      %7179 = vmatprep.subr.mxu0 0.0
      %7180 = vmatpush1.msra.mxu0 0.0
      %7181 = vmatprep.subr.mxu0 0.0
      %7182 = vmatpush1.msra.mxu0 0.0
      %7183 = vmatprep.subr.mxu0 0.0
      %7184 = vmatpush1.msra.mxu0 0.0
      %7185 = vmatprep.subr.mxu0 0.0
      %7186 = vmatpush1.msra.mxu0 0.0
      %7187 = vmatprep.subr.mxu0 0.0
      %7188 = vmatpush1.msra.mxu0 0.0
      %7189 = vmatprep.subr.mxu0 0.0
      %7190 = vmatpush1.msra.mxu0 0.0
      %7191 = vmatprep.subr.mxu0 0.0
      %7192 = vmatpush1.msra.mxu0 0.0
      %7193 = vmatprep.subr.mxu0 0.0
      %7194 = vmatpush1.msra.mxu0 0.0
      %7195 = vmatprep.subr.mxu0 0.0
      %7196 = vmatpush1.msra.mxu0 0.0
      %7197 = vmatprep.subr.mxu0 0.0
      %7198 = vmatpush1.msra.mxu0 0.0
      %7199 = vmatprep.subr.mxu0 0.0
      %7200 = vmatpush1.msra.mxu0 0.0
      %7201 = vmatprep.subr.mxu0 0.0
      %7202 = vmatpush1.msra.mxu0 0.0
      %7203 = vmatprep.subr.mxu0 0.0
      %7204 = vmatpush1.msra.mxu0 0.0
      %7205 = vmatprep.subr.mxu0 0.0
      %7206 = vmatpush1.msra.mxu0 0.0
      %7207 = vmatprep.subr.mxu0 0.0
      %7208 = vmatpush1.msra.mxu0 0.0
      %7209 = vmatprep.subr.mxu0 0.0
      %7210 = vmatpush1.msra.mxu0 0.0
      %7211 = vmatprep.subr.mxu0 0.0
      %7212 = vmatpush1.msra.mxu0 0.0
      %7213 = vmatprep.subr.mxu0 0.0
      %7214 = vmatpush1.msra.mxu0 0.0
      %7215 = vmatprep.subr.mxu0 0.0
      %7216 = vmatpush1.msra.mxu0 0.0
      %7217 = vmatprep.subr.mxu0 0.0
      %7218 = vmatpush1.msra.mxu0 0.0
      %7219 = vmatprep.subr.mxu0 0.0
      %7220 = vmatpush1.msra.mxu0 0.0
      %7221 = vmatprep.subr.mxu0 0.0
      %7222 = vmatpush1.msra.mxu0 0.0
      %7223 = vmatprep.subr.mxu0 0.0
      %7224 = vmatpush1.msra.mxu0 0.0
      %7225 = vmatprep.subr.mxu0 0.0
      %7226 = vmatpush1.msra.mxu0 0.0
      %7227 = vmatprep.subr.mxu0 0.0
      %7228 = vmatpush1.msra.mxu0 0.0
      %7229 = vmatprep.subr.mxu0 0.0
      %7230 = vmatpush1.msra.mxu0 0.0
      %7231 = vmatprep.subr.mxu0 0.0
      %7232 = vmatpush1.msra.mxu0 0.0
      %7233 = vmatprep.subr.mxu0 0.0
      %7234 = vmatpush1.msra.mxu0 0.0
      %7235 = vmatprep.mubr.f32.mxu0 0.0
      %7236 = vmatmul.mubr.f32.gmra.mrb[0].mxu0 %v7076
      %v7237 = vpop.f32.mrb[0].mxu0
      %v7238 = vadd.f32 0.0, %v7237
      %v7239 = vpop.f32.mrb[0].mxu0
      %7240 = vmatprep.mubr.f32.mxu0 0.0
      %7241 = vmatmul.mubr.f32.gmra.mrb[0].mxu0 %v7079
      %v7242 = vpop.f32.mrb[0].mxu0
      %v7243 = vadd.f32 0.0, %v7242
      %v7244 = vpop.f32.mrb[0].mxu0
      %7245 = vmatprep.mubr.f32.mxu0 0.0
      %7246 = vmatmul.mubr.f32.gmra.mrb[0].mxu0 %v7082
      %v7247 = vpop.f32.mrb[0].mxu0
      %v7248 = vadd.f32 0.0, %v7247
      %v7249 = vpop.f32.mrb[0].mxu0
      %7250 = vmatprep.mubr.f32.mxu0 0.0
      %7251 = vmatmul.mubr.f32.gmra.mrb[0].mxu0 %v7085
      %v7252 = vpop.f32.mrb[0].mxu0
      %v7253 = vadd.f32 0.0, %v7252
      %v7254 = vpop.f32.mrb[0].mxu0
      %7255 = vmatprep.mubr.f32.mxu0 0.0
      %7256 = vmatmul.mubr.f32.gmra.mrb[0].mxu0 %v7088
      %v7257 = vpop.f32.mrb[0].mxu0
      %v7258 = vadd.f32 0.0, %v7257
      %v7259 = vpop.f32.mrb[0].mxu0
      %7260 = vmatprep.mubr.f32.mxu0 0.0
      %7261 = vmatmul.mubr.f32.gmra.mrb[0].mxu0 %v7091
      %v7262 = vpop.f32.mrb[0].mxu0
      %v7263 = vadd.f32 0.0, %v7262
      %v7264 = vpop.f32.mrb[0].mxu0
      %7265 = vmatprep.mubr.f32.mxu0 0.0
      %7266 = vmatmul.mubr.f32.gmra.mrb[0].mxu0 %v7094
      %v7267 = vpop.f32.mrb[0].mxu0
      %v7268 = vadd.f32 0.0, %v7267
      %v7269 = vpop.f32.mrb[0].mxu0
      %7270 = vmatprep.mubr.f32.mxu0 0.0
      %7271 = vmatmul.mubr.f32.gmra.mrb[0].mxu0 %v7097
      %v7272 = vpop.f32.mrb[0].mxu0
      %v7273 = vadd.f32 0.0, %v7272
      %v7274 = vpop.f32.mrb[0].mxu0
      %7275 = vmatprep.mubr.f32.mxu0 0.0
      %7276 = vmatmul.mubr.f32.gmra.mrb[0].mxu0 %v7100
      %v7277 = vpop.f32.mrb[0].mxu0
      %v7278 = vadd.f32 0.0, %v7277
      %v7279 = vpop.f32.mrb[0].mxu0
      %7280 = vmatprep.mubr.f32.mxu0 0.0
      %7281 = vmatmul.mubr.f32.gmra.mrb[0].mxu0 %v7103
      %v7282 = vpop.f32.mrb[0].mxu0
      %v7283 = vadd.f32 0.0, %v7282
      %v7284 = vpop.f32.mrb[0].mxu0
      %7285 = vmatprep.mubr.f32.mxu0 0.0
      %7286 = vmatmul.mubr.f32.gmra.mrb[0].mxu0 %v7106
      %v7287 = vpop.f32.mrb[0].mxu0
      %v7288 = vadd.f32 0.0, %v7287
      %v7289 = vpop.f32.mrb[0].mxu0
      %7290 = vmatprep.mubr.f32.mxu0 0.0
      %7291 = vmatmul.mubr.f32.gmra.mrb[0].mxu0 %v7109
      %v7292 = vpop.f32.mrb[0].mxu0
      %v7293 = vadd.f32 0.0, %v7292
      %v7294 = vpop.f32.mrb[0].mxu0
      %7295 = vmatprep.mubr.f32.mxu0 0.0
      %7296 = vmatmul.mubr.f32.gmra.mrb[0].mxu0 %v7112
      %v7297 = vpop.f32.mrb[0].mxu0
      %v7298 = vadd.f32 0.0, %v7297
      %v7299 = vpop.f32.mrb[0].mxu0
      %7300 = vmatprep.mubr.f32.mxu0 0.0
      %7301 = vmatmul.mubr.f32.gmra.mrb[0].mxu0 %v7115
      %v7302 = vpop.f32.mrb[0].mxu0
      %v7303 = vadd.f32 0.0, %v7302
      %v7304 = vpop.f32.mrb[0].mxu0
      %7305 = vmatprep.mubr.f32.mxu0 0.0
      %7306 = vmatmul.mubr.f32.gmra.mrb[0].mxu0 %v7118
      %v7307 = vpop.f32.mrb[0].mxu0
      %v7308 = vadd.f32 0.0, %v7307
      %v7309 = vpop.f32.mrb[0].mxu0
      %7310 = vmatprep.mubr.f32.mxu0 0.0
      %7311 = vmatmul.mubr.f32.gmra.mrb[0].mxu0 %v7121
      %v7312 = vpop.f32.mrb[0].mxu0
      %v7313 = vadd.f32 0.0, %v7312
      %v7314 = vpop.f32.mrb[0].mxu0
      %7315 = vmatprep.mubr.f32.mxu0 0.0
      %7316 = vmatmul.mubr.f32.gmra.mrb[0].mxu0 %v7124
      %v7317 = vpop.f32.mrb[0].mxu0
      %v7318 = vadd.f32 0.0, %v7317
      %v7319 = vpop.f32.mrb[0].mxu0
      %7320 = vmatprep.mubr.f32.mxu0 0.0
      %7321 = vmatmul.mubr.f32.gmra.mrb[0].mxu0 %v7127
      %v7322 = vpop.f32.mrb[0].mxu0
      %v7323 = vadd.f32 0.0, %v7322
      %v7324 = vpop.f32.mrb[0].mxu0
      %7325 = vmatprep.mubr.f32.mxu0 0.0
      %7326 = vmatmul.mubr.f32.gmra.mrb[0].mxu0 %v7130
      %v7327 = vpop.f32.mrb[0].mxu0
      %v7328 = vadd.f32 0.0, %v7327
      %v7329 = vpop.f32.mrb[0].mxu0
      %7330 = vmatprep.mubr.f32.mxu0 0.0
      %7331 = vmatmul.mubr.f32.gmra.mrb[0].mxu0 %v7133
      %v7332 = vpop.f32.mrb[0].mxu0
      %v7333 = vadd.f32 0.0, %v7332
      %v7334 = vpop.f32.mrb[0].mxu0
      %7335 = vmatprep.mubr.f32.mxu0 0.0
      %7336 = vmatmul.mubr.f32.gmra.mrb[0].mxu0 %v7136
      %v7337 = vpop.f32.mrb[0].mxu0
      %v7338 = vadd.f32 0.0, %v7337
      %v7339 = vpop.f32.mrb[0].mxu0
      %7340 = vmatprep.mubr.f32.mxu0 0.0
      %7341 = vmatmul.mubr.f32.gmra.mrb[0].mxu0 %v7139
      %v7342 = vpop.f32.mrb[0].mxu0
      %v7343 = vadd.f32 0.0, %v7342
      %v7344 = vpop.f32.mrb[0].mxu0
      %7345 = vmatprep.mubr.f32.mxu0 0.0
      %7346 = vmatmul.mubr.f32.gmra.mrb[0].mxu0 %v7142
      %v7347 = vpop.f32.mrb[0].mxu0
      %v7348 = vadd.f32 0.0, %v7347
      %v7349 = vpop.f32.mrb[0].mxu0
      %7350 = vmatprep.mubr.f32.mxu0 0.0
      %7351 = vmatmul.mubr.f32.gmra.mrb[0].mxu0 %v7145
      %v7352 = vpop.f32.mrb[0].mxu0
      %v7353 = vadd.f32 0.0, %v7352
      %v7354 = vpop.f32.mrb[0].mxu0
      %7355 = vmatprep.mubr.f32.mxu0 0.0
      %7356 = vmatmul.mubr.f32.gmra.mrb[0].mxu0 %v7148
      %v7357 = vpop.f32.mrb[0].mxu0
      %v7358 = vadd.f32 0.0, %v7357
      %v7359 = vpop.f32.mrb[0].mxu0
      %7360 = vmatprep.mubr.f32.mxu0 0.0
      %7361 = vmatmul.mubr.f32.gmra.mrb[0].mxu0 %v7151
      %v7362 = vpop.f32.mrb[0].mxu0
      %v7363 = vadd.f32 0.0, %v7362
      %v7364 = vpop.f32.mrb[0].mxu0
      %7365 = vmatprep.mubr.f32.mxu0 0.0
      %7366 = vmatmul.mubr.f32.gmra.mrb[0].mxu0 %v7154
      %v7367 = vpop.f32.mrb[0].mxu0
      %v7368 = vadd.f32 0.0, %v7367
      %v7369 = vpop.f32.mrb[0].mxu0
      %7370 = vmatprep.mubr.f32.mxu0 0.0
      %7371 = vmatmul.mubr.f32.gmra.mrb[0].mxu0 %v7157
      %v7372 = vpop.f32.mrb[0].mxu0
      %v7373 = vadd.f32 0.0, %v7372
      %v7374 = vpop.f32.mrb[0].mxu0
      %7375 = vmatprep.mubr.f32.mxu0 0.0
      %7376 = vmatmul.mubr.f32.gmra.mrb[0].mxu0 %v7160
      %v7377 = vpop.f32.mrb[0].mxu0
      %v7378 = vadd.f32 0.0, %v7377
      %v7379 = vpop.f32.mrb[0].mxu0
      %7380 = vmatprep.mubr.f32.mxu0 0.0
      %7381 = vmatmul.mubr.f32.gmra.mrb[0].mxu0 %v7163
      %v7382 = vpop.f32.mrb[0].mxu0
      %v7383 = vadd.f32 0.0, %v7382
      %v7384 = vpop.f32.mrb[0].mxu0
      %7385 = vmatprep.mubr.f32.mxu0 0.0
      %7386 = vmatmul.mubr.f32.gmra.mrb[0].mxu0 %v7166
      %v7387 = vpop.f32.mrb[0].mxu0
      %v7388 = vadd.f32 0.0, %v7387
      %v7389 = vpop.f32.mrb[0].mxu0
      %7390 = vmatprep.mubr.f32.mxu0 0.0
      %7391 = vmatmul.mubr.f32.gmra.mrb[0].mxu0 %v7169
      %v7392 = vpop.f32.mrb[0].mxu0
      %v7393 = vadd.f32 0.0, %v7392
      %v7394 = vpop.f32.mrb[0].mxu0
      %7395 = vdwg.mxu0
      %v7396 = vadd.f32 %v7009, %v7238
      %v7397 = vadd.f32 %v7010, %v7243
      %v7398 = vadd.f32 %v7011, %v7248
      %v7399 = vadd.f32 %v7012, %v7253
      %v7400 = vadd.f32 %v7013, %v7258
      %v7401 = vadd.f32 %v7014, %v7263
      %v7402 = vadd.f32 %v7015, %v7268
      %v7403 = vadd.f32 %v7016, %v7273
      %v7404 = vadd.f32 %v7017, %v7278
      %v7405 = vadd.f32 %v7018, %v7283
      %v7406 = vadd.f32 %v7019, %v7288
      %v7407 = vadd.f32 %v7020, %v7293
      %v7408 = vadd.f32 %v7021, %v7298
      %v7409 = vadd.f32 %v7022, %v7303
      %v7410 = vadd.f32 %v7023, %v7308
      %v7411 = vadd.f32 %v7024, %v7313
      %v7412 = vadd.f32 %v7025, %v7318
      %v7413 = vadd.f32 %v7026, %v7323
      %v7414 = vadd.f32 %v7027, %v7328
      %v7415 = vadd.f32 %v7028, %v7333
      %v7416 = vadd.f32 %v7029, %v7338
      %v7417 = vadd.f32 %v7030, %v7343
      %v7418 = vadd.f32 %v7031, %v7348
      %v7419 = vadd.f32 %v7032, %v7353
      %v7420 = vadd.f32 %v7033, %v7358
      %v7421 = vadd.f32 %v7034, %v7363
      %v7422 = vadd.f32 %v7035, %v7368
      %v7423 = vadd.f32 %v7036, %v7373
      %v7424 = vadd.f32 %v7037, %v7378
      %v7425 = vadd.f32 %v7038, %v7383
      %v7426 = vadd.f32 %v7039, %v7388
      %v7427 = vadd.f32 %v7040, %v7393
      %v7428 = vadd.f32 %v3975, %v7396
      %v7429 = vadd.f32 %v3976, %v7397
      %v7430 = vadd.f32 %v3977, %v7398
      %v7431 = vadd.f32 %v3978, %v7399
      %v7432 = vadd.f32 %v3979, %v7400
      %v7433 = vadd.f32 %v3980, %v7401
      %v7434 = vadd.f32 %v3981, %v7402
      %v7435 = vadd.f32 %v3982, %v7403
      %v7436 = vadd.f32 %v3983, %v7404
      %v7437 = vadd.f32 %v3984, %v7405
      %v7438 = vadd.f32 %v3985, %v7406
      %v7439 = vadd.f32 %v3986, %v7407
      %v7440 = vadd.f32 %v3987, %v7408
      %v7441 = vadd.f32 %v3988, %v7409
      %v7442 = vadd.f32 %v3989, %v7410
      %v7443 = vadd.f32 %v3990, %v7411
      %v7444 = vadd.f32 %v3991, %v7412
      %v7445 = vadd.f32 %v3992, %v7413
      %v7446 = vadd.f32 %v3993, %v7414
      %v7447 = vadd.f32 %v3994, %v7415
      %v7448 = vadd.f32 %v3995, %v7416
      %v7449 = vadd.f32 %v3996, %v7417
      %v7450 = vadd.f32 %v3997, %v7418
      %v7451 = vadd.f32 %v3998, %v7419
      %v7452 = vadd.f32 %v3999, %v7420
      %v7453 = vadd.f32 %v4000, %v7421
      %v7454 = vadd.f32 %v4001, %v7422
      %v7455 = vadd.f32 %v4002, %v7423
      %v7456 = vadd.f32 %v4003, %v7424
      %v7457 = vadd.f32 %v4004, %v7425
      %v7458 = vadd.f32 %v4005, %v7426
      %v7459 = vadd.f32 %v4006, %v7427
      %v7460 = vxor.u32 %v7428, 2147483648
      %v7461 = vxor.u32 %v7429, 2147483648
      %v7462 = vxor.u32 %v7430, 2147483648
      %v7463 = vxor.u32 %v7431, 2147483648
      %v7464 = vxor.u32 %v7432, 2147483648
      %v7465 = vxor.u32 %v7433, 2147483648
      %v7466 = vxor.u32 %v7434, 2147483648
      %v7467 = vxor.u32 %v7435, 2147483648
      %v7468 = vxor.u32 %v7436, 2147483648
      %v7469 = vxor.u32 %v7437, 2147483648
      %v7470 = vxor.u32 %v7438, 2147483648
      %v7471 = vxor.u32 %v7439, 2147483648
      %v7472 = vxor.u32 %v7440, 2147483648
      %v7473 = vxor.u32 %v7441, 2147483648
      %v7474 = vxor.u32 %v7442, 2147483648
      %v7475 = vxor.u32 %v7443, 2147483648
      %v7476 = vxor.u32 %v7444, 2147483648
      %v7477 = vxor.u32 %v7445, 2147483648
      %v7478 = vxor.u32 %v7446, 2147483648
      %v7479 = vxor.u32 %v7447, 2147483648
      %v7480 = vxor.u32 %v7448, 2147483648
      %v7481 = vxor.u32 %v7449, 2147483648
      %v7482 = vxor.u32 %v7450, 2147483648
      %v7483 = vxor.u32 %v7451, 2147483648
      %v7484 = vxor.u32 %v7452, 2147483648
      %v7485 = vxor.u32 %v7453, 2147483648
      %v7486 = vxor.u32 %v7454, 2147483648
      %v7487 = vxor.u32 %v7455, 2147483648
      %v7488 = vxor.u32 %v7456, 2147483648
      %v7489 = vxor.u32 %v7457, 2147483648
      %v7490 = vxor.u32 %v7458, 2147483648
      %v7491 = vxor.u32 %v7459, 2147483648
      %v7492 = vmul.f32 %v7460, 1.442695
      %v7493 = vpow.pop %v7492
      %v7494 = vmul.f32 %v7461, 1.442695
      %v7495 = vpow.pop %v7494
      %v7496 = vmul.f32 %v7462, 1.442695
      %v7497 = vpow.pop %v7496
      %v7498 = vmul.f32 %v7463, 1.442695
      %v7499 = vpow.pop %v7498
      %v7500 = vmul.f32 %v7464, 1.442695
      %v7501 = vpow.pop %v7500
      %v7502 = vmul.f32 %v7465, 1.442695
      %v7503 = vpow.pop %v7502
      %v7504 = vmul.f32 %v7466, 1.442695
      %v7505 = vpow.pop %v7504
      %v7506 = vmul.f32 %v7467, 1.442695
      %v7507 = vpow.pop %v7506
      %v7508 = vmul.f32 %v7468, 1.442695
      %v7509 = vpow.pop %v7508
      %v7510 = vmul.f32 %v7469, 1.442695
      %v7511 = vpow.pop %v7510
      %v7512 = vmul.f32 %v7470, 1.442695
      %v7513 = vpow.pop %v7512
      %v7514 = vmul.f32 %v7471, 1.442695
      %v7515 = vpow.pop %v7514
      %v7516 = vmul.f32 %v7472, 1.442695
      %v7517 = vpow.pop %v7516
      %v7518 = vmul.f32 %v7473, 1.442695
      %v7519 = vpow.pop %v7518
      %v7520 = vmul.f32 %v7474, 1.442695
      %v7521 = vpow.pop %v7520
      %v7522 = vmul.f32 %v7475, 1.442695
      %v7523 = vpow.pop %v7522
      %v7524 = vmul.f32 %v7476, 1.442695
      %v7525 = vpow.pop %v7524
      %v7526 = vmul.f32 %v7477, 1.442695
      %v7527 = vpow.pop %v7526
      %v7528 = vmul.f32 %v7478, 1.442695
      %v7529 = vpow.pop %v7528
      %v7530 = vmul.f32 %v7479, 1.442695
      %v7531 = vpow.pop %v7530
      %v7532 = vmul.f32 %v7480, 1.442695
      %v7533 = vpow.pop %v7532
      %v7534 = vmul.f32 %v7481, 1.442695
      %v7535 = vpow.pop %v7534
      %v7536 = vmul.f32 %v7482, 1.442695
      %v7537 = vpow.pop %v7536
      %v7538 = vmul.f32 %v7483, 1.442695
      %v7539 = vpow.pop %v7538
      %v7540 = vmul.f32 %v7484, 1.442695
      %v7541 = vpow.pop %v7540
      %v7542 = vmul.f32 %v7485, 1.442695
      %v7543 = vpow.pop %v7542
      %v7544 = vmul.f32 %v7486, 1.442695
      %v7545 = vpow.pop %v7544
      %v7546 = vmul.f32 %v7487, 1.442695
      %v7547 = vpow.pop %v7546
      %v7548 = vmul.f32 %v7488, 1.442695
      %v7549 = vpow.pop %v7548
      %v7550 = vmul.f32 %v7489, 1.442695
      %v7551 = vpow.pop %v7550
      %v7552 = vmul.f32 %v7490, 1.442695
      %v7553 = vpow.pop %v7552
      %v7554 = vmul.f32 %v7491, 1.442695
      %v7555 = vpow.pop %v7554
      %v7556 = vadd.f32 %v7493, 1.0
      %v7557 = vadd.f32 %v7495, 1.0
      %v7558 = vadd.f32 %v7497, 1.0
      %v7559 = vadd.f32 %v7499, 1.0
      %v7560 = vadd.f32 %v7501, 1.0
      %v7561 = vadd.f32 %v7503, 1.0
      %v7562 = vadd.f32 %v7505, 1.0
      %v7563 = vadd.f32 %v7507, 1.0
      %v7564 = vadd.f32 %v7509, 1.0
      %v7565 = vadd.f32 %v7511, 1.0
      %v7566 = vadd.f32 %v7513, 1.0
      %v7567 = vadd.f32 %v7515, 1.0
      %v7568 = vadd.f32 %v7517, 1.0
      %v7569 = vadd.f32 %v7519, 1.0
      %v7570 = vadd.f32 %v7521, 1.0
      %v7571 = vadd.f32 %v7523, 1.0
      %v7572 = vadd.f32 %v7525, 1.0
      %v7573 = vadd.f32 %v7527, 1.0
      %v7574 = vadd.f32 %v7529, 1.0
      %v7575 = vadd.f32 %v7531, 1.0
      %v7576 = vadd.f32 %v7533, 1.0
      %v7577 = vadd.f32 %v7535, 1.0
      %v7578 = vadd.f32 %v7537, 1.0
      %v7579 = vadd.f32 %v7539, 1.0
      %v7580 = vadd.f32 %v7541, 1.0
      %v7581 = vadd.f32 %v7543, 1.0
      %v7582 = vadd.f32 %v7545, 1.0
      %v7583 = vadd.f32 %v7547, 1.0
      %v7584 = vadd.f32 %v7549, 1.0
      %v7585 = vadd.f32 %v7551, 1.0
      %v7586 = vadd.f32 %v7553, 1.0
      %v7587 = vadd.f32 %v7555, 1.0
      %v7588 = vrcp.pop %v7556
      %v7589 = vmul.f32 1.0, %v7588
      %v7590 = vrcp.pop %v7557
      %v7591 = vmul.f32 1.0, %v7590
      %v7592 = vrcp.pop %v7558
      %v7593 = vmul.f32 1.0, %v7592
      %v7594 = vrcp.pop %v7559
      %v7595 = vmul.f32 1.0, %v7594
      %v7596 = vrcp.pop %v7560
      %v7597 = vmul.f32 1.0, %v7596
      %v7598 = vrcp.pop %v7561
      %v7599 = vmul.f32 1.0, %v7598
      %v7600 = vrcp.pop %v7562
      %v7601 = vmul.f32 1.0, %v7600
      %v7602 = vrcp.pop %v7563
      %v7603 = vmul.f32 1.0, %v7602
      %v7604 = vrcp.pop %v7564
      %v7605 = vmul.f32 1.0, %v7604
      %v7606 = vrcp.pop %v7565
      %v7607 = vmul.f32 1.0, %v7606
      %v7608 = vrcp.pop %v7566
      %v7609 = vmul.f32 1.0, %v7608
      %v7610 = vrcp.pop %v7567
      %v7611 = vmul.f32 1.0, %v7610
      %v7612 = vrcp.pop %v7568
      %v7613 = vmul.f32 1.0, %v7612
      %v7614 = vrcp.pop %v7569
      %v7615 = vmul.f32 1.0, %v7614
      %v7616 = vrcp.pop %v7570
      %v7617 = vmul.f32 1.0, %v7616
      %v7618 = vrcp.pop %v7571
      %v7619 = vmul.f32 1.0, %v7618
      %v7620 = vrcp.pop %v7572
      %v7621 = vmul.f32 1.0, %v7620
      %v7622 = vrcp.pop %v7573
      %v7623 = vmul.f32 1.0, %v7622
      %v7624 = vrcp.pop %v7574
      %v7625 = vmul.f32 1.0, %v7624
      %v7626 = vrcp.pop %v7575
      %v7627 = vmul.f32 1.0, %v7626
      %v7628 = vrcp.pop %v7576
      %v7629 = vmul.f32 1.0, %v7628
      %v7630 = vrcp.pop %v7577
      %v7631 = vmul.f32 1.0, %v7630
      %v7632 = vrcp.pop %v7578
      %v7633 = vmul.f32 1.0, %v7632
      %v7634 = vrcp.pop %v7579
      %v7635 = vmul.f32 1.0, %v7634
      %v7636 = vrcp.pop %v7580
      %v7637 = vmul.f32 1.0, %v7636
      %v7638 = vrcp.pop %v7581
      %v7639 = vmul.f32 1.0, %v7638
      %v7640 = vrcp.pop %v7582
      %v7641 = vmul.f32 1.0, %v7640
      %v7642 = vrcp.pop %v7583
      %v7643 = vmul.f32 1.0, %v7642
      %v7644 = vrcp.pop %v7584
      %v7645 = vmul.f32 1.0, %v7644
      %v7646 = vrcp.pop %v7585
      %v7647 = vmul.f32 1.0, %v7646
      %v7648 = vrcp.pop %v7586
      %v7649 = vmul.f32 1.0, %v7648
      %v7650 = vrcp.pop %v7587
      %v7651 = vmul.f32 1.0, %v7650
      %v7652 = vmul.f32 %v7589, %v5492
      %v7653 = vmul.f32 %v7591, %v5493
      %v7654 = vmul.f32 %v7593, %v5494
      %v7655 = vmul.f32 %v7595, %v5495
      %v7656 = vmul.f32 %v7597, %v5496
      %v7657 = vmul.f32 %v7599, %v5497
      %v7658 = vmul.f32 %v7601, %v5498
      %v7659 = vmul.f32 %v7603, %v5499
      %v7660 = vmul.f32 %v7605, %v5500
      %v7661 = vmul.f32 %v7607, %v5501
      %v7662 = vmul.f32 %v7609, %v5502
      %v7663 = vmul.f32 %v7611, %v5503
      %v7664 = vmul.f32 %v7613, %v5504
      %v7665 = vmul.f32 %v7615, %v5505
      %v7666 = vmul.f32 %v7617, %v5506
      %v7667 = vmul.f32 %v7619, %v5507
      %v7668 = vmul.f32 %v7621, %v5508
      %v7669 = vmul.f32 %v7623, %v5509
      %v7670 = vmul.f32 %v7625, %v5510
      %v7671 = vmul.f32 %v7627, %v5511
      %v7672 = vmul.f32 %v7629, %v5512
      %v7673 = vmul.f32 %v7631, %v5513
      %v7674 = vmul.f32 %v7633, %v5514
      %v7675 = vmul.f32 %v7635, %v5515
      %v7676 = vmul.f32 %v7637, %v5516
      %v7677 = vmul.f32 %v7639, %v5517
      %v7678 = vmul.f32 %v7641, %v5518
      %v7679 = vmul.f32 %v7643, %v5519
      %v7680 = vmul.f32 %v7645, %v5520
      %v7681 = vmul.f32 %v7647, %v5521
      %v7682 = vmul.f32 %v7649, %v5522
      %v7683 = vmul.f32 %v7651, %v5523
      %s7684 = scalar_lea.vmem [#allocation3], 24
      %7685 = vst.msk [vmem:[%s7684 + $0x1] sm:$0xff] %vm4074, %v7652
      %7686 = vst.msk [vmem:[%s7684 + $0x9] sm:$0xff] %vm4074, %v7653
      %7687 = vst.msk [vmem:[%s7684 + $0x19] sm:$0xff] %vm4074, %v7654
      %7688 = vst.msk [vmem:[%s7684 + $0x21] sm:$0xff] %vm4074, %v7655
      %7689 = vst.msk [vmem:[%s7684 + $0x31] sm:$0xff] %vm4074, %v7656
      %7690 = vst.msk [vmem:[%s7684 + $0x39] sm:$0xff] %vm4074, %v7657
      %7691 = vst.msk [vmem:[%s7684 + $0x49] sm:$0xff] %vm4074, %v7658
      %7692 = vst.msk [vmem:[%s7684 + $0x51] sm:$0xff] %vm4074, %v7659
      %7693 = vst.msk [vmem:[%s7684 + $0x61] sm:$0xff] %vm4074, %v7660
      %7694 = vst.msk [vmem:[%s7684 + $0x69] sm:$0xff] %vm4074, %v7661
      %7695 = vst.msk [vmem:[%s7684 + $0x79] sm:$0xff] %vm4074, %v7662
      %7696 = vst.msk [vmem:[%s7684 + $0x81] sm:$0xff] %vm4074, %v7663
      %7697 = vst.msk [vmem:[%s7684 + $0x91] sm:$0xff] %vm4074, %v7664
      %7698 = vst.msk [vmem:[%s7684 + $0x99] sm:$0xff] %vm4074, %v7665
      %7699 = vst.msk [vmem:[%s7684 + $0xa9] sm:$0xff] %vm4074, %v7666
      %7700 = vst.msk [vmem:[%s7684 + $0xb1] sm:$0xff] %vm4074, %v7667
      %7701 = vst.msk [vmem:[%s7684 + $0xc1] sm:$0xff] %vm4074, %v7668
      %7702 = vst.msk [vmem:[%s7684 + $0xc9] sm:$0xff] %vm4074, %v7669
      %7703 = vst.msk [vmem:[%s7684 + $0xd9] sm:$0xff] %vm4074, %v7670
      %7704 = vst.msk [vmem:[%s7684 + $0xe1] sm:$0xff] %vm4074, %v7671
      %7705 = vst.msk [vmem:[%s7684 + $0xf1] sm:$0xff] %vm4074, %v7672
      %7706 = vst.msk [vmem:[%s7684 + $0xf9] sm:$0xff] %vm4074, %v7673
      %7707 = vst.msk [vmem:[%s7684 + $0x109] sm:$0xff] %vm4074, %v7674
      %7708 = vst.msk [vmem:[%s7684 + $0x111] sm:$0xff] %vm4074, %v7675
      %7709 = vst.msk [vmem:[%s7684 + $0x121] sm:$0xff] %vm4074, %v7676
      %7710 = vst.msk [vmem:[%s7684 + $0x129] sm:$0xff] %vm4074, %v7677
      %7711 = vst.msk [vmem:[%s7684 + $0x139] sm:$0xff] %vm4074, %v7678
      %7712 = vst.msk [vmem:[%s7684 + $0x141] sm:$0xff] %vm4074, %v7679
      %7713 = vst.msk [vmem:[%s7684 + $0x151] sm:$0xff] %vm4074, %v7680
      %7714 = vst.msk [vmem:[%s7684 + $0x159] sm:$0xff] %vm4074, %v7681
      %7715 = vst.msk [vmem:[%s7684 + $0x169] sm:$0xff] %vm4074, %v7682
      %7716 = vst.msk [vmem:[%s7684 + $0x171] sm:$0xff] %vm4074, %v7683
      %v7717 = vld [vmem:[#allocation3] sm:$0xff]
      %v7718 = vld [vmem:[#allocation3 + $0x8] sm:$0xff]
      %v7719 = vld [vmem:[#allocation3 + $0x18] sm:$0xff]
      %v7720 = vld [vmem:[#allocation3 + $0x20] sm:$0xff]
      %v7721 = vld [vmem:[#allocation3 + $0x30] sm:$0xff]
      %v7722 = vld [vmem:[#allocation3 + $0x38] sm:$0xff]
      %v7723 = vld [vmem:[#allocation3 + $0x48] sm:$0xff]
      %v7724 = vld [vmem:[#allocation3 + $0x50] sm:$0xff]
      %v7725 = vld [vmem:[#allocation3 + $0x60] sm:$0xff]
      %v7726 = vld [vmem:[#allocation3 + $0x68] sm:$0xff]
      %v7727 = vld [vmem:[#allocation3 + $0x78] sm:$0xff]
      %v7728 = vld [vmem:[#allocation3 + $0x80] sm:$0xff]
      %v7729 = vld [vmem:[#allocation3 + $0x90] sm:$0xff]
      %v7730 = vld [vmem:[#allocation3 + $0x98] sm:$0xff]
      %v7731 = vld [vmem:[#allocation3 + $0xa8] sm:$0xff]
      %v7732 = vld [vmem:[#allocation3 + $0xb0] sm:$0xff]
      %v7733 = vld [vmem:[#allocation3 + $0xc0] sm:$0xff]
      %v7734 = vld [vmem:[#allocation3 + $0xc8] sm:$0xff]
      %v7735 = vld [vmem:[#allocation3 + $0xd8] sm:$0xff]
      %v7736 = vld [vmem:[#allocation3 + $0xe0] sm:$0xff]
      %v7737 = vld [vmem:[#allocation3 + $0xf0] sm:$0xff]
      %v7738 = vld [vmem:[#allocation3 + $0xf8] sm:$0xff]
      %v7739 = vld [vmem:[#allocation3 + $0x108] sm:$0xff]
      %v7740 = vld [vmem:[#allocation3 + $0x110] sm:$0xff]
      %v7741 = vld [vmem:[#allocation3 + $0x120] sm:$0xff]
      %v7742 = vld [vmem:[#allocation3 + $0x128] sm:$0xff]
      %v7743 = vld [vmem:[#allocation3 + $0x138] sm:$0xff]
      %v7744 = vld [vmem:[#allocation3 + $0x140] sm:$0xff]
      %v7745 = vld [vmem:[#allocation3 + $0x150] sm:$0xff]
      %v7746 = vld [vmem:[#allocation3 + $0x158] sm:$0xff]
      %v7747 = vld [vmem:[#allocation3 + $0x168] sm:$0xff]
      %v7748 = vld [vmem:[#allocation3 + $0x170] sm:$0xff]
      %v7749 = vld [vmem:[%s4] sm:$0xff]
      %v7750 = vld [vmem:[#allocation3 + $0x1] sm:$0xff]
      %v7751 = vld [vmem:[#allocation3 + $0x9] sm:$0xff]
      %v7752 = vld [vmem:[#allocation3 + $0x19] sm:$0xff]
      %v7753 = vld [vmem:[#allocation3 + $0x21] sm:$0xff]
      %v7754 = vld [vmem:[#allocation3 + $0x31] sm:$0xff]
      %v7755 = vld [vmem:[#allocation3 + $0x39] sm:$0xff]
      %v7756 = vld [vmem:[#allocation3 + $0x49] sm:$0xff]
      %v7757 = vld [vmem:[#allocation3 + $0x51] sm:$0xff]
      %v7758 = vld [vmem:[#allocation3 + $0x61] sm:$0xff]
      %v7759 = vld [vmem:[#allocation3 + $0x69] sm:$0xff]
      %v7760 = vld [vmem:[#allocation3 + $0x79] sm:$0xff]
      %v7761 = vld [vmem:[#allocation3 + $0x81] sm:$0xff]
      %v7762 = vld [vmem:[#allocation3 + $0x91] sm:$0xff]
      %v7763 = vld [vmem:[#allocation3 + $0x99] sm:$0xff]
      %v7764 = vld [vmem:[#allocation3 + $0xa9] sm:$0xff]
      %v7765 = vld [vmem:[#allocation3 + $0xb1] sm:$0xff]
      %v7766 = vld [vmem:[#allocation3 + $0xc1] sm:$0xff]
      %v7767 = vld [vmem:[#allocation3 + $0xc9] sm:$0xff]
      %v7768 = vld [vmem:[#allocation3 + $0xd9] sm:$0xff]
      %v7769 = vld [vmem:[#allocation3 + $0xe1] sm:$0xff]
      %v7770 = vld [vmem:[#allocation3 + $0xf1] sm:$0xff]
      %v7771 = vld [vmem:[#allocation3 + $0xf9] sm:$0xff]
      %v7772 = vld [vmem:[#allocation3 + $0x109] sm:$0xff]
      %v7773 = vld [vmem:[#allocation3 + $0x111] sm:$0xff]
      %v7774 = vld [vmem:[#allocation3 + $0x121] sm:$0xff]
      %v7775 = vld [vmem:[#allocation3 + $0x129] sm:$0xff]
      %v7776 = vld [vmem:[#allocation3 + $0x139] sm:$0xff]
      %v7777 = vld [vmem:[#allocation3 + $0x141] sm:$0xff]
      %v7778 = vld [vmem:[#allocation3 + $0x151] sm:$0xff]
      %v7779 = vld [vmem:[#allocation3 + $0x159] sm:$0xff]
      %v7780 = vld [vmem:[#allocation3 + $0x169] sm:$0xff]
      %v7781 = vld [vmem:[#allocation3 + $0x171] sm:$0xff]
      %s7782 = scalar_lea.vmem %s4, 8
      %v7783 = vld [vmem:[%s7782] sm:$0xff]
      %v7785 = vsel %vm4074, %v7750, 0
      %v7788 = vsel %vm4074, %v7751, 0
      %v7791 = vsel %vm4074, %v7752, 0
      %v7794 = vsel %vm4074, %v7753, 0
      %v7797 = vsel %vm4074, %v7754, 0
      %v7800 = vsel %vm4074, %v7755, 0
      %v7803 = vsel %vm4074, %v7756, 0
      %v7806 = vsel %vm4074, %v7757, 0
      %v7809 = vsel %vm4074, %v7758, 0
      %v7812 = vsel %vm4074, %v7759, 0
      %v7815 = vsel %vm4074, %v7760, 0
      %v7818 = vsel %vm4074, %v7761, 0
      %v7821 = vsel %vm4074, %v7762, 0
      %v7824 = vsel %vm4074, %v7763, 0
      %v7827 = vsel %vm4074, %v7764, 0
      %v7830 = vsel %vm4074, %v7765, 0
      %v7833 = vsel %vm4074, %v7766, 0
      %v7836 = vsel %vm4074, %v7767, 0
      %v7839 = vsel %vm4074, %v7768, 0
      %v7842 = vsel %vm4074, %v7769, 0
      %v7845 = vsel %vm4074, %v7770, 0
      %v7848 = vsel %vm4074, %v7771, 0
      %v7851 = vsel %vm4074, %v7772, 0
      %v7854 = vsel %vm4074, %v7773, 0
      %v7857 = vsel %vm4074, %v7774, 0
      %v7860 = vsel %vm4074, %v7775, 0
      %v7863 = vsel %vm4074, %v7776, 0
      %v7866 = vsel %vm4074, %v7777, 0
      %v7869 = vsel %vm4074, %v7778, 0
      %v7872 = vsel %vm4074, %v7779, 0
      %v7875 = vsel %vm4074, %v7780, 0
      %v7878 = vsel %vm4074, %v7781, 0
      %7880 = vmatprep.subr.mxu0 0.0
      %7881 = vmatpush1.msra.mxu0 %v7783
      %7882 = vmatprep.subr.mxu0 0.0
      %7883 = vmatpush1.msra.mxu0 0.0
      %7884 = vmatprep.subr.mxu0 0.0
      %7885 = vmatpush1.msra.mxu0 0.0
      %7886 = vmatprep.subr.mxu0 0.0
      %7887 = vmatpush1.msra.mxu0 0.0
      %7888 = vmatprep.subr.mxu0 0.0
      %7889 = vmatpush1.msra.mxu0 0.0
      %7890 = vmatprep.subr.mxu0 0.0
      %7891 = vmatpush1.msra.mxu0 0.0
      %7892 = vmatprep.subr.mxu0 0.0
      %7893 = vmatpush1.msra.mxu0 0.0
      %7894 = vmatprep.subr.mxu0 0.0
      %7895 = vmatpush1.msra.mxu0 0.0
      %7896 = vmatprep.subr.mxu0 0.0
      %7897 = vmatpush1.msra.mxu0 0.0
      %7898 = vmatprep.subr.mxu0 0.0
      %7899 = vmatpush1.msra.mxu0 0.0
      %7900 = vmatprep.subr.mxu0 0.0
      %7901 = vmatpush1.msra.mxu0 0.0
      %7902 = vmatprep.subr.mxu0 0.0
      %7903 = vmatpush1.msra.mxu0 0.0
      %7904 = vmatprep.subr.mxu0 0.0
      %7905 = vmatpush1.msra.mxu0 0.0
      %7906 = vmatprep.subr.mxu0 0.0
      %7907 = vmatpush1.msra.mxu0 0.0
      %7908 = vmatprep.subr.mxu0 0.0
      %7909 = vmatpush1.msra.mxu0 0.0
      %7910 = vmatprep.subr.mxu0 0.0
      %7911 = vmatpush1.msra.mxu0 0.0
      %7912 = vmatprep.subr.mxu0 0.0
      %7913 = vmatpush1.msra.mxu0 0.0
      %7914 = vmatprep.subr.mxu0 0.0
      %7915 = vmatpush1.msra.mxu0 0.0
      %7916 = vmatprep.subr.mxu0 0.0
      %7917 = vmatpush1.msra.mxu0 0.0
      %7918 = vmatprep.subr.mxu0 0.0
      %7919 = vmatpush1.msra.mxu0 0.0
      %7920 = vmatprep.subr.mxu0 0.0
      %7921 = vmatpush1.msra.mxu0 0.0
      %7922 = vmatprep.subr.mxu0 0.0
      %7923 = vmatpush1.msra.mxu0 0.0
      %7924 = vmatprep.subr.mxu0 0.0
      %7925 = vmatpush1.msra.mxu0 0.0
      %7926 = vmatprep.subr.mxu0 0.0
      %7927 = vmatpush1.msra.mxu0 0.0
      %7928 = vmatprep.subr.mxu0 0.0
      %7929 = vmatpush1.msra.mxu0 0.0
      %7930 = vmatprep.subr.mxu0 0.0
      %7931 = vmatpush1.msra.mxu0 0.0
      %7932 = vmatprep.subr.mxu0 0.0
      %7933 = vmatpush1.msra.mxu0 0.0
      %7934 = vmatprep.subr.mxu0 0.0
      %7935 = vmatpush1.msra.mxu0 0.0
      %7936 = vmatprep.subr.mxu0 0.0
      %7937 = vmatpush1.msra.mxu0 0.0
      %7938 = vmatprep.subr.mxu0 0.0
      %7939 = vmatpush1.msra.mxu0 0.0
      %7940 = vmatprep.subr.mxu0 0.0
      %7941 = vmatpush1.msra.mxu0 0.0
      %7942 = vmatprep.subr.mxu0 0.0
      %7943 = vmatpush1.msra.mxu0 0.0
      %7944 = vmatprep.mubr.f32.mxu0 0.0
      %7945 = vmatmul.mubr.f32.gmra.mrb[0].mxu0 %v7785
      %v7946 = vpop.f32.mrb[0].mxu0
      %v7947 = vadd.f32 0.0, %v7946
      %v7948 = vpop.f32.mrb[0].mxu0
      %7949 = vmatprep.mubr.f32.mxu0 0.0
      %7950 = vmatmul.mubr.f32.gmra.mrb[0].mxu0 %v7788
      %v7951 = vpop.f32.mrb[0].mxu0
      %v7952 = vadd.f32 0.0, %v7951
      %v7953 = vpop.f32.mrb[0].mxu0
      %7954 = vmatprep.mubr.f32.mxu0 0.0
      %7955 = vmatmul.mubr.f32.gmra.mrb[0].mxu0 %v7791
      %v7956 = vpop.f32.mrb[0].mxu0
      %v7957 = vadd.f32 0.0, %v7956
      %v7958 = vpop.f32.mrb[0].mxu0
      %7959 = vmatprep.mubr.f32.mxu0 0.0
      %7960 = vmatmul.mubr.f32.gmra.mrb[0].mxu0 %v7794
      %v7961 = vpop.f32.mrb[0].mxu0
      %v7962 = vadd.f32 0.0, %v7961
      %v7963 = vpop.f32.mrb[0].mxu0
      %7964 = vmatprep.mubr.f32.mxu0 0.0
      %7965 = vmatmul.mubr.f32.gmra.mrb[0].mxu0 %v7797
      %v7966 = vpop.f32.mrb[0].mxu0
      %v7967 = vadd.f32 0.0, %v7966
      %v7968 = vpop.f32.mrb[0].mxu0
      %7969 = vmatprep.mubr.f32.mxu0 0.0
      %7970 = vmatmul.mubr.f32.gmra.mrb[0].mxu0 %v7800
      %v7971 = vpop.f32.mrb[0].mxu0
      %v7972 = vadd.f32 0.0, %v7971
      %v7973 = vpop.f32.mrb[0].mxu0
      %7974 = vmatprep.mubr.f32.mxu0 0.0
      %7975 = vmatmul.mubr.f32.gmra.mrb[0].mxu0 %v7803
      %v7976 = vpop.f32.mrb[0].mxu0
      %v7977 = vadd.f32 0.0, %v7976
      %v7978 = vpop.f32.mrb[0].mxu0
      %7979 = vmatprep.mubr.f32.mxu0 0.0
      %7980 = vmatmul.mubr.f32.gmra.mrb[0].mxu0 %v7806
      %v7981 = vpop.f32.mrb[0].mxu0
      %v7982 = vadd.f32 0.0, %v7981
      %v7983 = vpop.f32.mrb[0].mxu0
      %7984 = vmatprep.mubr.f32.mxu0 0.0
      %7985 = vmatmul.mubr.f32.gmra.mrb[0].mxu0 %v7809
      %v7986 = vpop.f32.mrb[0].mxu0
      %v7987 = vadd.f32 0.0, %v7986
      %v7988 = vpop.f32.mrb[0].mxu0
      %7989 = vmatprep.mubr.f32.mxu0 0.0
      %7990 = vmatmul.mubr.f32.gmra.mrb[0].mxu0 %v7812
      %v7991 = vpop.f32.mrb[0].mxu0
      %v7992 = vadd.f32 0.0, %v7991
      %v7993 = vpop.f32.mrb[0].mxu0
      %7994 = vmatprep.mubr.f32.mxu0 0.0
      %7995 = vmatmul.mubr.f32.gmra.mrb[0].mxu0 %v7815
      %v7996 = vpop.f32.mrb[0].mxu0
      %v7997 = vadd.f32 0.0, %v7996
      %v7998 = vpop.f32.mrb[0].mxu0
      %7999 = vmatprep.mubr.f32.mxu0 0.0
      %8000 = vmatmul.mubr.f32.gmra.mrb[0].mxu0 %v7818
      %v8001 = vpop.f32.mrb[0].mxu0
      %v8002 = vadd.f32 0.0, %v8001
      %v8003 = vpop.f32.mrb[0].mxu0
      %8004 = vmatprep.mubr.f32.mxu0 0.0
      %8005 = vmatmul.mubr.f32.gmra.mrb[0].mxu0 %v7821
      %v8006 = vpop.f32.mrb[0].mxu0
      %v8007 = vadd.f32 0.0, %v8006
      %v8008 = vpop.f32.mrb[0].mxu0
      %8009 = vmatprep.mubr.f32.mxu0 0.0
      %8010 = vmatmul.mubr.f32.gmra.mrb[0].mxu0 %v7824
      %v8011 = vpop.f32.mrb[0].mxu0
      %v8012 = vadd.f32 0.0, %v8011
      %v8013 = vpop.f32.mrb[0].mxu0
      %8014 = vmatprep.mubr.f32.mxu0 0.0
      %8015 = vmatmul.mubr.f32.gmra.mrb[0].mxu0 %v7827
      %v8016 = vpop.f32.mrb[0].mxu0
      %v8017 = vadd.f32 0.0, %v8016
      %v8018 = vpop.f32.mrb[0].mxu0
      %8019 = vmatprep.mubr.f32.mxu0 0.0
      %8020 = vmatmul.mubr.f32.gmra.mrb[0].mxu0 %v7830
      %v8021 = vpop.f32.mrb[0].mxu0
      %v8022 = vadd.f32 0.0, %v8021
      %v8023 = vpop.f32.mrb[0].mxu0
      %8024 = vmatprep.mubr.f32.mxu0 0.0
      %8025 = vmatmul.mubr.f32.gmra.mrb[0].mxu0 %v7833
      %v8026 = vpop.f32.mrb[0].mxu0
      %v8027 = vadd.f32 0.0, %v8026
      %v8028 = vpop.f32.mrb[0].mxu0
      %8029 = vmatprep.mubr.f32.mxu0 0.0
      %8030 = vmatmul.mubr.f32.gmra.mrb[0].mxu0 %v7836
      %v8031 = vpop.f32.mrb[0].mxu0
      %v8032 = vadd.f32 0.0, %v8031
      %v8033 = vpop.f32.mrb[0].mxu0
      %8034 = vmatprep.mubr.f32.mxu0 0.0
      %8035 = vmatmul.mubr.f32.gmra.mrb[0].mxu0 %v7839
      %v8036 = vpop.f32.mrb[0].mxu0
      %v8037 = vadd.f32 0.0, %v8036
      %v8038 = vpop.f32.mrb[0].mxu0
      %8039 = vmatprep.mubr.f32.mxu0 0.0
      %8040 = vmatmul.mubr.f32.gmra.mrb[0].mxu0 %v7842
      %v8041 = vpop.f32.mrb[0].mxu0
      %v8042 = vadd.f32 0.0, %v8041
      %v8043 = vpop.f32.mrb[0].mxu0
      %8044 = vmatprep.mubr.f32.mxu0 0.0
      %8045 = vmatmul.mubr.f32.gmra.mrb[0].mxu0 %v7845
      %v8046 = vpop.f32.mrb[0].mxu0
      %v8047 = vadd.f32 0.0, %v8046
      %v8048 = vpop.f32.mrb[0].mxu0
      %8049 = vmatprep.mubr.f32.mxu0 0.0
      %8050 = vmatmul.mubr.f32.gmra.mrb[0].mxu0 %v7848
      %v8051 = vpop.f32.mrb[0].mxu0
      %v8052 = vadd.f32 0.0, %v8051
      %v8053 = vpop.f32.mrb[0].mxu0
      %8054 = vmatprep.mubr.f32.mxu0 0.0
      %8055 = vmatmul.mubr.f32.gmra.mrb[0].mxu0 %v7851
      %v8056 = vpop.f32.mrb[0].mxu0
      %v8057 = vadd.f32 0.0, %v8056
      %v8058 = vpop.f32.mrb[0].mxu0
      %8059 = vmatprep.mubr.f32.mxu0 0.0
      %8060 = vmatmul.mubr.f32.gmra.mrb[0].mxu0 %v7854
      %v8061 = vpop.f32.mrb[0].mxu0
      %v8062 = vadd.f32 0.0, %v8061
      %v8063 = vpop.f32.mrb[0].mxu0
      %8064 = vmatprep.mubr.f32.mxu0 0.0
      %8065 = vmatmul.mubr.f32.gmra.mrb[0].mxu0 %v7857
      %v8066 = vpop.f32.mrb[0].mxu0
      %v8067 = vadd.f32 0.0, %v8066
      %v8068 = vpop.f32.mrb[0].mxu0
      %8069 = vmatprep.mubr.f32.mxu0 0.0
      %8070 = vmatmul.mubr.f32.gmra.mrb[0].mxu0 %v7860
      %v8071 = vpop.f32.mrb[0].mxu0
      %v8072 = vadd.f32 0.0, %v8071
      %v8073 = vpop.f32.mrb[0].mxu0
      %8074 = vmatprep.mubr.f32.mxu0 0.0
      %8075 = vmatmul.mubr.f32.gmra.mrb[0].mxu0 %v7863
      %v8076 = vpop.f32.mrb[0].mxu0
      %v8077 = vadd.f32 0.0, %v8076
      %v8078 = vpop.f32.mrb[0].mxu0
      %8079 = vmatprep.mubr.f32.mxu0 0.0
      %8080 = vmatmul.mubr.f32.gmra.mrb[0].mxu0 %v7866
      %v8081 = vpop.f32.mrb[0].mxu0
      %v8082 = vadd.f32 0.0, %v8081
      %v8083 = vpop.f32.mrb[0].mxu0
      %8084 = vmatprep.mubr.f32.mxu0 0.0
      %8085 = vmatmul.mubr.f32.gmra.mrb[0].mxu0 %v7869
      %v8086 = vpop.f32.mrb[0].mxu0
      %v8087 = vadd.f32 0.0, %v8086
      %v8088 = vpop.f32.mrb[0].mxu0
      %8089 = vmatprep.mubr.f32.mxu0 0.0
      %8090 = vmatmul.mubr.f32.gmra.mrb[0].mxu0 %v7872
      %v8091 = vpop.f32.mrb[0].mxu0
      %v8092 = vadd.f32 0.0, %v8091
      %v8093 = vpop.f32.mrb[0].mxu0
      %8094 = vmatprep.mubr.f32.mxu0 0.0
      %8095 = vmatmul.mubr.f32.gmra.mrb[0].mxu0 %v7875
      %v8096 = vpop.f32.mrb[0].mxu0
      %v8097 = vadd.f32 0.0, %v8096
      %v8098 = vpop.f32.mrb[0].mxu0
      %8099 = vmatprep.mubr.f32.mxu0 0.0
      %8100 = vmatmul.mubr.f32.gmra.mrb[0].mxu0 %v7878
      %v8101 = vpop.f32.mrb[0].mxu0
      %v8102 = vadd.f32 0.0, %v8101
      %v8103 = vpop.f32.mrb[0].mxu0
      %8104 = vdwg.mxu0
      %v8106 = vsel %vm4074, %v7717, 0
      %v8109 = vsel %vm4074, %v7718, 0
      %v8112 = vsel %vm4074, %v7719, 0
      %v8115 = vsel %vm4074, %v7720, 0
      %v8118 = vsel %vm4074, %v7721, 0
      %v8121 = vsel %vm4074, %v7722, 0
      %v8124 = vsel %vm4074, %v7723, 0
      %v8127 = vsel %vm4074, %v7724, 0
      %v8130 = vsel %vm4074, %v7725, 0
      %v8133 = vsel %vm4074, %v7726, 0
      %v8136 = vsel %vm4074, %v7727, 0
      %v8139 = vsel %vm4074, %v7728, 0
      %v8142 = vsel %vm4074, %v7729, 0
      %v8145 = vsel %vm4074, %v7730, 0
      %v8148 = vsel %vm4074, %v7731, 0
      %v8151 = vsel %vm4074, %v7732, 0
      %v8154 = vsel %vm4074, %v7733, 0
      %v8157 = vsel %vm4074, %v7734, 0
      %v8160 = vsel %vm4074, %v7735, 0
      %v8163 = vsel %vm4074, %v7736, 0
      %v8166 = vsel %vm4074, %v7737, 0
      %v8169 = vsel %vm4074, %v7738, 0
      %v8172 = vsel %vm4074, %v7739, 0
      %v8175 = vsel %vm4074, %v7740, 0
      %v8178 = vsel %vm4074, %v7741, 0
      %v8181 = vsel %vm4074, %v7742, 0
      %v8184 = vsel %vm4074, %v7743, 0
      %v8187 = vsel %vm4074, %v7744, 0
      %v8190 = vsel %vm4074, %v7745, 0
      %v8193 = vsel %vm4074, %v7746, 0
      %v8196 = vsel %vm4074, %v7747, 0
      %v8199 = vsel %vm4074, %v7748, 0
      %8201 = vmatprep.subr.mxu0 0.0
      %8202 = vmatpush1.msra.mxu0 %v7749
      %8203 = vmatprep.subr.mxu0 0.0
      %8204 = vmatpush1.msra.mxu0 0.0
      %8205 = vmatprep.subr.mxu0 0.0
      %8206 = vmatpush1.msra.mxu0 0.0
      %8207 = vmatprep.subr.mxu0 0.0
      %8208 = vmatpush1.msra.mxu0 0.0
      %8209 = vmatprep.subr.mxu0 0.0
      %8210 = vmatpush1.msra.mxu0 0.0
      %8211 = vmatprep.subr.mxu0 0.0
      %8212 = vmatpush1.msra.mxu0 0.0
      %8213 = vmatprep.subr.mxu0 0.0
      %8214 = vmatpush1.msra.mxu0 0.0
      %8215 = vmatprep.subr.mxu0 0.0
      %8216 = vmatpush1.msra.mxu0 0.0
      %8217 = vmatprep.subr.mxu0 0.0
      %8218 = vmatpush1.msra.mxu0 0.0
      %8219 = vmatprep.subr.mxu0 0.0
      %8220 = vmatpush1.msra.mxu0 0.0
      %8221 = vmatprep.subr.mxu0 0.0
      %8222 = vmatpush1.msra.mxu0 0.0
      %8223 = vmatprep.subr.mxu0 0.0
      %8224 = vmatpush1.msra.mxu0 0.0
      %8225 = vmatprep.subr.mxu0 0.0
      %8226 = vmatpush1.msra.mxu0 0.0
      %8227 = vmatprep.subr.mxu0 0.0
      %8228 = vmatpush1.msra.mxu0 0.0
      %8229 = vmatprep.subr.mxu0 0.0
      %8230 = vmatpush1.msra.mxu0 0.0
      %8231 = vmatprep.subr.mxu0 0.0
      %8232 = vmatpush1.msra.mxu0 0.0
      %8233 = vmatprep.subr.mxu0 0.0
      %8234 = vmatpush1.msra.mxu0 0.0
      %8235 = vmatprep.subr.mxu0 0.0
      %8236 = vmatpush1.msra.mxu0 0.0
      %8237 = vmatprep.subr.mxu0 0.0
      %8238 = vmatpush1.msra.mxu0 0.0
      %8239 = vmatprep.subr.mxu0 0.0
      %8240 = vmatpush1.msra.mxu0 0.0
      %8241 = vmatprep.subr.mxu0 0.0
      %8242 = vmatpush1.msra.mxu0 0.0
      %8243 = vmatprep.subr.mxu0 0.0
      %8244 = vmatpush1.msra.mxu0 0.0
      %8245 = vmatprep.subr.mxu0 0.0
      %8246 = vmatpush1.msra.mxu0 0.0
      %8247 = vmatprep.subr.mxu0 0.0
      %8248 = vmatpush1.msra.mxu0 0.0
      %8249 = vmatprep.subr.mxu0 0.0
      %8250 = vmatpush1.msra.mxu0 0.0
      %8251 = vmatprep.subr.mxu0 0.0
      %8252 = vmatpush1.msra.mxu0 0.0
      %8253 = vmatprep.subr.mxu0 0.0
      %8254 = vmatpush1.msra.mxu0 0.0
      %8255 = vmatprep.subr.mxu0 0.0
      %8256 = vmatpush1.msra.mxu0 0.0
      %8257 = vmatprep.subr.mxu0 0.0
      %8258 = vmatpush1.msra.mxu0 0.0
      %8259 = vmatprep.subr.mxu0 0.0
      %8260 = vmatpush1.msra.mxu0 0.0
      %8261 = vmatprep.subr.mxu0 0.0
      %8262 = vmatpush1.msra.mxu0 0.0
      %8263 = vmatprep.subr.mxu0 0.0
      %8264 = vmatpush1.msra.mxu0 0.0
      %8265 = vmatprep.mubr.f32.mxu0 0.0
      %8266 = vmatmul.mubr.f32.gmra.mrb[0].mxu0 %v8106
      %v8267 = vpop.f32.mrb[0].mxu0
      %v8268 = vadd.f32 %v7947, %v8267
      %v8269 = vpop.f32.mrb[0].mxu0
      %8270 = vmatprep.mubr.f32.mxu0 0.0
      %8271 = vmatmul.mubr.f32.gmra.mrb[0].mxu0 %v8109
      %v8272 = vpop.f32.mrb[0].mxu0
      %v8273 = vadd.f32 %v7952, %v8272
      %v8274 = vpop.f32.mrb[0].mxu0
      %8275 = vmatprep.mubr.f32.mxu0 0.0
      %8276 = vmatmul.mubr.f32.gmra.mrb[0].mxu0 %v8112
      %v8277 = vpop.f32.mrb[0].mxu0
      %v8278 = vadd.f32 %v7957, %v8277
      %v8279 = vpop.f32.mrb[0].mxu0
      %8280 = vmatprep.mubr.f32.mxu0 0.0
      %8281 = vmatmul.mubr.f32.gmra.mrb[0].mxu0 %v8115
      %v8282 = vpop.f32.mrb[0].mxu0
      %v8283 = vadd.f32 %v7962, %v8282
      %v8284 = vpop.f32.mrb[0].mxu0
      %8285 = vmatprep.mubr.f32.mxu0 0.0
      %8286 = vmatmul.mubr.f32.gmra.mrb[0].mxu0 %v8118
      %v8287 = vpop.f32.mrb[0].mxu0
      %v8288 = vadd.f32 %v7967, %v8287
      %v8289 = vpop.f32.mrb[0].mxu0
      %8290 = vmatprep.mubr.f32.mxu0 0.0
      %8291 = vmatmul.mubr.f32.gmra.mrb[0].mxu0 %v8121
      %v8292 = vpop.f32.mrb[0].mxu0
      %v8293 = vadd.f32 %v7972, %v8292
      %v8294 = vpop.f32.mrb[0].mxu0
      %8295 = vmatprep.mubr.f32.mxu0 0.0
      %8296 = vmatmul.mubr.f32.gmra.mrb[0].mxu0 %v8124
      %v8297 = vpop.f32.mrb[0].mxu0
      %v8298 = vadd.f32 %v7977, %v8297
      %v8299 = vpop.f32.mrb[0].mxu0
      %8300 = vmatprep.mubr.f32.mxu0 0.0
      %8301 = vmatmul.mubr.f32.gmra.mrb[0].mxu0 %v8127
      %v8302 = vpop.f32.mrb[0].mxu0
      %v8303 = vadd.f32 %v7982, %v8302
      %v8304 = vpop.f32.mrb[0].mxu0
      %8305 = vmatprep.mubr.f32.mxu0 0.0
      %8306 = vmatmul.mubr.f32.gmra.mrb[0].mxu0 %v8130
      %v8307 = vpop.f32.mrb[0].mxu0
      %v8308 = vadd.f32 %v7987, %v8307
      %v8309 = vpop.f32.mrb[0].mxu0
      %8310 = vmatprep.mubr.f32.mxu0 0.0
      %8311 = vmatmul.mubr.f32.gmra.mrb[0].mxu0 %v8133
      %v8312 = vpop.f32.mrb[0].mxu0
      %v8313 = vadd.f32 %v7992, %v8312
      %v8314 = vpop.f32.mrb[0].mxu0
      %8315 = vmatprep.mubr.f32.mxu0 0.0
      %8316 = vmatmul.mubr.f32.gmra.mrb[0].mxu0 %v8136
      %v8317 = vpop.f32.mrb[0].mxu0
      %v8318 = vadd.f32 %v7997, %v8317
      %v8319 = vpop.f32.mrb[0].mxu0
      %8320 = vmatprep.mubr.f32.mxu0 0.0
      %8321 = vmatmul.mubr.f32.gmra.mrb[0].mxu0 %v8139
      %v8322 = vpop.f32.mrb[0].mxu0
      %v8323 = vadd.f32 %v8002, %v8322
      %v8324 = vpop.f32.mrb[0].mxu0
      %8325 = vmatprep.mubr.f32.mxu0 0.0
      %8326 = vmatmul.mubr.f32.gmra.mrb[0].mxu0 %v8142
      %v8327 = vpop.f32.mrb[0].mxu0
      %v8328 = vadd.f32 %v8007, %v8327
      %v8329 = vpop.f32.mrb[0].mxu0
      %8330 = vmatprep.mubr.f32.mxu0 0.0
      %8331 = vmatmul.mubr.f32.gmra.mrb[0].mxu0 %v8145
      %v8332 = vpop.f32.mrb[0].mxu0
      %v8333 = vadd.f32 %v8012, %v8332
      %v8334 = vpop.f32.mrb[0].mxu0
      %8335 = vmatprep.mubr.f32.mxu0 0.0
      %8336 = vmatmul.mubr.f32.gmra.mrb[0].mxu0 %v8148
      %v8337 = vpop.f32.mrb[0].mxu0
      %v8338 = vadd.f32 %v8017, %v8337
      %v8339 = vpop.f32.mrb[0].mxu0
      %8340 = vmatprep.mubr.f32.mxu0 0.0
      %8341 = vmatmul.mubr.f32.gmra.mrb[0].mxu0 %v8151
      %v8342 = vpop.f32.mrb[0].mxu0
      %v8343 = vadd.f32 %v8022, %v8342
      %v8344 = vpop.f32.mrb[0].mxu0
      %8345 = vmatprep.mubr.f32.mxu0 0.0
      %8346 = vmatmul.mubr.f32.gmra.mrb[0].mxu0 %v8154
      %v8347 = vpop.f32.mrb[0].mxu0
      %v8348 = vadd.f32 %v8027, %v8347
      %v8349 = vpop.f32.mrb[0].mxu0
      %8350 = vmatprep.mubr.f32.mxu0 0.0
      %8351 = vmatmul.mubr.f32.gmra.mrb[0].mxu0 %v8157
      %v8352 = vpop.f32.mrb[0].mxu0
      %v8353 = vadd.f32 %v8032, %v8352
      %v8354 = vpop.f32.mrb[0].mxu0
      %8355 = vmatprep.mubr.f32.mxu0 0.0
      %8356 = vmatmul.mubr.f32.gmra.mrb[0].mxu0 %v8160
      %v8357 = vpop.f32.mrb[0].mxu0
      %v8358 = vadd.f32 %v8037, %v8357
      %v8359 = vpop.f32.mrb[0].mxu0
      %8360 = vmatprep.mubr.f32.mxu0 0.0
      %8361 = vmatmul.mubr.f32.gmra.mrb[0].mxu0 %v8163
      %v8362 = vpop.f32.mrb[0].mxu0
      %v8363 = vadd.f32 %v8042, %v8362
      %v8364 = vpop.f32.mrb[0].mxu0
      %8365 = vmatprep.mubr.f32.mxu0 0.0
      %8366 = vmatmul.mubr.f32.gmra.mrb[0].mxu0 %v8166
      %v8367 = vpop.f32.mrb[0].mxu0
      %v8368 = vadd.f32 %v8047, %v8367
      %v8369 = vpop.f32.mrb[0].mxu0
      %8370 = vmatprep.mubr.f32.mxu0 0.0
      %8371 = vmatmul.mubr.f32.gmra.mrb[0].mxu0 %v8169
      %v8372 = vpop.f32.mrb[0].mxu0
      %v8373 = vadd.f32 %v8052, %v8372
      %v8374 = vpop.f32.mrb[0].mxu0
      %8375 = vmatprep.mubr.f32.mxu0 0.0
      %8376 = vmatmul.mubr.f32.gmra.mrb[0].mxu0 %v8172
      %v8377 = vpop.f32.mrb[0].mxu0
      %v8378 = vadd.f32 %v8057, %v8377
      %v8379 = vpop.f32.mrb[0].mxu0
      %8380 = vmatprep.mubr.f32.mxu0 0.0
      %8381 = vmatmul.mubr.f32.gmra.mrb[0].mxu0 %v8175
      %v8382 = vpop.f32.mrb[0].mxu0
      %v8383 = vadd.f32 %v8062, %v8382
      %v8384 = vpop.f32.mrb[0].mxu0
      %8385 = vmatprep.mubr.f32.mxu0 0.0
      %8386 = vmatmul.mubr.f32.gmra.mrb[0].mxu0 %v8178
      %v8387 = vpop.f32.mrb[0].mxu0
      %v8388 = vadd.f32 %v8067, %v8387
      %v8389 = vpop.f32.mrb[0].mxu0
      %8390 = vmatprep.mubr.f32.mxu0 0.0
      %8391 = vmatmul.mubr.f32.gmra.mrb[0].mxu0 %v8181
      %v8392 = vpop.f32.mrb[0].mxu0
      %v8393 = vadd.f32 %v8072, %v8392
      %v8394 = vpop.f32.mrb[0].mxu0
      %8395 = vmatprep.mubr.f32.mxu0 0.0
      %8396 = vmatmul.mubr.f32.gmra.mrb[0].mxu0 %v8184
      %v8397 = vpop.f32.mrb[0].mxu0
      %v8398 = vadd.f32 %v8077, %v8397
      %v8399 = vpop.f32.mrb[0].mxu0
      %8400 = vmatprep.mubr.f32.mxu0 0.0
      %8401 = vmatmul.mubr.f32.gmra.mrb[0].mxu0 %v8187
      %v8402 = vpop.f32.mrb[0].mxu0
      %v8403 = vadd.f32 %v8082, %v8402
      %v8404 = vpop.f32.mrb[0].mxu0
      %8405 = vmatprep.mubr.f32.mxu0 0.0
      %8406 = vmatmul.mubr.f32.gmra.mrb[0].mxu0 %v8190
      %v8407 = vpop.f32.mrb[0].mxu0
      %v8408 = vadd.f32 %v8087, %v8407
      %v8409 = vpop.f32.mrb[0].mxu0
      %8410 = vmatprep.mubr.f32.mxu0 0.0
      %8411 = vmatmul.mubr.f32.gmra.mrb[0].mxu0 %v8193
      %v8412 = vpop.f32.mrb[0].mxu0
      %v8413 = vadd.f32 %v8092, %v8412
      %v8414 = vpop.f32.mrb[0].mxu0
      %8415 = vmatprep.mubr.f32.mxu0 0.0
      %8416 = vmatmul.mubr.f32.gmra.mrb[0].mxu0 %v8196
      %v8417 = vpop.f32.mrb[0].mxu0
      %v8418 = vadd.f32 %v8097, %v8417
      %v8419 = vpop.f32.mrb[0].mxu0
      %8420 = vmatprep.mubr.f32.mxu0 0.0
      %8421 = vmatmul.mubr.f32.gmra.mrb[0].mxu0 %v8199
      %v8422 = vpop.f32.mrb[0].mxu0
      %v8423 = vadd.f32 %v8102, %v8422
      %v8424 = vpop.f32.mrb[0].mxu0
      %8425 = vdwg.mxu0
      %v8426 = vld [vmem:[#allocation3 + $0x2] sm:$0xff]
      %v8427 = vld [vmem:[#allocation3 + $0xa] sm:$0xff]
      %v8428 = vld [vmem:[#allocation3 + $0x1a] sm:$0xff]
      %v8429 = vld [vmem:[#allocation3 + $0x22] sm:$0xff]
      %v8430 = vld [vmem:[#allocation3 + $0x32] sm:$0xff]
      %v8431 = vld [vmem:[#allocation3 + $0x3a] sm:$0xff]
      %v8432 = vld [vmem:[#allocation3 + $0x4a] sm:$0xff]
      %v8433 = vld [vmem:[#allocation3 + $0x52] sm:$0xff]
      %v8434 = vld [vmem:[#allocation3 + $0x62] sm:$0xff]
      %v8435 = vld [vmem:[#allocation3 + $0x6a] sm:$0xff]
      %v8436 = vld [vmem:[#allocation3 + $0x7a] sm:$0xff]
      %v8437 = vld [vmem:[#allocation3 + $0x82] sm:$0xff]
      %v8438 = vld [vmem:[#allocation3 + $0x92] sm:$0xff]
      %v8439 = vld [vmem:[#allocation3 + $0x9a] sm:$0xff]
      %v8440 = vld [vmem:[#allocation3 + $0xaa] sm:$0xff]
      %v8441 = vld [vmem:[#allocation3 + $0xb2] sm:$0xff]
      %v8442 = vld [vmem:[#allocation3 + $0xc2] sm:$0xff]
      %v8443 = vld [vmem:[#allocation3 + $0xca] sm:$0xff]
      %v8444 = vld [vmem:[#allocation3 + $0xda] sm:$0xff]
      %v8445 = vld [vmem:[#allocation3 + $0xe2] sm:$0xff]
      %v8446 = vld [vmem:[#allocation3 + $0xf2] sm:$0xff]
      %v8447 = vld [vmem:[#allocation3 + $0xfa] sm:$0xff]
      %v8448 = vld [vmem:[#allocation3 + $0x10a] sm:$0xff]
      %v8449 = vld [vmem:[#allocation3 + $0x112] sm:$0xff]
      %v8450 = vld [vmem:[#allocation3 + $0x122] sm:$0xff]
      %v8451 = vld [vmem:[#allocation3 + $0x12a] sm:$0xff]
      %v8452 = vld [vmem:[#allocation3 + $0x13a] sm:$0xff]
      %v8453 = vld [vmem:[#allocation3 + $0x142] sm:$0xff]
      %v8454 = vld [vmem:[#allocation3 + $0x152] sm:$0xff]
      %v8455 = vld [vmem:[#allocation3 + $0x15a] sm:$0xff]
      %v8456 = vld [vmem:[#allocation3 + $0x16a] sm:$0xff]
      %v8457 = vld [vmem:[#allocation3 + $0x172] sm:$0xff]
      %s8458 = scalar_lea.vmem %s4, 16
      %v8459 = vld [vmem:[%s8458] sm:$0xff]
      %v8461 = vsel %vm4074, %v8426, 0
      %v8464 = vsel %vm4074, %v8427, 0
      %v8467 = vsel %vm4074, %v8428, 0
      %v8470 = vsel %vm4074, %v8429, 0
      %v8473 = vsel %vm4074, %v8430, 0
      %v8476 = vsel %vm4074, %v8431, 0
      %v8479 = vsel %vm4074, %v8432, 0
      %v8482 = vsel %vm4074, %v8433, 0
      %v8485 = vsel %vm4074, %v8434, 0
      %v8488 = vsel %vm4074, %v8435, 0
      %v8491 = vsel %vm4074, %v8436, 0
      %v8494 = vsel %vm4074, %v8437, 0
      %v8497 = vsel %vm4074, %v8438, 0
      %v8500 = vsel %vm4074, %v8439, 0
      %v8503 = vsel %vm4074, %v8440, 0
      %v8506 = vsel %vm4074, %v8441, 0
      %v8509 = vsel %vm4074, %v8442, 0
      %v8512 = vsel %vm4074, %v8443, 0
      %v8515 = vsel %vm4074, %v8444, 0
      %v8518 = vsel %vm4074, %v8445, 0
      %v8521 = vsel %vm4074, %v8446, 0
      %v8524 = vsel %vm4074, %v8447, 0
      %v8527 = vsel %vm4074, %v8448, 0
      %v8530 = vsel %vm4074, %v8449, 0
      %v8533 = vsel %vm4074, %v8450, 0
      %v8536 = vsel %vm4074, %v8451, 0
      %v8539 = vsel %vm4074, %v8452, 0
      %v8542 = vsel %vm4074, %v8453, 0
      %v8545 = vsel %vm4074, %v8454, 0
      %v8548 = vsel %vm4074, %v8455, 0
      %v8551 = vsel %vm4074, %v8456, 0
      %v8554 = vsel %vm4074, %v8457, 0
      %8556 = vmatprep.subr.mxu0 0.0
      %8557 = vmatpush1.msra.mxu0 %v8459
      %8558 = vmatprep.subr.mxu0 0.0
      %8559 = vmatpush1.msra.mxu0 0.0
      %8560 = vmatprep.subr.mxu0 0.0
      %8561 = vmatpush1.msra.mxu0 0.0
      %8562 = vmatprep.subr.mxu0 0.0
      %8563 = vmatpush1.msra.mxu0 0.0
      %8564 = vmatprep.subr.mxu0 0.0
      %8565 = vmatpush1.msra.mxu0 0.0
      %8566 = vmatprep.subr.mxu0 0.0
      %8567 = vmatpush1.msra.mxu0 0.0
      %8568 = vmatprep.subr.mxu0 0.0
      %8569 = vmatpush1.msra.mxu0 0.0
      %8570 = vmatprep.subr.mxu0 0.0
      %8571 = vmatpush1.msra.mxu0 0.0
      %8572 = vmatprep.subr.mxu0 0.0
      %8573 = vmatpush1.msra.mxu0 0.0
      %8574 = vmatprep.subr.mxu0 0.0
      %8575 = vmatpush1.msra.mxu0 0.0
      %8576 = vmatprep.subr.mxu0 0.0
      %8577 = vmatpush1.msra.mxu0 0.0
      %8578 = vmatprep.subr.mxu0 0.0
      %8579 = vmatpush1.msra.mxu0 0.0
      %8580 = vmatprep.subr.mxu0 0.0
      %8581 = vmatpush1.msra.mxu0 0.0
      %8582 = vmatprep.subr.mxu0 0.0
      %8583 = vmatpush1.msra.mxu0 0.0
      %8584 = vmatprep.subr.mxu0 0.0
      %8585 = vmatpush1.msra.mxu0 0.0
      %8586 = vmatprep.subr.mxu0 0.0
      %8587 = vmatpush1.msra.mxu0 0.0
      %8588 = vmatprep.subr.mxu0 0.0
      %8589 = vmatpush1.msra.mxu0 0.0
      %8590 = vmatprep.subr.mxu0 0.0
      %8591 = vmatpush1.msra.mxu0 0.0
      %8592 = vmatprep.subr.mxu0 0.0
      %8593 = vmatpush1.msra.mxu0 0.0
      %8594 = vmatprep.subr.mxu0 0.0
      %8595 = vmatpush1.msra.mxu0 0.0
      %8596 = vmatprep.subr.mxu0 0.0
      %8597 = vmatpush1.msra.mxu0 0.0
      %8598 = vmatprep.subr.mxu0 0.0
      %8599 = vmatpush1.msra.mxu0 0.0
      %8600 = vmatprep.subr.mxu0 0.0
      %8601 = vmatpush1.msra.mxu0 0.0
      %8602 = vmatprep.subr.mxu0 0.0
      %8603 = vmatpush1.msra.mxu0 0.0
      %8604 = vmatprep.subr.mxu0 0.0
      %8605 = vmatpush1.msra.mxu0 0.0
      %8606 = vmatprep.subr.mxu0 0.0
      %8607 = vmatpush1.msra.mxu0 0.0
      %8608 = vmatprep.subr.mxu0 0.0
      %8609 = vmatpush1.msra.mxu0 0.0
      %8610 = vmatprep.subr.mxu0 0.0
      %8611 = vmatpush1.msra.mxu0 0.0
      %8612 = vmatprep.subr.mxu0 0.0
      %8613 = vmatpush1.msra.mxu0 0.0
      %8614 = vmatprep.subr.mxu0 0.0
      %8615 = vmatpush1.msra.mxu0 0.0
      %8616 = vmatprep.subr.mxu0 0.0
      %8617 = vmatpush1.msra.mxu0 0.0
      %8618 = vmatprep.subr.mxu0 0.0
      %8619 = vmatpush1.msra.mxu0 0.0
      %8620 = vmatprep.mubr.f32.mxu0 0.0
      %8621 = vmatmul.mubr.f32.gmra.mrb[0].mxu0 %v8461
      %v8622 = vpop.f32.mrb[0].mxu0
      %v8623 = vadd.f32 0.0, %v8622
      %v8624 = vpop.f32.mrb[0].mxu0
      %8625 = vmatprep.mubr.f32.mxu0 0.0
      %8626 = vmatmul.mubr.f32.gmra.mrb[0].mxu0 %v8464
      %v8627 = vpop.f32.mrb[0].mxu0
      %v8628 = vadd.f32 0.0, %v8627
      %v8629 = vpop.f32.mrb[0].mxu0
      %8630 = vmatprep.mubr.f32.mxu0 0.0
      %8631 = vmatmul.mubr.f32.gmra.mrb[0].mxu0 %v8467
      %v8632 = vpop.f32.mrb[0].mxu0
      %v8633 = vadd.f32 0.0, %v8632
      %v8634 = vpop.f32.mrb[0].mxu0
      %8635 = vmatprep.mubr.f32.mxu0 0.0
      %8636 = vmatmul.mubr.f32.gmra.mrb[0].mxu0 %v8470
      %v8637 = vpop.f32.mrb[0].mxu0
      %v8638 = vadd.f32 0.0, %v8637
      %v8639 = vpop.f32.mrb[0].mxu0
      %8640 = vmatprep.mubr.f32.mxu0 0.0
      %8641 = vmatmul.mubr.f32.gmra.mrb[0].mxu0 %v8473
      %v8642 = vpop.f32.mrb[0].mxu0
      %v8643 = vadd.f32 0.0, %v8642
      %v8644 = vpop.f32.mrb[0].mxu0
      %8645 = vmatprep.mubr.f32.mxu0 0.0
      %8646 = vmatmul.mubr.f32.gmra.mrb[0].mxu0 %v8476
      %v8647 = vpop.f32.mrb[0].mxu0
      %v8648 = vadd.f32 0.0, %v8647
      %v8649 = vpop.f32.mrb[0].mxu0
      %8650 = vmatprep.mubr.f32.mxu0 0.0
      %8651 = vmatmul.mubr.f32.gmra.mrb[0].mxu0 %v8479
      %v8652 = vpop.f32.mrb[0].mxu0
      %v8653 = vadd.f32 0.0, %v8652
      %v8654 = vpop.f32.mrb[0].mxu0
      %8655 = vmatprep.mubr.f32.mxu0 0.0
      %8656 = vmatmul.mubr.f32.gmra.mrb[0].mxu0 %v8482
      %v8657 = vpop.f32.mrb[0].mxu0
      %v8658 = vadd.f32 0.0, %v8657
      %v8659 = vpop.f32.mrb[0].mxu0
      %8660 = vmatprep.mubr.f32.mxu0 0.0
      %8661 = vmatmul.mubr.f32.gmra.mrb[0].mxu0 %v8485
      %v8662 = vpop.f32.mrb[0].mxu0
      %v8663 = vadd.f32 0.0, %v8662
      %v8664 = vpop.f32.mrb[0].mxu0
      %8665 = vmatprep.mubr.f32.mxu0 0.0
      %8666 = vmatmul.mubr.f32.gmra.mrb[0].mxu0 %v8488
      %v8667 = vpop.f32.mrb[0].mxu0
      %v8668 = vadd.f32 0.0, %v8667
      %v8669 = vpop.f32.mrb[0].mxu0
      %8670 = vmatprep.mubr.f32.mxu0 0.0
      %8671 = vmatmul.mubr.f32.gmra.mrb[0].mxu0 %v8491
      %v8672 = vpop.f32.mrb[0].mxu0
      %v8673 = vadd.f32 0.0, %v8672
      %v8674 = vpop.f32.mrb[0].mxu0
      %8675 = vmatprep.mubr.f32.mxu0 0.0
      %8676 = vmatmul.mubr.f32.gmra.mrb[0].mxu0 %v8494
      %v8677 = vpop.f32.mrb[0].mxu0
      %v8678 = vadd.f32 0.0, %v8677
      %v8679 = vpop.f32.mrb[0].mxu0
      %8680 = vmatprep.mubr.f32.mxu0 0.0
      %8681 = vmatmul.mubr.f32.gmra.mrb[0].mxu0 %v8497
      %v8682 = vpop.f32.mrb[0].mxu0
      %v8683 = vadd.f32 0.0, %v8682
      %v8684 = vpop.f32.mrb[0].mxu0
      %8685 = vmatprep.mubr.f32.mxu0 0.0
      %8686 = vmatmul.mubr.f32.gmra.mrb[0].mxu0 %v8500
      %v8687 = vpop.f32.mrb[0].mxu0
      %v8688 = vadd.f32 0.0, %v8687
      %v8689 = vpop.f32.mrb[0].mxu0
      %8690 = vmatprep.mubr.f32.mxu0 0.0
      %8691 = vmatmul.mubr.f32.gmra.mrb[0].mxu0 %v8503
      %v8692 = vpop.f32.mrb[0].mxu0
      %v8693 = vadd.f32 0.0, %v8692
      %v8694 = vpop.f32.mrb[0].mxu0
      %8695 = vmatprep.mubr.f32.mxu0 0.0
      %8696 = vmatmul.mubr.f32.gmra.mrb[0].mxu0 %v8506
      %v8697 = vpop.f32.mrb[0].mxu0
      %v8698 = vadd.f32 0.0, %v8697
      %v8699 = vpop.f32.mrb[0].mxu0
      %8700 = vmatprep.mubr.f32.mxu0 0.0
      %8701 = vmatmul.mubr.f32.gmra.mrb[0].mxu0 %v8509
      %v8702 = vpop.f32.mrb[0].mxu0
      %v8703 = vadd.f32 0.0, %v8702
      %v8704 = vpop.f32.mrb[0].mxu0
      %8705 = vmatprep.mubr.f32.mxu0 0.0
      %8706 = vmatmul.mubr.f32.gmra.mrb[0].mxu0 %v8512
      %v8707 = vpop.f32.mrb[0].mxu0
      %v8708 = vadd.f32 0.0, %v8707
      %v8709 = vpop.f32.mrb[0].mxu0
      %8710 = vmatprep.mubr.f32.mxu0 0.0
      %8711 = vmatmul.mubr.f32.gmra.mrb[0].mxu0 %v8515
      %v8712 = vpop.f32.mrb[0].mxu0
      %v8713 = vadd.f32 0.0, %v8712
      %v8714 = vpop.f32.mrb[0].mxu0
      %8715 = vmatprep.mubr.f32.mxu0 0.0
      %8716 = vmatmul.mubr.f32.gmra.mrb[0].mxu0 %v8518
      %v8717 = vpop.f32.mrb[0].mxu0
      %v8718 = vadd.f32 0.0, %v8717
      %v8719 = vpop.f32.mrb[0].mxu0
      %8720 = vmatprep.mubr.f32.mxu0 0.0
      %8721 = vmatmul.mubr.f32.gmra.mrb[0].mxu0 %v8521
      %v8722 = vpop.f32.mrb[0].mxu0
      %v8723 = vadd.f32 0.0, %v8722
      %v8724 = vpop.f32.mrb[0].mxu0
      %8725 = vmatprep.mubr.f32.mxu0 0.0
      %8726 = vmatmul.mubr.f32.gmra.mrb[0].mxu0 %v8524
      %v8727 = vpop.f32.mrb[0].mxu0
      %v8728 = vadd.f32 0.0, %v8727
      %v8729 = vpop.f32.mrb[0].mxu0
      %8730 = vmatprep.mubr.f32.mxu0 0.0
      %8731 = vmatmul.mubr.f32.gmra.mrb[0].mxu0 %v8527
      %v8732 = vpop.f32.mrb[0].mxu0
      %v8733 = vadd.f32 0.0, %v8732
      %v8734 = vpop.f32.mrb[0].mxu0
      %8735 = vmatprep.mubr.f32.mxu0 0.0
      %8736 = vmatmul.mubr.f32.gmra.mrb[0].mxu0 %v8530
      %v8737 = vpop.f32.mrb[0].mxu0
      %v8738 = vadd.f32 0.0, %v8737
      %v8739 = vpop.f32.mrb[0].mxu0
      %8740 = vmatprep.mubr.f32.mxu0 0.0
      %8741 = vmatmul.mubr.f32.gmra.mrb[0].mxu0 %v8533
      %v8742 = vpop.f32.mrb[0].mxu0
      %v8743 = vadd.f32 0.0, %v8742
      %v8744 = vpop.f32.mrb[0].mxu0
      %8745 = vmatprep.mubr.f32.mxu0 0.0
      %8746 = vmatmul.mubr.f32.gmra.mrb[0].mxu0 %v8536
      %v8747 = vpop.f32.mrb[0].mxu0
      %v8748 = vadd.f32 0.0, %v8747
      %v8749 = vpop.f32.mrb[0].mxu0
      %8750 = vmatprep.mubr.f32.mxu0 0.0
      %8751 = vmatmul.mubr.f32.gmra.mrb[0].mxu0 %v8539
      %v8752 = vpop.f32.mrb[0].mxu0
      %v8753 = vadd.f32 0.0, %v8752
      %v8754 = vpop.f32.mrb[0].mxu0
      %8755 = vmatprep.mubr.f32.mxu0 0.0
      %8756 = vmatmul.mubr.f32.gmra.mrb[0].mxu0 %v8542
      %v8757 = vpop.f32.mrb[0].mxu0
      %v8758 = vadd.f32 0.0, %v8757
      %v8759 = vpop.f32.mrb[0].mxu0
      %8760 = vmatprep.mubr.f32.mxu0 0.0
      %8761 = vmatmul.mubr.f32.gmra.mrb[0].mxu0 %v8545
      %v8762 = vpop.f32.mrb[0].mxu0
      %v8763 = vadd.f32 0.0, %v8762
      %v8764 = vpop.f32.mrb[0].mxu0
      %8765 = vmatprep.mubr.f32.mxu0 0.0
      %8766 = vmatmul.mubr.f32.gmra.mrb[0].mxu0 %v8548
      %v8767 = vpop.f32.mrb[0].mxu0
      %v8768 = vadd.f32 0.0, %v8767
      %v8769 = vpop.f32.mrb[0].mxu0
      %8770 = vmatprep.mubr.f32.mxu0 0.0
      %8771 = vmatmul.mubr.f32.gmra.mrb[0].mxu0 %v8551
      %v8772 = vpop.f32.mrb[0].mxu0
      %v8773 = vadd.f32 0.0, %v8772
      %v8774 = vpop.f32.mrb[0].mxu0
      %8775 = vmatprep.mubr.f32.mxu0 0.0
      %8776 = vmatmul.mubr.f32.gmra.mrb[0].mxu0 %v8554
      %v8777 = vpop.f32.mrb[0].mxu0
      %v8778 = vadd.f32 0.0, %v8777
      %v8779 = vpop.f32.mrb[0].mxu0
      %8780 = vdwg.mxu0
      %v8781 = vadd.f32 %v8268, %v8623
      %v8782 = vadd.f32 %v8273, %v8628
      %v8783 = vadd.f32 %v8278, %v8633
      %v8784 = vadd.f32 %v8283, %v8638
      %v8785 = vadd.f32 %v8288, %v8643
      %v8786 = vadd.f32 %v8293, %v8648
      %v8787 = vadd.f32 %v8298, %v8653
      %v8788 = vadd.f32 %v8303, %v8658
      %v8789 = vadd.f32 %v8308, %v8663
      %v8790 = vadd.f32 %v8313, %v8668
      %v8791 = vadd.f32 %v8318, %v8673
      %v8792 = vadd.f32 %v8323, %v8678
      %v8793 = vadd.f32 %v8328, %v8683
      %v8794 = vadd.f32 %v8333, %v8688
      %v8795 = vadd.f32 %v8338, %v8693
      %v8796 = vadd.f32 %v8343, %v8698
      %v8797 = vadd.f32 %v8348, %v8703
      %v8798 = vadd.f32 %v8353, %v8708
      %v8799 = vadd.f32 %v8358, %v8713
      %v8800 = vadd.f32 %v8363, %v8718
      %v8801 = vadd.f32 %v8368, %v8723
      %v8802 = vadd.f32 %v8373, %v8728
      %v8803 = vadd.f32 %v8378, %v8733
      %v8804 = vadd.f32 %v8383, %v8738
      %v8805 = vadd.f32 %v8388, %v8743
      %v8806 = vadd.f32 %v8393, %v8748
      %v8807 = vadd.f32 %v8398, %v8753
      %v8808 = vadd.f32 %v8403, %v8758
      %v8809 = vadd.f32 %v8408, %v8763
      %v8810 = vadd.f32 %v8413, %v8768
      %v8811 = vadd.f32 %v8418, %v8773
      %v8812 = vadd.f32 %v8423, %v8778
      %v8813 = vld [vmem:[%s7684] sm:$0xff]
      %v8814 = vld [vmem:[%s7684 + $0x8] sm:$0xff]
      %v8815 = vld [vmem:[%s7684 + $0x18] sm:$0xff]
      %v8816 = vld [vmem:[%s7684 + $0x20] sm:$0xff]
      %v8817 = vld [vmem:[%s7684 + $0x30] sm:$0xff]
      %v8818 = vld [vmem:[%s7684 + $0x38] sm:$0xff]
      %v8819 = vld [vmem:[%s7684 + $0x48] sm:$0xff]
      %v8820 = vld [vmem:[%s7684 + $0x50] sm:$0xff]
      %v8821 = vld [vmem:[%s7684 + $0x60] sm:$0xff]
      %v8822 = vld [vmem:[%s7684 + $0x68] sm:$0xff]
      %v8823 = vld [vmem:[%s7684 + $0x78] sm:$0xff]
      %v8824 = vld [vmem:[%s7684 + $0x80] sm:$0xff]
      %v8825 = vld [vmem:[%s7684 + $0x90] sm:$0xff]
      %v8826 = vld [vmem:[%s7684 + $0x98] sm:$0xff]
      %v8827 = vld [vmem:[%s7684 + $0xa8] sm:$0xff]
      %v8828 = vld [vmem:[%s7684 + $0xb0] sm:$0xff]
      %v8829 = vld [vmem:[%s7684 + $0xc0] sm:$0xff]
      %v8830 = vld [vmem:[%s7684 + $0xc8] sm:$0xff]
      %v8831 = vld [vmem:[%s7684 + $0xd8] sm:$0xff]
      %v8832 = vld [vmem:[%s7684 + $0xe0] sm:$0xff]
      %v8833 = vld [vmem:[%s7684 + $0xf0] sm:$0xff]
      %v8834 = vld [vmem:[%s7684 + $0xf8] sm:$0xff]
      %v8835 = vld [vmem:[%s7684 + $0x108] sm:$0xff]
      %v8836 = vld [vmem:[%s7684 + $0x110] sm:$0xff]
      %v8837 = vld [vmem:[%s7684 + $0x120] sm:$0xff]
      %v8838 = vld [vmem:[%s7684 + $0x128] sm:$0xff]
      %v8839 = vld [vmem:[%s7684 + $0x138] sm:$0xff]
      %v8840 = vld [vmem:[%s7684 + $0x140] sm:$0xff]
      %v8841 = vld [vmem:[%s7684 + $0x150] sm:$0xff]
      %v8842 = vld [vmem:[%s7684 + $0x158] sm:$0xff]
      %v8843 = vld [vmem:[%s7684 + $0x168] sm:$0xff]
      %v8844 = vld [vmem:[%s7684 + $0x170] sm:$0xff]
      %s8845 = scalar_lea.vmem %s4, 24
      %v8846 = vld [vmem:[%s8845] sm:$0xff]
      %v8848 = vsel %vm4074, %v8813, 0
      %v8851 = vsel %vm4074, %v8814, 0
      %v8854 = vsel %vm4074, %v8815, 0
      %v8857 = vsel %vm4074, %v8816, 0
      %v8860 = vsel %vm4074, %v8817, 0
      %v8863 = vsel %vm4074, %v8818, 0
      %v8866 = vsel %vm4074, %v8819, 0
      %v8869 = vsel %vm4074, %v8820, 0
      %v8872 = vsel %vm4074, %v8821, 0
      %v8875 = vsel %vm4074, %v8822, 0
      %v8878 = vsel %vm4074, %v8823, 0
      %v8881 = vsel %vm4074, %v8824, 0
      %v8884 = vsel %vm4074, %v8825, 0
      %v8887 = vsel %vm4074, %v8826, 0
      %v8890 = vsel %vm4074, %v8827, 0
      %v8893 = vsel %vm4074, %v8828, 0
      %v8896 = vsel %vm4074, %v8829, 0
      %v8899 = vsel %vm4074, %v8830, 0
      %v8902 = vsel %vm4074, %v8831, 0
      %v8905 = vsel %vm4074, %v8832, 0
      %v8908 = vsel %vm4074, %v8833, 0
      %v8911 = vsel %vm4074, %v8834, 0
      %v8914 = vsel %vm4074, %v8835, 0
      %v8917 = vsel %vm4074, %v8836, 0
      %v8920 = vsel %vm4074, %v8837, 0
      %v8923 = vsel %vm4074, %v8838, 0
      %v8926 = vsel %vm4074, %v8839, 0
      %v8929 = vsel %vm4074, %v8840, 0
      %v8932 = vsel %vm4074, %v8841, 0
      %v8935 = vsel %vm4074, %v8842, 0
      %v8938 = vsel %vm4074, %v8843, 0
      %v8941 = vsel %vm4074, %v8844, 0
      %8943 = vmatprep.subr.mxu0 0.0
      %8944 = vmatpush1.msra.mxu0 %v8846
      %8945 = vmatprep.subr.mxu0 0.0
      %8946 = vmatpush1.msra.mxu0 0.0
      %8947 = vmatprep.subr.mxu0 0.0
      %8948 = vmatpush1.msra.mxu0 0.0
      %8949 = vmatprep.subr.mxu0 0.0
      %8950 = vmatpush1.msra.mxu0 0.0
      %8951 = vmatprep.subr.mxu0 0.0
      %8952 = vmatpush1.msra.mxu0 0.0
      %8953 = vmatprep.subr.mxu0 0.0
      %8954 = vmatpush1.msra.mxu0 0.0
      %8955 = vmatprep.subr.mxu0 0.0
      %8956 = vmatpush1.msra.mxu0 0.0
      %8957 = vmatprep.subr.mxu0 0.0
      %8958 = vmatpush1.msra.mxu0 0.0
      %8959 = vmatprep.subr.mxu0 0.0
      %8960 = vmatpush1.msra.mxu0 0.0
      %8961 = vmatprep.subr.mxu0 0.0
      %8962 = vmatpush1.msra.mxu0 0.0
      %8963 = vmatprep.subr.mxu0 0.0
      %8964 = vmatpush1.msra.mxu0 0.0
      %8965 = vmatprep.subr.mxu0 0.0
      %8966 = vmatpush1.msra.mxu0 0.0
      %8967 = vmatprep.subr.mxu0 0.0
      %8968 = vmatpush1.msra.mxu0 0.0
      %8969 = vmatprep.subr.mxu0 0.0
      %8970 = vmatpush1.msra.mxu0 0.0
      %8971 = vmatprep.subr.mxu0 0.0
      %8972 = vmatpush1.msra.mxu0 0.0
      %8973 = vmatprep.subr.mxu0 0.0
      %8974 = vmatpush1.msra.mxu0 0.0
      %8975 = vmatprep.subr.mxu0 0.0
      %8976 = vmatpush1.msra.mxu0 0.0
      %8977 = vmatprep.subr.mxu0 0.0
      %8978 = vmatpush1.msra.mxu0 0.0
      %8979 = vmatprep.subr.mxu0 0.0
      %8980 = vmatpush1.msra.mxu0 0.0
      %8981 = vmatprep.subr.mxu0 0.0
      %8982 = vmatpush1.msra.mxu0 0.0
      %8983 = vmatprep.subr.mxu0 0.0
      %8984 = vmatpush1.msra.mxu0 0.0
      %8985 = vmatprep.subr.mxu0 0.0
      %8986 = vmatpush1.msra.mxu0 0.0
      %8987 = vmatprep.subr.mxu0 0.0
      %8988 = vmatpush1.msra.mxu0 0.0
      %8989 = vmatprep.subr.mxu0 0.0
      %8990 = vmatpush1.msra.mxu0 0.0
      %8991 = vmatprep.subr.mxu0 0.0
      %8992 = vmatpush1.msra.mxu0 0.0
      %8993 = vmatprep.subr.mxu0 0.0
      %8994 = vmatpush1.msra.mxu0 0.0
      %8995 = vmatprep.subr.mxu0 0.0
      %8996 = vmatpush1.msra.mxu0 0.0
      %8997 = vmatprep.subr.mxu0 0.0
      %8998 = vmatpush1.msra.mxu0 0.0
      %8999 = vmatprep.subr.mxu0 0.0
      %9000 = vmatpush1.msra.mxu0 0.0
      %9001 = vmatprep.subr.mxu0 0.0
      %9002 = vmatpush1.msra.mxu0 0.0
      %9003 = vmatprep.subr.mxu0 0.0
      %9004 = vmatpush1.msra.mxu0 0.0
      %9005 = vmatprep.subr.mxu0 0.0
      %9006 = vmatpush1.msra.mxu0 0.0
      %9007 = vmatprep.mubr.f32.mxu0 0.0
      %9008 = vmatmul.mubr.f32.gmra.mrb[0].mxu0 %v8848
      %v9009 = vpop.f32.mrb[0].mxu0
      %v9010 = vadd.f32 0.0, %v9009
      %v9011 = vpop.f32.mrb[0].mxu0
      %9012 = vmatprep.mubr.f32.mxu0 0.0
      %9013 = vmatmul.mubr.f32.gmra.mrb[0].mxu0 %v8851
      %v9014 = vpop.f32.mrb[0].mxu0
      %v9015 = vadd.f32 0.0, %v9014
      %v9016 = vpop.f32.mrb[0].mxu0
      %9017 = vmatprep.mubr.f32.mxu0 0.0
      %9018 = vmatmul.mubr.f32.gmra.mrb[0].mxu0 %v8854
      %v9019 = vpop.f32.mrb[0].mxu0
      %v9020 = vadd.f32 0.0, %v9019
      %v9021 = vpop.f32.mrb[0].mxu0
      %9022 = vmatprep.mubr.f32.mxu0 0.0
      %9023 = vmatmul.mubr.f32.gmra.mrb[0].mxu0 %v8857
      %v9024 = vpop.f32.mrb[0].mxu0
      %v9025 = vadd.f32 0.0, %v9024
      %v9026 = vpop.f32.mrb[0].mxu0
      %9027 = vmatprep.mubr.f32.mxu0 0.0
      %9028 = vmatmul.mubr.f32.gmra.mrb[0].mxu0 %v8860
      %v9029 = vpop.f32.mrb[0].mxu0
      %v9030 = vadd.f32 0.0, %v9029
      %v9031 = vpop.f32.mrb[0].mxu0
      %9032 = vmatprep.mubr.f32.mxu0 0.0
      %9033 = vmatmul.mubr.f32.gmra.mrb[0].mxu0 %v8863
      %v9034 = vpop.f32.mrb[0].mxu0
      %v9035 = vadd.f32 0.0, %v9034
      %v9036 = vpop.f32.mrb[0].mxu0
      %9037 = vmatprep.mubr.f32.mxu0 0.0
      %9038 = vmatmul.mubr.f32.gmra.mrb[0].mxu0 %v8866
      %v9039 = vpop.f32.mrb[0].mxu0
      %v9040 = vadd.f32 0.0, %v9039
      %v9041 = vpop.f32.mrb[0].mxu0
      %9042 = vmatprep.mubr.f32.mxu0 0.0
      %9043 = vmatmul.mubr.f32.gmra.mrb[0].mxu0 %v8869
      %v9044 = vpop.f32.mrb[0].mxu0
      %v9045 = vadd.f32 0.0, %v9044
      %v9046 = vpop.f32.mrb[0].mxu0
      %9047 = vmatprep.mubr.f32.mxu0 0.0
      %9048 = vmatmul.mubr.f32.gmra.mrb[0].mxu0 %v8872
      %v9049 = vpop.f32.mrb[0].mxu0
      %v9050 = vadd.f32 0.0, %v9049
      %v9051 = vpop.f32.mrb[0].mxu0
      %9052 = vmatprep.mubr.f32.mxu0 0.0
      %9053 = vmatmul.mubr.f32.gmra.mrb[0].mxu0 %v8875
      %v9054 = vpop.f32.mrb[0].mxu0
      %v9055 = vadd.f32 0.0, %v9054
      %v9056 = vpop.f32.mrb[0].mxu0
      %9057 = vmatprep.mubr.f32.mxu0 0.0
      %9058 = vmatmul.mubr.f32.gmra.mrb[0].mxu0 %v8878
      %v9059 = vpop.f32.mrb[0].mxu0
      %v9060 = vadd.f32 0.0, %v9059
      %v9061 = vpop.f32.mrb[0].mxu0
      %9062 = vmatprep.mubr.f32.mxu0 0.0
      %9063 = vmatmul.mubr.f32.gmra.mrb[0].mxu0 %v8881
      %v9064 = vpop.f32.mrb[0].mxu0
      %v9065 = vadd.f32 0.0, %v9064
      %v9066 = vpop.f32.mrb[0].mxu0
      %9067 = vmatprep.mubr.f32.mxu0 0.0
      %9068 = vmatmul.mubr.f32.gmra.mrb[0].mxu0 %v8884
      %v9069 = vpop.f32.mrb[0].mxu0
      %v9070 = vadd.f32 0.0, %v9069
      %v9071 = vpop.f32.mrb[0].mxu0
      %9072 = vmatprep.mubr.f32.mxu0 0.0
      %9073 = vmatmul.mubr.f32.gmra.mrb[0].mxu0 %v8887
      %v9074 = vpop.f32.mrb[0].mxu0
      %v9075 = vadd.f32 0.0, %v9074
      %v9076 = vpop.f32.mrb[0].mxu0
      %9077 = vmatprep.mubr.f32.mxu0 0.0
      %9078 = vmatmul.mubr.f32.gmra.mrb[0].mxu0 %v8890
      %v9079 = vpop.f32.mrb[0].mxu0
      %v9080 = vadd.f32 0.0, %v9079
      %v9081 = vpop.f32.mrb[0].mxu0
      %9082 = vmatprep.mubr.f32.mxu0 0.0
      %9083 = vmatmul.mubr.f32.gmra.mrb[0].mxu0 %v8893
      %v9084 = vpop.f32.mrb[0].mxu0
      %v9085 = vadd.f32 0.0, %v9084
      %v9086 = vpop.f32.mrb[0].mxu0
      %9087 = vmatprep.mubr.f32.mxu0 0.0
      %9088 = vmatmul.mubr.f32.gmra.mrb[0].mxu0 %v8896
      %v9089 = vpop.f32.mrb[0].mxu0
      %v9090 = vadd.f32 0.0, %v9089
      %v9091 = vpop.f32.mrb[0].mxu0
      %9092 = vmatprep.mubr.f32.mxu0 0.0
      %9093 = vmatmul.mubr.f32.gmra.mrb[0].mxu0 %v8899
      %v9094 = vpop.f32.mrb[0].mxu0
      %v9095 = vadd.f32 0.0, %v9094
      %v9096 = vpop.f32.mrb[0].mxu0
      %9097 = vmatprep.mubr.f32.mxu0 0.0
      %9098 = vmatmul.mubr.f32.gmra.mrb[0].mxu0 %v8902
      %v9099 = vpop.f32.mrb[0].mxu0
      %v9100 = vadd.f32 0.0, %v9099
      %v9101 = vpop.f32.mrb[0].mxu0
      %9102 = vmatprep.mubr.f32.mxu0 0.0
      %9103 = vmatmul.mubr.f32.gmra.mrb[0].mxu0 %v8905
      %v9104 = vpop.f32.mrb[0].mxu0
      %v9105 = vadd.f32 0.0, %v9104
      %v9106 = vpop.f32.mrb[0].mxu0
      %9107 = vmatprep.mubr.f32.mxu0 0.0
      %9108 = vmatmul.mubr.f32.gmra.mrb[0].mxu0 %v8908
      %v9109 = vpop.f32.mrb[0].mxu0
      %v9110 = vadd.f32 0.0, %v9109
      %v9111 = vpop.f32.mrb[0].mxu0
      %9112 = vmatprep.mubr.f32.mxu0 0.0
      %9113 = vmatmul.mubr.f32.gmra.mrb[0].mxu0 %v8911
      %v9114 = vpop.f32.mrb[0].mxu0
      %v9115 = vadd.f32 0.0, %v9114
      %v9116 = vpop.f32.mrb[0].mxu0
      %9117 = vmatprep.mubr.f32.mxu0 0.0
      %9118 = vmatmul.mubr.f32.gmra.mrb[0].mxu0 %v8914
      %v9119 = vpop.f32.mrb[0].mxu0
      %v9120 = vadd.f32 0.0, %v9119
      %v9121 = vpop.f32.mrb[0].mxu0
      %9122 = vmatprep.mubr.f32.mxu0 0.0
      %9123 = vmatmul.mubr.f32.gmra.mrb[0].mxu0 %v8917
      %v9124 = vpop.f32.mrb[0].mxu0
      %v9125 = vadd.f32 0.0, %v9124
      %v9126 = vpop.f32.mrb[0].mxu0
      %9127 = vmatprep.mubr.f32.mxu0 0.0
      %9128 = vmatmul.mubr.f32.gmra.mrb[0].mxu0 %v8920
      %v9129 = vpop.f32.mrb[0].mxu0
      %v9130 = vadd.f32 0.0, %v9129
      %v9131 = vpop.f32.mrb[0].mxu0
      %9132 = vmatprep.mubr.f32.mxu0 0.0
      %9133 = vmatmul.mubr.f32.gmra.mrb[0].mxu0 %v8923
      %v9134 = vpop.f32.mrb[0].mxu0
      %v9135 = vadd.f32 0.0, %v9134
      %v9136 = vpop.f32.mrb[0].mxu0
      %9137 = vmatprep.mubr.f32.mxu0 0.0
      %9138 = vmatmul.mubr.f32.gmra.mrb[0].mxu0 %v8926
      %v9139 = vpop.f32.mrb[0].mxu0
      %v9140 = vadd.f32 0.0, %v9139
      %v9141 = vpop.f32.mrb[0].mxu0
      %9142 = vmatprep.mubr.f32.mxu0 0.0
      %9143 = vmatmul.mubr.f32.gmra.mrb[0].mxu0 %v8929
      %v9144 = vpop.f32.mrb[0].mxu0
      %v9145 = vadd.f32 0.0, %v9144
      %v9146 = vpop.f32.mrb[0].mxu0
      %9147 = vmatprep.mubr.f32.mxu0 0.0
      %9148 = vmatmul.mubr.f32.gmra.mrb[0].mxu0 %v8932
      %v9149 = vpop.f32.mrb[0].mxu0
      %v9150 = vadd.f32 0.0, %v9149
      %v9151 = vpop.f32.mrb[0].mxu0
      %9152 = vmatprep.mubr.f32.mxu0 0.0
      %9153 = vmatmul.mubr.f32.gmra.mrb[0].mxu0 %v8935
      %v9154 = vpop.f32.mrb[0].mxu0
      %v9155 = vadd.f32 0.0, %v9154
      %v9156 = vpop.f32.mrb[0].mxu0
      %9157 = vmatprep.mubr.f32.mxu0 0.0
      %9158 = vmatmul.mubr.f32.gmra.mrb[0].mxu0 %v8938
      %v9159 = vpop.f32.mrb[0].mxu0
      %v9160 = vadd.f32 0.0, %v9159
      %v9161 = vpop.f32.mrb[0].mxu0
      %9162 = vmatprep.mubr.f32.mxu0 0.0
      %9163 = vmatmul.mubr.f32.gmra.mrb[0].mxu0 %v8941
      %v9164 = vpop.f32.mrb[0].mxu0
      %v9165 = vadd.f32 0.0, %v9164
      %v9166 = vpop.f32.mrb[0].mxu0
      %9167 = vdwg.mxu0
      %v9168 = vadd.f32 %v8781, %v9010
      %v9169 = vadd.f32 %v8782, %v9015
      %v9170 = vadd.f32 %v8783, %v9020
      %v9171 = vadd.f32 %v8784, %v9025
      %v9172 = vadd.f32 %v8785, %v9030
      %v9173 = vadd.f32 %v8786, %v9035
      %v9174 = vadd.f32 %v8787, %v9040
      %v9175 = vadd.f32 %v8788, %v9045
      %v9176 = vadd.f32 %v8789, %v9050
      %v9177 = vadd.f32 %v8790, %v9055
      %v9178 = vadd.f32 %v8791, %v9060
      %v9179 = vadd.f32 %v8792, %v9065
      %v9180 = vadd.f32 %v8793, %v9070
      %v9181 = vadd.f32 %v8794, %v9075
      %v9182 = vadd.f32 %v8795, %v9080
      %v9183 = vadd.f32 %v8796, %v9085
      %v9184 = vadd.f32 %v8797, %v9090
      %v9185 = vadd.f32 %v8798, %v9095
      %v9186 = vadd.f32 %v8799, %v9100
      %v9187 = vadd.f32 %v8800, %v9105
      %v9188 = vadd.f32 %v8801, %v9110
      %v9189 = vadd.f32 %v8802, %v9115
      %v9190 = vadd.f32 %v8803, %v9120
      %v9191 = vadd.f32 %v8804, %v9125
      %v9192 = vadd.f32 %v8805, %v9130
      %v9193 = vadd.f32 %v8806, %v9135
      %v9194 = vadd.f32 %v8807, %v9140
      %v9195 = vadd.f32 %v8808, %v9145
      %v9196 = vadd.f32 %v8809, %v9150
      %v9197 = vadd.f32 %v8810, %v9155
      %v9198 = vadd.f32 %v8811, %v9160
      %v9199 = vadd.f32 %v8812, %v9165
      %v9200 = vld [vmem:[%s7684 + $0x1] sm:$0xff]
      %v9201 = vld [vmem:[%s7684 + $0x9] sm:$0xff]
      %v9202 = vld [vmem:[%s7684 + $0x19] sm:$0xff]
      %v9203 = vld [vmem:[%s7684 + $0x21] sm:$0xff]
      %v9204 = vld [vmem:[%s7684 + $0x31] sm:$0xff]
      %v9205 = vld [vmem:[%s7684 + $0x39] sm:$0xff]
      %v9206 = vld [vmem:[%s7684 + $0x49] sm:$0xff]
      %v9207 = vld [vmem:[%s7684 + $0x51] sm:$0xff]
      %v9208 = vld [vmem:[%s7684 + $0x61] sm:$0xff]
      %v9209 = vld [vmem:[%s7684 + $0x69] sm:$0xff]
      %v9210 = vld [vmem:[%s7684 + $0x79] sm:$0xff]
      %v9211 = vld [vmem:[%s7684 + $0x81] sm:$0xff]
      %v9212 = vld [vmem:[%s7684 + $0x91] sm:$0xff]
      %v9213 = vld [vmem:[%s7684 + $0x99] sm:$0xff]
      %v9214 = vld [vmem:[%s7684 + $0xa9] sm:$0xff]
      %v9215 = vld [vmem:[%s7684 + $0xb1] sm:$0xff]
      %v9216 = vld [vmem:[%s7684 + $0xc1] sm:$0xff]
      %v9217 = vld [vmem:[%s7684 + $0xc9] sm:$0xff]
      %v9218 = vld [vmem:[%s7684 + $0xd9] sm:$0xff]
      %v9219 = vld [vmem:[%s7684 + $0xe1] sm:$0xff]
      %v9220 = vld [vmem:[%s7684 + $0xf1] sm:$0xff]
      %v9221 = vld [vmem:[%s7684 + $0xf9] sm:$0xff]
      %v9222 = vld [vmem:[%s7684 + $0x109] sm:$0xff]
      %v9223 = vld [vmem:[%s7684 + $0x111] sm:$0xff]
      %v9224 = vld [vmem:[%s7684 + $0x121] sm:$0xff]
      %v9225 = vld [vmem:[%s7684 + $0x129] sm:$0xff]
      %v9226 = vld [vmem:[%s7684 + $0x139] sm:$0xff]
      %v9227 = vld [vmem:[%s7684 + $0x141] sm:$0xff]
      %v9228 = vld [vmem:[%s7684 + $0x151] sm:$0xff]
      %v9229 = vld [vmem:[%s7684 + $0x159] sm:$0xff]
      %v9230 = vld [vmem:[%s7684 + $0x169] sm:$0xff]
      %v9231 = vld [vmem:[%s7684 + $0x171] sm:$0xff]
      %s9232 = scalar_lea.vmem %s4, 32
      %v9233 = vld [vmem:[%s9232] sm:$0xff]
      %v9235 = vsel %vm4074, %v9200, 0
      %v9238 = vsel %vm4074, %v9201, 0
      %v9241 = vsel %vm4074, %v9202, 0
      %v9244 = vsel %vm4074, %v9203, 0
      %v9247 = vsel %vm4074, %v9204, 0
      %v9250 = vsel %vm4074, %v9205, 0
      %v9253 = vsel %vm4074, %v9206, 0
      %v9256 = vsel %vm4074, %v9207, 0
      %v9259 = vsel %vm4074, %v9208, 0
      %v9262 = vsel %vm4074, %v9209, 0
      %v9265 = vsel %vm4074, %v9210, 0
      %v9268 = vsel %vm4074, %v9211, 0
      %v9271 = vsel %vm4074, %v9212, 0
      %v9274 = vsel %vm4074, %v9213, 0
      %v9277 = vsel %vm4074, %v9214, 0
      %v9280 = vsel %vm4074, %v9215, 0
      %v9283 = vsel %vm4074, %v9216, 0
      %v9286 = vsel %vm4074, %v9217, 0
      %v9289 = vsel %vm4074, %v9218, 0
      %v9292 = vsel %vm4074, %v9219, 0
      %v9295 = vsel %vm4074, %v9220, 0
      %v9298 = vsel %vm4074, %v9221, 0
      %v9301 = vsel %vm4074, %v9222, 0
      %v9304 = vsel %vm4074, %v9223, 0
      %v9307 = vsel %vm4074, %v9224, 0
      %v9310 = vsel %vm4074, %v9225, 0
      %v9313 = vsel %vm4074, %v9226, 0
      %v9316 = vsel %vm4074, %v9227, 0
      %v9319 = vsel %vm4074, %v9228, 0
      %v9322 = vsel %vm4074, %v9229, 0
      %v9325 = vsel %vm4074, %v9230, 0
      %v9328 = vsel %vm4074, %v9231, 0
      %9330 = vmatprep.subr.mxu0 0.0
      %9331 = vmatpush1.msra.mxu0 %v9233
      %9332 = vmatprep.subr.mxu0 0.0
      %9333 = vmatpush1.msra.mxu0 0.0
      %9334 = vmatprep.subr.mxu0 0.0
      %9335 = vmatpush1.msra.mxu0 0.0
      %9336 = vmatprep.subr.mxu0 0.0
      %9337 = vmatpush1.msra.mxu0 0.0
      %9338 = vmatprep.subr.mxu0 0.0
      %9339 = vmatpush1.msra.mxu0 0.0
      %9340 = vmatprep.subr.mxu0 0.0
      %9341 = vmatpush1.msra.mxu0 0.0
      %9342 = vmatprep.subr.mxu0 0.0
      %9343 = vmatpush1.msra.mxu0 0.0
      %9344 = vmatprep.subr.mxu0 0.0
      %9345 = vmatpush1.msra.mxu0 0.0
      %9346 = vmatprep.subr.mxu0 0.0
      %9347 = vmatpush1.msra.mxu0 0.0
      %9348 = vmatprep.subr.mxu0 0.0
      %9349 = vmatpush1.msra.mxu0 0.0
      %9350 = vmatprep.subr.mxu0 0.0
      %9351 = vmatpush1.msra.mxu0 0.0
      %9352 = vmatprep.subr.mxu0 0.0
      %9353 = vmatpush1.msra.mxu0 0.0
      %9354 = vmatprep.subr.mxu0 0.0
      %9355 = vmatpush1.msra.mxu0 0.0
      %9356 = vmatprep.subr.mxu0 0.0
      %9357 = vmatpush1.msra.mxu0 0.0
      %9358 = vmatprep.subr.mxu0 0.0
      %9359 = vmatpush1.msra.mxu0 0.0
      %9360 = vmatprep.subr.mxu0 0.0
      %9361 = vmatpush1.msra.mxu0 0.0
      %9362 = vmatprep.subr.mxu0 0.0
      %9363 = vmatpush1.msra.mxu0 0.0
      %9364 = vmatprep.subr.mxu0 0.0
      %9365 = vmatpush1.msra.mxu0 0.0
      %9366 = vmatprep.subr.mxu0 0.0
      %9367 = vmatpush1.msra.mxu0 0.0
      %9368 = vmatprep.subr.mxu0 0.0
      %9369 = vmatpush1.msra.mxu0 0.0
      %9370 = vmatprep.subr.mxu0 0.0
      %9371 = vmatpush1.msra.mxu0 0.0
      %9372 = vmatprep.subr.mxu0 0.0
      %9373 = vmatpush1.msra.mxu0 0.0
      %9374 = vmatprep.subr.mxu0 0.0
      %9375 = vmatpush1.msra.mxu0 0.0
      %9376 = vmatprep.subr.mxu0 0.0
      %9377 = vmatpush1.msra.mxu0 0.0
      %9378 = vmatprep.subr.mxu0 0.0
      %9379 = vmatpush1.msra.mxu0 0.0
      %9380 = vmatprep.subr.mxu0 0.0
      %9381 = vmatpush1.msra.mxu0 0.0
      %9382 = vmatprep.subr.mxu0 0.0
      %9383 = vmatpush1.msra.mxu0 0.0
      %9384 = vmatprep.subr.mxu0 0.0
      %9385 = vmatpush1.msra.mxu0 0.0
      %9386 = vmatprep.subr.mxu0 0.0
      %9387 = vmatpush1.msra.mxu0 0.0
      %9388 = vmatprep.subr.mxu0 0.0
      %9389 = vmatpush1.msra.mxu0 0.0
      %9390 = vmatprep.subr.mxu0 0.0
      %9391 = vmatpush1.msra.mxu0 0.0
      %9392 = vmatprep.subr.mxu0 0.0
      %9393 = vmatpush1.msra.mxu0 0.0
      %9394 = vmatprep.mubr.f32.mxu0 0.0
      %9395 = vmatmul.mubr.f32.gmra.mrb[0].mxu0 %v9235
      %v9396 = vpop.f32.mrb[0].mxu0
      %v9397 = vadd.f32 0.0, %v9396
      %v9398 = vpop.f32.mrb[0].mxu0
      %9399 = vmatprep.mubr.f32.mxu0 0.0
      %9400 = vmatmul.mubr.f32.gmra.mrb[0].mxu0 %v9238
      %v9401 = vpop.f32.mrb[0].mxu0
      %v9402 = vadd.f32 0.0, %v9401
      %v9403 = vpop.f32.mrb[0].mxu0
      %9404 = vmatprep.mubr.f32.mxu0 0.0
      %9405 = vmatmul.mubr.f32.gmra.mrb[0].mxu0 %v9241
      %v9406 = vpop.f32.mrb[0].mxu0
      %v9407 = vadd.f32 0.0, %v9406
      %v9408 = vpop.f32.mrb[0].mxu0
      %9409 = vmatprep.mubr.f32.mxu0 0.0
      %9410 = vmatmul.mubr.f32.gmra.mrb[0].mxu0 %v9244
      %v9411 = vpop.f32.mrb[0].mxu0
      %v9412 = vadd.f32 0.0, %v9411
      %v9413 = vpop.f32.mrb[0].mxu0
      %9414 = vmatprep.mubr.f32.mxu0 0.0
      %9415 = vmatmul.mubr.f32.gmra.mrb[0].mxu0 %v9247
      %v9416 = vpop.f32.mrb[0].mxu0
      %v9417 = vadd.f32 0.0, %v9416
      %v9418 = vpop.f32.mrb[0].mxu0
      %9419 = vmatprep.mubr.f32.mxu0 0.0
      %9420 = vmatmul.mubr.f32.gmra.mrb[0].mxu0 %v9250
      %v9421 = vpop.f32.mrb[0].mxu0
      %v9422 = vadd.f32 0.0, %v9421
      %v9423 = vpop.f32.mrb[0].mxu0
      %9424 = vmatprep.mubr.f32.mxu0 0.0
      %9425 = vmatmul.mubr.f32.gmra.mrb[0].mxu0 %v9253
      %v9426 = vpop.f32.mrb[0].mxu0
      %v9427 = vadd.f32 0.0, %v9426
      %v9428 = vpop.f32.mrb[0].mxu0
      %9429 = vmatprep.mubr.f32.mxu0 0.0
      %9430 = vmatmul.mubr.f32.gmra.mrb[0].mxu0 %v9256
      %v9431 = vpop.f32.mrb[0].mxu0
      %v9432 = vadd.f32 0.0, %v9431
      %v9433 = vpop.f32.mrb[0].mxu0
      %9434 = vmatprep.mubr.f32.mxu0 0.0
      %9435 = vmatmul.mubr.f32.gmra.mrb[0].mxu0 %v9259
      %v9436 = vpop.f32.mrb[0].mxu0
      %v9437 = vadd.f32 0.0, %v9436
      %v9438 = vpop.f32.mrb[0].mxu0
      %9439 = vmatprep.mubr.f32.mxu0 0.0
      %9440 = vmatmul.mubr.f32.gmra.mrb[0].mxu0 %v9262
      %v9441 = vpop.f32.mrb[0].mxu0
      %v9442 = vadd.f32 0.0, %v9441
      %v9443 = vpop.f32.mrb[0].mxu0
      %9444 = vmatprep.mubr.f32.mxu0 0.0
      %9445 = vmatmul.mubr.f32.gmra.mrb[0].mxu0 %v9265
      %v9446 = vpop.f32.mrb[0].mxu0
      %v9447 = vadd.f32 0.0, %v9446
      %v9448 = vpop.f32.mrb[0].mxu0
      %9449 = vmatprep.mubr.f32.mxu0 0.0
      %9450 = vmatmul.mubr.f32.gmra.mrb[0].mxu0 %v9268
      %v9451 = vpop.f32.mrb[0].mxu0
      %v9452 = vadd.f32 0.0, %v9451
      %v9453 = vpop.f32.mrb[0].mxu0
      %9454 = vmatprep.mubr.f32.mxu0 0.0
      %9455 = vmatmul.mubr.f32.gmra.mrb[0].mxu0 %v9271
      %v9456 = vpop.f32.mrb[0].mxu0
      %v9457 = vadd.f32 0.0, %v9456
      %v9458 = vpop.f32.mrb[0].mxu0
      %9459 = vmatprep.mubr.f32.mxu0 0.0
      %9460 = vmatmul.mubr.f32.gmra.mrb[0].mxu0 %v9274
      %v9461 = vpop.f32.mrb[0].mxu0
      %v9462 = vadd.f32 0.0, %v9461
      %v9463 = vpop.f32.mrb[0].mxu0
      %9464 = vmatprep.mubr.f32.mxu0 0.0
      %9465 = vmatmul.mubr.f32.gmra.mrb[0].mxu0 %v9277
      %v9466 = vpop.f32.mrb[0].mxu0
      %v9467 = vadd.f32 0.0, %v9466
      %v9468 = vpop.f32.mrb[0].mxu0
      %9469 = vmatprep.mubr.f32.mxu0 0.0
      %9470 = vmatmul.mubr.f32.gmra.mrb[0].mxu0 %v9280
      %v9471 = vpop.f32.mrb[0].mxu0
      %v9472 = vadd.f32 0.0, %v9471
      %v9473 = vpop.f32.mrb[0].mxu0
      %9474 = vmatprep.mubr.f32.mxu0 0.0
      %9475 = vmatmul.mubr.f32.gmra.mrb[0].mxu0 %v9283
      %v9476 = vpop.f32.mrb[0].mxu0
      %v9477 = vadd.f32 0.0, %v9476
      %v9478 = vpop.f32.mrb[0].mxu0
      %9479 = vmatprep.mubr.f32.mxu0 0.0
      %9480 = vmatmul.mubr.f32.gmra.mrb[0].mxu0 %v9286
      %v9481 = vpop.f32.mrb[0].mxu0
      %v9482 = vadd.f32 0.0, %v9481
      %v9483 = vpop.f32.mrb[0].mxu0
      %9484 = vmatprep.mubr.f32.mxu0 0.0
      %9485 = vmatmul.mubr.f32.gmra.mrb[0].mxu0 %v9289
      %v9486 = vpop.f32.mrb[0].mxu0
      %v9487 = vadd.f32 0.0, %v9486
      %v9488 = vpop.f32.mrb[0].mxu0
      %9489 = vmatprep.mubr.f32.mxu0 0.0
      %9490 = vmatmul.mubr.f32.gmra.mrb[0].mxu0 %v9292
      %v9491 = vpop.f32.mrb[0].mxu0
      %v9492 = vadd.f32 0.0, %v9491
      %v9493 = vpop.f32.mrb[0].mxu0
      %9494 = vmatprep.mubr.f32.mxu0 0.0
      %9495 = vmatmul.mubr.f32.gmra.mrb[0].mxu0 %v9295
      %v9496 = vpop.f32.mrb[0].mxu0
      %v9497 = vadd.f32 0.0, %v9496
      %v9498 = vpop.f32.mrb[0].mxu0
      %9499 = vmatprep.mubr.f32.mxu0 0.0
      %9500 = vmatmul.mubr.f32.gmra.mrb[0].mxu0 %v9298
      %v9501 = vpop.f32.mrb[0].mxu0
      %v9502 = vadd.f32 0.0, %v9501
      %v9503 = vpop.f32.mrb[0].mxu0
      %9504 = vmatprep.mubr.f32.mxu0 0.0
      %9505 = vmatmul.mubr.f32.gmra.mrb[0].mxu0 %v9301
      %v9506 = vpop.f32.mrb[0].mxu0
      %v9507 = vadd.f32 0.0, %v9506
      %v9508 = vpop.f32.mrb[0].mxu0
      %9509 = vmatprep.mubr.f32.mxu0 0.0
      %9510 = vmatmul.mubr.f32.gmra.mrb[0].mxu0 %v9304
      %v9511 = vpop.f32.mrb[0].mxu0
      %v9512 = vadd.f32 0.0, %v9511
      %v9513 = vpop.f32.mrb[0].mxu0
      %9514 = vmatprep.mubr.f32.mxu0 0.0
      %9515 = vmatmul.mubr.f32.gmra.mrb[0].mxu0 %v9307
      %v9516 = vpop.f32.mrb[0].mxu0
      %v9517 = vadd.f32 0.0, %v9516
      %v9518 = vpop.f32.mrb[0].mxu0
      %9519 = vmatprep.mubr.f32.mxu0 0.0
      %9520 = vmatmul.mubr.f32.gmra.mrb[0].mxu0 %v9310
      %v9521 = vpop.f32.mrb[0].mxu0
      %v9522 = vadd.f32 0.0, %v9521
      %v9523 = vpop.f32.mrb[0].mxu0
      %9524 = vmatprep.mubr.f32.mxu0 0.0
      %9525 = vmatmul.mubr.f32.gmra.mrb[0].mxu0 %v9313
      %v9526 = vpop.f32.mrb[0].mxu0
      %v9527 = vadd.f32 0.0, %v9526
      %v9528 = vpop.f32.mrb[0].mxu0
      %9529 = vmatprep.mubr.f32.mxu0 0.0
      %9530 = vmatmul.mubr.f32.gmra.mrb[0].mxu0 %v9316
      %v9531 = vpop.f32.mrb[0].mxu0
      %v9532 = vadd.f32 0.0, %v9531
      %v9533 = vpop.f32.mrb[0].mxu0
      %9534 = vmatprep.mubr.f32.mxu0 0.0
      %9535 = vmatmul.mubr.f32.gmra.mrb[0].mxu0 %v9319
      %v9536 = vpop.f32.mrb[0].mxu0
      %v9537 = vadd.f32 0.0, %v9536
      %v9538 = vpop.f32.mrb[0].mxu0
      %9539 = vmatprep.mubr.f32.mxu0 0.0
      %9540 = vmatmul.mubr.f32.gmra.mrb[0].mxu0 %v9322
      %v9541 = vpop.f32.mrb[0].mxu0
      %v9542 = vadd.f32 0.0, %v9541
      %v9543 = vpop.f32.mrb[0].mxu0
      %9544 = vmatprep.mubr.f32.mxu0 0.0
      %9545 = vmatmul.mubr.f32.gmra.mrb[0].mxu0 %v9325
      %v9546 = vpop.f32.mrb[0].mxu0
      %v9547 = vadd.f32 0.0, %v9546
      %v9548 = vpop.f32.mrb[0].mxu0
      %9549 = vmatprep.mubr.f32.mxu0 0.0
      %9550 = vmatmul.mubr.f32.gmra.mrb[0].mxu0 %v9328
      %v9551 = vpop.f32.mrb[0].mxu0
      %v9552 = vadd.f32 0.0, %v9551
      %v9553 = vpop.f32.mrb[0].mxu0
      %9554 = vdwg.mxu0
      %v9555 = vadd.f32 %v9168, %v9397
      %v9556 = vadd.f32 %v9169, %v9402
      %v9557 = vadd.f32 %v9170, %v9407
      %v9558 = vadd.f32 %v9171, %v9412
      %v9559 = vadd.f32 %v9172, %v9417
      %v9560 = vadd.f32 %v9173, %v9422
      %v9561 = vadd.f32 %v9174, %v9427
      %v9562 = vadd.f32 %v9175, %v9432
      %v9563 = vadd.f32 %v9176, %v9437
      %v9564 = vadd.f32 %v9177, %v9442
      %v9565 = vadd.f32 %v9178, %v9447
      %v9566 = vadd.f32 %v9179, %v9452
      %v9567 = vadd.f32 %v9180, %v9457
      %v9568 = vadd.f32 %v9181, %v9462
      %v9569 = vadd.f32 %v9182, %v9467
      %v9570 = vadd.f32 %v9183, %v9472
      %v9571 = vadd.f32 %v9184, %v9477
      %v9572 = vadd.f32 %v9185, %v9482
      %v9573 = vadd.f32 %v9186, %v9487
      %v9574 = vadd.f32 %v9187, %v9492
      %v9575 = vadd.f32 %v9188, %v9497
      %v9576 = vadd.f32 %v9189, %v9502
      %v9577 = vadd.f32 %v9190, %v9507
      %v9578 = vadd.f32 %v9191, %v9512
      %v9579 = vadd.f32 %v9192, %v9517
      %v9580 = vadd.f32 %v9193, %v9522
      %v9581 = vadd.f32 %v9194, %v9527
      %v9582 = vadd.f32 %v9195, %v9532
      %v9583 = vadd.f32 %v9196, %v9537
      %v9584 = vadd.f32 %v9197, %v9542
      %v9585 = vadd.f32 %v9198, %v9547
      %v9586 = vadd.f32 %v9199, %v9552
      %v9587 = vld [vmem:[%s7684 + $0x2] sm:$0xff]
      %v9588 = vld [vmem:[%s7684 + $0xa] sm:$0xff]
      %v9589 = vld [vmem:[%s7684 + $0x1a] sm:$0xff]
      %v9590 = vld [vmem:[%s7684 + $0x22] sm:$0xff]
      %v9591 = vld [vmem:[%s7684 + $0x32] sm:$0xff]
      %v9592 = vld [vmem:[%s7684 + $0x3a] sm:$0xff]
      %v9593 = vld [vmem:[%s7684 + $0x4a] sm:$0xff]
      %v9594 = vld [vmem:[%s7684 + $0x52] sm:$0xff]
      %v9595 = vld [vmem:[%s7684 + $0x62] sm:$0xff]
      %v9596 = vld [vmem:[%s7684 + $0x6a] sm:$0xff]
      %v9597 = vld [vmem:[%s7684 + $0x7a] sm:$0xff]
      %v9598 = vld [vmem:[%s7684 + $0x82] sm:$0xff]
      %v9599 = vld [vmem:[%s7684 + $0x92] sm:$0xff]
      %v9600 = vld [vmem:[%s7684 + $0x9a] sm:$0xff]
      %v9601 = vld [vmem:[%s7684 + $0xaa] sm:$0xff]
      %v9602 = vld [vmem:[%s7684 + $0xb2] sm:$0xff]
      %v9603 = vld [vmem:[%s7684 + $0xc2] sm:$0xff]
      %v9604 = vld [vmem:[%s7684 + $0xca] sm:$0xff]
      %v9605 = vld [vmem:[%s7684 + $0xda] sm:$0xff]
      %v9606 = vld [vmem:[%s7684 + $0xe2] sm:$0xff]
      %v9607 = vld [vmem:[%s7684 + $0xf2] sm:$0xff]
      %v9608 = vld [vmem:[%s7684 + $0xfa] sm:$0xff]
      %v9609 = vld [vmem:[%s7684 + $0x10a] sm:$0xff]
      %v9610 = vld [vmem:[%s7684 + $0x112] sm:$0xff]
      %v9611 = vld [vmem:[%s7684 + $0x122] sm:$0xff]
      %v9612 = vld [vmem:[%s7684 + $0x12a] sm:$0xff]
      %v9613 = vld [vmem:[%s7684 + $0x13a] sm:$0xff]
      %v9614 = vld [vmem:[%s7684 + $0x142] sm:$0xff]
      %v9615 = vld [vmem:[%s7684 + $0x152] sm:$0xff]
      %v9616 = vld [vmem:[%s7684 + $0x15a] sm:$0xff]
      %v9617 = vld [vmem:[%s7684 + $0x16a] sm:$0xff]
      %v9618 = vld [vmem:[%s7684 + $0x172] sm:$0xff]
      %s9619 = scalar_lea.vmem %s4, 40
      %v9620 = vld [vmem:[%s9619] sm:$0xff]
      %v9622 = vsel %vm4074, %v9587, 0
      %v9625 = vsel %vm4074, %v9588, 0
      %v9628 = vsel %vm4074, %v9589, 0
      %v9631 = vsel %vm4074, %v9590, 0
      %v9634 = vsel %vm4074, %v9591, 0
      %v9637 = vsel %vm4074, %v9592, 0
      %v9640 = vsel %vm4074, %v9593, 0
      %v9643 = vsel %vm4074, %v9594, 0
      %v9646 = vsel %vm4074, %v9595, 0
      %v9649 = vsel %vm4074, %v9596, 0
      %v9652 = vsel %vm4074, %v9597, 0
      %v9655 = vsel %vm4074, %v9598, 0
      %v9658 = vsel %vm4074, %v9599, 0
      %v9661 = vsel %vm4074, %v9600, 0
      %v9664 = vsel %vm4074, %v9601, 0
      %v9667 = vsel %vm4074, %v9602, 0
      %v9670 = vsel %vm4074, %v9603, 0
      %v9673 = vsel %vm4074, %v9604, 0
      %v9676 = vsel %vm4074, %v9605, 0
      %v9679 = vsel %vm4074, %v9606, 0
      %v9682 = vsel %vm4074, %v9607, 0
      %v9685 = vsel %vm4074, %v9608, 0
      %v9688 = vsel %vm4074, %v9609, 0
      %v9691 = vsel %vm4074, %v9610, 0
      %v9694 = vsel %vm4074, %v9611, 0
      %v9697 = vsel %vm4074, %v9612, 0
      %v9700 = vsel %vm4074, %v9613, 0
      %v9703 = vsel %vm4074, %v9614, 0
      %v9706 = vsel %vm4074, %v9615, 0
      %v9709 = vsel %vm4074, %v9616, 0
      %v9712 = vsel %vm4074, %v9617, 0
      %v9715 = vsel %vm4074, %v9618, 0
      %9717 = vmatprep.subr.mxu0 0.0
      %9718 = vmatpush1.msra.mxu0 %v9620
      %9719 = vmatprep.subr.mxu0 0.0
      %9720 = vmatpush1.msra.mxu0 0.0
      %9721 = vmatprep.subr.mxu0 0.0
      %9722 = vmatpush1.msra.mxu0 0.0
      %9723 = vmatprep.subr.mxu0 0.0
      %9724 = vmatpush1.msra.mxu0 0.0
      %9725 = vmatprep.subr.mxu0 0.0
      %9726 = vmatpush1.msra.mxu0 0.0
      %9727 = vmatprep.subr.mxu0 0.0
      %9728 = vmatpush1.msra.mxu0 0.0
      %9729 = vmatprep.subr.mxu0 0.0
      %9730 = vmatpush1.msra.mxu0 0.0
      %9731 = vmatprep.subr.mxu0 0.0
      %9732 = vmatpush1.msra.mxu0 0.0
      %9733 = vmatprep.subr.mxu0 0.0
      %9734 = vmatpush1.msra.mxu0 0.0
      %9735 = vmatprep.subr.mxu0 0.0
      %9736 = vmatpush1.msra.mxu0 0.0
      %9737 = vmatprep.subr.mxu0 0.0
      %9738 = vmatpush1.msra.mxu0 0.0
      %9739 = vmatprep.subr.mxu0 0.0
      %9740 = vmatpush1.msra.mxu0 0.0
      %9741 = vmatprep.subr.mxu0 0.0
      %9742 = vmatpush1.msra.mxu0 0.0
      %9743 = vmatprep.subr.mxu0 0.0
      %9744 = vmatpush1.msra.mxu0 0.0
      %9745 = vmatprep.subr.mxu0 0.0
      %9746 = vmatpush1.msra.mxu0 0.0
      %9747 = vmatprep.subr.mxu0 0.0
      %9748 = vmatpush1.msra.mxu0 0.0
      %9749 = vmatprep.subr.mxu0 0.0
      %9750 = vmatpush1.msra.mxu0 0.0
      %9751 = vmatprep.subr.mxu0 0.0
      %9752 = vmatpush1.msra.mxu0 0.0
      %9753 = vmatprep.subr.mxu0 0.0
      %9754 = vmatpush1.msra.mxu0 0.0
      %9755 = vmatprep.subr.mxu0 0.0
      %9756 = vmatpush1.msra.mxu0 0.0
      %9757 = vmatprep.subr.mxu0 0.0
      %9758 = vmatpush1.msra.mxu0 0.0
      %9759 = vmatprep.subr.mxu0 0.0
      %9760 = vmatpush1.msra.mxu0 0.0
      %9761 = vmatprep.subr.mxu0 0.0
      %9762 = vmatpush1.msra.mxu0 0.0
      %9763 = vmatprep.subr.mxu0 0.0
      %9764 = vmatpush1.msra.mxu0 0.0
      %9765 = vmatprep.subr.mxu0 0.0
      %9766 = vmatpush1.msra.mxu0 0.0
      %9767 = vmatprep.subr.mxu0 0.0
      %9768 = vmatpush1.msra.mxu0 0.0
      %9769 = vmatprep.subr.mxu0 0.0
      %9770 = vmatpush1.msra.mxu0 0.0
      %9771 = vmatprep.subr.mxu0 0.0
      %9772 = vmatpush1.msra.mxu0 0.0
      %9773 = vmatprep.subr.mxu0 0.0
      %9774 = vmatpush1.msra.mxu0 0.0
      %9775 = vmatprep.subr.mxu0 0.0
      %9776 = vmatpush1.msra.mxu0 0.0
      %9777 = vmatprep.subr.mxu0 0.0
      %9778 = vmatpush1.msra.mxu0 0.0
      %9779 = vmatprep.subr.mxu0 0.0
      %9780 = vmatpush1.msra.mxu0 0.0
      %9781 = vmatprep.mubr.f32.mxu0 0.0
      %9782 = vmatmul.mubr.f32.gmra.mrb[0].mxu0 %v9622
      %v9783 = vpop.f32.mrb[0].mxu0
      %v9784 = vadd.f32 0.0, %v9783
      %v9785 = vpop.f32.mrb[0].mxu0
      %9786 = vmatprep.mubr.f32.mxu0 0.0
      %9787 = vmatmul.mubr.f32.gmra.mrb[0].mxu0 %v9625
      %v9788 = vpop.f32.mrb[0].mxu0
      %v9789 = vadd.f32 0.0, %v9788
      %v9790 = vpop.f32.mrb[0].mxu0
      %9791 = vmatprep.mubr.f32.mxu0 0.0
      %9792 = vmatmul.mubr.f32.gmra.mrb[0].mxu0 %v9628
      %v9793 = vpop.f32.mrb[0].mxu0
      %v9794 = vadd.f32 0.0, %v9793
      %v9795 = vpop.f32.mrb[0].mxu0
      %9796 = vmatprep.mubr.f32.mxu0 0.0
      %9797 = vmatmul.mubr.f32.gmra.mrb[0].mxu0 %v9631
      %v9798 = vpop.f32.mrb[0].mxu0
      %v9799 = vadd.f32 0.0, %v9798
      %v9800 = vpop.f32.mrb[0].mxu0
      %9801 = vmatprep.mubr.f32.mxu0 0.0
      %9802 = vmatmul.mubr.f32.gmra.mrb[0].mxu0 %v9634
      %v9803 = vpop.f32.mrb[0].mxu0
      %v9804 = vadd.f32 0.0, %v9803
      %v9805 = vpop.f32.mrb[0].mxu0
      %9806 = vmatprep.mubr.f32.mxu0 0.0
      %9807 = vmatmul.mubr.f32.gmra.mrb[0].mxu0 %v9637
      %v9808 = vpop.f32.mrb[0].mxu0
      %v9809 = vadd.f32 0.0, %v9808
      %v9810 = vpop.f32.mrb[0].mxu0
      %9811 = vmatprep.mubr.f32.mxu0 0.0
      %9812 = vmatmul.mubr.f32.gmra.mrb[0].mxu0 %v9640
      %v9813 = vpop.f32.mrb[0].mxu0
      %v9814 = vadd.f32 0.0, %v9813
      %v9815 = vpop.f32.mrb[0].mxu0
      %9816 = vmatprep.mubr.f32.mxu0 0.0
      %9817 = vmatmul.mubr.f32.gmra.mrb[0].mxu0 %v9643
      %v9818 = vpop.f32.mrb[0].mxu0
      %v9819 = vadd.f32 0.0, %v9818
      %v9820 = vpop.f32.mrb[0].mxu0
      %9821 = vmatprep.mubr.f32.mxu0 0.0
      %9822 = vmatmul.mubr.f32.gmra.mrb[0].mxu0 %v9646
      %v9823 = vpop.f32.mrb[0].mxu0
      %v9824 = vadd.f32 0.0, %v9823
      %v9825 = vpop.f32.mrb[0].mxu0
      %9826 = vmatprep.mubr.f32.mxu0 0.0
      %9827 = vmatmul.mubr.f32.gmra.mrb[0].mxu0 %v9649
      %v9828 = vpop.f32.mrb[0].mxu0
      %v9829 = vadd.f32 0.0, %v9828
      %v9830 = vpop.f32.mrb[0].mxu0
      %9831 = vmatprep.mubr.f32.mxu0 0.0
      %9832 = vmatmul.mubr.f32.gmra.mrb[0].mxu0 %v9652
      %v9833 = vpop.f32.mrb[0].mxu0
      %v9834 = vadd.f32 0.0, %v9833
      %v9835 = vpop.f32.mrb[0].mxu0
      %9836 = vmatprep.mubr.f32.mxu0 0.0
      %9837 = vmatmul.mubr.f32.gmra.mrb[0].mxu0 %v9655
      %v9838 = vpop.f32.mrb[0].mxu0
      %v9839 = vadd.f32 0.0, %v9838
      %v9840 = vpop.f32.mrb[0].mxu0
      %9841 = vmatprep.mubr.f32.mxu0 0.0
      %9842 = vmatmul.mubr.f32.gmra.mrb[0].mxu0 %v9658
      %v9843 = vpop.f32.mrb[0].mxu0
      %v9844 = vadd.f32 0.0, %v9843
      %v9845 = vpop.f32.mrb[0].mxu0
      %9846 = vmatprep.mubr.f32.mxu0 0.0
      %9847 = vmatmul.mubr.f32.gmra.mrb[0].mxu0 %v9661
      %v9848 = vpop.f32.mrb[0].mxu0
      %v9849 = vadd.f32 0.0, %v9848
      %v9850 = vpop.f32.mrb[0].mxu0
      %9851 = vmatprep.mubr.f32.mxu0 0.0
      %9852 = vmatmul.mubr.f32.gmra.mrb[0].mxu0 %v9664
      %v9853 = vpop.f32.mrb[0].mxu0
      %v9854 = vadd.f32 0.0, %v9853
      %v9855 = vpop.f32.mrb[0].mxu0
      %9856 = vmatprep.mubr.f32.mxu0 0.0
      %9857 = vmatmul.mubr.f32.gmra.mrb[0].mxu0 %v9667
      %v9858 = vpop.f32.mrb[0].mxu0
      %v9859 = vadd.f32 0.0, %v9858
      %v9860 = vpop.f32.mrb[0].mxu0
      %9861 = vmatprep.mubr.f32.mxu0 0.0
      %9862 = vmatmul.mubr.f32.gmra.mrb[0].mxu0 %v9670
      %v9863 = vpop.f32.mrb[0].mxu0
      %v9864 = vadd.f32 0.0, %v9863
      %v9865 = vpop.f32.mrb[0].mxu0
      %9866 = vmatprep.mubr.f32.mxu0 0.0
      %9867 = vmatmul.mubr.f32.gmra.mrb[0].mxu0 %v9673
      %v9868 = vpop.f32.mrb[0].mxu0
      %v9869 = vadd.f32 0.0, %v9868
      %v9870 = vpop.f32.mrb[0].mxu0
      %9871 = vmatprep.mubr.f32.mxu0 0.0
      %9872 = vmatmul.mubr.f32.gmra.mrb[0].mxu0 %v9676
      %v9873 = vpop.f32.mrb[0].mxu0
      %v9874 = vadd.f32 0.0, %v9873
      %v9875 = vpop.f32.mrb[0].mxu0
      %9876 = vmatprep.mubr.f32.mxu0 0.0
      %9877 = vmatmul.mubr.f32.gmra.mrb[0].mxu0 %v9679
      %v9878 = vpop.f32.mrb[0].mxu0
      %v9879 = vadd.f32 0.0, %v9878
      %v9880 = vpop.f32.mrb[0].mxu0
      %9881 = vmatprep.mubr.f32.mxu0 0.0
      %9882 = vmatmul.mubr.f32.gmra.mrb[0].mxu0 %v9682
      %v9883 = vpop.f32.mrb[0].mxu0
      %v9884 = vadd.f32 0.0, %v9883
      %v9885 = vpop.f32.mrb[0].mxu0
      %9886 = vmatprep.mubr.f32.mxu0 0.0
      %9887 = vmatmul.mubr.f32.gmra.mrb[0].mxu0 %v9685
      %v9888 = vpop.f32.mrb[0].mxu0
      %v9889 = vadd.f32 0.0, %v9888
      %v9890 = vpop.f32.mrb[0].mxu0
      %9891 = vmatprep.mubr.f32.mxu0 0.0
      %9892 = vmatmul.mubr.f32.gmra.mrb[0].mxu0 %v9688
      %v9893 = vpop.f32.mrb[0].mxu0
      %v9894 = vadd.f32 0.0, %v9893
      %v9895 = vpop.f32.mrb[0].mxu0
      %9896 = vmatprep.mubr.f32.mxu0 0.0
      %9897 = vmatmul.mubr.f32.gmra.mrb[0].mxu0 %v9691
      %v9898 = vpop.f32.mrb[0].mxu0
      %v9899 = vadd.f32 0.0, %v9898
      %v9900 = vpop.f32.mrb[0].mxu0
      %9901 = vmatprep.mubr.f32.mxu0 0.0
      %9902 = vmatmul.mubr.f32.gmra.mrb[0].mxu0 %v9694
      %v9903 = vpop.f32.mrb[0].mxu0
      %v9904 = vadd.f32 0.0, %v9903
      %v9905 = vpop.f32.mrb[0].mxu0
      %9906 = vmatprep.mubr.f32.mxu0 0.0
      %9907 = vmatmul.mubr.f32.gmra.mrb[0].mxu0 %v9697
      %v9908 = vpop.f32.mrb[0].mxu0
      %v9909 = vadd.f32 0.0, %v9908
      %v9910 = vpop.f32.mrb[0].mxu0
      %9911 = vmatprep.mubr.f32.mxu0 0.0
      %9912 = vmatmul.mubr.f32.gmra.mrb[0].mxu0 %v9700
      %v9913 = vpop.f32.mrb[0].mxu0
      %v9914 = vadd.f32 0.0, %v9913
      %v9915 = vpop.f32.mrb[0].mxu0
      %9916 = vmatprep.mubr.f32.mxu0 0.0
      %9917 = vmatmul.mubr.f32.gmra.mrb[0].mxu0 %v9703
      %v9918 = vpop.f32.mrb[0].mxu0
      %v9919 = vadd.f32 0.0, %v9918
      %v9920 = vpop.f32.mrb[0].mxu0
      %9921 = vmatprep.mubr.f32.mxu0 0.0
      %9922 = vmatmul.mubr.f32.gmra.mrb[0].mxu0 %v9706
      %v9923 = vpop.f32.mrb[0].mxu0
      %v9924 = vadd.f32 0.0, %v9923
      %v9925 = vpop.f32.mrb[0].mxu0
      %9926 = vmatprep.mubr.f32.mxu0 0.0
      %9927 = vmatmul.mubr.f32.gmra.mrb[0].mxu0 %v9709
      %v9928 = vpop.f32.mrb[0].mxu0
      %v9929 = vadd.f32 0.0, %v9928
      %v9930 = vpop.f32.mrb[0].mxu0
      %9931 = vmatprep.mubr.f32.mxu0 0.0
      %9932 = vmatmul.mubr.f32.gmra.mrb[0].mxu0 %v9712
      %v9933 = vpop.f32.mrb[0].mxu0
      %v9934 = vadd.f32 0.0, %v9933
      %v9935 = vpop.f32.mrb[0].mxu0
      %9936 = vmatprep.mubr.f32.mxu0 0.0
      %9937 = vmatmul.mubr.f32.gmra.mrb[0].mxu0 %v9715
      %v9938 = vpop.f32.mrb[0].mxu0
      %v9939 = vadd.f32 0.0, %v9938
      %v9940 = vpop.f32.mrb[0].mxu0
      %9941 = vdwg.mxu0
      %v9942 = vadd.f32 %v9555, %v9784
      %v9943 = vadd.f32 %v9556, %v9789
      %v9944 = vadd.f32 %v9557, %v9794
      %v9945 = vadd.f32 %v9558, %v9799
      %v9946 = vadd.f32 %v9559, %v9804
      %v9947 = vadd.f32 %v9560, %v9809
      %v9948 = vadd.f32 %v9561, %v9814
      %v9949 = vadd.f32 %v9562, %v9819
      %v9950 = vadd.f32 %v9563, %v9824
      %v9951 = vadd.f32 %v9564, %v9829
      %v9952 = vadd.f32 %v9565, %v9834
      %v9953 = vadd.f32 %v9566, %v9839
      %v9954 = vadd.f32 %v9567, %v9844
      %v9955 = vadd.f32 %v9568, %v9849
      %v9956 = vadd.f32 %v9569, %v9854
      %v9957 = vadd.f32 %v9570, %v9859
      %v9958 = vadd.f32 %v9571, %v9864
      %v9959 = vadd.f32 %v9572, %v9869
      %v9960 = vadd.f32 %v9573, %v9874
      %v9961 = vadd.f32 %v9574, %v9879
      %v9962 = vadd.f32 %v9575, %v9884
      %v9963 = vadd.f32 %v9576, %v9889
      %v9964 = vadd.f32 %v9577, %v9894
      %v9965 = vadd.f32 %v9578, %v9899
      %v9966 = vadd.f32 %v9579, %v9904
      %v9967 = vadd.f32 %v9580, %v9909
      %v9968 = vadd.f32 %v9581, %v9914
      %v9969 = vadd.f32 %v9582, %v9919
      %v9970 = vadd.f32 %v9583, %v9924
      %v9971 = vadd.f32 %v9584, %v9929
      %v9972 = vadd.f32 %v9585, %v9934
      %v9973 = vadd.f32 %v9586, %v9939
      %s9974 = scalar_lea.vmem [#allocation3], 48
      %v9975 = vld [vmem:[%s9974] sm:$0xff]
      %v9976 = vld [vmem:[%s9974 + $0x8] sm:$0xff]
      %v9977 = vld [vmem:[%s9974 + $0x18] sm:$0xff]
      %v9978 = vld [vmem:[%s9974 + $0x20] sm:$0xff]
      %v9979 = vld [vmem:[%s9974 + $0x30] sm:$0xff]
      %v9980 = vld [vmem:[%s9974 + $0x38] sm:$0xff]
      %v9981 = vld [vmem:[%s9974 + $0x48] sm:$0xff]
      %v9982 = vld [vmem:[%s9974 + $0x50] sm:$0xff]
      %v9983 = vld [vmem:[%s9974 + $0x60] sm:$0xff]
      %v9984 = vld [vmem:[%s9974 + $0x68] sm:$0xff]
      %v9985 = vld [vmem:[%s9974 + $0x78] sm:$0xff]
      %v9986 = vld [vmem:[%s9974 + $0x80] sm:$0xff]
      %v9987 = vld [vmem:[%s9974 + $0x90] sm:$0xff]
      %v9988 = vld [vmem:[%s9974 + $0x98] sm:$0xff]
      %v9989 = vld [vmem:[%s9974 + $0xa8] sm:$0xff]
      %v9990 = vld [vmem:[%s9974 + $0xb0] sm:$0xff]
      %v9991 = vld [vmem:[%s9974 + $0xc0] sm:$0xff]
      %v9992 = vld [vmem:[%s9974 + $0xc8] sm:$0xff]
      %v9993 = vld [vmem:[%s9974 + $0xd8] sm:$0xff]
      %v9994 = vld [vmem:[%s9974 + $0xe0] sm:$0xff]
      %v9995 = vld [vmem:[%s9974 + $0xf0] sm:$0xff]
      %v9996 = vld [vmem:[%s9974 + $0xf8] sm:$0xff]
      %v9997 = vld [vmem:[%s9974 + $0x108] sm:$0xff]
      %v9998 = vld [vmem:[%s9974 + $0x110] sm:$0xff]
      %v9999 = vld [vmem:[%s9974 + $0x120] sm:$0xff]
      %v10000 = vld [vmem:[%s9974 + $0x128] sm:$0xff]
      %v10001 = vld [vmem:[%s9974 + $0x138] sm:$0xff]
      %v10002 = vld [vmem:[%s9974 + $0x140] sm:$0xff]
      %v10003 = vld [vmem:[%s9974 + $0x150] sm:$0xff]
      %v10004 = vld [vmem:[%s9974 + $0x158] sm:$0xff]
      %v10005 = vld [vmem:[%s9974 + $0x168] sm:$0xff]
      %v10006 = vld [vmem:[%s9974 + $0x170] sm:$0xff]
      %s10007 = scalar_lea.vmem %s4, 48
      %v10008 = vld [vmem:[%s10007] sm:$0xff]
      %v10010 = vsel %vm4074, %v9975, 0
      %v10013 = vsel %vm4074, %v9976, 0
      %v10016 = vsel %vm4074, %v9977, 0
      %v10019 = vsel %vm4074, %v9978, 0
      %v10022 = vsel %vm4074, %v9979, 0
      %v10025 = vsel %vm4074, %v9980, 0
      %v10028 = vsel %vm4074, %v9981, 0
      %v10031 = vsel %vm4074, %v9982, 0
      %v10034 = vsel %vm4074, %v9983, 0
      %v10037 = vsel %vm4074, %v9984, 0
      %v10040 = vsel %vm4074, %v9985, 0
      %v10043 = vsel %vm4074, %v9986, 0
      %v10046 = vsel %vm4074, %v9987, 0
      %v10049 = vsel %vm4074, %v9988, 0
      %v10052 = vsel %vm4074, %v9989, 0
      %v10055 = vsel %vm4074, %v9990, 0
      %v10058 = vsel %vm4074, %v9991, 0
      %v10061 = vsel %vm4074, %v9992, 0
      %v10064 = vsel %vm4074, %v9993, 0
      %v10067 = vsel %vm4074, %v9994, 0
      %v10070 = vsel %vm4074, %v9995, 0
      %v10073 = vsel %vm4074, %v9996, 0
      %v10076 = vsel %vm4074, %v9997, 0
      %v10079 = vsel %vm4074, %v9998, 0
      %v10082 = vsel %vm4074, %v9999, 0
      %v10085 = vsel %vm4074, %v10000, 0
      %v10088 = vsel %vm4074, %v10001, 0
      %v10091 = vsel %vm4074, %v10002, 0
      %v10094 = vsel %vm4074, %v10003, 0
      %v10097 = vsel %vm4074, %v10004, 0
      %v10100 = vsel %vm4074, %v10005, 0
      %v10103 = vsel %vm4074, %v10006, 0
      %10105 = vmatprep.subr.mxu0 0.0
      %10106 = vmatpush1.msra.mxu0 %v10008
      %10107 = vmatprep.subr.mxu0 0.0
      %10108 = vmatpush1.msra.mxu0 0.0
      %10109 = vmatprep.subr.mxu0 0.0
      %10110 = vmatpush1.msra.mxu0 0.0
      %10111 = vmatprep.subr.mxu0 0.0
      %10112 = vmatpush1.msra.mxu0 0.0
      %10113 = vmatprep.subr.mxu0 0.0
      %10114 = vmatpush1.msra.mxu0 0.0
      %10115 = vmatprep.subr.mxu0 0.0
      %10116 = vmatpush1.msra.mxu0 0.0
      %10117 = vmatprep.subr.mxu0 0.0
      %10118 = vmatpush1.msra.mxu0 0.0
      %10119 = vmatprep.subr.mxu0 0.0
      %10120 = vmatpush1.msra.mxu0 0.0
      %10121 = vmatprep.subr.mxu0 0.0
      %10122 = vmatpush1.msra.mxu0 0.0
      %10123 = vmatprep.subr.mxu0 0.0
      %10124 = vmatpush1.msra.mxu0 0.0
      %10125 = vmatprep.subr.mxu0 0.0
      %10126 = vmatpush1.msra.mxu0 0.0
      %10127 = vmatprep.subr.mxu0 0.0
      %10128 = vmatpush1.msra.mxu0 0.0
      %10129 = vmatprep.subr.mxu0 0.0
      %10130 = vmatpush1.msra.mxu0 0.0
      %10131 = vmatprep.subr.mxu0 0.0
      %10132 = vmatpush1.msra.mxu0 0.0
      %10133 = vmatprep.subr.mxu0 0.0
      %10134 = vmatpush1.msra.mxu0 0.0
      %10135 = vmatprep.subr.mxu0 0.0
      %10136 = vmatpush1.msra.mxu0 0.0
      %10137 = vmatprep.subr.mxu0 0.0
      %10138 = vmatpush1.msra.mxu0 0.0
      %10139 = vmatprep.subr.mxu0 0.0
      %10140 = vmatpush1.msra.mxu0 0.0
      %10141 = vmatprep.subr.mxu0 0.0
      %10142 = vmatpush1.msra.mxu0 0.0
      %10143 = vmatprep.subr.mxu0 0.0
      %10144 = vmatpush1.msra.mxu0 0.0
      %10145 = vmatprep.subr.mxu0 0.0
      %10146 = vmatpush1.msra.mxu0 0.0
      %10147 = vmatprep.subr.mxu0 0.0
      %10148 = vmatpush1.msra.mxu0 0.0
      %10149 = vmatprep.subr.mxu0 0.0
      %10150 = vmatpush1.msra.mxu0 0.0
      %10151 = vmatprep.subr.mxu0 0.0
      %10152 = vmatpush1.msra.mxu0 0.0
      %10153 = vmatprep.subr.mxu0 0.0
      %10154 = vmatpush1.msra.mxu0 0.0
      %10155 = vmatprep.subr.mxu0 0.0
      %10156 = vmatpush1.msra.mxu0 0.0
      %10157 = vmatprep.subr.mxu0 0.0
      %10158 = vmatpush1.msra.mxu0 0.0
      %10159 = vmatprep.subr.mxu0 0.0
      %10160 = vmatpush1.msra.mxu0 0.0
      %10161 = vmatprep.subr.mxu0 0.0
      %10162 = vmatpush1.msra.mxu0 0.0
      %10163 = vmatprep.subr.mxu0 0.0
      %10164 = vmatpush1.msra.mxu0 0.0
      %10165 = vmatprep.subr.mxu0 0.0
      %10166 = vmatpush1.msra.mxu0 0.0
      %10167 = vmatprep.subr.mxu0 0.0
      %10168 = vmatpush1.msra.mxu0 0.0
      %10169 = vmatprep.mubr.f32.mxu0 0.0
      %10170 = vmatmul.mubr.f32.gmra.mrb[0].mxu0 %v10010
      %v10171 = vpop.f32.mrb[0].mxu0
      %v10172 = vadd.f32 0.0, %v10171
      %v10173 = vpop.f32.mrb[0].mxu0
      %10174 = vmatprep.mubr.f32.mxu0 0.0
      %10175 = vmatmul.mubr.f32.gmra.mrb[0].mxu0 %v10013
      %v10176 = vpop.f32.mrb[0].mxu0
      %v10177 = vadd.f32 0.0, %v10176
      %v10178 = vpop.f32.mrb[0].mxu0
      %10179 = vmatprep.mubr.f32.mxu0 0.0
      %10180 = vmatmul.mubr.f32.gmra.mrb[0].mxu0 %v10016
      %v10181 = vpop.f32.mrb[0].mxu0
      %v10182 = vadd.f32 0.0, %v10181
      %v10183 = vpop.f32.mrb[0].mxu0
      %10184 = vmatprep.mubr.f32.mxu0 0.0
      %10185 = vmatmul.mubr.f32.gmra.mrb[0].mxu0 %v10019
      %v10186 = vpop.f32.mrb[0].mxu0
      %v10187 = vadd.f32 0.0, %v10186
      %v10188 = vpop.f32.mrb[0].mxu0
      %10189 = vmatprep.mubr.f32.mxu0 0.0
      %10190 = vmatmul.mubr.f32.gmra.mrb[0].mxu0 %v10022
      %v10191 = vpop.f32.mrb[0].mxu0
      %v10192 = vadd.f32 0.0, %v10191
      %v10193 = vpop.f32.mrb[0].mxu0
      %10194 = vmatprep.mubr.f32.mxu0 0.0
      %10195 = vmatmul.mubr.f32.gmra.mrb[0].mxu0 %v10025
      %v10196 = vpop.f32.mrb[0].mxu0
      %v10197 = vadd.f32 0.0, %v10196
      %v10198 = vpop.f32.mrb[0].mxu0
      %10199 = vmatprep.mubr.f32.mxu0 0.0
      %10200 = vmatmul.mubr.f32.gmra.mrb[0].mxu0 %v10028
      %v10201 = vpop.f32.mrb[0].mxu0
      %v10202 = vadd.f32 0.0, %v10201
      %v10203 = vpop.f32.mrb[0].mxu0
      %10204 = vmatprep.mubr.f32.mxu0 0.0
      %10205 = vmatmul.mubr.f32.gmra.mrb[0].mxu0 %v10031
      %v10206 = vpop.f32.mrb[0].mxu0
      %v10207 = vadd.f32 0.0, %v10206
      %v10208 = vpop.f32.mrb[0].mxu0
      %10209 = vmatprep.mubr.f32.mxu0 0.0
      %10210 = vmatmul.mubr.f32.gmra.mrb[0].mxu0 %v10034
      %v10211 = vpop.f32.mrb[0].mxu0
      %v10212 = vadd.f32 0.0, %v10211
      %v10213 = vpop.f32.mrb[0].mxu0
      %10214 = vmatprep.mubr.f32.mxu0 0.0
      %10215 = vmatmul.mubr.f32.gmra.mrb[0].mxu0 %v10037
      %v10216 = vpop.f32.mrb[0].mxu0
      %v10217 = vadd.f32 0.0, %v10216
      %v10218 = vpop.f32.mrb[0].mxu0
      %10219 = vmatprep.mubr.f32.mxu0 0.0
      %10220 = vmatmul.mubr.f32.gmra.mrb[0].mxu0 %v10040
      %v10221 = vpop.f32.mrb[0].mxu0
      %v10222 = vadd.f32 0.0, %v10221
      %v10223 = vpop.f32.mrb[0].mxu0
      %10224 = vmatprep.mubr.f32.mxu0 0.0
      %10225 = vmatmul.mubr.f32.gmra.mrb[0].mxu0 %v10043
      %v10226 = vpop.f32.mrb[0].mxu0
      %v10227 = vadd.f32 0.0, %v10226
      %v10228 = vpop.f32.mrb[0].mxu0
      %10229 = vmatprep.mubr.f32.mxu0 0.0
      %10230 = vmatmul.mubr.f32.gmra.mrb[0].mxu0 %v10046
      %v10231 = vpop.f32.mrb[0].mxu0
      %v10232 = vadd.f32 0.0, %v10231
      %v10233 = vpop.f32.mrb[0].mxu0
      %10234 = vmatprep.mubr.f32.mxu0 0.0
      %10235 = vmatmul.mubr.f32.gmra.mrb[0].mxu0 %v10049
      %v10236 = vpop.f32.mrb[0].mxu0
      %v10237 = vadd.f32 0.0, %v10236
      %v10238 = vpop.f32.mrb[0].mxu0
      %10239 = vmatprep.mubr.f32.mxu0 0.0
      %10240 = vmatmul.mubr.f32.gmra.mrb[0].mxu0 %v10052
      %v10241 = vpop.f32.mrb[0].mxu0
      %v10242 = vadd.f32 0.0, %v10241
      %v10243 = vpop.f32.mrb[0].mxu0
      %10244 = vmatprep.mubr.f32.mxu0 0.0
      %10245 = vmatmul.mubr.f32.gmra.mrb[0].mxu0 %v10055
      %v10246 = vpop.f32.mrb[0].mxu0
      %v10247 = vadd.f32 0.0, %v10246
      %v10248 = vpop.f32.mrb[0].mxu0
      %10249 = vmatprep.mubr.f32.mxu0 0.0
      %10250 = vmatmul.mubr.f32.gmra.mrb[0].mxu0 %v10058
      %v10251 = vpop.f32.mrb[0].mxu0
      %v10252 = vadd.f32 0.0, %v10251
      %v10253 = vpop.f32.mrb[0].mxu0
      %10254 = vmatprep.mubr.f32.mxu0 0.0
      %10255 = vmatmul.mubr.f32.gmra.mrb[0].mxu0 %v10061
      %v10256 = vpop.f32.mrb[0].mxu0
      %v10257 = vadd.f32 0.0, %v10256
      %v10258 = vpop.f32.mrb[0].mxu0
      %10259 = vmatprep.mubr.f32.mxu0 0.0
      %10260 = vmatmul.mubr.f32.gmra.mrb[0].mxu0 %v10064
      %v10261 = vpop.f32.mrb[0].mxu0
      %v10262 = vadd.f32 0.0, %v10261
      %v10263 = vpop.f32.mrb[0].mxu0
      %10264 = vmatprep.mubr.f32.mxu0 0.0
      %10265 = vmatmul.mubr.f32.gmra.mrb[0].mxu0 %v10067
      %v10266 = vpop.f32.mrb[0].mxu0
      %v10267 = vadd.f32 0.0, %v10266
      %v10268 = vpop.f32.mrb[0].mxu0
      %10269 = vmatprep.mubr.f32.mxu0 0.0
      %10270 = vmatmul.mubr.f32.gmra.mrb[0].mxu0 %v10070
      %v10271 = vpop.f32.mrb[0].mxu0
      %v10272 = vadd.f32 0.0, %v10271
      %v10273 = vpop.f32.mrb[0].mxu0
      %10274 = vmatprep.mubr.f32.mxu0 0.0
      %10275 = vmatmul.mubr.f32.gmra.mrb[0].mxu0 %v10073
      %v10276 = vpop.f32.mrb[0].mxu0
      %v10277 = vadd.f32 0.0, %v10276
      %v10278 = vpop.f32.mrb[0].mxu0
      %10279 = vmatprep.mubr.f32.mxu0 0.0
      %10280 = vmatmul.mubr.f32.gmra.mrb[0].mxu0 %v10076
      %v10281 = vpop.f32.mrb[0].mxu0
      %v10282 = vadd.f32 0.0, %v10281
      %v10283 = vpop.f32.mrb[0].mxu0
      %10284 = vmatprep.mubr.f32.mxu0 0.0
      %10285 = vmatmul.mubr.f32.gmra.mrb[0].mxu0 %v10079
      %v10286 = vpop.f32.mrb[0].mxu0
      %v10287 = vadd.f32 0.0, %v10286
      %v10288 = vpop.f32.mrb[0].mxu0
      %10289 = vmatprep.mubr.f32.mxu0 0.0
      %10290 = vmatmul.mubr.f32.gmra.mrb[0].mxu0 %v10082
      %v10291 = vpop.f32.mrb[0].mxu0
      %v10292 = vadd.f32 0.0, %v10291
      %v10293 = vpop.f32.mrb[0].mxu0
      %10294 = vmatprep.mubr.f32.mxu0 0.0
      %10295 = vmatmul.mubr.f32.gmra.mrb[0].mxu0 %v10085
      %v10296 = vpop.f32.mrb[0].mxu0
      %v10297 = vadd.f32 0.0, %v10296
      %v10298 = vpop.f32.mrb[0].mxu0
      %10299 = vmatprep.mubr.f32.mxu0 0.0
      %10300 = vmatmul.mubr.f32.gmra.mrb[0].mxu0 %v10088
      %v10301 = vpop.f32.mrb[0].mxu0
      %v10302 = vadd.f32 0.0, %v10301
      %v10303 = vpop.f32.mrb[0].mxu0
      %10304 = vmatprep.mubr.f32.mxu0 0.0
      %10305 = vmatmul.mubr.f32.gmra.mrb[0].mxu0 %v10091
      %v10306 = vpop.f32.mrb[0].mxu0
      %v10307 = vadd.f32 0.0, %v10306
      %v10308 = vpop.f32.mrb[0].mxu0
      %10309 = vmatprep.mubr.f32.mxu0 0.0
      %10310 = vmatmul.mubr.f32.gmra.mrb[0].mxu0 %v10094
      %v10311 = vpop.f32.mrb[0].mxu0
      %v10312 = vadd.f32 0.0, %v10311
      %v10313 = vpop.f32.mrb[0].mxu0
      %10314 = vmatprep.mubr.f32.mxu0 0.0
      %10315 = vmatmul.mubr.f32.gmra.mrb[0].mxu0 %v10097
      %v10316 = vpop.f32.mrb[0].mxu0
      %v10317 = vadd.f32 0.0, %v10316
      %v10318 = vpop.f32.mrb[0].mxu0
      %10319 = vmatprep.mubr.f32.mxu0 0.0
      %10320 = vmatmul.mubr.f32.gmra.mrb[0].mxu0 %v10100
      %v10321 = vpop.f32.mrb[0].mxu0
      %v10322 = vadd.f32 0.0, %v10321
      %v10323 = vpop.f32.mrb[0].mxu0
      %10324 = vmatprep.mubr.f32.mxu0 0.0
      %10325 = vmatmul.mubr.f32.gmra.mrb[0].mxu0 %v10103
      %v10326 = vpop.f32.mrb[0].mxu0
      %v10327 = vadd.f32 0.0, %v10326
      %v10328 = vpop.f32.mrb[0].mxu0
      %10329 = vdwg.mxu0
      %v10330 = vadd.f32 %v9942, %v10172
      %v10331 = vadd.f32 %v9943, %v10177
      %v10332 = vadd.f32 %v9944, %v10182
      %v10333 = vadd.f32 %v9945, %v10187
      %v10334 = vadd.f32 %v9946, %v10192
      %v10335 = vadd.f32 %v9947, %v10197
      %v10336 = vadd.f32 %v9948, %v10202
      %v10337 = vadd.f32 %v9949, %v10207
      %v10338 = vadd.f32 %v9950, %v10212
      %v10339 = vadd.f32 %v9951, %v10217
      %v10340 = vadd.f32 %v9952, %v10222
      %v10341 = vadd.f32 %v9953, %v10227
      %v10342 = vadd.f32 %v9954, %v10232
      %v10343 = vadd.f32 %v9955, %v10237
      %v10344 = vadd.f32 %v9956, %v10242
      %v10345 = vadd.f32 %v9957, %v10247
      %v10346 = vadd.f32 %v9958, %v10252
      %v10347 = vadd.f32 %v9959, %v10257
      %v10348 = vadd.f32 %v9960, %v10262
      %v10349 = vadd.f32 %v9961, %v10267
      %v10350 = vadd.f32 %v9962, %v10272
      %v10351 = vadd.f32 %v9963, %v10277
      %v10352 = vadd.f32 %v9964, %v10282
      %v10353 = vadd.f32 %v9965, %v10287
      %v10354 = vadd.f32 %v9966, %v10292
      %v10355 = vadd.f32 %v9967, %v10297
      %v10356 = vadd.f32 %v9968, %v10302
      %v10357 = vadd.f32 %v9969, %v10307
      %v10358 = vadd.f32 %v9970, %v10312
      %v10359 = vadd.f32 %v9971, %v10317
      %v10360 = vadd.f32 %v9972, %v10322
      %v10361 = vadd.f32 %v9973, %v10327
      %v10362 = vld [vmem:[%s9974 + $0x1] sm:$0xff]
      %v10363 = vld [vmem:[%s9974 + $0x9] sm:$0xff]
      %v10364 = vld [vmem:[%s9974 + $0x19] sm:$0xff]
      %v10365 = vld [vmem:[%s9974 + $0x21] sm:$0xff]
      %v10366 = vld [vmem:[%s9974 + $0x31] sm:$0xff]
      %v10367 = vld [vmem:[%s9974 + $0x39] sm:$0xff]
      %v10368 = vld [vmem:[%s9974 + $0x49] sm:$0xff]
      %v10369 = vld [vmem:[%s9974 + $0x51] sm:$0xff]
      %v10370 = vld [vmem:[%s9974 + $0x61] sm:$0xff]
      %v10371 = vld [vmem:[%s9974 + $0x69] sm:$0xff]
      %v10372 = vld [vmem:[%s9974 + $0x79] sm:$0xff]
      %v10373 = vld [vmem:[%s9974 + $0x81] sm:$0xff]
      %v10374 = vld [vmem:[%s9974 + $0x91] sm:$0xff]
      %v10375 = vld [vmem:[%s9974 + $0x99] sm:$0xff]
      %v10376 = vld [vmem:[%s9974 + $0xa9] sm:$0xff]
      %v10377 = vld [vmem:[%s9974 + $0xb1] sm:$0xff]
      %v10378 = vld [vmem:[%s9974 + $0xc1] sm:$0xff]
      %v10379 = vld [vmem:[%s9974 + $0xc9] sm:$0xff]
      %v10380 = vld [vmem:[%s9974 + $0xd9] sm:$0xff]
      %v10381 = vld [vmem:[%s9974 + $0xe1] sm:$0xff]
      %v10382 = vld [vmem:[%s9974 + $0xf1] sm:$0xff]
      %v10383 = vld [vmem:[%s9974 + $0xf9] sm:$0xff]
      %v10384 = vld [vmem:[%s9974 + $0x109] sm:$0xff]
      %v10385 = vld [vmem:[%s9974 + $0x111] sm:$0xff]
      %v10386 = vld [vmem:[%s9974 + $0x121] sm:$0xff]
      %v10387 = vld [vmem:[%s9974 + $0x129] sm:$0xff]
      %v10388 = vld [vmem:[%s9974 + $0x139] sm:$0xff]
      %v10389 = vld [vmem:[%s9974 + $0x141] sm:$0xff]
      %v10390 = vld [vmem:[%s9974 + $0x151] sm:$0xff]
      %v10391 = vld [vmem:[%s9974 + $0x159] sm:$0xff]
      %v10392 = vld [vmem:[%s9974 + $0x169] sm:$0xff]
      %v10393 = vld [vmem:[%s9974 + $0x171] sm:$0xff]
      %s10394 = scalar_lea.vmem %s4, 56
      %v10395 = vld [vmem:[%s10394] sm:$0xff]
      %v10397 = vsel %vm4074, %v10362, 0
      %v10400 = vsel %vm4074, %v10363, 0
      %v10403 = vsel %vm4074, %v10364, 0
      %v10406 = vsel %vm4074, %v10365, 0
      %v10409 = vsel %vm4074, %v10366, 0
      %v10412 = vsel %vm4074, %v10367, 0
      %v10415 = vsel %vm4074, %v10368, 0
      %v10418 = vsel %vm4074, %v10369, 0
      %v10421 = vsel %vm4074, %v10370, 0
      %v10424 = vsel %vm4074, %v10371, 0
      %v10427 = vsel %vm4074, %v10372, 0
      %v10430 = vsel %vm4074, %v10373, 0
      %v10433 = vsel %vm4074, %v10374, 0
      %v10436 = vsel %vm4074, %v10375, 0
      %v10439 = vsel %vm4074, %v10376, 0
      %v10442 = vsel %vm4074, %v10377, 0
      %v10445 = vsel %vm4074, %v10378, 0
      %v10448 = vsel %vm4074, %v10379, 0
      %v10451 = vsel %vm4074, %v10380, 0
      %v10454 = vsel %vm4074, %v10381, 0
      %v10457 = vsel %vm4074, %v10382, 0
      %v10460 = vsel %vm4074, %v10383, 0
      %v10463 = vsel %vm4074, %v10384, 0
      %v10466 = vsel %vm4074, %v10385, 0
      %v10469 = vsel %vm4074, %v10386, 0
      %v10472 = vsel %vm4074, %v10387, 0
      %v10475 = vsel %vm4074, %v10388, 0
      %v10478 = vsel %vm4074, %v10389, 0
      %v10481 = vsel %vm4074, %v10390, 0
      %v10484 = vsel %vm4074, %v10391, 0
      %v10487 = vsel %vm4074, %v10392, 0
      %v10490 = vsel %vm4074, %v10393, 0
      %10492 = vmatprep.subr.mxu0 0.0
      %10493 = vmatpush1.msra.mxu0 %v10395
      %10494 = vmatprep.subr.mxu0 0.0
      %10495 = vmatpush1.msra.mxu0 0.0
      %10496 = vmatprep.subr.mxu0 0.0
      %10497 = vmatpush1.msra.mxu0 0.0
      %10498 = vmatprep.subr.mxu0 0.0
      %10499 = vmatpush1.msra.mxu0 0.0
      %10500 = vmatprep.subr.mxu0 0.0
      %10501 = vmatpush1.msra.mxu0 0.0
      %10502 = vmatprep.subr.mxu0 0.0
      %10503 = vmatpush1.msra.mxu0 0.0
      %10504 = vmatprep.subr.mxu0 0.0
      %10505 = vmatpush1.msra.mxu0 0.0
      %10506 = vmatprep.subr.mxu0 0.0
      %10507 = vmatpush1.msra.mxu0 0.0
      %10508 = vmatprep.subr.mxu0 0.0
      %10509 = vmatpush1.msra.mxu0 0.0
      %10510 = vmatprep.subr.mxu0 0.0
      %10511 = vmatpush1.msra.mxu0 0.0
      %10512 = vmatprep.subr.mxu0 0.0
      %10513 = vmatpush1.msra.mxu0 0.0
      %10514 = vmatprep.subr.mxu0 0.0
      %10515 = vmatpush1.msra.mxu0 0.0
      %10516 = vmatprep.subr.mxu0 0.0
      %10517 = vmatpush1.msra.mxu0 0.0
      %10518 = vmatprep.subr.mxu0 0.0
      %10519 = vmatpush1.msra.mxu0 0.0
      %10520 = vmatprep.subr.mxu0 0.0
      %10521 = vmatpush1.msra.mxu0 0.0
      %10522 = vmatprep.subr.mxu0 0.0
      %10523 = vmatpush1.msra.mxu0 0.0
      %10524 = vmatprep.subr.mxu0 0.0
      %10525 = vmatpush1.msra.mxu0 0.0
      %10526 = vmatprep.subr.mxu0 0.0
      %10527 = vmatpush1.msra.mxu0 0.0
      %10528 = vmatprep.subr.mxu0 0.0
      %10529 = vmatpush1.msra.mxu0 0.0
      %10530 = vmatprep.subr.mxu0 0.0
      %10531 = vmatpush1.msra.mxu0 0.0
      %10532 = vmatprep.subr.mxu0 0.0
      %10533 = vmatpush1.msra.mxu0 0.0
      %10534 = vmatprep.subr.mxu0 0.0
      %10535 = vmatpush1.msra.mxu0 0.0
      %10536 = vmatprep.subr.mxu0 0.0
      %10537 = vmatpush1.msra.mxu0 0.0
      %10538 = vmatprep.subr.mxu0 0.0
      %10539 = vmatpush1.msra.mxu0 0.0
      %10540 = vmatprep.subr.mxu0 0.0
      %10541 = vmatpush1.msra.mxu0 0.0
      %10542 = vmatprep.subr.mxu0 0.0
      %10543 = vmatpush1.msra.mxu0 0.0
      %10544 = vmatprep.subr.mxu0 0.0
      %10545 = vmatpush1.msra.mxu0 0.0
      %10546 = vmatprep.subr.mxu0 0.0
      %10547 = vmatpush1.msra.mxu0 0.0
      %10548 = vmatprep.subr.mxu0 0.0
      %10549 = vmatpush1.msra.mxu0 0.0
      %10550 = vmatprep.subr.mxu0 0.0
      %10551 = vmatpush1.msra.mxu0 0.0
      %10552 = vmatprep.subr.mxu0 0.0
      %10553 = vmatpush1.msra.mxu0 0.0
      %10554 = vmatprep.subr.mxu0 0.0
      %10555 = vmatpush1.msra.mxu0 0.0
      %10556 = vmatprep.mubr.f32.mxu0 0.0
      %10557 = vmatmul.mubr.f32.gmra.mrb[0].mxu0 %v10397
      %v10558 = vpop.f32.mrb[0].mxu0
      %v10559 = vadd.f32 0.0, %v10558
      %v10560 = vpop.f32.mrb[0].mxu0
      %10561 = vmatprep.mubr.f32.mxu0 0.0
      %10562 = vmatmul.mubr.f32.gmra.mrb[0].mxu0 %v10400
      %v10563 = vpop.f32.mrb[0].mxu0
      %v10564 = vadd.f32 0.0, %v10563
      %v10565 = vpop.f32.mrb[0].mxu0
      %10566 = vmatprep.mubr.f32.mxu0 0.0
      %10567 = vmatmul.mubr.f32.gmra.mrb[0].mxu0 %v10403
      %v10568 = vpop.f32.mrb[0].mxu0
      %v10569 = vadd.f32 0.0, %v10568
      %v10570 = vpop.f32.mrb[0].mxu0
      %10571 = vmatprep.mubr.f32.mxu0 0.0
      %10572 = vmatmul.mubr.f32.gmra.mrb[0].mxu0 %v10406
      %v10573 = vpop.f32.mrb[0].mxu0
      %v10574 = vadd.f32 0.0, %v10573
      %v10575 = vpop.f32.mrb[0].mxu0
      %10576 = vmatprep.mubr.f32.mxu0 0.0
      %10577 = vmatmul.mubr.f32.gmra.mrb[0].mxu0 %v10409
      %v10578 = vpop.f32.mrb[0].mxu0
      %v10579 = vadd.f32 0.0, %v10578
      %v10580 = vpop.f32.mrb[0].mxu0
      %10581 = vmatprep.mubr.f32.mxu0 0.0
      %10582 = vmatmul.mubr.f32.gmra.mrb[0].mxu0 %v10412
      %v10583 = vpop.f32.mrb[0].mxu0
      %v10584 = vadd.f32 0.0, %v10583
      %v10585 = vpop.f32.mrb[0].mxu0
      %10586 = vmatprep.mubr.f32.mxu0 0.0
      %10587 = vmatmul.mubr.f32.gmra.mrb[0].mxu0 %v10415
      %v10588 = vpop.f32.mrb[0].mxu0
      %v10589 = vadd.f32 0.0, %v10588
      %v10590 = vpop.f32.mrb[0].mxu0
      %10591 = vmatprep.mubr.f32.mxu0 0.0
      %10592 = vmatmul.mubr.f32.gmra.mrb[0].mxu0 %v10418
      %v10593 = vpop.f32.mrb[0].mxu0
      %v10594 = vadd.f32 0.0, %v10593
      %v10595 = vpop.f32.mrb[0].mxu0
      %10596 = vmatprep.mubr.f32.mxu0 0.0
      %10597 = vmatmul.mubr.f32.gmra.mrb[0].mxu0 %v10421
      %v10598 = vpop.f32.mrb[0].mxu0
      %v10599 = vadd.f32 0.0, %v10598
      %v10600 = vpop.f32.mrb[0].mxu0
      %10601 = vmatprep.mubr.f32.mxu0 0.0
      %10602 = vmatmul.mubr.f32.gmra.mrb[0].mxu0 %v10424
      %v10603 = vpop.f32.mrb[0].mxu0
      %v10604 = vadd.f32 0.0, %v10603
      %v10605 = vpop.f32.mrb[0].mxu0
      %10606 = vmatprep.mubr.f32.mxu0 0.0
      %10607 = vmatmul.mubr.f32.gmra.mrb[0].mxu0 %v10427
      %v10608 = vpop.f32.mrb[0].mxu0
      %v10609 = vadd.f32 0.0, %v10608
      %v10610 = vpop.f32.mrb[0].mxu0
      %10611 = vmatprep.mubr.f32.mxu0 0.0
      %10612 = vmatmul.mubr.f32.gmra.mrb[0].mxu0 %v10430
      %v10613 = vpop.f32.mrb[0].mxu0
      %v10614 = vadd.f32 0.0, %v10613
      %v10615 = vpop.f32.mrb[0].mxu0
      %10616 = vmatprep.mubr.f32.mxu0 0.0
      %10617 = vmatmul.mubr.f32.gmra.mrb[0].mxu0 %v10433
      %v10618 = vpop.f32.mrb[0].mxu0
      %v10619 = vadd.f32 0.0, %v10618
      %v10620 = vpop.f32.mrb[0].mxu0
      %10621 = vmatprep.mubr.f32.mxu0 0.0
      %10622 = vmatmul.mubr.f32.gmra.mrb[0].mxu0 %v10436
      %v10623 = vpop.f32.mrb[0].mxu0
      %v10624 = vadd.f32 0.0, %v10623
      %v10625 = vpop.f32.mrb[0].mxu0
      %10626 = vmatprep.mubr.f32.mxu0 0.0
      %10627 = vmatmul.mubr.f32.gmra.mrb[0].mxu0 %v10439
      %v10628 = vpop.f32.mrb[0].mxu0
      %v10629 = vadd.f32 0.0, %v10628
      %v10630 = vpop.f32.mrb[0].mxu0
      %10631 = vmatprep.mubr.f32.mxu0 0.0
      %10632 = vmatmul.mubr.f32.gmra.mrb[0].mxu0 %v10442
      %v10633 = vpop.f32.mrb[0].mxu0
      %v10634 = vadd.f32 0.0, %v10633
      %v10635 = vpop.f32.mrb[0].mxu0
      %10636 = vmatprep.mubr.f32.mxu0 0.0
      %10637 = vmatmul.mubr.f32.gmra.mrb[0].mxu0 %v10445
      %v10638 = vpop.f32.mrb[0].mxu0
      %v10639 = vadd.f32 0.0, %v10638
      %v10640 = vpop.f32.mrb[0].mxu0
      %10641 = vmatprep.mubr.f32.mxu0 0.0
      %10642 = vmatmul.mubr.f32.gmra.mrb[0].mxu0 %v10448
      %v10643 = vpop.f32.mrb[0].mxu0
      %v10644 = vadd.f32 0.0, %v10643
      %v10645 = vpop.f32.mrb[0].mxu0
      %10646 = vmatprep.mubr.f32.mxu0 0.0
      %10647 = vmatmul.mubr.f32.gmra.mrb[0].mxu0 %v10451
      %v10648 = vpop.f32.mrb[0].mxu0
      %v10649 = vadd.f32 0.0, %v10648
      %v10650 = vpop.f32.mrb[0].mxu0
      %10651 = vmatprep.mubr.f32.mxu0 0.0
      %10652 = vmatmul.mubr.f32.gmra.mrb[0].mxu0 %v10454
      %v10653 = vpop.f32.mrb[0].mxu0
      %v10654 = vadd.f32 0.0, %v10653
      %v10655 = vpop.f32.mrb[0].mxu0
      %10656 = vmatprep.mubr.f32.mxu0 0.0
      %10657 = vmatmul.mubr.f32.gmra.mrb[0].mxu0 %v10457
      %v10658 = vpop.f32.mrb[0].mxu0
      %v10659 = vadd.f32 0.0, %v10658
      %v10660 = vpop.f32.mrb[0].mxu0
      %10661 = vmatprep.mubr.f32.mxu0 0.0
      %10662 = vmatmul.mubr.f32.gmra.mrb[0].mxu0 %v10460
      %v10663 = vpop.f32.mrb[0].mxu0
      %v10664 = vadd.f32 0.0, %v10663
      %v10665 = vpop.f32.mrb[0].mxu0
      %10666 = vmatprep.mubr.f32.mxu0 0.0
      %10667 = vmatmul.mubr.f32.gmra.mrb[0].mxu0 %v10463
      %v10668 = vpop.f32.mrb[0].mxu0
      %v10669 = vadd.f32 0.0, %v10668
      %v10670 = vpop.f32.mrb[0].mxu0
      %10671 = vmatprep.mubr.f32.mxu0 0.0
      %10672 = vmatmul.mubr.f32.gmra.mrb[0].mxu0 %v10466
      %v10673 = vpop.f32.mrb[0].mxu0
      %v10674 = vadd.f32 0.0, %v10673
      %v10675 = vpop.f32.mrb[0].mxu0
      %10676 = vmatprep.mubr.f32.mxu0 0.0
      %10677 = vmatmul.mubr.f32.gmra.mrb[0].mxu0 %v10469
      %v10678 = vpop.f32.mrb[0].mxu0
      %v10679 = vadd.f32 0.0, %v10678
      %v10680 = vpop.f32.mrb[0].mxu0
      %10681 = vmatprep.mubr.f32.mxu0 0.0
      %10682 = vmatmul.mubr.f32.gmra.mrb[0].mxu0 %v10472
      %v10683 = vpop.f32.mrb[0].mxu0
      %v10684 = vadd.f32 0.0, %v10683
      %v10685 = vpop.f32.mrb[0].mxu0
      %10686 = vmatprep.mubr.f32.mxu0 0.0
      %10687 = vmatmul.mubr.f32.gmra.mrb[0].mxu0 %v10475
      %v10688 = vpop.f32.mrb[0].mxu0
      %v10689 = vadd.f32 0.0, %v10688
      %v10690 = vpop.f32.mrb[0].mxu0
      %10691 = vmatprep.mubr.f32.mxu0 0.0
      %10692 = vmatmul.mubr.f32.gmra.mrb[0].mxu0 %v10478
      %v10693 = vpop.f32.mrb[0].mxu0
      %v10694 = vadd.f32 0.0, %v10693
      %v10695 = vpop.f32.mrb[0].mxu0
      %10696 = vmatprep.mubr.f32.mxu0 0.0
      %10697 = vmatmul.mubr.f32.gmra.mrb[0].mxu0 %v10481
      %v10698 = vpop.f32.mrb[0].mxu0
      %v10699 = vadd.f32 0.0, %v10698
      %v10700 = vpop.f32.mrb[0].mxu0
      %10701 = vmatprep.mubr.f32.mxu0 0.0
      %10702 = vmatmul.mubr.f32.gmra.mrb[0].mxu0 %v10484
      %v10703 = vpop.f32.mrb[0].mxu0
      %v10704 = vadd.f32 0.0, %v10703
      %v10705 = vpop.f32.mrb[0].mxu0
      %10706 = vmatprep.mubr.f32.mxu0 0.0
      %10707 = vmatmul.mubr.f32.gmra.mrb[0].mxu0 %v10487
      %v10708 = vpop.f32.mrb[0].mxu0
      %v10709 = vadd.f32 0.0, %v10708
      %v10710 = vpop.f32.mrb[0].mxu0
      %10711 = vmatprep.mubr.f32.mxu0 0.0
      %10712 = vmatmul.mubr.f32.gmra.mrb[0].mxu0 %v10490
      %v10713 = vpop.f32.mrb[0].mxu0
      %v10714 = vadd.f32 0.0, %v10713
      %v10715 = vpop.f32.mrb[0].mxu0
      %10716 = vdwg.mxu0
      %v10717 = vadd.f32 %v10330, %v10559
      %v10718 = vadd.f32 %v10331, %v10564
      %v10719 = vadd.f32 %v10332, %v10569
      %v10720 = vadd.f32 %v10333, %v10574
      %v10721 = vadd.f32 %v10334, %v10579
      %v10722 = vadd.f32 %v10335, %v10584
      %v10723 = vadd.f32 %v10336, %v10589
      %v10724 = vadd.f32 %v10337, %v10594
      %v10725 = vadd.f32 %v10338, %v10599
      %v10726 = vadd.f32 %v10339, %v10604
      %v10727 = vadd.f32 %v10340, %v10609
      %v10728 = vadd.f32 %v10341, %v10614
      %v10729 = vadd.f32 %v10342, %v10619
      %v10730 = vadd.f32 %v10343, %v10624
      %v10731 = vadd.f32 %v10344, %v10629
      %v10732 = vadd.f32 %v10345, %v10634
      %v10733 = vadd.f32 %v10346, %v10639
      %v10734 = vadd.f32 %v10347, %v10644
      %v10735 = vadd.f32 %v10348, %v10649
      %v10736 = vadd.f32 %v10349, %v10654
      %v10737 = vadd.f32 %v10350, %v10659
      %v10738 = vadd.f32 %v10351, %v10664
      %v10739 = vadd.f32 %v10352, %v10669
      %v10740 = vadd.f32 %v10353, %v10674
      %v10741 = vadd.f32 %v10354, %v10679
      %v10742 = vadd.f32 %v10355, %v10684
      %v10743 = vadd.f32 %v10356, %v10689
      %v10744 = vadd.f32 %v10357, %v10694
      %v10745 = vadd.f32 %v10358, %v10699
      %v10746 = vadd.f32 %v10359, %v10704
      %v10747 = vadd.f32 %v10360, %v10709
      %v10748 = vadd.f32 %v10361, %v10714
      %v10749 = vld [vmem:[%s9974 + $0x2] sm:$0xff]
      %v10750 = vld [vmem:[%s9974 + $0xa] sm:$0xff]
      %v10751 = vld [vmem:[%s9974 + $0x1a] sm:$0xff]
      %v10752 = vld [vmem:[%s9974 + $0x22] sm:$0xff]
      %v10753 = vld [vmem:[%s9974 + $0x32] sm:$0xff]
      %v10754 = vld [vmem:[%s9974 + $0x3a] sm:$0xff]
      %v10755 = vld [vmem:[%s9974 + $0x4a] sm:$0xff]
      %v10756 = vld [vmem:[%s9974 + $0x52] sm:$0xff]
      %v10757 = vld [vmem:[%s9974 + $0x62] sm:$0xff]
      %v10758 = vld [vmem:[%s9974 + $0x6a] sm:$0xff]
      %v10759 = vld [vmem:[%s9974 + $0x7a] sm:$0xff]
      %v10760 = vld [vmem:[%s9974 + $0x82] sm:$0xff]
      %v10761 = vld [vmem:[%s9974 + $0x92] sm:$0xff]
      %v10762 = vld [vmem:[%s9974 + $0x9a] sm:$0xff]
      %v10763 = vld [vmem:[%s9974 + $0xaa] sm:$0xff]
      %v10764 = vld [vmem:[%s9974 + $0xb2] sm:$0xff]
      %v10765 = vld [vmem:[%s9974 + $0xc2] sm:$0xff]
      %v10766 = vld [vmem:[%s9974 + $0xca] sm:$0xff]
      %v10767 = vld [vmem:[%s9974 + $0xda] sm:$0xff]
      %v10768 = vld [vmem:[%s9974 + $0xe2] sm:$0xff]
      %v10769 = vld [vmem:[%s9974 + $0xf2] sm:$0xff]
      %v10770 = vld [vmem:[%s9974 + $0xfa] sm:$0xff]
      %v10771 = vld [vmem:[%s9974 + $0x10a] sm:$0xff]
      %v10772 = vld [vmem:[%s9974 + $0x112] sm:$0xff]
      %v10773 = vld [vmem:[%s9974 + $0x122] sm:$0xff]
      %v10774 = vld [vmem:[%s9974 + $0x12a] sm:$0xff]
      %v10775 = vld [vmem:[%s9974 + $0x13a] sm:$0xff]
      %v10776 = vld [vmem:[%s9974 + $0x142] sm:$0xff]
      %v10777 = vld [vmem:[%s9974 + $0x152] sm:$0xff]
      %v10778 = vld [vmem:[%s9974 + $0x15a] sm:$0xff]
      %v10779 = vld [vmem:[%s9974 + $0x16a] sm:$0xff]
      %v10780 = vld [vmem:[%s9974 + $0x172] sm:$0xff]
      %s10781 = scalar_lea.vmem %s4, 64
      %v10782 = vld [vmem:[%s10781] sm:$0xff]
      %v10784 = vsel %vm4074, %v10749, 0
      %v10787 = vsel %vm4074, %v10750, 0
      %v10790 = vsel %vm4074, %v10751, 0
      %v10793 = vsel %vm4074, %v10752, 0
      %v10796 = vsel %vm4074, %v10753, 0
      %v10799 = vsel %vm4074, %v10754, 0
      %v10802 = vsel %vm4074, %v10755, 0
      %v10805 = vsel %vm4074, %v10756, 0
      %v10808 = vsel %vm4074, %v10757, 0
      %v10811 = vsel %vm4074, %v10758, 0
      %v10814 = vsel %vm4074, %v10759, 0
      %v10817 = vsel %vm4074, %v10760, 0
      %v10820 = vsel %vm4074, %v10761, 0
      %v10823 = vsel %vm4074, %v10762, 0
      %v10826 = vsel %vm4074, %v10763, 0
      %v10829 = vsel %vm4074, %v10764, 0
      %v10832 = vsel %vm4074, %v10765, 0
      %v10835 = vsel %vm4074, %v10766, 0
      %v10838 = vsel %vm4074, %v10767, 0
      %v10841 = vsel %vm4074, %v10768, 0
      %v10844 = vsel %vm4074, %v10769, 0
      %v10847 = vsel %vm4074, %v10770, 0
      %v10850 = vsel %vm4074, %v10771, 0
      %v10853 = vsel %vm4074, %v10772, 0
      %v10856 = vsel %vm4074, %v10773, 0
      %v10859 = vsel %vm4074, %v10774, 0
      %v10862 = vsel %vm4074, %v10775, 0
      %v10865 = vsel %vm4074, %v10776, 0
      %v10868 = vsel %vm4074, %v10777, 0
      %v10871 = vsel %vm4074, %v10778, 0
      %v10874 = vsel %vm4074, %v10779, 0
      %v10877 = vsel %vm4074, %v10780, 0
      %10879 = vmatprep.subr.mxu0 0.0
      %10880 = vmatpush1.msra.mxu0 %v10782
      %10881 = vmatprep.subr.mxu0 0.0
      %10882 = vmatpush1.msra.mxu0 0.0
      %10883 = vmatprep.subr.mxu0 0.0
      %10884 = vmatpush1.msra.mxu0 0.0
      %10885 = vmatprep.subr.mxu0 0.0
      %10886 = vmatpush1.msra.mxu0 0.0
      %10887 = vmatprep.subr.mxu0 0.0
      %10888 = vmatpush1.msra.mxu0 0.0
      %10889 = vmatprep.subr.mxu0 0.0
      %10890 = vmatpush1.msra.mxu0 0.0
      %10891 = vmatprep.subr.mxu0 0.0
      %10892 = vmatpush1.msra.mxu0 0.0
      %10893 = vmatprep.subr.mxu0 0.0
      %10894 = vmatpush1.msra.mxu0 0.0
      %10895 = vmatprep.subr.mxu0 0.0
      %10896 = vmatpush1.msra.mxu0 0.0
      %10897 = vmatprep.subr.mxu0 0.0
      %10898 = vmatpush1.msra.mxu0 0.0
      %10899 = vmatprep.subr.mxu0 0.0
      %10900 = vmatpush1.msra.mxu0 0.0
      %10901 = vmatprep.subr.mxu0 0.0
      %10902 = vmatpush1.msra.mxu0 0.0
      %10903 = vmatprep.subr.mxu0 0.0
      %10904 = vmatpush1.msra.mxu0 0.0
      %10905 = vmatprep.subr.mxu0 0.0
      %10906 = vmatpush1.msra.mxu0 0.0
      %10907 = vmatprep.subr.mxu0 0.0
      %10908 = vmatpush1.msra.mxu0 0.0
      %10909 = vmatprep.subr.mxu0 0.0
      %10910 = vmatpush1.msra.mxu0 0.0
      %10911 = vmatprep.subr.mxu0 0.0
      %10912 = vmatpush1.msra.mxu0 0.0
      %10913 = vmatprep.subr.mxu0 0.0
      %10914 = vmatpush1.msra.mxu0 0.0
      %10915 = vmatprep.subr.mxu0 0.0
      %10916 = vmatpush1.msra.mxu0 0.0
      %10917 = vmatprep.subr.mxu0 0.0
      %10918 = vmatpush1.msra.mxu0 0.0
      %10919 = vmatprep.subr.mxu0 0.0
      %10920 = vmatpush1.msra.mxu0 0.0
      %10921 = vmatprep.subr.mxu0 0.0
      %10922 = vmatpush1.msra.mxu0 0.0
      %10923 = vmatprep.subr.mxu0 0.0
      %10924 = vmatpush1.msra.mxu0 0.0
      %10925 = vmatprep.subr.mxu0 0.0
      %10926 = vmatpush1.msra.mxu0 0.0
      %10927 = vmatprep.subr.mxu0 0.0
      %10928 = vmatpush1.msra.mxu0 0.0
      %10929 = vmatprep.subr.mxu0 0.0
      %10930 = vmatpush1.msra.mxu0 0.0
      %10931 = vmatprep.subr.mxu0 0.0
      %10932 = vmatpush1.msra.mxu0 0.0
      %10933 = vmatprep.subr.mxu0 0.0
      %10934 = vmatpush1.msra.mxu0 0.0
      %10935 = vmatprep.subr.mxu0 0.0
      %10936 = vmatpush1.msra.mxu0 0.0
      %10937 = vmatprep.subr.mxu0 0.0
      %10938 = vmatpush1.msra.mxu0 0.0
      %10939 = vmatprep.subr.mxu0 0.0
      %10940 = vmatpush1.msra.mxu0 0.0
      %10941 = vmatprep.subr.mxu0 0.0
      %10942 = vmatpush1.msra.mxu0 0.0
      %10943 = vmatprep.mubr.f32.mxu0 0.0
      %10944 = vmatmul.mubr.f32.gmra.mrb[0].mxu0 %v10784
      %v10945 = vpop.f32.mrb[0].mxu0
      %v10946 = vadd.f32 0.0, %v10945
      %v10947 = vpop.f32.mrb[0].mxu0
      %10948 = vmatprep.mubr.f32.mxu0 0.0
      %10949 = vmatmul.mubr.f32.gmra.mrb[0].mxu0 %v10787
      %v10950 = vpop.f32.mrb[0].mxu0
      %v10951 = vadd.f32 0.0, %v10950
      %v10952 = vpop.f32.mrb[0].mxu0
      %10953 = vmatprep.mubr.f32.mxu0 0.0
      %10954 = vmatmul.mubr.f32.gmra.mrb[0].mxu0 %v10790
      %v10955 = vpop.f32.mrb[0].mxu0
      %v10956 = vadd.f32 0.0, %v10955
      %v10957 = vpop.f32.mrb[0].mxu0
      %10958 = vmatprep.mubr.f32.mxu0 0.0
      %10959 = vmatmul.mubr.f32.gmra.mrb[0].mxu0 %v10793
      %v10960 = vpop.f32.mrb[0].mxu0
      %v10961 = vadd.f32 0.0, %v10960
      %v10962 = vpop.f32.mrb[0].mxu0
      %10963 = vmatprep.mubr.f32.mxu0 0.0
      %10964 = vmatmul.mubr.f32.gmra.mrb[0].mxu0 %v10796
      %v10965 = vpop.f32.mrb[0].mxu0
      %v10966 = vadd.f32 0.0, %v10965
      %v10967 = vpop.f32.mrb[0].mxu0
      %10968 = vmatprep.mubr.f32.mxu0 0.0
      %10969 = vmatmul.mubr.f32.gmra.mrb[0].mxu0 %v10799
      %v10970 = vpop.f32.mrb[0].mxu0
      %v10971 = vadd.f32 0.0, %v10970
      %v10972 = vpop.f32.mrb[0].mxu0
      %10973 = vmatprep.mubr.f32.mxu0 0.0
      %10974 = vmatmul.mubr.f32.gmra.mrb[0].mxu0 %v10802
      %v10975 = vpop.f32.mrb[0].mxu0
      %v10976 = vadd.f32 0.0, %v10975
      %v10977 = vpop.f32.mrb[0].mxu0
      %10978 = vmatprep.mubr.f32.mxu0 0.0
      %10979 = vmatmul.mubr.f32.gmra.mrb[0].mxu0 %v10805
      %v10980 = vpop.f32.mrb[0].mxu0
      %v10981 = vadd.f32 0.0, %v10980
      %v10982 = vpop.f32.mrb[0].mxu0
      %10983 = vmatprep.mubr.f32.mxu0 0.0
      %10984 = vmatmul.mubr.f32.gmra.mrb[0].mxu0 %v10808
      %v10985 = vpop.f32.mrb[0].mxu0
      %v10986 = vadd.f32 0.0, %v10985
      %v10987 = vpop.f32.mrb[0].mxu0
      %10988 = vmatprep.mubr.f32.mxu0 0.0
      %10989 = vmatmul.mubr.f32.gmra.mrb[0].mxu0 %v10811
      %v10990 = vpop.f32.mrb[0].mxu0
      %v10991 = vadd.f32 0.0, %v10990
      %v10992 = vpop.f32.mrb[0].mxu0
      %10993 = vmatprep.mubr.f32.mxu0 0.0
      %10994 = vmatmul.mubr.f32.gmra.mrb[0].mxu0 %v10814
      %v10995 = vpop.f32.mrb[0].mxu0
      %v10996 = vadd.f32 0.0, %v10995
      %v10997 = vpop.f32.mrb[0].mxu0
      %10998 = vmatprep.mubr.f32.mxu0 0.0
      %10999 = vmatmul.mubr.f32.gmra.mrb[0].mxu0 %v10817
      %v11000 = vpop.f32.mrb[0].mxu0
      %v11001 = vadd.f32 0.0, %v11000
      %v11002 = vpop.f32.mrb[0].mxu0
      %11003 = vmatprep.mubr.f32.mxu0 0.0
      %11004 = vmatmul.mubr.f32.gmra.mrb[0].mxu0 %v10820
      %v11005 = vpop.f32.mrb[0].mxu0
      %v11006 = vadd.f32 0.0, %v11005
      %v11007 = vpop.f32.mrb[0].mxu0
      %11008 = vmatprep.mubr.f32.mxu0 0.0
      %11009 = vmatmul.mubr.f32.gmra.mrb[0].mxu0 %v10823
      %v11010 = vpop.f32.mrb[0].mxu0
      %v11011 = vadd.f32 0.0, %v11010
      %v11012 = vpop.f32.mrb[0].mxu0
      %11013 = vmatprep.mubr.f32.mxu0 0.0
      %11014 = vmatmul.mubr.f32.gmra.mrb[0].mxu0 %v10826
      %v11015 = vpop.f32.mrb[0].mxu0
      %v11016 = vadd.f32 0.0, %v11015
      %v11017 = vpop.f32.mrb[0].mxu0
      %11018 = vmatprep.mubr.f32.mxu0 0.0
      %11019 = vmatmul.mubr.f32.gmra.mrb[0].mxu0 %v10829
      %v11020 = vpop.f32.mrb[0].mxu0
      %v11021 = vadd.f32 0.0, %v11020
      %v11022 = vpop.f32.mrb[0].mxu0
      %11023 = vmatprep.mubr.f32.mxu0 0.0
      %11024 = vmatmul.mubr.f32.gmra.mrb[0].mxu0 %v10832
      %v11025 = vpop.f32.mrb[0].mxu0
      %v11026 = vadd.f32 0.0, %v11025
      %v11027 = vpop.f32.mrb[0].mxu0
      %11028 = vmatprep.mubr.f32.mxu0 0.0
      %11029 = vmatmul.mubr.f32.gmra.mrb[0].mxu0 %v10835
      %v11030 = vpop.f32.mrb[0].mxu0
      %v11031 = vadd.f32 0.0, %v11030
      %v11032 = vpop.f32.mrb[0].mxu0
      %11033 = vmatprep.mubr.f32.mxu0 0.0
      %11034 = vmatmul.mubr.f32.gmra.mrb[0].mxu0 %v10838
      %v11035 = vpop.f32.mrb[0].mxu0
      %v11036 = vadd.f32 0.0, %v11035
      %v11037 = vpop.f32.mrb[0].mxu0
      %11038 = vmatprep.mubr.f32.mxu0 0.0
      %11039 = vmatmul.mubr.f32.gmra.mrb[0].mxu0 %v10841
      %v11040 = vpop.f32.mrb[0].mxu0
      %v11041 = vadd.f32 0.0, %v11040
      %v11042 = vpop.f32.mrb[0].mxu0
      %11043 = vmatprep.mubr.f32.mxu0 0.0
      %11044 = vmatmul.mubr.f32.gmra.mrb[0].mxu0 %v10844
      %v11045 = vpop.f32.mrb[0].mxu0
      %v11046 = vadd.f32 0.0, %v11045
      %v11047 = vpop.f32.mrb[0].mxu0
      %11048 = vmatprep.mubr.f32.mxu0 0.0
      %11049 = vmatmul.mubr.f32.gmra.mrb[0].mxu0 %v10847
      %v11050 = vpop.f32.mrb[0].mxu0
      %v11051 = vadd.f32 0.0, %v11050
      %v11052 = vpop.f32.mrb[0].mxu0
      %11053 = vmatprep.mubr.f32.mxu0 0.0
      %11054 = vmatmul.mubr.f32.gmra.mrb[0].mxu0 %v10850
      %v11055 = vpop.f32.mrb[0].mxu0
      %v11056 = vadd.f32 0.0, %v11055
      %v11057 = vpop.f32.mrb[0].mxu0
      %11058 = vmatprep.mubr.f32.mxu0 0.0
      %11059 = vmatmul.mubr.f32.gmra.mrb[0].mxu0 %v10853
      %v11060 = vpop.f32.mrb[0].mxu0
      %v11061 = vadd.f32 0.0, %v11060
      %v11062 = vpop.f32.mrb[0].mxu0
      %11063 = vmatprep.mubr.f32.mxu0 0.0
      %11064 = vmatmul.mubr.f32.gmra.mrb[0].mxu0 %v10856
      %v11065 = vpop.f32.mrb[0].mxu0
      %v11066 = vadd.f32 0.0, %v11065
      %v11067 = vpop.f32.mrb[0].mxu0
      %11068 = vmatprep.mubr.f32.mxu0 0.0
      %11069 = vmatmul.mubr.f32.gmra.mrb[0].mxu0 %v10859
      %v11070 = vpop.f32.mrb[0].mxu0
      %v11071 = vadd.f32 0.0, %v11070
      %v11072 = vpop.f32.mrb[0].mxu0
      %11073 = vmatprep.mubr.f32.mxu0 0.0
      %11074 = vmatmul.mubr.f32.gmra.mrb[0].mxu0 %v10862
      %v11075 = vpop.f32.mrb[0].mxu0
      %v11076 = vadd.f32 0.0, %v11075
      %v11077 = vpop.f32.mrb[0].mxu0
      %11078 = vmatprep.mubr.f32.mxu0 0.0
      %11079 = vmatmul.mubr.f32.gmra.mrb[0].mxu0 %v10865
      %v11080 = vpop.f32.mrb[0].mxu0
      %v11081 = vadd.f32 0.0, %v11080
      %v11082 = vpop.f32.mrb[0].mxu0
      %11083 = vmatprep.mubr.f32.mxu0 0.0
      %11084 = vmatmul.mubr.f32.gmra.mrb[0].mxu0 %v10868
      %v11085 = vpop.f32.mrb[0].mxu0
      %v11086 = vadd.f32 0.0, %v11085
      %v11087 = vpop.f32.mrb[0].mxu0
      %11088 = vmatprep.mubr.f32.mxu0 0.0
      %11089 = vmatmul.mubr.f32.gmra.mrb[0].mxu0 %v10871
      %v11090 = vpop.f32.mrb[0].mxu0
      %v11091 = vadd.f32 0.0, %v11090
      %v11092 = vpop.f32.mrb[0].mxu0
      %11093 = vmatprep.mubr.f32.mxu0 0.0
      %11094 = vmatmul.mubr.f32.gmra.mrb[0].mxu0 %v10874
      %v11095 = vpop.f32.mrb[0].mxu0
      %v11096 = vadd.f32 0.0, %v11095
      %v11097 = vpop.f32.mrb[0].mxu0
      %11098 = vmatprep.mubr.f32.mxu0 0.0
      %11099 = vmatmul.mubr.f32.gmra.mrb[0].mxu0 %v10877
      %v11100 = vpop.f32.mrb[0].mxu0
      %v11101 = vadd.f32 0.0, %v11100
      %v11102 = vpop.f32.mrb[0].mxu0
      %11103 = vdwg.mxu0
      %v11104 = vadd.f32 %v10717, %v10946
      %v11105 = vadd.f32 %v10718, %v10951
      %v11106 = vadd.f32 %v10719, %v10956
      %v11107 = vadd.f32 %v10720, %v10961
      %v11108 = vadd.f32 %v10721, %v10966
      %v11109 = vadd.f32 %v10722, %v10971
      %v11110 = vadd.f32 %v10723, %v10976
      %v11111 = vadd.f32 %v10724, %v10981
      %v11112 = vadd.f32 %v10725, %v10986
      %v11113 = vadd.f32 %v10726, %v10991
      %v11114 = vadd.f32 %v10727, %v10996
      %v11115 = vadd.f32 %v10728, %v11001
      %v11116 = vadd.f32 %v10729, %v11006
      %v11117 = vadd.f32 %v10730, %v11011
      %v11118 = vadd.f32 %v10731, %v11016
      %v11119 = vadd.f32 %v10732, %v11021
      %v11120 = vadd.f32 %v10733, %v11026
      %v11121 = vadd.f32 %v10734, %v11031
      %v11122 = vadd.f32 %v10735, %v11036
      %v11123 = vadd.f32 %v10736, %v11041
      %v11124 = vadd.f32 %v10737, %v11046
      %v11125 = vadd.f32 %v10738, %v11051
      %v11126 = vadd.f32 %v10739, %v11056
      %v11127 = vadd.f32 %v10740, %v11061
      %v11128 = vadd.f32 %v10741, %v11066
      %v11129 = vadd.f32 %v10742, %v11071
      %v11130 = vadd.f32 %v10743, %v11076
      %v11131 = vadd.f32 %v10744, %v11081
      %v11132 = vadd.f32 %v10745, %v11086
      %v11133 = vadd.f32 %v10746, %v11091
      %v11134 = vadd.f32 %v10747, %v11096
      %v11135 = vadd.f32 %v10748, %v11101
      %11168 = vrot.lane.b32.xlu0 %v11104, 16
      %v11169 = vpop.permute.xlu0 %11168
      %11170 = vrot.lane.b32.xlu0 %v11105, 16
      %v11171 = vpop.permute.xlu0 %11170
      %11172 = vrot.lane.b32.xlu0 %v11106, 16
      %v11173 = vpop.permute.xlu0 %11172
      %11174 = vrot.lane.b32.xlu0 %v11107, 16
      %v11175 = vpop.permute.xlu0 %11174
      %11176 = vrot.lane.b32.xlu0 %v11108, 16
      %v11177 = vpop.permute.xlu0 %11176
      %11178 = vrot.lane.b32.xlu0 %v11109, 16
      %v11179 = vpop.permute.xlu0 %11178
      %11180 = vrot.lane.b32.xlu0 %v11110, 16
      %v11181 = vpop.permute.xlu0 %11180
      %11182 = vrot.lane.b32.xlu0 %v11111, 16
      %v11183 = vpop.permute.xlu0 %11182
      %11184 = vrot.lane.b32.xlu0 %v11112, 16
      %v11185 = vpop.permute.xlu0 %11184
      %11186 = vrot.lane.b32.xlu0 %v11113, 16
      %v11187 = vpop.permute.xlu0 %11186
      %11188 = vrot.lane.b32.xlu0 %v11114, 16
      %v11189 = vpop.permute.xlu0 %11188
      %11190 = vrot.lane.b32.xlu0 %v11115, 16
      %v11191 = vpop.permute.xlu0 %11190
      %11192 = vrot.lane.b32.xlu0 %v11116, 16
      %v11193 = vpop.permute.xlu0 %11192
      %11194 = vrot.lane.b32.xlu0 %v11117, 16
      %v11195 = vpop.permute.xlu0 %11194
      %11196 = vrot.lane.b32.xlu0 %v11118, 16
      %v11197 = vpop.permute.xlu0 %11196
      %11198 = vrot.lane.b32.xlu0 %v11119, 16
      %v11199 = vpop.permute.xlu0 %11198
      %11200 = vrot.lane.b32.xlu0 %v11120, 16
      %v11201 = vpop.permute.xlu0 %11200
      %11202 = vrot.lane.b32.xlu0 %v11121, 16
      %v11203 = vpop.permute.xlu0 %11202
      %11204 = vrot.lane.b32.xlu0 %v11122, 16
      %v11205 = vpop.permute.xlu0 %11204
      %11206 = vrot.lane.b32.xlu0 %v11123, 16
      %v11207 = vpop.permute.xlu0 %11206
      %11208 = vrot.lane.b32.xlu0 %v11124, 16
      %v11209 = vpop.permute.xlu0 %11208
      %11210 = vrot.lane.b32.xlu0 %v11125, 16
      %v11211 = vpop.permute.xlu0 %11210
      %11212 = vrot.lane.b32.xlu0 %v11126, 16
      %v11213 = vpop.permute.xlu0 %11212
      %11214 = vrot.lane.b32.xlu0 %v11127, 16
      %v11215 = vpop.permute.xlu0 %11214
      %11216 = vrot.lane.b32.xlu0 %v11128, 16
      %v11217 = vpop.permute.xlu0 %11216
      %11218 = vrot.lane.b32.xlu0 %v11129, 16
      %v11219 = vpop.permute.xlu0 %11218
      %11220 = vrot.lane.b32.xlu0 %v11130, 16
      %v11221 = vpop.permute.xlu0 %11220
      %11222 = vrot.lane.b32.xlu0 %v11131, 16
      %v11223 = vpop.permute.xlu0 %11222
      %11224 = vrot.lane.b32.xlu0 %v11132, 16
      %v11225 = vpop.permute.xlu0 %11224
      %11226 = vrot.lane.b32.xlu0 %v11133, 16
      %v11227 = vpop.permute.xlu0 %11226
      %11228 = vrot.lane.b32.xlu0 %v11134, 16
      %v11229 = vpop.permute.xlu0 %11228
      %11230 = vrot.lane.b32.xlu0 %v11135, 16
      %v11231 = vpop.permute.xlu0 %11230
      %v11264 = vadd.f32 %v3975, %v11169
      %v11265 = vadd.f32 %v3976, %v11171
      %v11266 = vadd.f32 %v3977, %v11173
      %v11267 = vadd.f32 %v3978, %v11175
      %v11268 = vadd.f32 %v3979, %v11177
      %v11269 = vadd.f32 %v3980, %v11179
      %v11270 = vadd.f32 %v3981, %v11181
      %v11271 = vadd.f32 %v3982, %v11183
      %v11272 = vadd.f32 %v3983, %v11185
      %v11273 = vadd.f32 %v3984, %v11187
      %v11274 = vadd.f32 %v3985, %v11189
      %v11275 = vadd.f32 %v3986, %v11191
      %v11276 = vadd.f32 %v3987, %v11193
      %v11277 = vadd.f32 %v3988, %v11195
      %v11278 = vadd.f32 %v3989, %v11197
      %v11279 = vadd.f32 %v3990, %v11199
      %v11280 = vadd.f32 %v3991, %v11201
      %v11281 = vadd.f32 %v3992, %v11203
      %v11282 = vadd.f32 %v3993, %v11205
      %v11283 = vadd.f32 %v3994, %v11207
      %v11284 = vadd.f32 %v3995, %v11209
      %v11285 = vadd.f32 %v3996, %v11211
      %v11286 = vadd.f32 %v3997, %v11213
      %v11287 = vadd.f32 %v3998, %v11215
      %v11288 = vadd.f32 %v3999, %v11217
      %v11289 = vadd.f32 %v4000, %v11219
      %v11290 = vadd.f32 %v4001, %v11221
      %v11291 = vadd.f32 %v4002, %v11223
      %v11292 = vadd.f32 %v4003, %v11225
      %v11293 = vadd.f32 %v4004, %v11227
      %v11294 = vadd.f32 %v4005, %v11229
      %v11295 = vadd.f32 %v4006, %v11231
      %v11296 = vmax.f32 %v11264, 0.0
      %v11297 = vmax.f32 %v11265, 0.0
      %v11298 = vmax.f32 %v11266, 0.0
      %v11299 = vmax.f32 %v11267, 0.0
      %v11300 = vmax.f32 %v11268, 0.0
      %v11301 = vmax.f32 %v11269, 0.0
      %v11302 = vmax.f32 %v11270, 0.0
      %v11303 = vmax.f32 %v11271, 0.0
      %v11304 = vmax.f32 %v11272, 0.0
      %v11305 = vmax.f32 %v11273, 0.0
      %v11306 = vmax.f32 %v11274, 0.0
      %v11307 = vmax.f32 %v11275, 0.0
      %v11308 = vmax.f32 %v11276, 0.0
      %v11309 = vmax.f32 %v11277, 0.0
      %v11310 = vmax.f32 %v11278, 0.0
      %v11311 = vmax.f32 %v11279, 0.0
      %v11312 = vmax.f32 %v11280, 0.0
      %v11313 = vmax.f32 %v11281, 0.0
      %v11314 = vmax.f32 %v11282, 0.0
      %v11315 = vmax.f32 %v11283, 0.0
      %v11316 = vmax.f32 %v11284, 0.0
      %v11317 = vmax.f32 %v11285, 0.0
      %v11318 = vmax.f32 %v11286, 0.0
      %v11319 = vmax.f32 %v11287, 0.0
      %v11320 = vmax.f32 %v11288, 0.0
      %v11321 = vmax.f32 %v11289, 0.0
      %v11322 = vmax.f32 %v11290, 0.0
      %v11323 = vmax.f32 %v11291, 0.0
      %v11324 = vmax.f32 %v11292, 0.0
      %v11325 = vmax.f32 %v11293, 0.0
      %v11326 = vmax.f32 %v11294, 0.0
      %v11327 = vmax.f32 %v11295, 0.0
      %11328 = vrot.lane.b32.xlu0 %v5492, 8
      %v11329 = vpop.permute.xlu0 %11328
      %11330 = vrot.lane.b32.xlu0 %v5493, 8
      %v11331 = vpop.permute.xlu0 %11330
      %11332 = vrot.lane.b32.xlu0 %v5494, 8
      %v11333 = vpop.permute.xlu0 %11332
      %11334 = vrot.lane.b32.xlu0 %v5495, 8
      %v11335 = vpop.permute.xlu0 %11334
      %11336 = vrot.lane.b32.xlu0 %v5496, 8
      %v11337 = vpop.permute.xlu0 %11336
      %11338 = vrot.lane.b32.xlu0 %v5497, 8
      %v11339 = vpop.permute.xlu0 %11338
      %11340 = vrot.lane.b32.xlu0 %v5498, 8
      %v11341 = vpop.permute.xlu0 %11340
      %11342 = vrot.lane.b32.xlu0 %v5499, 8
      %v11343 = vpop.permute.xlu0 %11342
      %11344 = vrot.lane.b32.xlu0 %v5500, 8
      %v11345 = vpop.permute.xlu0 %11344
      %11346 = vrot.lane.b32.xlu0 %v5501, 8
      %v11347 = vpop.permute.xlu0 %11346
      %11348 = vrot.lane.b32.xlu0 %v5502, 8
      %v11349 = vpop.permute.xlu0 %11348
      %11350 = vrot.lane.b32.xlu0 %v5503, 8
      %v11351 = vpop.permute.xlu0 %11350
      %11352 = vrot.lane.b32.xlu0 %v5504, 8
      %v11353 = vpop.permute.xlu0 %11352
      %11354 = vrot.lane.b32.xlu0 %v5505, 8
      %v11355 = vpop.permute.xlu0 %11354
      %11356 = vrot.lane.b32.xlu0 %v5506, 8
      %v11357 = vpop.permute.xlu0 %11356
      %11358 = vrot.lane.b32.xlu0 %v5507, 8
      %v11359 = vpop.permute.xlu0 %11358
      %11360 = vrot.lane.b32.xlu0 %v5508, 8
      %v11361 = vpop.permute.xlu0 %11360
      %11362 = vrot.lane.b32.xlu0 %v5509, 8
      %v11363 = vpop.permute.xlu0 %11362
      %11364 = vrot.lane.b32.xlu0 %v5510, 8
      %v11365 = vpop.permute.xlu0 %11364
      %11366 = vrot.lane.b32.xlu0 %v5511, 8
      %v11367 = vpop.permute.xlu0 %11366
      %11368 = vrot.lane.b32.xlu0 %v5512, 8
      %v11369 = vpop.permute.xlu0 %11368
      %11370 = vrot.lane.b32.xlu0 %v5513, 8
      %v11371 = vpop.permute.xlu0 %11370
      %11372 = vrot.lane.b32.xlu0 %v5514, 8
      %v11373 = vpop.permute.xlu0 %11372
      %11374 = vrot.lane.b32.xlu0 %v5515, 8
      %v11375 = vpop.permute.xlu0 %11374
      %11376 = vrot.lane.b32.xlu0 %v5516, 8
      %v11377 = vpop.permute.xlu0 %11376
      %11378 = vrot.lane.b32.xlu0 %v5517, 8
      %v11379 = vpop.permute.xlu0 %11378
      %11380 = vrot.lane.b32.xlu0 %v5518, 8
      %v11381 = vpop.permute.xlu0 %11380
      %11382 = vrot.lane.b32.xlu0 %v5519, 8
      %v11383 = vpop.permute.xlu0 %11382
      %11384 = vrot.lane.b32.xlu0 %v5520, 8
      %v11385 = vpop.permute.xlu0 %11384
      %11386 = vrot.lane.b32.xlu0 %v5521, 8
      %v11387 = vpop.permute.xlu0 %11386
      %11388 = vrot.lane.b32.xlu0 %v5522, 8
      %v11389 = vpop.permute.xlu0 %11388
      %11390 = vrot.lane.b32.xlu0 %v5523, 8
      %v11391 = vpop.permute.xlu0 %11390
      %v11424 = vmul.f32 %v7589, %v11329
      %v11425 = vmul.f32 %v7591, %v11331
      %v11426 = vmul.f32 %v7593, %v11333
      %v11427 = vmul.f32 %v7595, %v11335
      %v11428 = vmul.f32 %v7597, %v11337
      %v11429 = vmul.f32 %v7599, %v11339
      %v11430 = vmul.f32 %v7601, %v11341
      %v11431 = vmul.f32 %v7603, %v11343
      %v11432 = vmul.f32 %v7605, %v11345
      %v11433 = vmul.f32 %v7607, %v11347
      %v11434 = vmul.f32 %v7609, %v11349
      %v11435 = vmul.f32 %v7611, %v11351
      %v11436 = vmul.f32 %v7613, %v11353
      %v11437 = vmul.f32 %v7615, %v11355
      %v11438 = vmul.f32 %v7617, %v11357
      %v11439 = vmul.f32 %v7619, %v11359
      %v11440 = vmul.f32 %v7621, %v11361
      %v11441 = vmul.f32 %v7623, %v11363
      %v11442 = vmul.f32 %v7625, %v11365
      %v11443 = vmul.f32 %v7627, %v11367
      %v11444 = vmul.f32 %v7629, %v11369
      %v11445 = vmul.f32 %v7631, %v11371
      %v11446 = vmul.f32 %v7633, %v11373
      %v11447 = vmul.f32 %v7635, %v11375
      %v11448 = vmul.f32 %v7637, %v11377
      %v11449 = vmul.f32 %v7639, %v11379
      %v11450 = vmul.f32 %v7641, %v11381
      %v11451 = vmul.f32 %v7643, %v11383
      %v11452 = vmul.f32 %v7645, %v11385
      %v11453 = vmul.f32 %v7647, %v11387
      %v11454 = vmul.f32 %v7649, %v11389
      %v11455 = vmul.f32 %v7651, %v11391
      %v11456 = vsub.f32 1.0, %v7589
      %v11457 = vsub.f32 1.0, %v7591
      %v11458 = vsub.f32 1.0, %v7593
      %v11459 = vsub.f32 1.0, %v7595
      %v11460 = vsub.f32 1.0, %v7597
      %v11461 = vsub.f32 1.0, %v7599
      %v11462 = vsub.f32 1.0, %v7601
      %v11463 = vsub.f32 1.0, %v7603
      %v11464 = vsub.f32 1.0, %v7605
      %v11465 = vsub.f32 1.0, %v7607
      %v11466 = vsub.f32 1.0, %v7609
      %v11467 = vsub.f32 1.0, %v7611
      %v11468 = vsub.f32 1.0, %v7613
      %v11469 = vsub.f32 1.0, %v7615
      %v11470 = vsub.f32 1.0, %v7617
      %v11471 = vsub.f32 1.0, %v7619
      %v11472 = vsub.f32 1.0, %v7621
      %v11473 = vsub.f32 1.0, %v7623
      %v11474 = vsub.f32 1.0, %v7625
      %v11475 = vsub.f32 1.0, %v7627
      %v11476 = vsub.f32 1.0, %v7629
      %v11477 = vsub.f32 1.0, %v7631
      %v11478 = vsub.f32 1.0, %v7633
      %v11479 = vsub.f32 1.0, %v7635
      %v11480 = vsub.f32 1.0, %v7637
      %v11481 = vsub.f32 1.0, %v7639
      %v11482 = vsub.f32 1.0, %v7641
      %v11483 = vsub.f32 1.0, %v7643
      %v11484 = vsub.f32 1.0, %v7645
      %v11485 = vsub.f32 1.0, %v7647
      %v11486 = vsub.f32 1.0, %v7649
      %v11487 = vsub.f32 1.0, %v7651
      %11520 = vrot.lane.b32.xlu0 %v11296, 120
      %v11521 = vpop.permute.xlu0 %11520
      %11522 = vrot.lane.b32.xlu0 %v11297, 120
      %v11523 = vpop.permute.xlu0 %11522
      %11524 = vrot.lane.b32.xlu0 %v11298, 120
      %v11525 = vpop.permute.xlu0 %11524
      %11526 = vrot.lane.b32.xlu0 %v11299, 120
      %v11527 = vpop.permute.xlu0 %11526
      %11528 = vrot.lane.b32.xlu0 %v11300, 120
      %v11529 = vpop.permute.xlu0 %11528
      %11530 = vrot.lane.b32.xlu0 %v11301, 120
      %v11531 = vpop.permute.xlu0 %11530
      %11532 = vrot.lane.b32.xlu0 %v11302, 120
      %v11533 = vpop.permute.xlu0 %11532
      %11534 = vrot.lane.b32.xlu0 %v11303, 120
      %v11535 = vpop.permute.xlu0 %11534
      %11536 = vrot.lane.b32.xlu0 %v11304, 120
      %v11537 = vpop.permute.xlu0 %11536
      %11538 = vrot.lane.b32.xlu0 %v11305, 120
      %v11539 = vpop.permute.xlu0 %11538
      %11540 = vrot.lane.b32.xlu0 %v11306, 120
      %v11541 = vpop.permute.xlu0 %11540
      %11542 = vrot.lane.b32.xlu0 %v11307, 120
      %v11543 = vpop.permute.xlu0 %11542
      %11544 = vrot.lane.b32.xlu0 %v11308, 120
      %v11545 = vpop.permute.xlu0 %11544
      %11546 = vrot.lane.b32.xlu0 %v11309, 120
      %v11547 = vpop.permute.xlu0 %11546
      %11548 = vrot.lane.b32.xlu0 %v11310, 120
      %v11549 = vpop.permute.xlu0 %11548
      %11550 = vrot.lane.b32.xlu0 %v11311, 120
      %v11551 = vpop.permute.xlu0 %11550
      %11552 = vrot.lane.b32.xlu0 %v11312, 120
      %v11553 = vpop.permute.xlu0 %11552
      %11554 = vrot.lane.b32.xlu0 %v11313, 120
      %v11555 = vpop.permute.xlu0 %11554
      %11556 = vrot.lane.b32.xlu0 %v11314, 120
      %v11557 = vpop.permute.xlu0 %11556
      %11558 = vrot.lane.b32.xlu0 %v11315, 120
      %v11559 = vpop.permute.xlu0 %11558
      %11560 = vrot.lane.b32.xlu0 %v11316, 120
      %v11561 = vpop.permute.xlu0 %11560
      %11562 = vrot.lane.b32.xlu0 %v11317, 120
      %v11563 = vpop.permute.xlu0 %11562
      %11564 = vrot.lane.b32.xlu0 %v11318, 120
      %v11565 = vpop.permute.xlu0 %11564
      %11566 = vrot.lane.b32.xlu0 %v11319, 120
      %v11567 = vpop.permute.xlu0 %11566
      %11568 = vrot.lane.b32.xlu0 %v11320, 120
      %v11569 = vpop.permute.xlu0 %11568
      %11570 = vrot.lane.b32.xlu0 %v11321, 120
      %v11571 = vpop.permute.xlu0 %11570
      %11572 = vrot.lane.b32.xlu0 %v11322, 120
      %v11573 = vpop.permute.xlu0 %11572
      %11574 = vrot.lane.b32.xlu0 %v11323, 120
      %v11575 = vpop.permute.xlu0 %11574
      %11576 = vrot.lane.b32.xlu0 %v11324, 120
      %v11577 = vpop.permute.xlu0 %11576
      %11578 = vrot.lane.b32.xlu0 %v11325, 120
      %v11579 = vpop.permute.xlu0 %11578
      %11580 = vrot.lane.b32.xlu0 %v11326, 120
      %v11581 = vpop.permute.xlu0 %11580
      %11582 = vrot.lane.b32.xlu0 %v11327, 120
      %v11583 = vpop.permute.xlu0 %11582
      %v11616 = vmul.f32 %v11456, %v11521
      %v11617 = vmul.f32 %v11457, %v11523
      %v11618 = vmul.f32 %v11458, %v11525
      %v11619 = vmul.f32 %v11459, %v11527
      %v11620 = vmul.f32 %v11460, %v11529
      %v11621 = vmul.f32 %v11461, %v11531
      %v11622 = vmul.f32 %v11462, %v11533
      %v11623 = vmul.f32 %v11463, %v11535
      %v11624 = vmul.f32 %v11464, %v11537
      %v11625 = vmul.f32 %v11465, %v11539
      %v11626 = vmul.f32 %v11466, %v11541
      %v11627 = vmul.f32 %v11467, %v11543
      %v11628 = vmul.f32 %v11468, %v11545
      %v11629 = vmul.f32 %v11469, %v11547
      %v11630 = vmul.f32 %v11470, %v11549
      %v11631 = vmul.f32 %v11471, %v11551
      %v11632 = vmul.f32 %v11472, %v11553
      %v11633 = vmul.f32 %v11473, %v11555
      %v11634 = vmul.f32 %v11474, %v11557
      %v11635 = vmul.f32 %v11475, %v11559
      %v11636 = vmul.f32 %v11476, %v11561
      %v11637 = vmul.f32 %v11477, %v11563
      %v11638 = vmul.f32 %v11478, %v11565
      %v11639 = vmul.f32 %v11479, %v11567
      %v11640 = vmul.f32 %v11480, %v11569
      %v11641 = vmul.f32 %v11481, %v11571
      %v11642 = vmul.f32 %v11482, %v11573
      %v11643 = vmul.f32 %v11483, %v11575
      %v11644 = vmul.f32 %v11484, %v11577
      %v11645 = vmul.f32 %v11485, %v11579
      %v11646 = vmul.f32 %v11486, %v11581
      %v11647 = vmul.f32 %v11487, %v11583
      %v11648 = vadd.f32 %v11424, %v11616
      %v11649 = vadd.f32 %v11425, %v11617
      %v11650 = vadd.f32 %v11426, %v11618
      %v11651 = vadd.f32 %v11427, %v11619
      %v11652 = vadd.f32 %v11428, %v11620
      %v11653 = vadd.f32 %v11429, %v11621
      %v11654 = vadd.f32 %v11430, %v11622
      %v11655 = vadd.f32 %v11431, %v11623
      %v11656 = vadd.f32 %v11432, %v11624
      %v11657 = vadd.f32 %v11433, %v11625
      %v11658 = vadd.f32 %v11434, %v11626
      %v11659 = vadd.f32 %v11435, %v11627
      %v11660 = vadd.f32 %v11436, %v11628
      %v11661 = vadd.f32 %v11437, %v11629
      %v11662 = vadd.f32 %v11438, %v11630
      %v11663 = vadd.f32 %v11439, %v11631
      %v11664 = vadd.f32 %v11440, %v11632
      %v11665 = vadd.f32 %v11441, %v11633
      %v11666 = vadd.f32 %v11442, %v11634
      %v11667 = vadd.f32 %v11443, %v11635
      %v11668 = vadd.f32 %v11444, %v11636
      %v11669 = vadd.f32 %v11445, %v11637
      %v11670 = vadd.f32 %v11446, %v11638
      %v11671 = vadd.f32 %v11447, %v11639
      %v11672 = vadd.f32 %v11448, %v11640
      %v11673 = vadd.f32 %v11449, %v11641
      %v11674 = vadd.f32 %v11450, %v11642
      %v11675 = vadd.f32 %v11451, %v11643
      %v11676 = vadd.f32 %v11452, %v11644
      %v11677 = vadd.f32 %v11453, %v11645
      %v11678 = vadd.f32 %v11454, %v11646
      %v11679 = vadd.f32 %v11455, %v11647
      %11712 = vrot.lane.b32.xlu0 %v11648, 120
      %v11713 = vpop.permute.xlu0 %11712
      %11714 = vrot.lane.b32.xlu0 %v11649, 120
      %v11715 = vpop.permute.xlu0 %11714
      %11716 = vrot.lane.b32.xlu0 %v11650, 120
      %v11717 = vpop.permute.xlu0 %11716
      %11718 = vrot.lane.b32.xlu0 %v11651, 120
      %v11719 = vpop.permute.xlu0 %11718
      %11720 = vrot.lane.b32.xlu0 %v11652, 120
      %v11721 = vpop.permute.xlu0 %11720
      %11722 = vrot.lane.b32.xlu0 %v11653, 120
      %v11723 = vpop.permute.xlu0 %11722
      %11724 = vrot.lane.b32.xlu0 %v11654, 120
      %v11725 = vpop.permute.xlu0 %11724
      %11726 = vrot.lane.b32.xlu0 %v11655, 120
      %v11727 = vpop.permute.xlu0 %11726
      %11728 = vrot.lane.b32.xlu0 %v11656, 120
      %v11729 = vpop.permute.xlu0 %11728
      %11730 = vrot.lane.b32.xlu0 %v11657, 120
      %v11731 = vpop.permute.xlu0 %11730
      %11732 = vrot.lane.b32.xlu0 %v11658, 120
      %v11733 = vpop.permute.xlu0 %11732
      %11734 = vrot.lane.b32.xlu0 %v11659, 120
      %v11735 = vpop.permute.xlu0 %11734
      %11736 = vrot.lane.b32.xlu0 %v11660, 120
      %v11737 = vpop.permute.xlu0 %11736
      %11738 = vrot.lane.b32.xlu0 %v11661, 120
      %v11739 = vpop.permute.xlu0 %11738
      %11740 = vrot.lane.b32.xlu0 %v11662, 120
      %v11741 = vpop.permute.xlu0 %11740
      %11742 = vrot.lane.b32.xlu0 %v11663, 120
      %v11743 = vpop.permute.xlu0 %11742
      %11744 = vrot.lane.b32.xlu0 %v11664, 120
      %v11745 = vpop.permute.xlu0 %11744
      %11746 = vrot.lane.b32.xlu0 %v11665, 120
      %v11747 = vpop.permute.xlu0 %11746
      %11748 = vrot.lane.b32.xlu0 %v11666, 120
      %v11749 = vpop.permute.xlu0 %11748
      %11750 = vrot.lane.b32.xlu0 %v11667, 120
      %v11751 = vpop.permute.xlu0 %11750
      %11752 = vrot.lane.b32.xlu0 %v11668, 120
      %v11753 = vpop.permute.xlu0 %11752
      %11754 = vrot.lane.b32.xlu0 %v11669, 120
      %v11755 = vpop.permute.xlu0 %11754
      %11756 = vrot.lane.b32.xlu0 %v11670, 120
      %v11757 = vpop.permute.xlu0 %11756
      %11758 = vrot.lane.b32.xlu0 %v11671, 120
      %v11759 = vpop.permute.xlu0 %11758
      %11760 = vrot.lane.b32.xlu0 %v11672, 120
      %v11761 = vpop.permute.xlu0 %11760
      %11762 = vrot.lane.b32.xlu0 %v11673, 120
      %v11763 = vpop.permute.xlu0 %11762
      %11764 = vrot.lane.b32.xlu0 %v11674, 120
      %v11765 = vpop.permute.xlu0 %11764
      %11766 = vrot.lane.b32.xlu0 %v11675, 120
      %v11767 = vpop.permute.xlu0 %11766
      %11768 = vrot.lane.b32.xlu0 %v11676, 120
      %v11769 = vpop.permute.xlu0 %11768
      %11770 = vrot.lane.b32.xlu0 %v11677, 120
      %v11771 = vpop.permute.xlu0 %11770
      %11772 = vrot.lane.b32.xlu0 %v11678, 120
      %v11773 = vpop.permute.xlu0 %11772
      %11774 = vrot.lane.b32.xlu0 %v11679, 120
      %v11775 = vpop.permute.xlu0 %11774
      %11808 = vst.msk [vmem:[%s5104 + $0x1] sm:$0xff] %vm4074, %v11713
      %11809 = vst.msk [vmem:[%s5104 + $0x9] sm:$0xff] %vm4074, %v11715
      %11810 = vst.msk [vmem:[%s5104 + $0x19] sm:$0xff] %vm4074, %v11717
      %11811 = vst.msk [vmem:[%s5104 + $0x21] sm:$0xff] %vm4074, %v11719
      %11812 = vst.msk [vmem:[%s5104 + $0x31] sm:$0xff] %vm4074, %v11721
      %11813 = vst.msk [vmem:[%s5104 + $0x39] sm:$0xff] %vm4074, %v11723
      %11814 = vst.msk [vmem:[%s5104 + $0x49] sm:$0xff] %vm4074, %v11725
      %11815 = vst.msk [vmem:[%s5104 + $0x51] sm:$0xff] %vm4074, %v11727
      %11816 = vst.msk [vmem:[%s5104 + $0x61] sm:$0xff] %vm4074, %v11729
      %11817 = vst.msk [vmem:[%s5104 + $0x69] sm:$0xff] %vm4074, %v11731
      %11818 = vst.msk [vmem:[%s5104 + $0x79] sm:$0xff] %vm4074, %v11733
      %11819 = vst.msk [vmem:[%s5104 + $0x81] sm:$0xff] %vm4074, %v11735
      %11820 = vst.msk [vmem:[%s5104 + $0x91] sm:$0xff] %vm4074, %v11737
      %11821 = vst.msk [vmem:[%s5104 + $0x99] sm:$0xff] %vm4074, %v11739
      %11822 = vst.msk [vmem:[%s5104 + $0xa9] sm:$0xff] %vm4074, %v11741
      %11823 = vst.msk [vmem:[%s5104 + $0xb1] sm:$0xff] %vm4074, %v11743
      %11824 = vst.msk [vmem:[%s5104 + $0xc1] sm:$0xff] %vm4074, %v11745
      %11825 = vst.msk [vmem:[%s5104 + $0xc9] sm:$0xff] %vm4074, %v11747
      %11826 = vst.msk [vmem:[%s5104 + $0xd9] sm:$0xff] %vm4074, %v11749
      %11827 = vst.msk [vmem:[%s5104 + $0xe1] sm:$0xff] %vm4074, %v11751
      %11828 = vst.msk [vmem:[%s5104 + $0xf1] sm:$0xff] %vm4074, %v11753
      %11829 = vst.msk [vmem:[%s5104 + $0xf9] sm:$0xff] %vm4074, %v11755
      %11830 = vst.msk [vmem:[%s5104 + $0x109] sm:$0xff] %vm4074, %v11757
      %11831 = vst.msk [vmem:[%s5104 + $0x111] sm:$0xff] %vm4074, %v11759
      %11832 = vst.msk [vmem:[%s5104 + $0x121] sm:$0xff] %vm4074, %v11761
      %11833 = vst.msk [vmem:[%s5104 + $0x129] sm:$0xff] %vm4074, %v11763
      %11834 = vst.msk [vmem:[%s5104 + $0x139] sm:$0xff] %vm4074, %v11765
      %11835 = vst.msk [vmem:[%s5104 + $0x141] sm:$0xff] %vm4074, %v11767
      %11836 = vst.msk [vmem:[%s5104 + $0x151] sm:$0xff] %vm4074, %v11769
      %11837 = vst.msk [vmem:[%s5104 + $0x159] sm:$0xff] %vm4074, %v11771
      %11838 = vst.msk [vmem:[%s5104 + $0x169] sm:$0xff] %vm4074, %v11773
      %11839 = vst.msk [vmem:[%s5104 + $0x171] sm:$0xff] %vm4074, %v11775
      %11840 = vst.msk [vmem:[%s307] sm:$0xff] %vm4074, %v11713
      %11841 = vst.msk [vmem:[%s307 + $0x8] sm:$0xff] %vm4074, %v11715
      %11842 = vst.msk [vmem:[%s307 + $0x10] sm:$0xff] %vm4074, %v11717
      %11843 = vst.msk [vmem:[%s307 + $0x18] sm:$0xff] %vm4074, %v11719
      %11844 = vst.msk [vmem:[%s307 + $0x20] sm:$0xff] %vm4074, %v11721
      %11845 = vst.msk [vmem:[%s307 + $0x28] sm:$0xff] %vm4074, %v11723
      %11846 = vst.msk [vmem:[%s307 + $0x30] sm:$0xff] %vm4074, %v11725
      %11847 = vst.msk [vmem:[%s307 + $0x38] sm:$0xff] %vm4074, %v11727
      %11848 = vst.msk [vmem:[%s307 + $0x40] sm:$0xff] %vm4074, %v11729
      %11849 = vst.msk [vmem:[%s307 + $0x48] sm:$0xff] %vm4074, %v11731
      %11850 = vst.msk [vmem:[%s307 + $0x50] sm:$0xff] %vm4074, %v11733
      %11851 = vst.msk [vmem:[%s307 + $0x58] sm:$0xff] %vm4074, %v11735
      %11852 = vst.msk [vmem:[%s307 + $0x60] sm:$0xff] %vm4074, %v11737
      %11853 = vst.msk [vmem:[%s307 + $0x68] sm:$0xff] %vm4074, %v11739
      %11854 = vst.msk [vmem:[%s307 + $0x70] sm:$0xff] %vm4074, %v11741
      %11855 = vst.msk [vmem:[%s307 + $0x78] sm:$0xff] %vm4074, %v11743
      %11856 = vst.msk [vmem:[%s307 + $0x80] sm:$0xff] %vm4074, %v11745
      %11857 = vst.msk [vmem:[%s307 + $0x88] sm:$0xff] %vm4074, %v11747
      %11858 = vst.msk [vmem:[%s307 + $0x90] sm:$0xff] %vm4074, %v11749
      %11859 = vst.msk [vmem:[%s307 + $0x98] sm:$0xff] %vm4074, %v11751
      %11860 = vst.msk [vmem:[%s307 + $0xa0] sm:$0xff] %vm4074, %v11753
      %11861 = vst.msk [vmem:[%s307 + $0xa8] sm:$0xff] %vm4074, %v11755
      %11862 = vst.msk [vmem:[%s307 + $0xb0] sm:$0xff] %vm4074, %v11757
      %11863 = vst.msk [vmem:[%s307 + $0xb8] sm:$0xff] %vm4074, %v11759
      %11864 = vst.msk [vmem:[%s307 + $0xc0] sm:$0xff] %vm4074, %v11761
      %11865 = vst.msk [vmem:[%s307 + $0xc8] sm:$0xff] %vm4074, %v11763
      %11866 = vst.msk [vmem:[%s307 + $0xd0] sm:$0xff] %vm4074, %v11765
      %11867 = vst.msk [vmem:[%s307 + $0xd8] sm:$0xff] %vm4074, %v11767
      %11868 = vst.msk [vmem:[%s307 + $0xe0] sm:$0xff] %vm4074, %v11769
      %11869 = vst.msk [vmem:[%s307 + $0xe8] sm:$0xff] %vm4074, %v11771
      %11870 = vst.msk [vmem:[%s307 + $0xf0] sm:$0xff] %vm4074, %v11773
      %11871 = vst.msk [vmem:[%s307 + $0xf8] sm:$0xff] %vm4074, %v11775
      %p11872 = scmp.lt.s32.totalorder %s22, 7
      %s11873 = scalar_select %p11872, %s22, 7
      %p11874 = scmp.lt.s32.totalorder %s21, 1
      %s11875 = scalar_select %p11874, %s21, 1
      %s11876 = smul.addr %s11875, 32
      %s11877 = smul.addr %s11873, 64
      %s11878 = sadd.s32 %s11876, %s11877
      %s11879 = smul.addr %s11878, 8
      %s11880 = scalar_lea.vmem %s6, %s11879
      // Predicated region
      $region49: #{convgru_forward.1} parent=43 // pred_check
        %p11881 = pneg %p187
      $region50: #{convgru_forward.1} parent=43 // pred_check_branch
        %11883 = sbr.rel (%p11881) target = $region52
      $region51: #{convgru_forward.1} parent=43 // pred_region
        _
      $region52: #{convgru_forward.1} parent=43 // pred_fallthru
        _
    $region44: #{convgru_forward.1} parent=5 // pred_fallthru
      _
    %p11884 = scmp.le.s32.totalorder 2, %s12
    // Predicated region
    $region53: #{convgru_forward.1} parent=5 // pred_check
      %p11885 = pneg %p11884
    $region54: #{convgru_forward.1} parent=5 // pred_check_branch
      %11887 = sbr.rel (%p11885) target = $region56
    $region55: #{convgru_forward.1} parent=5 // pred_region
      %s11888 = ssub.s32 %s12, 2
      // Predicated region
      $region57: #{convgru_forward.1} parent=55 // pred_check
        %p11889 = pneg %p193
      $region58: #{convgru_forward.1} parent=55 // pred_check_branch
        %11891 = sbr.rel (%p11889) target = $region60
      $region59: #{convgru_forward.1} parent=55 // pred_region
        %p11892 = scmp.lt.s32.totalorder %s24, 7
        %s11893 = scalar_select %p11892, %s24, 7
        %p11894 = scmp.lt.s32.totalorder %s23, 1
        %s11895 = scalar_select %p11894, %s23, 1
        %s11896 = smul.addr %s11895, 32
        %s11897 = smul.addr %s11893, 64
        %s11898 = sadd.s32 %s11896, %s11897
        %s11899 = smul.addr %s11898, 8
        %s11900 = scalar_lea.vmem %s6, %s11899
      $region60: #{convgru_forward.1} parent=55 // pred_fallthru
        _
    $region56: #{convgru_forward.1} parent=5 // pred_fallthru
      _
  $region6: #{convgru_forward.1} parent=0 // loop_footer
    %s16 = sadd.s32 1, %s12
  $region7: #{convgru_forward.1} parent=0 // loop_footer_branch
    %11 = sbr.rel target = $region3
  $region8: #{convgru_forward.1} parent=0 // loop_exit
    _

</llo_original>
